<compile_context>
chip_gen: v7x
topology: tpu7x:2x2x1
jax: 0.10.0
libtpu: 0.0.40
codegen_flags: <defaults>
</compile_context>

<pallas_src>
import math

import jax
import jax.numpy as jnp
from jax.experimental import pallas as pl
from jax.experimental.pallas import tpu as pltpu

# ----------------------------- hyper-parameters (small synthetic config) -----
ATOM_IN = 16          # atom_input_features
C = 32                # node_features == fc_features == edge(node) features
RBF_BINS = 32         # edge_features (RBF bins)
NV = 8                # multiplicity of l=1 / l=2 irreps in the equivariant update
OUT_F = 1             # output_features
RBF_VMIN, RBF_VMAX = -4.0, 0.0
RBF_GAMMA = (RBF_BINS - 1) / (RBF_VMAX - RBF_VMIN)
BN_EPS = 1e-5
LN_EPS = 1e-5
WNUM = C * C + 2 * C * NV       # flattened per-edge TP-weight width (= 1536)

_SQ3 = math.sqrt(3.0)
_SQ5 = math.sqrt(5.0)
_SQ15 = math.sqrt(15.0)
_INV_SQRT_C = 1.0 / math.sqrt(float(C))
_INV_SQRT_NV = 1.0 / math.sqrt(float(NV))


# ----------------------------- small helpers ---------------------------------
def _mxdot(a, b):
    """bf16 MXU matmul with f32 accumulation (0/1 one-hot & mixing matrices are exact)."""
    return jnp.dot(a.astype(jnp.bfloat16), b.astype(jnp.bfloat16),
                   preferred_element_type=jnp.float32)


def _full_spec(shape):
    nd = len(shape)
    return pl.BlockSpec(shape, lambda i, _nd=nd: (0,) * _nd)


# ----------------------------- fused forward kernel --------------------------
def _ecomformer_kernel(*refs):
    (x_ref, ea_ref, ohs_ref, ohd_ref, boh_ref, ics_ref, icb_ref,
     emb_w, emb_b, rbf_c, rbf_w, rbf_b,
     a_wqkv, a_bqkv, a_we, a_be, a_w1i, a_w1j, a_w1e, a_b1,
     a_w2, a_b2, a_wc, a_bc, a_lnw, a_lnb, a_bns, a_bnb,
     eqh_w, eqh_b, fc1b_w, fc1b_b, fc2b_w, fc2b_b,
     eq_wout, eq_bout,
     rep_x1, seg1, rep2, seg2,
     fc_w, fc_b, out_w, out_b,
     o_ref) = refs

    # --- graph incidence: transpose once in VMEM (no HBM transposed copies) ---
    ohs = ohs_ref[...]                      # [E, N]  one-hot of edge_index[0] (src)
    ohd = ohd_ref[...]                      # [E, N]  one-hot of edge_index[1] (dst)
    ohsT = ohs.T                            # [N, E]
    ohdT = ohd.T                            # [N, E]
    icnt_src = ics_ref[...]                 # [N, 1]  1 / max(deg_src, 1)

    # --- atom embedding + RBF edge features (fused) ----------------------------
    nf = _mxdot(x_ref[...], emb_w[...]) + emb_b[...]                    # [N, C]
    ea = ea_ref[...]                                                    # [E, 3]
    sq = jnp.sum(ea * ea, axis=1, keepdims=True)
    d = -0.75 * jax.lax.rsqrt(sq + 1e-12)                               # -0.75/||edge||
    rb = jnp.exp(-RBF_GAMMA * (d - rbf_c[...]) ** 2)                    # [E, bins]
    ef = jax.nn.softplus(_mxdot(rb, rbf_w[...]) + rbf_b[...])           # [E, C]

    # --- real spherical harmonics (shared by both equivariant passes) ----------
    # TODO(synk): e3nn's exact (y,z,x) component ordering / FullyConnectedTensorProduct
    #             path normalization is approximated (structure preserved).
    inv_r = jax.lax.rsqrt(sq + 1e-12)
    u = ea * inv_r
    ux, uy, uz = u[:, 0:1], u[:, 1:2], u[:, 2:3]
    y1c = [_SQ3 * ux, _SQ3 * uy, _SQ3 * uz]                             # l = 1
    y2c = [_SQ15 * ux * uy, _SQ15 * uy * uz,
           0.5 * _SQ5 * (3.0 * uz * uz - 1.0),
           _SQ15 * ux * uz, 0.5 * _SQ15 * (ux * ux - uy * uy)]          # l = 2
    onesv = jnp.ones((1, NV), jnp.float32)
    # lane-expanded harmonics: y?e[:, m*NV + v] = Y_l,m(edge)
    y1e = jnp.concatenate([c * onesv for c in y1c], axis=1)             # [E, 3*NV]
    y2e = jnp.concatenate([c * onesv for c in y2c], axis=1)             # [E, 5*NV]

    # --- ComformerConv graph-attention layer -----------------------------------
    def conv_layer(x, l):
        qkv = _mxdot(x, a_wqkv[l]) + a_bqkv[l]                          # [N, 3C] = [q|k|v]
        e = _mxdot(ef, a_we[l]) + a_be[l]                               # [E, C]
        gi = _mxdot(ohd, qkv)                                           # [E, 3C] gathered @ dst
        gj = _mxdot(ohs, qkv)                                           # [E, 3C] gathered @ src
        # key_update & msg_update MLPs, packed: hidden = [key_hidden | msg_hidden]
        h = (_mxdot(gi, a_w1i[l]) + _mxdot(gj, a_w1j[l])
             + _mxdot(e, a_w1e[l]) + a_b1[l])                           # [E, 2C]
        h = h * jax.nn.sigmoid(h)                                       # SiLU
        km = _mxdot(h, a_w2[l]) + a_b2[l]                               # [E, 2C] = [key_upd|msg]
        key_upd, msg = km[:, :C], km[:, C:]
        alpha = gi[:, :C] * key_upd * _INV_SQRT_C                       # q_i * key_upd / sqrt(C)
        mu = jnp.mean(alpha, axis=-1, keepdims=True)
        var = jnp.mean((alpha - mu) ** 2, axis=-1, keepdims=True)
        ln = (alpha - mu) * jax.lax.rsqrt(var + LN_EPS) * a_lnw[l] + a_lnb[l]
        out_msg = msg * jax.nn.sigmoid(ln)
        agg = _mxdot(ohdT, out_msg)                                     # scatter-add @ dst  [N, C]
        out = _mxdot(agg, a_wc[l]) + a_bc[l]
        out = out * a_bns[l] + a_bnb[l]                                 # BatchNorm1d (eval, 0/1 stats)
        return jax.nn.softplus(x + out)

    # --- ComformerConvEqui (equivariant update), TP-weight MLPs fused ----------
    def equi_update(x):
        # per-edge tensor-product weights from edge features (packed hidden layer,
        # intermediates never leave VMEM)
        hid = jnp.maximum(_mxdot(ef, eqh_w[...]) + eqh_b[...], 0.0)     # [E, 2C] = [h1 | h2]
        w1 = _mxdot(hid[:, :C], fc1b_w[...]) + fc1b_b[...]              # [E, WNUM]
        w2 = _mxdot(hid[:, C:], fc2b_w[...]) + fc2b_b[...]              # [E, WNUM]
        x_dst = _mxdot(ohd, x)                                          # [E, C] node feats @ dst
        # pass 1: (0e node feats) x (Y0,Y1,Y2) -> per-edge irreps, via
        #   replicate(x) * w  followed by a segment-sum matmul (vectorized TP).
        t_all = _mxdot(w1 * _mxdot(x_dst, rep_x1[...]), seg1[...]) * _INV_SQRT_C   # [E, C+2NV]
        t0, t1, t2 = t_all[:, :C], t_all[:, C:C + NV], t_all[:, C + NV:]
        out1 = jnp.concatenate([t1, t1, t1], axis=1) * y1e              # [E, 3NV]: t1[v]*Y1[m]
        out2 = jnp.concatenate([t2] * 5, axis=1) * y2e                  # [E, 5NV]: t2[v]*Y2[m]
        out_cat = jnp.concatenate([t0, out1, out2], axis=1)             # lane-dense [E, 96]
        hcat = _mxdot(ohsT, out_cat) * icnt_src                         # scatter-mean @ src [N, 96]

        # pass 2: gather irreps back @ dst, contract with Y -> scalars, mix, scatter-mean @ src
        gcat = _mxdot(ohd, hcat)                                        # [E, 96]
        g0 = gcat[:, :C]
        p1 = gcat[:, C:C + 3 * NV] * y1e
        s1 = (p1[:, :NV] + p1[:, NV:2 * NV] + p1[:, 2 * NV:]) * (1.0 / _SQ3)       # [E, NV]
        p2 = gcat[:, C + 3 * NV:] * y2e
        s2 = (p2[:, :NV] + p2[:, NV:2 * NV] + p2[:, 2 * NV:3 * NV]
              + p2[:, 3 * NV:4 * NV] + p2[:, 4 * NV:]) * (1.0 / _SQ5)              # [E, NV]
        mix = _mxdot(jnp.concatenate([g0, s1, s2], axis=1), rep2[...])  # [E, WNUM]
        res = _mxdot(w2 * mix, seg2[...])                               # [E, 3C]
        out_e = (res[:, :C] * _INV_SQRT_C
                 + res[:, C:2 * C] * _INV_SQRT_NV
                 + res[:, 2 * C:] * _INV_SQRT_NV)                       # [E, C]
        node_out = _mxdot(ohsT, out_e) * icnt_src                       # scatter-mean @ src [N, C]
        upd = _mxdot(node_out, eq_wout[...]) + eq_bout[...]
        return x + upd * jax.nn.sigmoid(upd)                            # residual + SiLU(lin_out)

    nf = conv_layer(nf, 0)
    nf = equi_update(nf)
    nf = conv_layer(nf, 1)
    nf = conv_layer(nf, 2)

    # --- graph readout (scatter-mean over batch) + MLP head --------------------
    pooled = _mxdot(boh_ref[...].T, nf) * icb_ref[...]                  # [B, C]
    hfc = _mxdot(pooled, fc_w[...]) + fc_b[...]
    hfc = hfc * jax.nn.sigmoid(hfc)                                     # SiLU
    o_ref[...] = jnp.dot(hfc, out_w[...],
                         preferred_element_type=jnp.float32) + out_b[...]


# ----------------------------- parameters ------------------------------------
def _init_linear(key, fan_in, fan_out):
    kw, kb = jax.random.split(key)
    bound = 1.0 / math.sqrt(fan_in)
    w = jax.random.uniform(kw, (fan_in, fan_out), jnp.float32, -bound, bound)
    b = jax.random.uniform(kb, (1, fan_out), jnp.float32, -bound, bound)
    return w, b


def _pack_att_layer(key):
    """One ComformerConv layer, packed into lane-dense block matrices."""
    ks = jax.random.split(key, 10)
    wq, bq = _init_linear(ks[0], C, C)
    wk, bk = _init_linear(ks[1], C, C)
    wv, bv = _init_linear(ks[2], C, C)
    we, be = _init_linear(ks[3], C, C)
    wk1, bk1 = _init_linear(ks[4], 3 * C, C)   # key_update: Linear(3C->C)/SiLU/Linear(C->C)
    wk2, bk2 = _init_linear(ks[5], C, C)
    wm1, bm1 = _init_linear(ks[6], 3 * C, C)   # msg_update: Linear(3C->C)/SiLU/Linear(C->C)
    wm2, bm2 = _init_linear(ks[7], C, C)
    wc, bc = _init_linear(ks[8], C, C)
    z = jnp.zeros((C, C), jnp.float32)
    wqkv = jnp.concatenate([wq, wk, wv], axis=1)                  # [C, 3C]
    bqkv = jnp.concatenate([bq, bk, bv], axis=1)                  # [1, 3C]
    # gi = [q_i|k_i|v_i], gj = [q_j|k_j|v_j]; packed hidden = [key_hidden | msg_hidden]
    w1i = jnp.concatenate([jnp.concatenate([z, z], axis=1),
                           jnp.concatenate([wk1[:C], z], axis=1),
                           jnp.concatenate([z, wm1[:C]], axis=1)], axis=0)        # [3C, 2C]
    w1j = jnp.concatenate([jnp.concatenate([z, z], axis=1),
                           jnp.concatenate([wk1[C:2 * C], z], axis=1),
                           jnp.concatenate([z, wm1[C:2 * C]], axis=1)], axis=0)   # [3C, 2C]
    w1e = jnp.concatenate([wk1[2 * C:], wm1[2 * C:]], axis=1)                     # [C, 2C]
    b1 = jnp.concatenate([bk1, bm1], axis=1)                                      # [1, 2C]
    w2 = jnp.concatenate([jnp.concatenate([wk2, z], axis=1),
                          jnp.concatenate([z, wm2], axis=1)], axis=0)             # [2C, 2C]
    b2 = jnp.concatenate([bk2, bm2], axis=1)
    return dict(
        wqkv=wqkv, bqkv=bqkv, we=we, be=be, w1i=w1i, w1j=w1j, w1e=w1e, b1=b1,
        w2=w2, b2=b2, wc=wc, bc=bc,
        lnw=jnp.ones((1, C), jnp.float32), lnb=jnp.zeros((1, C), jnp.float32),
        bns=jnp.full((1, C), 1.0 / math.sqrt(1.0 + BN_EPS), jnp.float32),
        bnb=jnp.zeros((1, C), jnp.float32),
    )


def init_params(key):
    keys = jax.random.split(key, 16)
    p = {}
    p["emb_w"], p["emb_b"] = _init_linear(keys[0], ATOM_IN, C)
    p["rbf_w"], p["rbf_b"] = _init_linear(keys[1], RBF_BINS, C)
    p["rbf_centers"] = jnp.linspace(RBF_VMIN, RBF_VMAX, RBF_BINS).reshape(
        1, RBF_BINS).astype(jnp.float32)
    layers = [_pack_att_layer(keys[2 + i]) for i in range(3)]
    for name in layers[0]:
        p["att_" + name] = jnp.stack([lyr[name] for lyr in layers])     # stacked [3, ...]
    # equivariant update: per-edge TP-weight MLPs (flattened layout = input-major,
    # identical to the original unrolled loops). The two hidden layers are packed
    # into one lane-dense [C, 2C] matrix.
    fc1a_w, fc1a_b = _init_linear(keys[5], C, C)
    fc2a_w, fc2a_b = _init_linear(keys[7], C, C)
    p["eqh_w"] = jnp.concatenate([fc1a_w, fc2a_w], axis=1)              # [C, 2C]
    p["eqh_b"] = jnp.concatenate([fc1a_b, fc2a_b], axis=1)              # [1, 2C]
    p["fc1b_w"], p["fc1b_b"] = _init_linear(keys[6], C, WNUM)
    p["fc2b_w"], p["fc2b_b"] = _init_linear(keys[8], C, WNUM)
    p["eq_wout"], p["eq_bout"] = _init_linear(keys[9], C, C)
    p["fc_w"], p["fc_b"] = _init_linear(keys[10], C, C)
    p["out_w"], p["out_b"] = _init_linear(keys[11], C, OUT_F)
    return p


def _block_diag(blocks):
    rows = sum(b.shape[0] for b in blocks)
    cols = sum(b.shape[1] for b in blocks)
    out = jnp.zeros((rows, cols), jnp.float32)
    r = c = 0
    for b in blocks:
        out = out.at[r:r + b.shape[0], c:c + b.shape[1]].set(b)
        r += b.shape[0]
        c += b.shape[1]
    return out


def make_tp_constants():
    """0/1 replicate & segment-sum matrices that vectorize the per-edge tensor product.

    Stored in bf16 (exact for 0/1 values): halves their HBM->VMEM traffic and the
    MXU consumes bf16 operands anyway.
    """
    eye_c = jnp.eye(C, dtype=jnp.float32)
    eye_v = jnp.eye(NV, dtype=jnp.float32)
    r1 = jnp.ones((1, C), jnp.float32)
    r2 = jnp.ones((1, NV), jnp.float32)
    c1 = jnp.ones((C, 1), jnp.float32)
    c2 = jnp.ones((NV, 1), jnp.float32)
    consts = {
        # x_rep[e, i*C + j] = x[e, i]   (and same for the two i*NV + v blocks)
        "rep_x1": jnp.concatenate([jnp.kron(eye_c, r1),
                                   jnp.kron(eye_c, r2),
                                   jnp.kron(eye_c, r2)], axis=1),        # [C, WNUM]
        # segment-sum over the input-channel index of each flattened TP block
        "seg1": _block_diag([jnp.kron(c1, eye_c),
                             jnp.kron(c1, eye_v),
                             jnp.kron(c1, eye_v)]),                      # [WNUM, C+2NV]
        # mix[e, i*C+j] = g0[e,i] ; mix[e, o1+v*C+j] = s1[e,v] ; mix[e, o2+v*C+j] = s2[e,v]
        "rep2": _block_diag([jnp.kron(eye_c, r1),
                             jnp.kron(eye_v, r1),
                             jnp.kron(eye_v, r1)]),                      # [C+2NV, WNUM]
        # segment-sum over the input index of each conv-2 path, per output channel j
        "seg2": _block_diag([jnp.kron(c1, eye_c),
                             jnp.kron(c2, eye_c),
                             jnp.kron(c2, eye_c)]),                      # [WNUM, 3C]
    }
    return {k: v.astype(jnp.bfloat16) for k, v in consts.items()}


# ----------------------------- forward wrapper --------------------------------
def ecomformer_forward(params, consts, x_atoms, edge_index, edge_attr, batch, *, num_graphs):
    n = x_atoms.shape[0]
    src, dst = edge_index[0], edge_index[1]
    ohs = jax.nn.one_hot(src, n, dtype=jnp.float32)                      # [E, N]
    ohd = jax.nn.one_hot(dst, n, dtype=jnp.float32)                      # [E, N]
    boh = jax.nn.one_hot(batch, num_graphs, dtype=jnp.float32)           # [N, B]
    icnt_src = 1.0 / jnp.maximum(jnp.sum(ohs, axis=0)[:, None], 1.0)     # [N, 1]
    icnt_b = 1.0 / jnp.maximum(jnp.sum(boh, axis=0)[:, None], 1.0)       # [B, 1]

    inputs = [
        x_atoms, edge_attr, ohs, ohd, boh, icnt_src, icnt_b,
        params["emb_w"], params["emb_b"], params["rbf_centers"], params["rbf_w"], params["rbf_b"],
        params["att_wqkv"], params["att_bqkv"], params["att_we"], params["att_be"],
        params["att_w1i"], params["att_w1j"], params["att_w1e"], params["att_b1"],
        params["att_w2"], params["att_b2"], params["att_wc"], params["att_bc"],
        params["att_lnw"], params["att_lnb"], params["att_bns"], params["att_bnb"],
        params["eqh_w"], params["eqh_b"], params["fc1b_w"], params["fc1b_b"],
        params["fc2b_w"], params["fc2b_b"],
        params["eq_wout"], params["eq_bout"],
        consts["rep_x1"], consts["seg1"], consts["rep2"], consts["seg2"],
        params["fc_w"], params["fc_b"], params["out_w"], params["out_b"],
    ]
    out_shape = jax.ShapeDtypeStruct((num_graphs, OUT_F), jnp.float32)
    fn = pl.pallas_call(
        _ecomformer_kernel,
        grid=(1,),
        in_specs=[_full_spec(a.shape) for a in inputs],
        out_specs=_full_spec(out_shape.shape),
        out_shape=out_shape,
        compiler_params=pltpu.CompilerParams(dimension_semantics=("arbitrary",)),
    )
    out = fn(*inputs)
    return jnp.squeeze(out)     # matches torch.squeeze (collapses if num_graphs == 1)


if __name__ == "__main__":
    key = jax.random.PRNGKey(0)
    kp, kx, ke, ki = jax.random.split(key, 4)
    params = init_params(kp)
    consts = make_tp_constants()

    N, E, B = 16, 48, 2
    x_atoms = jax.random.normal(kx, (N, ATOM_IN), jnp.float32)            # data.x
    edge_attr = jax.random.normal(ke, (E, 3), jnp.float32)                # data.edge_attr
    edge_index = jax.random.randint(ki, (2, E), 0, N, dtype=jnp.int32)    # data.edge_index
    batch = jnp.concatenate([jnp.zeros(N // 2, jnp.int32),
                             jnp.ones(N - N // 2, jnp.int32)])            # data.batch

    forward = jax.jit(ecomformer_forward, static_argnames=("num_graphs",))
    out = forward(params, consts, x_atoms, edge_index, edge_attr, batch, num_graphs=B)
    out = jax.block_until_ready(out)
    assert out.shape == (B,) and out.dtype == jnp.float32
    print("KERNEL_OK")
</pallas_src>

<mosaic_0001>
module attributes {stable_mosaic.version = 11 : i64} {
  func.func @_ecomformer_kernel(%arg0: i32, %arg1: memref<16x16xf32, #tpu.memory_space<vmem>>, %arg2: memref<48x3xf32, #tpu.memory_space<vmem>>, %arg3: memref<48x16xf32, #tpu.memory_space<vmem>>, %arg4: memref<48x16xf32, #tpu.memory_space<vmem>>, %arg5: memref<16x2xf32, #tpu.memory_space<vmem>>, %arg6: memref<16x1xf32, #tpu.memory_space<vmem>>, %arg7: memref<2x1xf32, #tpu.memory_space<vmem>>, %arg8: memref<16x32xf32, #tpu.memory_space<vmem>>, %arg9: memref<1x32xf32, #tpu.memory_space<vmem>>, %arg10: memref<1x32xf32, #tpu.memory_space<vmem>>, %arg11: memref<32x32xf32, #tpu.memory_space<vmem>>, %arg12: memref<1x32xf32, #tpu.memory_space<vmem>>, %arg13: memref<3x32x96xf32, #tpu.memory_space<vmem>>, %arg14: memref<3x1x96xf32, #tpu.memory_space<vmem>>, %arg15: memref<3x32x32xf32, #tpu.memory_space<vmem>>, %arg16: memref<3x1x32xf32, #tpu.memory_space<vmem>>, %arg17: memref<3x96x64xf32, #tpu.memory_space<vmem>>, %arg18: memref<3x96x64xf32, #tpu.memory_space<vmem>>, %arg19: memref<3x32x64xf32, #tpu.memory_space<vmem>>, %arg20: memref<3x1x64xf32, #tpu.memory_space<vmem>>, %arg21: memref<3x64x64xf32, #tpu.memory_space<vmem>>, %arg22: memref<3x1x64xf32, #tpu.memory_space<vmem>>, %arg23: memref<3x32x32xf32, #tpu.memory_space<vmem>>, %arg24: memref<3x1x32xf32, #tpu.memory_space<vmem>>, %arg25: memref<3x1x32xf32, #tpu.memory_space<vmem>>, %arg26: memref<3x1x32xf32, #tpu.memory_space<vmem>>, %arg27: memref<3x1x32xf32, #tpu.memory_space<vmem>>, %arg28: memref<3x1x32xf32, #tpu.memory_space<vmem>>, %arg29: memref<32x64xf32, #tpu.memory_space<vmem>>, %arg30: memref<1x64xf32, #tpu.memory_space<vmem>>, %arg31: memref<32x1536xf32, #tpu.memory_space<vmem>>, %arg32: memref<1x1536xf32, #tpu.memory_space<vmem>>, %arg33: memref<32x1536xf32, #tpu.memory_space<vmem>>, %arg34: memref<1x1536xf32, #tpu.memory_space<vmem>>, %arg35: memref<32x32xf32, #tpu.memory_space<vmem>>, %arg36: memref<1x32xf32, #tpu.memory_space<vmem>>, %arg37: memref<32x1536xbf16, #tpu.memory_space<vmem>>, %arg38: memref<1536x48xbf16, #tpu.memory_space<vmem>>, %arg39: memref<48x1536xbf16, #tpu.memory_space<vmem>>, %arg40: memref<1536x96xbf16, #tpu.memory_space<vmem>>, %arg41: memref<32x32xf32, #tpu.memory_space<vmem>>, %arg42: memref<1x32xf32, #tpu.memory_space<vmem>>, %arg43: memref<32x1xf32, #tpu.memory_space<vmem>>, %arg44: memref<1x1xf32, #tpu.memory_space<vmem>>, %arg45: memref<2x1xf32, #tpu.memory_space<vmem>>) attributes {dimension_semantics = [#tpu.dimension_semantics<arbitrary>], iteration_bounds = array<i64: 1>, scalar_prefetch = 0 : i64, scratch_operands = 0 : i64, tpu.core_type = #tpu.core_type<tc>, window_params = [{pipeline_mode = #tpu.pipeline_mode<synchronous>, transform_indices = @transform_0, window_bounds = array<i64: 16, 16>}, {pipeline_mode = #tpu.pipeline_mode<synchronous>, transform_indices = @transform_1, window_bounds = array<i64: 48, 3>}, {pipeline_mode = #tpu.pipeline_mode<synchronous>, transform_indices = @transform_2, window_bounds = array<i64: 48, 16>}, {pipeline_mode = #tpu.pipeline_mode<synchronous>, transform_indices = @transform_3, window_bounds = array<i64: 48, 16>}, {pipeline_mode = #tpu.pipeline_mode<synchronous>, transform_indices = @transform_4, window_bounds = array<i64: 16, 2>}, {pipeline_mode = #tpu.pipeline_mode<synchronous>, transform_indices = @transform_5, window_bounds = array<i64: 16, 1>}, {pipeline_mode = #tpu.pipeline_mode<synchronous>, transform_indices = @transform_6, window_bounds = array<i64: 2, 1>}, {pipeline_mode = #tpu.pipeline_mode<synchronous>, transform_indices = @transform_7, window_bounds = array<i64: 16, 32>}, {pipeline_mode = #tpu.pipeline_mode<synchronous>, transform_indices = @transform_8, window_bounds = array<i64: 1, 32>}, {pipeline_mode = #tpu.pipeline_mode<synchronous>, transform_indices = @transform_9, window_bounds = array<i64: 1, 32>}, {pipeline_mode = #tpu.pipeline_mode<synchronous>, transform_indices = @transform_10, window_bounds = array<i64: 32, 32>}, {pipeline_mode = #tpu.pipeline_mode<synchronous>, transform_indices = @transform_11, window_bounds = array<i64: 1, 32>}, {pipeline_mode = #tpu.pipeline_mode<synchronous>, transform_indices = @transform_12, window_bounds = array<i64: 3, 32, 96>}, {pipeline_mode = #tpu.pipeline_mode<synchronous>, transform_indices = @transform_13, window_bounds = array<i64: 3, 1, 96>}, {pipeline_mode = #tpu.pipeline_mode<synchronous>, transform_indices = @transform_14, window_bounds = array<i64: 3, 32, 32>}, {pipeline_mode = #tpu.pipeline_mode<synchronous>, transform_indices = @transform_15, window_bounds = array<i64: 3, 1, 32>}, {pipeline_mode = #tpu.pipeline_mode<synchronous>, transform_indices = @transform_16, window_bounds = array<i64: 3, 96, 64>}, {pipeline_mode = #tpu.pipeline_mode<synchronous>, transform_indices = @transform_17, window_bounds = array<i64: 3, 96, 64>}, {pipeline_mode = #tpu.pipeline_mode<synchronous>, transform_indices = @transform_18, window_bounds = array<i64: 3, 32, 64>}, {pipeline_mode = #tpu.pipeline_mode<synchronous>, transform_indices = @transform_19, window_bounds = array<i64: 3, 1, 64>}, {pipeline_mode = #tpu.pipeline_mode<synchronous>, transform_indices = @transform_20, window_bounds = array<i64: 3, 64, 64>}, {pipeline_mode = #tpu.pipeline_mode<synchronous>, transform_indices = @transform_21, window_bounds = array<i64: 3, 1, 64>}, {pipeline_mode = #tpu.pipeline_mode<synchronous>, transform_indices = @transform_22, window_bounds = array<i64: 3, 32, 32>}, {pipeline_mode = #tpu.pipeline_mode<synchronous>, transform_indices = @transform_23, window_bounds = array<i64: 3, 1, 32>}, {pipeline_mode = #tpu.pipeline_mode<synchronous>, transform_indices = @transform_24, window_bounds = array<i64: 3, 1, 32>}, {pipeline_mode = #tpu.pipeline_mode<synchronous>, transform_indices = @transform_25, window_bounds = array<i64: 3, 1, 32>}, {pipeline_mode = #tpu.pipeline_mode<synchronous>, transform_indices = @transform_26, window_bounds = array<i64: 3, 1, 32>}, {pipeline_mode = #tpu.pipeline_mode<synchronous>, transform_indices = @transform_27, window_bounds = array<i64: 3, 1, 32>}, {pipeline_mode = #tpu.pipeline_mode<synchronous>, transform_indices = @transform_28, window_bounds = array<i64: 32, 64>}, {pipeline_mode = #tpu.pipeline_mode<synchronous>, transform_indices = @transform_29, window_bounds = array<i64: 1, 64>}, {pipeline_mode = #tpu.pipeline_mode<synchronous>, transform_indices = @transform_30, window_bounds = array<i64: 32, 1536>}, {pipeline_mode = #tpu.pipeline_mode<synchronous>, transform_indices = @transform_31, window_bounds = array<i64: 1, 1536>}, {pipeline_mode = #tpu.pipeline_mode<synchronous>, transform_indices = @transform_32, window_bounds = array<i64: 32, 1536>}, {pipeline_mode = #tpu.pipeline_mode<synchronous>, transform_indices = @transform_33, window_bounds = array<i64: 1, 1536>}, {pipeline_mode = #tpu.pipeline_mode<synchronous>, transform_indices = @transform_34, window_bounds = array<i64: 32, 32>}, {pipeline_mode = #tpu.pipeline_mode<synchronous>, transform_indices = @transform_35, window_bounds = array<i64: 1, 32>}, {pipeline_mode = #tpu.pipeline_mode<synchronous>, transform_indices = @transform_36, window_bounds = array<i64: 32, 1536>}, {pipeline_mode = #tpu.pipeline_mode<synchronous>, transform_indices = @transform_37, window_bounds = array<i64: 1536, 48>}, {pipeline_mode = #tpu.pipeline_mode<synchronous>, transform_indices = @transform_38, window_bounds = array<i64: 48, 1536>}, {pipeline_mode = #tpu.pipeline_mode<synchronous>, transform_indices = @transform_39, window_bounds = array<i64: 1536, 96>}, {pipeline_mode = #tpu.pipeline_mode<synchronous>, transform_indices = @transform_40, window_bounds = array<i64: 32, 32>}, {pipeline_mode = #tpu.pipeline_mode<synchronous>, transform_indices = @transform_41, window_bounds = array<i64: 1, 32>}, {pipeline_mode = #tpu.pipeline_mode<synchronous>, transform_indices = @transform_42, window_bounds = array<i64: 32, 1>}, {pipeline_mode = #tpu.pipeline_mode<synchronous>, transform_indices = @transform_43, window_bounds = array<i64: 1, 1>}, {pipeline_mode = #tpu.pipeline_mode<synchronous>, transform_indices = @transform_44, window_bounds = array<i64: 2, 1>}]} {
    %c0 = arith.constant 0 : index
    %c0_0 = arith.constant 0 : index
    %0 = vector.load %arg3[%c0, %c0_0] : memref<48x16xf32, #tpu.memory_space<vmem>>, vector<48x16xf32>
    %c0_1 = arith.constant 0 : index
    %c0_2 = arith.constant 0 : index
    %1 = vector.load %arg4[%c0_1, %c0_2] : memref<48x16xf32, #tpu.memory_space<vmem>>, vector<48x16xf32>
    %2 = tpu.transpose %0, [1, 0] : vector<48x16xf32> -> vector<16x48xf32>
    %3 = tpu.transpose %1, [1, 0] : vector<48x16xf32> -> vector<16x48xf32>
    %c0_3 = arith.constant 0 : index
    %c0_4 = arith.constant 0 : index
    %4 = vector.load %arg6[%c0_3, %c0_4] : memref<16x1xf32, #tpu.memory_space<vmem>>, vector<16x1xf32>
    %c0_5 = arith.constant 0 : index
    %c0_6 = arith.constant 0 : index
    %5 = vector.load %arg1[%c0_5, %c0_6] : memref<16x16xf32, #tpu.memory_space<vmem>>, vector<16x16xf32>
    %c0_7 = arith.constant 0 : index
    %c0_8 = arith.constant 0 : index
    %6 = vector.load %arg8[%c0_7, %c0_8] : memref<16x32xf32, #tpu.memory_space<vmem>>, vector<16x32xf32>
    %7 = arith.truncf %5 : vector<16x16xf32> to vector<16x16xbf16>
    %8 = arith.truncf %6 : vector<16x32xf32> to vector<16x32xbf16>
    %cst = arith.constant dense<0.000000e+00> : vector<16x32xf32>
    %9 = tpu.matmul %7, %8, %cst {dimension_numbers = #tpu.dot_dimension_numbers<[1], [0], [0], [1], [0, 0, 1, 1], [], []>} : vector<16x16xbf16>, vector<16x32xbf16>, vector<16x32xf32> -> vector<16x32xf32>
    %c0_9 = arith.constant 0 : index
    %c0_10 = arith.constant 0 : index
    %10 = vector.load %arg9[%c0_9, %c0_10] : memref<1x32xf32, #tpu.memory_space<vmem>>, vector<1x32xf32>
    %11 = vector.broadcast %10 : vector<1x32xf32> to vector<16x32xf32>
    %12 = arith.addf %9, %11 : vector<16x32xf32>
    %c0_11 = arith.constant 0 : index
    %c0_12 = arith.constant 0 : index
    %13 = vector.load %arg2[%c0_11, %c0_12] : memref<48x3xf32, #tpu.memory_space<vmem>>, vector<48x3xf32>
    %14 = arith.mulf %13, %13 : vector<48x3xf32>
    %cst_13 = arith.constant dense<0.000000e+00> : vector<48xf32>
    %15 = vector.multi_reduction <add>, %14, %cst_13 [1] : vector<48x3xf32> to vector<48xf32>
    %16 = vector.shape_cast %15 : vector<48xf32> to vector<48x1xf32>
    %cst_14 = arith.constant 9.99999996E-13 : f32
    %17 = vector.broadcast %cst_14 : f32 to vector<48x1xf32>
    %18 = arith.addf %16, %17 : vector<48x1xf32>
    %19 = math.rsqrt %18 : vector<48x1xf32>
    %cst_15 = arith.constant -7.500000e-01 : f32
    %20 = vector.broadcast %cst_15 : f32 to vector<48x1xf32>
    %21 = arith.mulf %20, %19 : vector<48x1xf32>
    %c0_16 = arith.constant 0 : index
    %c0_17 = arith.constant 0 : index
    %22 = vector.load %arg10[%c0_16, %c0_17] : memref<1x32xf32, #tpu.memory_space<vmem>>, vector<1x32xf32>
    %23 = vector.broadcast %21 : vector<48x1xf32> to vector<48x32xf32>
    %24 = vector.broadcast %22 : vector<1x32xf32> to vector<48x32xf32>
    %25 = arith.subf %23, %24 : vector<48x32xf32>
    %26 = arith.mulf %25, %25 : vector<48x32xf32>
    %cst_18 = arith.constant -7.750000e+00 : f32
    %27 = vector.broadcast %cst_18 : f32 to vector<48x32xf32>
    %28 = arith.mulf %27, %26 : vector<48x32xf32>
    %29 = math.exp %28 : vector<48x32xf32>
    %c0_19 = arith.constant 0 : index
    %c0_20 = arith.constant 0 : index
    %30 = vector.load %arg11[%c0_19, %c0_20] : memref<32x32xf32, #tpu.memory_space<vmem>>, vector<32x32xf32>
    %31 = arith.truncf %29 : vector<48x32xf32> to vector<48x32xbf16>
    %32 = arith.truncf %30 : vector<32x32xf32> to vector<32x32xbf16>
    %cst_21 = arith.constant dense<0.000000e+00> : vector<48x32xf32>
    %33 = tpu.matmul %31, %32, %cst_21 {dimension_numbers = #tpu.dot_dimension_numbers<[1], [0], [0], [1], [0, 0, 1, 1], [], []>} : vector<48x32xbf16>, vector<32x32xbf16>, vector<48x32xf32> -> vector<48x32xf32>
    %c0_22 = arith.constant 0 : index
    %c0_23 = arith.constant 0 : index
    %34 = vector.load %arg12[%c0_22, %c0_23] : memref<1x32xf32, #tpu.memory_space<vmem>>, vector<1x32xf32>
    %35 = vector.broadcast %34 : vector<1x32xf32> to vector<48x32xf32>
    %36 = arith.addf %33, %35 : vector<48x32xf32>
    %cst_24 = arith.constant 0.000000e+00 : f32
    %37 = vector.broadcast %cst_24 : f32 to vector<48x32xf32>
    %38 = arith.maximumf %36, %37 : vector<48x32xf32>
    %39 = vector.broadcast %cst_24 : f32 to vector<48x32xf32>
    %40 = arith.subf %36, %39 : vector<48x32xf32>
    %41 = arith.cmpf one, %40, %40 : vector<48x32xf32>
    %42 = vector.broadcast %cst_24 : f32 to vector<48x32xf32>
    %43 = arith.addf %36, %42 : vector<48x32xf32>
    %44 = math.absf %40 : vector<48x32xf32>
    %cst_25 = arith.constant 0.000000e+00 : f32
    %45 = vector.broadcast %cst_25 : f32 to vector<48x32xf32>
    %46 = arith.subf %45, %44 : vector<48x32xf32>
    %47 = math.exp %46 : vector<48x32xf32>
    %48 = math.log1p %47 : vector<48x32xf32>
    %49 = arith.addf %38, %48 : vector<48x32xf32>
    %50 = arith.select %41, %43, %49 : vector<48x32xi1>, vector<48x32xf32>
    %cst_26 = arith.constant 9.99999996E-13 : f32
    %51 = vector.broadcast %cst_26 : f32 to vector<48x1xf32>
    %52 = arith.addf %16, %51 : vector<48x1xf32>
    %53 = math.rsqrt %52 : vector<48x1xf32>
    %54 = vector.broadcast %53 : vector<48x1xf32> to vector<48x3xf32>
    %55 = arith.mulf %13, %54 : vector<48x3xf32>
    %56 = vector.extract_strided_slice %55 {offsets = [0, 0], sizes = [48, 1], strides = [1, 1]} : vector<48x3xf32> to vector<48x1xf32>
    %57 = vector.extract_strided_slice %55 {offsets = [0, 1], sizes = [48, 1], strides = [1, 1]} : vector<48x3xf32> to vector<48x1xf32>
    %58 = vector.extract_strided_slice %55 {offsets = [0, 2], sizes = [48, 1], strides = [1, 1]} : vector<48x3xf32> to vector<48x1xf32>
    %cst_27 = arith.constant 1.73205078 : f32
    %59 = vector.broadcast %cst_27 : f32 to vector<48x1xf32>
    %60 = arith.mulf %59, %56 : vector<48x1xf32>
    %cst_28 = arith.constant 1.73205078 : f32
    %61 = vector.broadcast %cst_28 : f32 to vector<48x1xf32>
    %62 = arith.mulf %61, %57 : vector<48x1xf32>
    %cst_29 = arith.constant 1.73205078 : f32
    %63 = vector.broadcast %cst_29 : f32 to vector<48x1xf32>
    %64 = arith.mulf %63, %58 : vector<48x1xf32>
    %cst_30 = arith.constant 3.87298346 : f32
    %65 = vector.broadcast %cst_30 : f32 to vector<48x1xf32>
    %66 = arith.mulf %65, %56 : vector<48x1xf32>
    %67 = arith.mulf %66, %57 : vector<48x1xf32>
    %cst_31 = arith.constant 3.87298346 : f32
    %68 = vector.broadcast %cst_31 : f32 to vector<48x1xf32>
    %69 = arith.mulf %68, %57 : vector<48x1xf32>
    %70 = arith.mulf %69, %58 : vector<48x1xf32>
    %cst_32 = arith.constant 3.000000e+00 : f32
    %71 = vector.broadcast %cst_32 : f32 to vector<48x1xf32>
    %72 = arith.mulf %71, %58 : vector<48x1xf32>
    %73 = arith.mulf %72, %58 : vector<48x1xf32>
    %cst_33 = arith.constant 1.000000e+00 : f32
    %74 = vector.broadcast %cst_33 : f32 to vector<48x1xf32>
    %75 = arith.subf %73, %74 : vector<48x1xf32>
    %cst_34 = arith.constant 1.11803401 : f32
    %76 = vector.broadcast %cst_34 : f32 to vector<48x1xf32>
    %77 = arith.mulf %76, %75 : vector<48x1xf32>
    %cst_35 = arith.constant 3.87298346 : f32
    %78 = vector.broadcast %cst_35 : f32 to vector<48x1xf32>
    %79 = arith.mulf %78, %56 : vector<48x1xf32>
    %80 = arith.mulf %79, %58 : vector<48x1xf32>
    %81 = arith.mulf %56, %56 : vector<48x1xf32>
    %82 = arith.mulf %57, %57 : vector<48x1xf32>
    %83 = arith.subf %81, %82 : vector<48x1xf32>
    %cst_36 = arith.constant 1.93649173 : f32
    %84 = vector.broadcast %cst_36 : f32 to vector<48x1xf32>
    %85 = arith.mulf %84, %83 : vector<48x1xf32>
    %cst_37 = arith.constant 1.000000e+00 : f32
    %86 = vector.broadcast %cst_37 : f32 to vector<1x8xf32>
    %87 = vector.broadcast %60 : vector<48x1xf32> to vector<48x8xf32>
    %88 = vector.broadcast %86 : vector<1x8xf32> to vector<48x8xf32>
    %89 = arith.mulf %87, %88 : vector<48x8xf32>
    %90 = vector.broadcast %62 : vector<48x1xf32> to vector<48x8xf32>
    %91 = vector.broadcast %86 : vector<1x8xf32> to vector<48x8xf32>
    %92 = arith.mulf %90, %91 : vector<48x8xf32>
    %93 = vector.broadcast %64 : vector<48x1xf32> to vector<48x8xf32>
    %94 = vector.broadcast %86 : vector<1x8xf32> to vector<48x8xf32>
    %95 = arith.mulf %93, %94 : vector<48x8xf32>
    %96 = tpu.concatenate %89, %92, %95 in 1 : vector<48x8xf32>, vector<48x8xf32>, vector<48x8xf32> -> vector<48x24xf32>
    %97 = vector.broadcast %67 : vector<48x1xf32> to vector<48x8xf32>
    %98 = vector.broadcast %86 : vector<1x8xf32> to vector<48x8xf32>
    %99 = arith.mulf %97, %98 : vector<48x8xf32>
    %100 = vector.broadcast %70 : vector<48x1xf32> to vector<48x8xf32>
    %101 = vector.broadcast %86 : vector<1x8xf32> to vector<48x8xf32>
    %102 = arith.mulf %100, %101 : vector<48x8xf32>
    %103 = vector.broadcast %77 : vector<48x1xf32> to vector<48x8xf32>
    %104 = vector.broadcast %86 : vector<1x8xf32> to vector<48x8xf32>
    %105 = arith.mulf %103, %104 : vector<48x8xf32>
    %106 = vector.broadcast %80 : vector<48x1xf32> to vector<48x8xf32>
    %107 = vector.broadcast %86 : vector<1x8xf32> to vector<48x8xf32>
    %108 = arith.mulf %106, %107 : vector<48x8xf32>
    %109 = vector.broadcast %85 : vector<48x1xf32> to vector<48x8xf32>
    %110 = vector.broadcast %86 : vector<1x8xf32> to vector<48x8xf32>
    %111 = arith.mulf %109, %110 : vector<48x8xf32>
    %112 = tpu.concatenate %99, %102, %105, %108, %111 in 1 : vector<48x8xf32>, vector<48x8xf32>, vector<48x8xf32>, vector<48x8xf32>, vector<48x8xf32> -> vector<48x40xf32>
    %c0_38 = arith.constant 0 : index
    %c0_39 = arith.constant 0 : index
    %c0_40 = arith.constant 0 : index
    %113 = vector.load %arg13[%c0_38, %c0_39, %c0_40] : memref<3x32x96xf32, #tpu.memory_space<vmem>>, vector<1x32x96xf32>
    %114 = vector.shape_cast %113 : vector<1x32x96xf32> to vector<32x96xf32>
    %115 = arith.truncf %12 : vector<16x32xf32> to vector<16x32xbf16>
    %116 = arith.truncf %114 : vector<32x96xf32> to vector<32x96xbf16>
    %cst_41 = arith.constant dense<0.000000e+00> : vector<16x96xf32>
    %117 = tpu.matmul %115, %116, %cst_41 {dimension_numbers = #tpu.dot_dimension_numbers<[1], [0], [0], [1], [0, 0, 1, 1], [], []>} : vector<16x32xbf16>, vector<32x96xbf16>, vector<16x96xf32> -> vector<16x96xf32>
    %c0_42 = arith.constant 0 : index
    %c0_43 = arith.constant 0 : index
    %c0_44 = arith.constant 0 : index
    %118 = vector.load %arg14[%c0_42, %c0_43, %c0_44] : memref<3x1x96xf32, #tpu.memory_space<vmem>>, vector<1x1x96xf32>
    %119 = vector.shape_cast %118 : vector<1x1x96xf32> to vector<1x96xf32>
    %120 = vector.broadcast %119 : vector<1x96xf32> to vector<16x96xf32>
    %121 = arith.addf %117, %120 : vector<16x96xf32>
    %c0_45 = arith.constant 0 : index
    %c0_46 = arith.constant 0 : index
    %c0_47 = arith.constant 0 : index
    %122 = vector.load %arg15[%c0_45, %c0_46, %c0_47] : memref<3x32x32xf32, #tpu.memory_space<vmem>>, vector<1x32x32xf32>
    %123 = vector.shape_cast %122 : vector<1x32x32xf32> to vector<32x32xf32>
    %124 = arith.truncf %50 : vector<48x32xf32> to vector<48x32xbf16>
    %125 = arith.truncf %123 : vector<32x32xf32> to vector<32x32xbf16>
    %cst_48 = arith.constant dense<0.000000e+00> : vector<48x32xf32>
    %126 = tpu.matmul %124, %125, %cst_48 {dimension_numbers = #tpu.dot_dimension_numbers<[1], [0], [0], [1], [0, 0, 1, 1], [], []>} : vector<48x32xbf16>, vector<32x32xbf16>, vector<48x32xf32> -> vector<48x32xf32>
    %c0_49 = arith.constant 0 : index
    %c0_50 = arith.constant 0 : index
    %c0_51 = arith.constant 0 : index
    %127 = vector.load %arg16[%c0_49, %c0_50, %c0_51] : memref<3x1x32xf32, #tpu.memory_space<vmem>>, vector<1x1x32xf32>
    %128 = vector.shape_cast %127 : vector<1x1x32xf32> to vector<1x32xf32>
    %129 = vector.broadcast %128 : vector<1x32xf32> to vector<48x32xf32>
    %130 = arith.addf %126, %129 : vector<48x32xf32>
    %131 = arith.truncf %1 : vector<48x16xf32> to vector<48x16xbf16>
    %132 = arith.truncf %121 : vector<16x96xf32> to vector<16x96xbf16>
    %cst_52 = arith.constant dense<0.000000e+00> : vector<48x96xf32>
    %133 = tpu.matmul %131, %132, %cst_52 {dimension_numbers = #tpu.dot_dimension_numbers<[1], [0], [0], [1], [0, 0, 1, 1], [], []>} : vector<48x16xbf16>, vector<16x96xbf16>, vector<48x96xf32> -> vector<48x96xf32>
    %134 = arith.truncf %0 : vector<48x16xf32> to vector<48x16xbf16>
    %135 = arith.truncf %121 : vector<16x96xf32> to vector<16x96xbf16>
    %cst_53 = arith.constant dense<0.000000e+00> : vector<48x96xf32>
    %136 = tpu.matmul %134, %135, %cst_53 {dimension_numbers = #tpu.dot_dimension_numbers<[1], [0], [0], [1], [0, 0, 1, 1], [], []>} : vector<48x16xbf16>, vector<16x96xbf16>, vector<48x96xf32> -> vector<48x96xf32>
    %c0_54 = arith.constant 0 : index
    %c0_55 = arith.constant 0 : index
    %c0_56 = arith.constant 0 : index
    %137 = vector.load %arg17[%c0_54, %c0_55, %c0_56] : memref<3x96x64xf32, #tpu.memory_space<vmem>>, vector<1x96x64xf32>
    %138 = vector.shape_cast %137 : vector<1x96x64xf32> to vector<96x64xf32>
    %139 = arith.truncf %133 : vector<48x96xf32> to vector<48x96xbf16>
    %140 = arith.truncf %138 : vector<96x64xf32> to vector<96x64xbf16>
    %cst_57 = arith.constant dense<0.000000e+00> : vector<48x64xf32>
    %141 = tpu.matmul %139, %140, %cst_57 {dimension_numbers = #tpu.dot_dimension_numbers<[1], [0], [0], [1], [0, 0, 1, 1], [], []>} : vector<48x96xbf16>, vector<96x64xbf16>, vector<48x64xf32> -> vector<48x64xf32>
    %c0_58 = arith.constant 0 : index
    %c0_59 = arith.constant 0 : index
    %c0_60 = arith.constant 0 : index
    %142 = vector.load %arg18[%c0_58, %c0_59, %c0_60] : memref<3x96x64xf32, #tpu.memory_space<vmem>>, vector<1x96x64xf32>
    %143 = vector.shape_cast %142 : vector<1x96x64xf32> to vector<96x64xf32>
    %144 = arith.truncf %136 : vector<48x96xf32> to vector<48x96xbf16>
    %145 = arith.truncf %143 : vector<96x64xf32> to vector<96x64xbf16>
    %cst_61 = arith.constant dense<0.000000e+00> : vector<48x64xf32>
    %146 = tpu.matmul %144, %145, %cst_61 {dimension_numbers = #tpu.dot_dimension_numbers<[1], [0], [0], [1], [0, 0, 1, 1], [], []>} : vector<48x96xbf16>, vector<96x64xbf16>, vector<48x64xf32> -> vector<48x64xf32>
    %147 = arith.addf %141, %146 : vector<48x64xf32>
    %c0_62 = arith.constant 0 : index
    %c0_63 = arith.constant 0 : index
    %c0_64 = arith.constant 0 : index
    %148 = vector.load %arg19[%c0_62, %c0_63, %c0_64] : memref<3x32x64xf32, #tpu.memory_space<vmem>>, vector<1x32x64xf32>
    %149 = vector.shape_cast %148 : vector<1x32x64xf32> to vector<32x64xf32>
    %150 = arith.truncf %130 : vector<48x32xf32> to vector<48x32xbf16>
    %151 = arith.truncf %149 : vector<32x64xf32> to vector<32x64xbf16>
    %cst_65 = arith.constant dense<0.000000e+00> : vector<48x64xf32>
    %152 = tpu.matmul %150, %151, %cst_65 {dimension_numbers = #tpu.dot_dimension_numbers<[1], [0], [0], [1], [0, 0, 1, 1], [], []>} : vector<48x32xbf16>, vector<32x64xbf16>, vector<48x64xf32> -> vector<48x64xf32>
    %153 = arith.addf %147, %152 : vector<48x64xf32>
    %c0_66 = arith.constant 0 : index
    %c0_67 = arith.constant 0 : index
    %c0_68 = arith.constant 0 : index
    %154 = vector.load %arg20[%c0_66, %c0_67, %c0_68] : memref<3x1x64xf32, #tpu.memory_space<vmem>>, vector<1x1x64xf32>
    %155 = vector.shape_cast %154 : vector<1x1x64xf32> to vector<1x64xf32>
    %156 = vector.broadcast %155 : vector<1x64xf32> to vector<48x64xf32>
    %157 = arith.addf %153, %156 : vector<48x64xf32>
    %158 = arith.negf %157 : vector<48x64xf32>
    %159 = math.exp %158 : vector<48x64xf32>
    %cst_69 = arith.constant 1.000000e+00 : f32
    %160 = vector.broadcast %cst_69 : f32 to vector<48x64xf32>
    %161 = arith.addf %160, %159 : vector<48x64xf32>
    %162 = arith.divf %160, %161 : vector<48x64xf32>
    %163 = arith.mulf %157, %162 : vector<48x64xf32>
    %c0_70 = arith.constant 0 : index
    %c0_71 = arith.constant 0 : index
    %c0_72 = arith.constant 0 : index
    %164 = vector.load %arg21[%c0_70, %c0_71, %c0_72] : memref<3x64x64xf32, #tpu.memory_space<vmem>>, vector<1x64x64xf32>
    %165 = vector.shape_cast %164 : vector<1x64x64xf32> to vector<64x64xf32>
    %166 = arith.truncf %163 : vector<48x64xf32> to vector<48x64xbf16>
    %167 = arith.truncf %165 : vector<64x64xf32> to vector<64x64xbf16>
    %cst_73 = arith.constant dense<0.000000e+00> : vector<48x64xf32>
    %168 = tpu.matmul %166, %167, %cst_73 {dimension_numbers = #tpu.dot_dimension_numbers<[1], [0], [0], [1], [0, 0, 1, 1], [], []>} : vector<48x64xbf16>, vector<64x64xbf16>, vector<48x64xf32> -> vector<48x64xf32>
    %c0_74 = arith.constant 0 : index
    %c0_75 = arith.constant 0 : index
    %c0_76 = arith.constant 0 : index
    %169 = vector.load %arg22[%c0_74, %c0_75, %c0_76] : memref<3x1x64xf32, #tpu.memory_space<vmem>>, vector<1x1x64xf32>
    %170 = vector.shape_cast %169 : vector<1x1x64xf32> to vector<1x64xf32>
    %171 = vector.broadcast %170 : vector<1x64xf32> to vector<48x64xf32>
    %172 = arith.addf %168, %171 : vector<48x64xf32>
    %173 = vector.extract_strided_slice %172 {offsets = [0, 0], sizes = [48, 32], strides = [1, 1]} : vector<48x64xf32> to vector<48x32xf32>
    %174 = vector.extract_strided_slice %172 {offsets = [0, 32], sizes = [48, 32], strides = [1, 1]} : vector<48x64xf32> to vector<48x32xf32>
    %175 = vector.extract_strided_slice %133 {offsets = [0, 0], sizes = [48, 32], strides = [1, 1]} : vector<48x96xf32> to vector<48x32xf32>
    %176 = arith.mulf %175, %173 : vector<48x32xf32>
    %cst_77 = arith.constant 0.176776692 : f32
    %177 = vector.broadcast %cst_77 : f32 to vector<48x32xf32>
    %178 = arith.mulf %176, %177 : vector<48x32xf32>
    %cst_78 = arith.constant dense<0.000000e+00> : vector<48xf32>
    %179 = vector.multi_reduction <add>, %178, %cst_78 [1] : vector<48x32xf32> to vector<48xf32>
    %180 = vector.shape_cast %179 : vector<48xf32> to vector<48x1xf32>
    %cst_79 = arith.constant 3.200000e+01 : f32
    %181 = vector.broadcast %cst_79 : f32 to vector<48x1xf32>
    %182 = arith.divf %180, %181 : vector<48x1xf32>
    %183 = vector.broadcast %182 : vector<48x1xf32> to vector<48x32xf32>
    %184 = arith.subf %178, %183 : vector<48x32xf32>
    %185 = arith.mulf %184, %184 : vector<48x32xf32>
    %cst_80 = arith.constant dense<0.000000e+00> : vector<48xf32>
    %186 = vector.multi_reduction <add>, %185, %cst_80 [1] : vector<48x32xf32> to vector<48xf32>
    %187 = vector.shape_cast %186 : vector<48xf32> to vector<48x1xf32>
    %cst_81 = arith.constant 3.200000e+01 : f32
    %188 = vector.broadcast %cst_81 : f32 to vector<48x1xf32>
    %189 = arith.divf %187, %188 : vector<48x1xf32>
    %190 = vector.broadcast %182 : vector<48x1xf32> to vector<48x32xf32>
    %191 = arith.subf %178, %190 : vector<48x32xf32>
    %cst_82 = arith.constant 9.99999974E-6 : f32
    %192 = vector.broadcast %cst_82 : f32 to vector<48x1xf32>
    %193 = arith.addf %189, %192 : vector<48x1xf32>
    %194 = math.rsqrt %193 : vector<48x1xf32>
    %195 = vector.broadcast %194 : vector<48x1xf32> to vector<48x32xf32>
    %196 = arith.mulf %191, %195 : vector<48x32xf32>
    %c0_83 = arith.constant 0 : index
    %c0_84 = arith.constant 0 : index
    %c0_85 = arith.constant 0 : index
    %197 = vector.load %arg25[%c0_83, %c0_84, %c0_85] : memref<3x1x32xf32, #tpu.memory_space<vmem>>, vector<1x1x32xf32>
    %198 = vector.shape_cast %197 : vector<1x1x32xf32> to vector<1x32xf32>
    %199 = vector.broadcast %198 : vector<1x32xf32> to vector<48x32xf32>
    %200 = arith.mulf %196, %199 : vector<48x32xf32>
    %c0_86 = arith.constant 0 : index
    %c0_87 = arith.constant 0 : index
    %c0_88 = arith.constant 0 : index
    %201 = vector.load %arg26[%c0_86, %c0_87, %c0_88] : memref<3x1x32xf32, #tpu.memory_space<vmem>>, vector<1x1x32xf32>
    %202 = vector.shape_cast %201 : vector<1x1x32xf32> to vector<1x32xf32>
    %203 = vector.broadcast %202 : vector<1x32xf32> to vector<48x32xf32>
    %204 = arith.addf %200, %203 : vector<48x32xf32>
    %205 = arith.negf %204 : vector<48x32xf32>
    %206 = math.exp %205 : vector<48x32xf32>
    %cst_89 = arith.constant 1.000000e+00 : f32
    %207 = vector.broadcast %cst_89 : f32 to vector<48x32xf32>
    %208 = arith.addf %207, %206 : vector<48x32xf32>
    %209 = arith.divf %207, %208 : vector<48x32xf32>
    %210 = arith.mulf %174, %209 : vector<48x32xf32>
    %211 = arith.truncf %3 : vector<16x48xf32> to vector<16x48xbf16>
    %212 = arith.truncf %210 : vector<48x32xf32> to vector<48x32xbf16>
    %cst_90 = arith.constant dense<0.000000e+00> : vector<16x32xf32>
    %213 = tpu.matmul %211, %212, %cst_90 {dimension_numbers = #tpu.dot_dimension_numbers<[1], [0], [0], [1], [0, 0, 1, 1], [], []>} : vector<16x48xbf16>, vector<48x32xbf16>, vector<16x32xf32> -> vector<16x32xf32>
    %c0_91 = arith.constant 0 : index
    %c0_92 = arith.constant 0 : index
    %c0_93 = arith.constant 0 : index
    %214 = vector.load %arg23[%c0_91, %c0_92, %c0_93] : memref<3x32x32xf32, #tpu.memory_space<vmem>>, vector<1x32x32xf32>
    %215 = vector.shape_cast %214 : vector<1x32x32xf32> to vector<32x32xf32>
    %216 = arith.truncf %213 : vector<16x32xf32> to vector<16x32xbf16>
    %217 = arith.truncf %215 : vector<32x32xf32> to vector<32x32xbf16>
    %cst_94 = arith.constant dense<0.000000e+00> : vector<16x32xf32>
    %218 = tpu.matmul %216, %217, %cst_94 {dimension_numbers = #tpu.dot_dimension_numbers<[1], [0], [0], [1], [0, 0, 1, 1], [], []>} : vector<16x32xbf16>, vector<32x32xbf16>, vector<16x32xf32> -> vector<16x32xf32>
    %c0_95 = arith.constant 0 : index
    %c0_96 = arith.constant 0 : index
    %c0_97 = arith.constant 0 : index
    %219 = vector.load %arg24[%c0_95, %c0_96, %c0_97] : memref<3x1x32xf32, #tpu.memory_space<vmem>>, vector<1x1x32xf32>
    %220 = vector.shape_cast %219 : vector<1x1x32xf32> to vector<1x32xf32>
    %221 = vector.broadcast %220 : vector<1x32xf32> to vector<16x32xf32>
    %222 = arith.addf %218, %221 : vector<16x32xf32>
    %c0_98 = arith.constant 0 : index
    %c0_99 = arith.constant 0 : index
    %c0_100 = arith.constant 0 : index
    %223 = vector.load %arg27[%c0_98, %c0_99, %c0_100] : memref<3x1x32xf32, #tpu.memory_space<vmem>>, vector<1x1x32xf32>
    %224 = vector.shape_cast %223 : vector<1x1x32xf32> to vector<1x32xf32>
    %225 = vector.broadcast %224 : vector<1x32xf32> to vector<16x32xf32>
    %226 = arith.mulf %222, %225 : vector<16x32xf32>
    %c0_101 = arith.constant 0 : index
    %c0_102 = arith.constant 0 : index
    %c0_103 = arith.constant 0 : index
    %227 = vector.load %arg28[%c0_101, %c0_102, %c0_103] : memref<3x1x32xf32, #tpu.memory_space<vmem>>, vector<1x1x32xf32>
    %228 = vector.shape_cast %227 : vector<1x1x32xf32> to vector<1x32xf32>
    %229 = vector.broadcast %228 : vector<1x32xf32> to vector<16x32xf32>
    %230 = arith.addf %226, %229 : vector<16x32xf32>
    %231 = arith.addf %12, %230 : vector<16x32xf32>
    %cst_104 = arith.constant 0.000000e+00 : f32
    %232 = vector.broadcast %cst_104 : f32 to vector<16x32xf32>
    %233 = arith.maximumf %231, %232 : vector<16x32xf32>
    %234 = vector.broadcast %cst_104 : f32 to vector<16x32xf32>
    %235 = arith.subf %231, %234 : vector<16x32xf32>
    %236 = arith.cmpf one, %235, %235 : vector<16x32xf32>
    %237 = vector.broadcast %cst_104 : f32 to vector<16x32xf32>
    %238 = arith.addf %231, %237 : vector<16x32xf32>
    %239 = math.absf %235 : vector<16x32xf32>
    %cst_105 = arith.constant 0.000000e+00 : f32
    %240 = vector.broadcast %cst_105 : f32 to vector<16x32xf32>
    %241 = arith.subf %240, %239 : vector<16x32xf32>
    %242 = math.exp %241 : vector<16x32xf32>
    %243 = math.log1p %242 : vector<16x32xf32>
    %244 = arith.addf %233, %243 : vector<16x32xf32>
    %245 = arith.select %236, %238, %244 : vector<16x32xi1>, vector<16x32xf32>
    %c0_106 = arith.constant 0 : index
    %c0_107 = arith.constant 0 : index
    %246 = vector.load %arg29[%c0_106, %c0_107] : memref<32x64xf32, #tpu.memory_space<vmem>>, vector<32x64xf32>
    %247 = arith.truncf %50 : vector<48x32xf32> to vector<48x32xbf16>
    %248 = arith.truncf %246 : vector<32x64xf32> to vector<32x64xbf16>
    %cst_108 = arith.constant dense<0.000000e+00> : vector<48x64xf32>
    %249 = tpu.matmul %247, %248, %cst_108 {dimension_numbers = #tpu.dot_dimension_numbers<[1], [0], [0], [1], [0, 0, 1, 1], [], []>} : vector<48x32xbf16>, vector<32x64xbf16>, vector<48x64xf32> -> vector<48x64xf32>
    %c0_109 = arith.constant 0 : index
    %c0_110 = arith.constant 0 : index
    %250 = vector.load %arg30[%c0_109, %c0_110] : memref<1x64xf32, #tpu.memory_space<vmem>>, vector<1x64xf32>
    %251 = vector.broadcast %250 : vector<1x64xf32> to vector<48x64xf32>
    %252 = arith.addf %249, %251 : vector<48x64xf32>
    %cst_111 = arith.constant 0.000000e+00 : f32
    %253 = vector.broadcast %cst_111 : f32 to vector<48x64xf32>
    %254 = arith.maximumf %252, %253 : vector<48x64xf32>
    %255 = vector.extract_strided_slice %254 {offsets = [0, 0], sizes = [48, 32], strides = [1, 1]} : vector<48x64xf32> to vector<48x32xf32>
    %c0_112 = arith.constant 0 : index
    %c0_113 = arith.constant 0 : index
    %256 = vector.load %arg31[%c0_112, %c0_113] : memref<32x1536xf32, #tpu.memory_space<vmem>>, vector<32x1536xf32>
    %257 = arith.truncf %255 : vector<48x32xf32> to vector<48x32xbf16>
    %258 = arith.truncf %256 : vector<32x1536xf32> to vector<32x1536xbf16>
    %cst_114 = arith.constant dense<0.000000e+00> : vector<48x1536xf32>
    %259 = tpu.matmul %257, %258, %cst_114 {dimension_numbers = #tpu.dot_dimension_numbers<[1], [0], [0], [1], [0, 0, 1, 1], [], []>} : vector<48x32xbf16>, vector<32x1536xbf16>, vector<48x1536xf32> -> vector<48x1536xf32>
    %c0_115 = arith.constant 0 : index
    %c0_116 = arith.constant 0 : index
    %260 = vector.load %arg32[%c0_115, %c0_116] : memref<1x1536xf32, #tpu.memory_space<vmem>>, vector<1x1536xf32>
    %261 = vector.broadcast %260 : vector<1x1536xf32> to vector<48x1536xf32>
    %262 = arith.addf %259, %261 : vector<48x1536xf32>
    %263 = vector.extract_strided_slice %254 {offsets = [0, 32], sizes = [48, 32], strides = [1, 1]} : vector<48x64xf32> to vector<48x32xf32>
    %c0_117 = arith.constant 0 : index
    %c0_118 = arith.constant 0 : index
    %264 = vector.load %arg33[%c0_117, %c0_118] : memref<32x1536xf32, #tpu.memory_space<vmem>>, vector<32x1536xf32>
    %265 = arith.truncf %263 : vector<48x32xf32> to vector<48x32xbf16>
    %266 = arith.truncf %264 : vector<32x1536xf32> to vector<32x1536xbf16>
    %cst_119 = arith.constant dense<0.000000e+00> : vector<48x1536xf32>
    %267 = tpu.matmul %265, %266, %cst_119 {dimension_numbers = #tpu.dot_dimension_numbers<[1], [0], [0], [1], [0, 0, 1, 1], [], []>} : vector<48x32xbf16>, vector<32x1536xbf16>, vector<48x1536xf32> -> vector<48x1536xf32>
    %c0_120 = arith.constant 0 : index
    %c0_121 = arith.constant 0 : index
    %268 = vector.load %arg34[%c0_120, %c0_121] : memref<1x1536xf32, #tpu.memory_space<vmem>>, vector<1x1536xf32>
    %269 = vector.broadcast %268 : vector<1x1536xf32> to vector<48x1536xf32>
    %270 = arith.addf %267, %269 : vector<48x1536xf32>
    %271 = arith.truncf %1 : vector<48x16xf32> to vector<48x16xbf16>
    %272 = arith.truncf %245 : vector<16x32xf32> to vector<16x32xbf16>
    %cst_122 = arith.constant dense<0.000000e+00> : vector<48x32xf32>
    %273 = tpu.matmul %271, %272, %cst_122 {dimension_numbers = #tpu.dot_dimension_numbers<[1], [0], [0], [1], [0, 0, 1, 1], [], []>} : vector<48x16xbf16>, vector<16x32xbf16>, vector<48x32xf32> -> vector<48x32xf32>
    %c0_123 = arith.constant 0 : index
    %c0_124 = arith.constant 0 : index
    %274 = vector.load %arg37[%c0_123, %c0_124] : memref<32x1536xbf16, #tpu.memory_space<vmem>>, vector<32x1536xbf16>
    %275 = arith.truncf %273 : vector<48x32xf32> to vector<48x32xbf16>
    %cst_125 = arith.constant dense<0.000000e+00> : vector<48x1536xf32>
    %276 = tpu.matmul %275, %274, %cst_125 {dimension_numbers = #tpu.dot_dimension_numbers<[1], [0], [0], [1], [0, 0, 1, 1], [], []>} : vector<48x32xbf16>, vector<32x1536xbf16>, vector<48x1536xf32> -> vector<48x1536xf32>
    %277 = arith.mulf %262, %276 : vector<48x1536xf32>
    %c0_126 = arith.constant 0 : index
    %c0_127 = arith.constant 0 : index
    %278 = vector.load %arg38[%c0_126, %c0_127] : memref<1536x48xbf16, #tpu.memory_space<vmem>>, vector<1536x48xbf16>
    %279 = arith.truncf %277 : vector<48x1536xf32> to vector<48x1536xbf16>
    %cst_128 = arith.constant dense<0.000000e+00> : vector<48x48xf32>
    %280 = tpu.matmul %279, %278, %cst_128 {dimension_numbers = #tpu.dot_dimension_numbers<[1], [0], [0], [1], [0, 0, 1, 1], [], []>} : vector<48x1536xbf16>, vector<1536x48xbf16>, vector<48x48xf32> -> vector<48x48xf32>
    %cst_129 = arith.constant 0.176776692 : f32
    %281 = vector.broadcast %cst_129 : f32 to vector<48x48xf32>
    %282 = arith.mulf %280, %281 : vector<48x48xf32>
    %283 = vector.extract_strided_slice %282 {offsets = [0, 0], sizes = [48, 32], strides = [1, 1]} : vector<48x48xf32> to vector<48x32xf32>
    %284 = vector.extract_strided_slice %282 {offsets = [0, 32], sizes = [48, 8], strides = [1, 1]} : vector<48x48xf32> to vector<48x8xf32>
    %285 = vector.extract_strided_slice %282 {offsets = [0, 40], sizes = [48, 8], strides = [1, 1]} : vector<48x48xf32> to vector<48x8xf32>
    %286 = tpu.concatenate %284, %284, %284 in 1 : vector<48x8xf32>, vector<48x8xf32>, vector<48x8xf32> -> vector<48x24xf32>
    %287 = arith.mulf %286, %96 : vector<48x24xf32>
    %288 = tpu.concatenate %285, %285, %285, %285, %285 in 1 : vector<48x8xf32>, vector<48x8xf32>, vector<48x8xf32>, vector<48x8xf32>, vector<48x8xf32> -> vector<48x40xf32>
    %289 = arith.mulf %288, %112 : vector<48x40xf32>
    %290 = tpu.concatenate %283, %287, %289 in 1 : vector<48x32xf32>, vector<48x24xf32>, vector<48x40xf32> -> vector<48x96xf32>
    %291 = arith.truncf %2 : vector<16x48xf32> to vector<16x48xbf16>
    %292 = arith.truncf %290 : vector<48x96xf32> to vector<48x96xbf16>
    %cst_130 = arith.constant dense<0.000000e+00> : vector<16x96xf32>
    %293 = tpu.matmul %291, %292, %cst_130 {dimension_numbers = #tpu.dot_dimension_numbers<[1], [0], [0], [1], [0, 0, 1, 1], [], []>} : vector<16x48xbf16>, vector<48x96xbf16>, vector<16x96xf32> -> vector<16x96xf32>
    %294 = vector.broadcast %4 : vector<16x1xf32> to vector<16x96xf32>
    %295 = arith.mulf %293, %294 : vector<16x96xf32>
    %296 = arith.truncf %1 : vector<48x16xf32> to vector<48x16xbf16>
    %297 = arith.truncf %295 : vector<16x96xf32> to vector<16x96xbf16>
    %cst_131 = arith.constant dense<0.000000e+00> : vector<48x96xf32>
    %298 = tpu.matmul %296, %297, %cst_131 {dimension_numbers = #tpu.dot_dimension_numbers<[1], [0], [0], [1], [0, 0, 1, 1], [], []>} : vector<48x16xbf16>, vector<16x96xbf16>, vector<48x96xf32> -> vector<48x96xf32>
    %299 = vector.extract_strided_slice %298 {offsets = [0, 0], sizes = [48, 32], strides = [1, 1]} : vector<48x96xf32> to vector<48x32xf32>
    %300 = vector.extract_strided_slice %298 {offsets = [0, 32], sizes = [48, 24], strides = [1, 1]} : vector<48x96xf32> to vector<48x24xf32>
    %301 = arith.mulf %300, %96 : vector<48x24xf32>
    %302 = vector.extract_strided_slice %301 {offsets = [0, 0], sizes = [48, 8], strides = [1, 1]} : vector<48x24xf32> to vector<48x8xf32>
    %303 = vector.extract_strided_slice %301 {offsets = [0, 8], sizes = [48, 8], strides = [1, 1]} : vector<48x24xf32> to vector<48x8xf32>
    %304 = arith.addf %302, %303 : vector<48x8xf32>
    %305 = vector.extract_strided_slice %301 {offsets = [0, 16], sizes = [48, 8], strides = [1, 1]} : vector<48x24xf32> to vector<48x8xf32>
    %306 = arith.addf %304, %305 : vector<48x8xf32>
    %cst_132 = arith.constant 0.577350259 : f32
    %307 = vector.broadcast %cst_132 : f32 to vector<48x8xf32>
    %308 = arith.mulf %306, %307 : vector<48x8xf32>
    %309 = vector.extract_strided_slice %298 {offsets = [0, 56], sizes = [48, 40], strides = [1, 1]} : vector<48x96xf32> to vector<48x40xf32>
    %310 = arith.mulf %309, %112 : vector<48x40xf32>
    %311 = vector.extract_strided_slice %310 {offsets = [0, 0], sizes = [48, 8], strides = [1, 1]} : vector<48x40xf32> to vector<48x8xf32>
    %312 = vector.extract_strided_slice %310 {offsets = [0, 8], sizes = [48, 8], strides = [1, 1]} : vector<48x40xf32> to vector<48x8xf32>
    %313 = arith.addf %311, %312 : vector<48x8xf32>
    %314 = vector.extract_strided_slice %310 {offsets = [0, 16], sizes = [48, 8], strides = [1, 1]} : vector<48x40xf32> to vector<48x8xf32>
    %315 = arith.addf %313, %314 : vector<48x8xf32>
    %316 = vector.extract_strided_slice %310 {offsets = [0, 24], sizes = [48, 8], strides = [1, 1]} : vector<48x40xf32> to vector<48x8xf32>
    %317 = arith.addf %315, %316 : vector<48x8xf32>
    %318 = vector.extract_strided_slice %310 {offsets = [0, 32], sizes = [48, 8], strides = [1, 1]} : vector<48x40xf32> to vector<48x8xf32>
    %319 = arith.addf %317, %318 : vector<48x8xf32>
    %cst_133 = arith.constant 0.44721359 : f32
    %320 = vector.broadcast %cst_133 : f32 to vector<48x8xf32>
    %321 = arith.mulf %319, %320 : vector<48x8xf32>
    %322 = tpu.concatenate %299, %308, %321 in 1 : vector<48x32xf32>, vector<48x8xf32>, vector<48x8xf32> -> vector<48x48xf32>
    %c0_134 = arith.constant 0 : index
    %c0_135 = arith.constant 0 : index
    %323 = vector.load %arg39[%c0_134, %c0_135] : memref<48x1536xbf16, #tpu.memory_space<vmem>>, vector<48x1536xbf16>
    %324 = arith.truncf %322 : vector<48x48xf32> to vector<48x48xbf16>
    %cst_136 = arith.constant dense<0.000000e+00> : vector<48x1536xf32>
    %325 = tpu.matmul %324, %323, %cst_136 {dimension_numbers = #tpu.dot_dimension_numbers<[1], [0], [0], [1], [0, 0, 1, 1], [], []>} : vector<48x48xbf16>, vector<48x1536xbf16>, vector<48x1536xf32> -> vector<48x1536xf32>
    %326 = arith.mulf %270, %325 : vector<48x1536xf32>
    %c0_137 = arith.constant 0 : index
    %c0_138 = arith.constant 0 : index
    %327 = vector.load %arg40[%c0_137, %c0_138] : memref<1536x96xbf16, #tpu.memory_space<vmem>>, vector<1536x96xbf16>
    %328 = arith.truncf %326 : vector<48x1536xf32> to vector<48x1536xbf16>
    %cst_139 = arith.constant dense<0.000000e+00> : vector<48x96xf32>
    %329 = tpu.matmul %328, %327, %cst_139 {dimension_numbers = #tpu.dot_dimension_numbers<[1], [0], [0], [1], [0, 0, 1, 1], [], []>} : vector<48x1536xbf16>, vector<1536x96xbf16>, vector<48x96xf32> -> vector<48x96xf32>
    %330 = vector.extract_strided_slice %329 {offsets = [0, 0], sizes = [48, 32], strides = [1, 1]} : vector<48x96xf32> to vector<48x32xf32>
    %cst_140 = arith.constant 0.176776692 : f32
    %331 = vector.broadcast %cst_140 : f32 to vector<48x32xf32>
    %332 = arith.mulf %330, %331 : vector<48x32xf32>
    %333 = vector.extract_strided_slice %329 {offsets = [0, 32], sizes = [48, 32], strides = [1, 1]} : vector<48x96xf32> to vector<48x32xf32>
    %cst_141 = arith.constant 0.353553385 : f32
    %334 = vector.broadcast %cst_141 : f32 to vector<48x32xf32>
    %335 = arith.mulf %333, %334 : vector<48x32xf32>
    %336 = arith.addf %332, %335 : vector<48x32xf32>
    %337 = vector.extract_strided_slice %329 {offsets = [0, 64], sizes = [48, 32], strides = [1, 1]} : vector<48x96xf32> to vector<48x32xf32>
    %cst_142 = arith.constant 0.353553385 : f32
    %338 = vector.broadcast %cst_142 : f32 to vector<48x32xf32>
    %339 = arith.mulf %337, %338 : vector<48x32xf32>
    %340 = arith.addf %336, %339 : vector<48x32xf32>
    %341 = arith.truncf %2 : vector<16x48xf32> to vector<16x48xbf16>
    %342 = arith.truncf %340 : vector<48x32xf32> to vector<48x32xbf16>
    %cst_143 = arith.constant dense<0.000000e+00> : vector<16x32xf32>
    %343 = tpu.matmul %341, %342, %cst_143 {dimension_numbers = #tpu.dot_dimension_numbers<[1], [0], [0], [1], [0, 0, 1, 1], [], []>} : vector<16x48xbf16>, vector<48x32xbf16>, vector<16x32xf32> -> vector<16x32xf32>
    %344 = vector.broadcast %4 : vector<16x1xf32> to vector<16x32xf32>
    %345 = arith.mulf %343, %344 : vector<16x32xf32>
    %c0_144 = arith.constant 0 : index
    %c0_145 = arith.constant 0 : index
    %346 = vector.load %arg35[%c0_144, %c0_145] : memref<32x32xf32, #tpu.memory_space<vmem>>, vector<32x32xf32>
    %347 = arith.truncf %345 : vector<16x32xf32> to vector<16x32xbf16>
    %348 = arith.truncf %346 : vector<32x32xf32> to vector<32x32xbf16>
    %cst_146 = arith.constant dense<0.000000e+00> : vector<16x32xf32>
    %349 = tpu.matmul %347, %348, %cst_146 {dimension_numbers = #tpu.dot_dimension_numbers<[1], [0], [0], [1], [0, 0, 1, 1], [], []>} : vector<16x32xbf16>, vector<32x32xbf16>, vector<16x32xf32> -> vector<16x32xf32>
    %c0_147 = arith.constant 0 : index
    %c0_148 = arith.constant 0 : index
    %350 = vector.load %arg36[%c0_147, %c0_148] : memref<1x32xf32, #tpu.memory_space<vmem>>, vector<1x32xf32>
    %351 = vector.broadcast %350 : vector<1x32xf32> to vector<16x32xf32>
    %352 = arith.addf %349, %351 : vector<16x32xf32>
    %353 = arith.negf %352 : vector<16x32xf32>
    %354 = math.exp %353 : vector<16x32xf32>
    %cst_149 = arith.constant 1.000000e+00 : f32
    %355 = vector.broadcast %cst_149 : f32 to vector<16x32xf32>
    %356 = arith.addf %355, %354 : vector<16x32xf32>
    %357 = arith.divf %355, %356 : vector<16x32xf32>
    %358 = arith.mulf %352, %357 : vector<16x32xf32>
    %359 = arith.addf %245, %358 : vector<16x32xf32>
    %c1 = arith.constant 1 : index
    %c0_150 = arith.constant 0 : index
    %c0_151 = arith.constant 0 : index
    %360 = vector.load %arg13[%c1, %c0_150, %c0_151] : memref<3x32x96xf32, #tpu.memory_space<vmem>>, vector<1x32x96xf32>
    %361 = vector.shape_cast %360 : vector<1x32x96xf32> to vector<32x96xf32>
    %362 = arith.truncf %359 : vector<16x32xf32> to vector<16x32xbf16>
    %363 = arith.truncf %361 : vector<32x96xf32> to vector<32x96xbf16>
    %cst_152 = arith.constant dense<0.000000e+00> : vector<16x96xf32>
    %364 = tpu.matmul %362, %363, %cst_152 {dimension_numbers = #tpu.dot_dimension_numbers<[1], [0], [0], [1], [0, 0, 1, 1], [], []>} : vector<16x32xbf16>, vector<32x96xbf16>, vector<16x96xf32> -> vector<16x96xf32>
    %c1_153 = arith.constant 1 : index
    %c0_154 = arith.constant 0 : index
    %c0_155 = arith.constant 0 : index
    %365 = vector.load %arg14[%c1_153, %c0_154, %c0_155] : memref<3x1x96xf32, #tpu.memory_space<vmem>>, vector<1x1x96xf32>
    %366 = vector.shape_cast %365 : vector<1x1x96xf32> to vector<1x96xf32>
    %367 = vector.broadcast %366 : vector<1x96xf32> to vector<16x96xf32>
    %368 = arith.addf %364, %367 : vector<16x96xf32>
    %c1_156 = arith.constant 1 : index
    %c0_157 = arith.constant 0 : index
    %c0_158 = arith.constant 0 : index
    %369 = vector.load %arg15[%c1_156, %c0_157, %c0_158] : memref<3x32x32xf32, #tpu.memory_space<vmem>>, vector<1x32x32xf32>
    %370 = vector.shape_cast %369 : vector<1x32x32xf32> to vector<32x32xf32>
    %371 = arith.truncf %50 : vector<48x32xf32> to vector<48x32xbf16>
    %372 = arith.truncf %370 : vector<32x32xf32> to vector<32x32xbf16>
    %cst_159 = arith.constant dense<0.000000e+00> : vector<48x32xf32>
    %373 = tpu.matmul %371, %372, %cst_159 {dimension_numbers = #tpu.dot_dimension_numbers<[1], [0], [0], [1], [0, 0, 1, 1], [], []>} : vector<48x32xbf16>, vector<32x32xbf16>, vector<48x32xf32> -> vector<48x32xf32>
    %c1_160 = arith.constant 1 : index
    %c0_161 = arith.constant 0 : index
    %c0_162 = arith.constant 0 : index
    %374 = vector.load %arg16[%c1_160, %c0_161, %c0_162] : memref<3x1x32xf32, #tpu.memory_space<vmem>>, vector<1x1x32xf32>
    %375 = vector.shape_cast %374 : vector<1x1x32xf32> to vector<1x32xf32>
    %376 = vector.broadcast %375 : vector<1x32xf32> to vector<48x32xf32>
    %377 = arith.addf %373, %376 : vector<48x32xf32>
    %378 = arith.truncf %1 : vector<48x16xf32> to vector<48x16xbf16>
    %379 = arith.truncf %368 : vector<16x96xf32> to vector<16x96xbf16>
    %cst_163 = arith.constant dense<0.000000e+00> : vector<48x96xf32>
    %380 = tpu.matmul %378, %379, %cst_163 {dimension_numbers = #tpu.dot_dimension_numbers<[1], [0], [0], [1], [0, 0, 1, 1], [], []>} : vector<48x16xbf16>, vector<16x96xbf16>, vector<48x96xf32> -> vector<48x96xf32>
    %381 = arith.truncf %0 : vector<48x16xf32> to vector<48x16xbf16>
    %382 = arith.truncf %368 : vector<16x96xf32> to vector<16x96xbf16>
    %cst_164 = arith.constant dense<0.000000e+00> : vector<48x96xf32>
    %383 = tpu.matmul %381, %382, %cst_164 {dimension_numbers = #tpu.dot_dimension_numbers<[1], [0], [0], [1], [0, 0, 1, 1], [], []>} : vector<48x16xbf16>, vector<16x96xbf16>, vector<48x96xf32> -> vector<48x96xf32>
    %c1_165 = arith.constant 1 : index
    %c0_166 = arith.constant 0 : index
    %c0_167 = arith.constant 0 : index
    %384 = vector.load %arg17[%c1_165, %c0_166, %c0_167] : memref<3x96x64xf32, #tpu.memory_space<vmem>>, vector<1x96x64xf32>
    %385 = vector.shape_cast %384 : vector<1x96x64xf32> to vector<96x64xf32>
    %386 = arith.truncf %380 : vector<48x96xf32> to vector<48x96xbf16>
    %387 = arith.truncf %385 : vector<96x64xf32> to vector<96x64xbf16>
    %cst_168 = arith.constant dense<0.000000e+00> : vector<48x64xf32>
    %388 = tpu.matmul %386, %387, %cst_168 {dimension_numbers = #tpu.dot_dimension_numbers<[1], [0], [0], [1], [0, 0, 1, 1], [], []>} : vector<48x96xbf16>, vector<96x64xbf16>, vector<48x64xf32> -> vector<48x64xf32>
    %c1_169 = arith.constant 1 : index
    %c0_170 = arith.constant 0 : index
    %c0_171 = arith.constant 0 : index
    %389 = vector.load %arg18[%c1_169, %c0_170, %c0_171] : memref<3x96x64xf32, #tpu.memory_space<vmem>>, vector<1x96x64xf32>
    %390 = vector.shape_cast %389 : vector<1x96x64xf32> to vector<96x64xf32>
    %391 = arith.truncf %383 : vector<48x96xf32> to vector<48x96xbf16>
    %392 = arith.truncf %390 : vector<96x64xf32> to vector<96x64xbf16>
    %cst_172 = arith.constant dense<0.000000e+00> : vector<48x64xf32>
    %393 = tpu.matmul %391, %392, %cst_172 {dimension_numbers = #tpu.dot_dimension_numbers<[1], [0], [0], [1], [0, 0, 1, 1], [], []>} : vector<48x96xbf16>, vector<96x64xbf16>, vector<48x64xf32> -> vector<48x64xf32>
    %394 = arith.addf %388, %393 : vector<48x64xf32>
    %c1_173 = arith.constant 1 : index
    %c0_174 = arith.constant 0 : index
    %c0_175 = arith.constant 0 : index
    %395 = vector.load %arg19[%c1_173, %c0_174, %c0_175] : memref<3x32x64xf32, #tpu.memory_space<vmem>>, vector<1x32x64xf32>
    %396 = vector.shape_cast %395 : vector<1x32x64xf32> to vector<32x64xf32>
    %397 = arith.truncf %377 : vector<48x32xf32> to vector<48x32xbf16>
    %398 = arith.truncf %396 : vector<32x64xf32> to vector<32x64xbf16>
    %cst_176 = arith.constant dense<0.000000e+00> : vector<48x64xf32>
    %399 = tpu.matmul %397, %398, %cst_176 {dimension_numbers = #tpu.dot_dimension_numbers<[1], [0], [0], [1], [0, 0, 1, 1], [], []>} : vector<48x32xbf16>, vector<32x64xbf16>, vector<48x64xf32> -> vector<48x64xf32>
    %400 = arith.addf %394, %399 : vector<48x64xf32>
    %c1_177 = arith.constant 1 : index
    %c0_178 = arith.constant 0 : index
    %c0_179 = arith.constant 0 : index
    %401 = vector.load %arg20[%c1_177, %c0_178, %c0_179] : memref<3x1x64xf32, #tpu.memory_space<vmem>>, vector<1x1x64xf32>
    %402 = vector.shape_cast %401 : vector<1x1x64xf32> to vector<1x64xf32>
    %403 = vector.broadcast %402 : vector<1x64xf32> to vector<48x64xf32>
    %404 = arith.addf %400, %403 : vector<48x64xf32>
    %405 = arith.negf %404 : vector<48x64xf32>
    %406 = math.exp %405 : vector<48x64xf32>
    %cst_180 = arith.constant 1.000000e+00 : f32
    %407 = vector.broadcast %cst_180 : f32 to vector<48x64xf32>
    %408 = arith.addf %407, %406 : vector<48x64xf32>
    %409 = arith.divf %407, %408 : vector<48x64xf32>
    %410 = arith.mulf %404, %409 : vector<48x64xf32>
    %c1_181 = arith.constant 1 : index
    %c0_182 = arith.constant 0 : index
    %c0_183 = arith.constant 0 : index
    %411 = vector.load %arg21[%c1_181, %c0_182, %c0_183] : memref<3x64x64xf32, #tpu.memory_space<vmem>>, vector<1x64x64xf32>
    %412 = vector.shape_cast %411 : vector<1x64x64xf32> to vector<64x64xf32>
    %413 = arith.truncf %410 : vector<48x64xf32> to vector<48x64xbf16>
    %414 = arith.truncf %412 : vector<64x64xf32> to vector<64x64xbf16>
    %cst_184 = arith.constant dense<0.000000e+00> : vector<48x64xf32>
    %415 = tpu.matmul %413, %414, %cst_184 {dimension_numbers = #tpu.dot_dimension_numbers<[1], [0], [0], [1], [0, 0, 1, 1], [], []>} : vector<48x64xbf16>, vector<64x64xbf16>, vector<48x64xf32> -> vector<48x64xf32>
    %c1_185 = arith.constant 1 : index
    %c0_186 = arith.constant 0 : index
    %c0_187 = arith.constant 0 : index
    %416 = vector.load %arg22[%c1_185, %c0_186, %c0_187] : memref<3x1x64xf32, #tpu.memory_space<vmem>>, vector<1x1x64xf32>
    %417 = vector.shape_cast %416 : vector<1x1x64xf32> to vector<1x64xf32>
    %418 = vector.broadcast %417 : vector<1x64xf32> to vector<48x64xf32>
    %419 = arith.addf %415, %418 : vector<48x64xf32>
    %420 = vector.extract_strided_slice %419 {offsets = [0, 0], sizes = [48, 32], strides = [1, 1]} : vector<48x64xf32> to vector<48x32xf32>
    %421 = vector.extract_strided_slice %419 {offsets = [0, 32], sizes = [48, 32], strides = [1, 1]} : vector<48x64xf32> to vector<48x32xf32>
    %422 = vector.extract_strided_slice %380 {offsets = [0, 0], sizes = [48, 32], strides = [1, 1]} : vector<48x96xf32> to vector<48x32xf32>
    %423 = arith.mulf %422, %420 : vector<48x32xf32>
    %cst_188 = arith.constant 0.176776692 : f32
    %424 = vector.broadcast %cst_188 : f32 to vector<48x32xf32>
    %425 = arith.mulf %423, %424 : vector<48x32xf32>
    %cst_189 = arith.constant dense<0.000000e+00> : vector<48xf32>
    %426 = vector.multi_reduction <add>, %425, %cst_189 [1] : vector<48x32xf32> to vector<48xf32>
    %427 = vector.shape_cast %426 : vector<48xf32> to vector<48x1xf32>
    %cst_190 = arith.constant 3.200000e+01 : f32
    %428 = vector.broadcast %cst_190 : f32 to vector<48x1xf32>
    %429 = arith.divf %427, %428 : vector<48x1xf32>
    %430 = vector.broadcast %429 : vector<48x1xf32> to vector<48x32xf32>
    %431 = arith.subf %425, %430 : vector<48x32xf32>
    %432 = arith.mulf %431, %431 : vector<48x32xf32>
    %cst_191 = arith.constant dense<0.000000e+00> : vector<48xf32>
    %433 = vector.multi_reduction <add>, %432, %cst_191 [1] : vector<48x32xf32> to vector<48xf32>
    %434 = vector.shape_cast %433 : vector<48xf32> to vector<48x1xf32>
    %cst_192 = arith.constant 3.200000e+01 : f32
    %435 = vector.broadcast %cst_192 : f32 to vector<48x1xf32>
    %436 = arith.divf %434, %435 : vector<48x1xf32>
    %437 = vector.broadcast %429 : vector<48x1xf32> to vector<48x32xf32>
    %438 = arith.subf %425, %437 : vector<48x32xf32>
    %cst_193 = arith.constant 9.99999974E-6 : f32
    %439 = vector.broadcast %cst_193 : f32 to vector<48x1xf32>
    %440 = arith.addf %436, %439 : vector<48x1xf32>
    %441 = math.rsqrt %440 : vector<48x1xf32>
    %442 = vector.broadcast %441 : vector<48x1xf32> to vector<48x32xf32>
    %443 = arith.mulf %438, %442 : vector<48x32xf32>
    %c1_194 = arith.constant 1 : index
    %c0_195 = arith.constant 0 : index
    %c0_196 = arith.constant 0 : index
    %444 = vector.load %arg25[%c1_194, %c0_195, %c0_196] : memref<3x1x32xf32, #tpu.memory_space<vmem>>, vector<1x1x32xf32>
    %445 = vector.shape_cast %444 : vector<1x1x32xf32> to vector<1x32xf32>
    %446 = vector.broadcast %445 : vector<1x32xf32> to vector<48x32xf32>
    %447 = arith.mulf %443, %446 : vector<48x32xf32>
    %c1_197 = arith.constant 1 : index
    %c0_198 = arith.constant 0 : index
    %c0_199 = arith.constant 0 : index
    %448 = vector.load %arg26[%c1_197, %c0_198, %c0_199] : memref<3x1x32xf32, #tpu.memory_space<vmem>>, vector<1x1x32xf32>
    %449 = vector.shape_cast %448 : vector<1x1x32xf32> to vector<1x32xf32>
    %450 = vector.broadcast %449 : vector<1x32xf32> to vector<48x32xf32>
    %451 = arith.addf %447, %450 : vector<48x32xf32>
    %452 = arith.negf %451 : vector<48x32xf32>
    %453 = math.exp %452 : vector<48x32xf32>
    %cst_200 = arith.constant 1.000000e+00 : f32
    %454 = vector.broadcast %cst_200 : f32 to vector<48x32xf32>
    %455 = arith.addf %454, %453 : vector<48x32xf32>
    %456 = arith.divf %454, %455 : vector<48x32xf32>
    %457 = arith.mulf %421, %456 : vector<48x32xf32>
    %458 = arith.truncf %3 : vector<16x48xf32> to vector<16x48xbf16>
    %459 = arith.truncf %457 : vector<48x32xf32> to vector<48x32xbf16>
    %cst_201 = arith.constant dense<0.000000e+00> : vector<16x32xf32>
    %460 = tpu.matmul %458, %459, %cst_201 {dimension_numbers = #tpu.dot_dimension_numbers<[1], [0], [0], [1], [0, 0, 1, 1], [], []>} : vector<16x48xbf16>, vector<48x32xbf16>, vector<16x32xf32> -> vector<16x32xf32>
    %c1_202 = arith.constant 1 : index
    %c0_203 = arith.constant 0 : index
    %c0_204 = arith.constant 0 : index
    %461 = vector.load %arg23[%c1_202, %c0_203, %c0_204] : memref<3x32x32xf32, #tpu.memory_space<vmem>>, vector<1x32x32xf32>
    %462 = vector.shape_cast %461 : vector<1x32x32xf32> to vector<32x32xf32>
    %463 = arith.truncf %460 : vector<16x32xf32> to vector<16x32xbf16>
    %464 = arith.truncf %462 : vector<32x32xf32> to vector<32x32xbf16>
    %cst_205 = arith.constant dense<0.000000e+00> : vector<16x32xf32>
    %465 = tpu.matmul %463, %464, %cst_205 {dimension_numbers = #tpu.dot_dimension_numbers<[1], [0], [0], [1], [0, 0, 1, 1], [], []>} : vector<16x32xbf16>, vector<32x32xbf16>, vector<16x32xf32> -> vector<16x32xf32>
    %c1_206 = arith.constant 1 : index
    %c0_207 = arith.constant 0 : index
    %c0_208 = arith.constant 0 : index
    %466 = vector.load %arg24[%c1_206, %c0_207, %c0_208] : memref<3x1x32xf32, #tpu.memory_space<vmem>>, vector<1x1x32xf32>
    %467 = vector.shape_cast %466 : vector<1x1x32xf32> to vector<1x32xf32>
    %468 = vector.broadcast %467 : vector<1x32xf32> to vector<16x32xf32>
    %469 = arith.addf %465, %468 : vector<16x32xf32>
    %c1_209 = arith.constant 1 : index
    %c0_210 = arith.constant 0 : index
    %c0_211 = arith.constant 0 : index
    %470 = vector.load %arg27[%c1_209, %c0_210, %c0_211] : memref<3x1x32xf32, #tpu.memory_space<vmem>>, vector<1x1x32xf32>
    %471 = vector.shape_cast %470 : vector<1x1x32xf32> to vector<1x32xf32>
    %472 = vector.broadcast %471 : vector<1x32xf32> to vector<16x32xf32>
    %473 = arith.mulf %469, %472 : vector<16x32xf32>
    %c1_212 = arith.constant 1 : index
    %c0_213 = arith.constant 0 : index
    %c0_214 = arith.constant 0 : index
    %474 = vector.load %arg28[%c1_212, %c0_213, %c0_214] : memref<3x1x32xf32, #tpu.memory_space<vmem>>, vector<1x1x32xf32>
    %475 = vector.shape_cast %474 : vector<1x1x32xf32> to vector<1x32xf32>
    %476 = vector.broadcast %475 : vector<1x32xf32> to vector<16x32xf32>
    %477 = arith.addf %473, %476 : vector<16x32xf32>
    %478 = arith.addf %359, %477 : vector<16x32xf32>
    %cst_215 = arith.constant 0.000000e+00 : f32
    %479 = vector.broadcast %cst_215 : f32 to vector<16x32xf32>
    %480 = arith.maximumf %478, %479 : vector<16x32xf32>
    %481 = vector.broadcast %cst_215 : f32 to vector<16x32xf32>
    %482 = arith.subf %478, %481 : vector<16x32xf32>
    %483 = arith.cmpf one, %482, %482 : vector<16x32xf32>
    %484 = vector.broadcast %cst_215 : f32 to vector<16x32xf32>
    %485 = arith.addf %478, %484 : vector<16x32xf32>
    %486 = math.absf %482 : vector<16x32xf32>
    %cst_216 = arith.constant 0.000000e+00 : f32
    %487 = vector.broadcast %cst_216 : f32 to vector<16x32xf32>
    %488 = arith.subf %487, %486 : vector<16x32xf32>
    %489 = math.exp %488 : vector<16x32xf32>
    %490 = math.log1p %489 : vector<16x32xf32>
    %491 = arith.addf %480, %490 : vector<16x32xf32>
    %492 = arith.select %483, %485, %491 : vector<16x32xi1>, vector<16x32xf32>
    %c2 = arith.constant 2 : index
    %c0_217 = arith.constant 0 : index
    %c0_218 = arith.constant 0 : index
    %493 = vector.load %arg13[%c2, %c0_217, %c0_218] : memref<3x32x96xf32, #tpu.memory_space<vmem>>, vector<1x32x96xf32>
    %494 = vector.shape_cast %493 : vector<1x32x96xf32> to vector<32x96xf32>
    %495 = arith.truncf %492 : vector<16x32xf32> to vector<16x32xbf16>
    %496 = arith.truncf %494 : vector<32x96xf32> to vector<32x96xbf16>
    %cst_219 = arith.constant dense<0.000000e+00> : vector<16x96xf32>
    %497 = tpu.matmul %495, %496, %cst_219 {dimension_numbers = #tpu.dot_dimension_numbers<[1], [0], [0], [1], [0, 0, 1, 1], [], []>} : vector<16x32xbf16>, vector<32x96xbf16>, vector<16x96xf32> -> vector<16x96xf32>
    %c2_220 = arith.constant 2 : index
    %c0_221 = arith.constant 0 : index
    %c0_222 = arith.constant 0 : index
    %498 = vector.load %arg14[%c2_220, %c0_221, %c0_222] : memref<3x1x96xf32, #tpu.memory_space<vmem>>, vector<1x1x96xf32>
    %499 = vector.shape_cast %498 : vector<1x1x96xf32> to vector<1x96xf32>
    %500 = vector.broadcast %499 : vector<1x96xf32> to vector<16x96xf32>
    %501 = arith.addf %497, %500 : vector<16x96xf32>
    %c2_223 = arith.constant 2 : index
    %c0_224 = arith.constant 0 : index
    %c0_225 = arith.constant 0 : index
    %502 = vector.load %arg15[%c2_223, %c0_224, %c0_225] : memref<3x32x32xf32, #tpu.memory_space<vmem>>, vector<1x32x32xf32>
    %503 = vector.shape_cast %502 : vector<1x32x32xf32> to vector<32x32xf32>
    %504 = arith.truncf %50 : vector<48x32xf32> to vector<48x32xbf16>
    %505 = arith.truncf %503 : vector<32x32xf32> to vector<32x32xbf16>
    %cst_226 = arith.constant dense<0.000000e+00> : vector<48x32xf32>
    %506 = tpu.matmul %504, %505, %cst_226 {dimension_numbers = #tpu.dot_dimension_numbers<[1], [0], [0], [1], [0, 0, 1, 1], [], []>} : vector<48x32xbf16>, vector<32x32xbf16>, vector<48x32xf32> -> vector<48x32xf32>
    %c2_227 = arith.constant 2 : index
    %c0_228 = arith.constant 0 : index
    %c0_229 = arith.constant 0 : index
    %507 = vector.load %arg16[%c2_227, %c0_228, %c0_229] : memref<3x1x32xf32, #tpu.memory_space<vmem>>, vector<1x1x32xf32>
    %508 = vector.shape_cast %507 : vector<1x1x32xf32> to vector<1x32xf32>
    %509 = vector.broadcast %508 : vector<1x32xf32> to vector<48x32xf32>
    %510 = arith.addf %506, %509 : vector<48x32xf32>
    %511 = arith.truncf %1 : vector<48x16xf32> to vector<48x16xbf16>
    %512 = arith.truncf %501 : vector<16x96xf32> to vector<16x96xbf16>
    %cst_230 = arith.constant dense<0.000000e+00> : vector<48x96xf32>
    %513 = tpu.matmul %511, %512, %cst_230 {dimension_numbers = #tpu.dot_dimension_numbers<[1], [0], [0], [1], [0, 0, 1, 1], [], []>} : vector<48x16xbf16>, vector<16x96xbf16>, vector<48x96xf32> -> vector<48x96xf32>
    %514 = arith.truncf %0 : vector<48x16xf32> to vector<48x16xbf16>
    %515 = arith.truncf %501 : vector<16x96xf32> to vector<16x96xbf16>
    %cst_231 = arith.constant dense<0.000000e+00> : vector<48x96xf32>
    %516 = tpu.matmul %514, %515, %cst_231 {dimension_numbers = #tpu.dot_dimension_numbers<[1], [0], [0], [1], [0, 0, 1, 1], [], []>} : vector<48x16xbf16>, vector<16x96xbf16>, vector<48x96xf32> -> vector<48x96xf32>
    %c2_232 = arith.constant 2 : index
    %c0_233 = arith.constant 0 : index
    %c0_234 = arith.constant 0 : index
    %517 = vector.load %arg17[%c2_232, %c0_233, %c0_234] : memref<3x96x64xf32, #tpu.memory_space<vmem>>, vector<1x96x64xf32>
    %518 = vector.shape_cast %517 : vector<1x96x64xf32> to vector<96x64xf32>
    %519 = arith.truncf %513 : vector<48x96xf32> to vector<48x96xbf16>
    %520 = arith.truncf %518 : vector<96x64xf32> to vector<96x64xbf16>
    %cst_235 = arith.constant dense<0.000000e+00> : vector<48x64xf32>
    %521 = tpu.matmul %519, %520, %cst_235 {dimension_numbers = #tpu.dot_dimension_numbers<[1], [0], [0], [1], [0, 0, 1, 1], [], []>} : vector<48x96xbf16>, vector<96x64xbf16>, vector<48x64xf32> -> vector<48x64xf32>
    %c2_236 = arith.constant 2 : index
    %c0_237 = arith.constant 0 : index
    %c0_238 = arith.constant 0 : index
    %522 = vector.load %arg18[%c2_236, %c0_237, %c0_238] : memref<3x96x64xf32, #tpu.memory_space<vmem>>, vector<1x96x64xf32>
    %523 = vector.shape_cast %522 : vector<1x96x64xf32> to vector<96x64xf32>
    %524 = arith.truncf %516 : vector<48x96xf32> to vector<48x96xbf16>
    %525 = arith.truncf %523 : vector<96x64xf32> to vector<96x64xbf16>
    %cst_239 = arith.constant dense<0.000000e+00> : vector<48x64xf32>
    %526 = tpu.matmul %524, %525, %cst_239 {dimension_numbers = #tpu.dot_dimension_numbers<[1], [0], [0], [1], [0, 0, 1, 1], [], []>} : vector<48x96xbf16>, vector<96x64xbf16>, vector<48x64xf32> -> vector<48x64xf32>
    %527 = arith.addf %521, %526 : vector<48x64xf32>
    %c2_240 = arith.constant 2 : index
    %c0_241 = arith.constant 0 : index
    %c0_242 = arith.constant 0 : index
    %528 = vector.load %arg19[%c2_240, %c0_241, %c0_242] : memref<3x32x64xf32, #tpu.memory_space<vmem>>, vector<1x32x64xf32>
    %529 = vector.shape_cast %528 : vector<1x32x64xf32> to vector<32x64xf32>
    %530 = arith.truncf %510 : vector<48x32xf32> to vector<48x32xbf16>
    %531 = arith.truncf %529 : vector<32x64xf32> to vector<32x64xbf16>
    %cst_243 = arith.constant dense<0.000000e+00> : vector<48x64xf32>
    %532 = tpu.matmul %530, %531, %cst_243 {dimension_numbers = #tpu.dot_dimension_numbers<[1], [0], [0], [1], [0, 0, 1, 1], [], []>} : vector<48x32xbf16>, vector<32x64xbf16>, vector<48x64xf32> -> vector<48x64xf32>
    %533 = arith.addf %527, %532 : vector<48x64xf32>
    %c2_244 = arith.constant 2 : index
    %c0_245 = arith.constant 0 : index
    %c0_246 = arith.constant 0 : index
    %534 = vector.load %arg20[%c2_244, %c0_245, %c0_246] : memref<3x1x64xf32, #tpu.memory_space<vmem>>, vector<1x1x64xf32>
    %535 = vector.shape_cast %534 : vector<1x1x64xf32> to vector<1x64xf32>
    %536 = vector.broadcast %535 : vector<1x64xf32> to vector<48x64xf32>
    %537 = arith.addf %533, %536 : vector<48x64xf32>
    %538 = arith.negf %537 : vector<48x64xf32>
    %539 = math.exp %538 : vector<48x64xf32>
    %cst_247 = arith.constant 1.000000e+00 : f32
    %540 = vector.broadcast %cst_247 : f32 to vector<48x64xf32>
    %541 = arith.addf %540, %539 : vector<48x64xf32>
    %542 = arith.divf %540, %541 : vector<48x64xf32>
    %543 = arith.mulf %537, %542 : vector<48x64xf32>
    %c2_248 = arith.constant 2 : index
    %c0_249 = arith.constant 0 : index
    %c0_250 = arith.constant 0 : index
    %544 = vector.load %arg21[%c2_248, %c0_249, %c0_250] : memref<3x64x64xf32, #tpu.memory_space<vmem>>, vector<1x64x64xf32>
    %545 = vector.shape_cast %544 : vector<1x64x64xf32> to vector<64x64xf32>
    %546 = arith.truncf %543 : vector<48x64xf32> to vector<48x64xbf16>
    %547 = arith.truncf %545 : vector<64x64xf32> to vector<64x64xbf16>
    %cst_251 = arith.constant dense<0.000000e+00> : vector<48x64xf32>
    %548 = tpu.matmul %546, %547, %cst_251 {dimension_numbers = #tpu.dot_dimension_numbers<[1], [0], [0], [1], [0, 0, 1, 1], [], []>} : vector<48x64xbf16>, vector<64x64xbf16>, vector<48x64xf32> -> vector<48x64xf32>
    %c2_252 = arith.constant 2 : index
    %c0_253 = arith.constant 0 : index
    %c0_254 = arith.constant 0 : index
    %549 = vector.load %arg22[%c2_252, %c0_253, %c0_254] : memref<3x1x64xf32, #tpu.memory_space<vmem>>, vector<1x1x64xf32>
    %550 = vector.shape_cast %549 : vector<1x1x64xf32> to vector<1x64xf32>
    %551 = vector.broadcast %550 : vector<1x64xf32> to vector<48x64xf32>
    %552 = arith.addf %548, %551 : vector<48x64xf32>
    %553 = vector.extract_strided_slice %552 {offsets = [0, 0], sizes = [48, 32], strides = [1, 1]} : vector<48x64xf32> to vector<48x32xf32>
    %554 = vector.extract_strided_slice %552 {offsets = [0, 32], sizes = [48, 32], strides = [1, 1]} : vector<48x64xf32> to vector<48x32xf32>
    %555 = vector.extract_strided_slice %513 {offsets = [0, 0], sizes = [48, 32], strides = [1, 1]} : vector<48x96xf32> to vector<48x32xf32>
    %556 = arith.mulf %555, %553 : vector<48x32xf32>
    %cst_255 = arith.constant 0.176776692 : f32
    %557 = vector.broadcast %cst_255 : f32 to vector<48x32xf32>
    %558 = arith.mulf %556, %557 : vector<48x32xf32>
    %cst_256 = arith.constant dense<0.000000e+00> : vector<48xf32>
    %559 = vector.multi_reduction <add>, %558, %cst_256 [1] : vector<48x32xf32> to vector<48xf32>
    %560 = vector.shape_cast %559 : vector<48xf32> to vector<48x1xf32>
    %cst_257 = arith.constant 3.200000e+01 : f32
    %561 = vector.broadcast %cst_257 : f32 to vector<48x1xf32>
    %562 = arith.divf %560, %561 : vector<48x1xf32>
    %563 = vector.broadcast %562 : vector<48x1xf32> to vector<48x32xf32>
    %564 = arith.subf %558, %563 : vector<48x32xf32>
    %565 = arith.mulf %564, %564 : vector<48x32xf32>
    %cst_258 = arith.constant dense<0.000000e+00> : vector<48xf32>
    %566 = vector.multi_reduction <add>, %565, %cst_258 [1] : vector<48x32xf32> to vector<48xf32>
    %567 = vector.shape_cast %566 : vector<48xf32> to vector<48x1xf32>
    %cst_259 = arith.constant 3.200000e+01 : f32
    %568 = vector.broadcast %cst_259 : f32 to vector<48x1xf32>
    %569 = arith.divf %567, %568 : vector<48x1xf32>
    %570 = vector.broadcast %562 : vector<48x1xf32> to vector<48x32xf32>
    %571 = arith.subf %558, %570 : vector<48x32xf32>
    %cst_260 = arith.constant 9.99999974E-6 : f32
    %572 = vector.broadcast %cst_260 : f32 to vector<48x1xf32>
    %573 = arith.addf %569, %572 : vector<48x1xf32>
    %574 = math.rsqrt %573 : vector<48x1xf32>
    %575 = vector.broadcast %574 : vector<48x1xf32> to vector<48x32xf32>
    %576 = arith.mulf %571, %575 : vector<48x32xf32>
    %c2_261 = arith.constant 2 : index
    %c0_262 = arith.constant 0 : index
    %c0_263 = arith.constant 0 : index
    %577 = vector.load %arg25[%c2_261, %c0_262, %c0_263] : memref<3x1x32xf32, #tpu.memory_space<vmem>>, vector<1x1x32xf32>
    %578 = vector.shape_cast %577 : vector<1x1x32xf32> to vector<1x32xf32>
    %579 = vector.broadcast %578 : vector<1x32xf32> to vector<48x32xf32>
    %580 = arith.mulf %576, %579 : vector<48x32xf32>
    %c2_264 = arith.constant 2 : index
    %c0_265 = arith.constant 0 : index
    %c0_266 = arith.constant 0 : index
    %581 = vector.load %arg26[%c2_264, %c0_265, %c0_266] : memref<3x1x32xf32, #tpu.memory_space<vmem>>, vector<1x1x32xf32>
    %582 = vector.shape_cast %581 : vector<1x1x32xf32> to vector<1x32xf32>
    %583 = vector.broadcast %582 : vector<1x32xf32> to vector<48x32xf32>
    %584 = arith.addf %580, %583 : vector<48x32xf32>
    %585 = arith.negf %584 : vector<48x32xf32>
    %586 = math.exp %585 : vector<48x32xf32>
    %cst_267 = arith.constant 1.000000e+00 : f32
    %587 = vector.broadcast %cst_267 : f32 to vector<48x32xf32>
    %588 = arith.addf %587, %586 : vector<48x32xf32>
    %589 = arith.divf %587, %588 : vector<48x32xf32>
    %590 = arith.mulf %554, %589 : vector<48x32xf32>
    %591 = arith.truncf %3 : vector<16x48xf32> to vector<16x48xbf16>
    %592 = arith.truncf %590 : vector<48x32xf32> to vector<48x32xbf16>
    %cst_268 = arith.constant dense<0.000000e+00> : vector<16x32xf32>
    %593 = tpu.matmul %591, %592, %cst_268 {dimension_numbers = #tpu.dot_dimension_numbers<[1], [0], [0], [1], [0, 0, 1, 1], [], []>} : vector<16x48xbf16>, vector<48x32xbf16>, vector<16x32xf32> -> vector<16x32xf32>
    %c2_269 = arith.constant 2 : index
    %c0_270 = arith.constant 0 : index
    %c0_271 = arith.constant 0 : index
    %594 = vector.load %arg23[%c2_269, %c0_270, %c0_271] : memref<3x32x32xf32, #tpu.memory_space<vmem>>, vector<1x32x32xf32>
    %595 = vector.shape_cast %594 : vector<1x32x32xf32> to vector<32x32xf32>
    %596 = arith.truncf %593 : vector<16x32xf32> to vector<16x32xbf16>
    %597 = arith.truncf %595 : vector<32x32xf32> to vector<32x32xbf16>
    %cst_272 = arith.constant dense<0.000000e+00> : vector<16x32xf32>
    %598 = tpu.matmul %596, %597, %cst_272 {dimension_numbers = #tpu.dot_dimension_numbers<[1], [0], [0], [1], [0, 0, 1, 1], [], []>} : vector<16x32xbf16>, vector<32x32xbf16>, vector<16x32xf32> -> vector<16x32xf32>
    %c2_273 = arith.constant 2 : index
    %c0_274 = arith.constant 0 : index
    %c0_275 = arith.constant 0 : index
    %599 = vector.load %arg24[%c2_273, %c0_274, %c0_275] : memref<3x1x32xf32, #tpu.memory_space<vmem>>, vector<1x1x32xf32>
    %600 = vector.shape_cast %599 : vector<1x1x32xf32> to vector<1x32xf32>
    %601 = vector.broadcast %600 : vector<1x32xf32> to vector<16x32xf32>
    %602 = arith.addf %598, %601 : vector<16x32xf32>
    %c2_276 = arith.constant 2 : index
    %c0_277 = arith.constant 0 : index
    %c0_278 = arith.constant 0 : index
    %603 = vector.load %arg27[%c2_276, %c0_277, %c0_278] : memref<3x1x32xf32, #tpu.memory_space<vmem>>, vector<1x1x32xf32>
    %604 = vector.shape_cast %603 : vector<1x1x32xf32> to vector<1x32xf32>
    %605 = vector.broadcast %604 : vector<1x32xf32> to vector<16x32xf32>
    %606 = arith.mulf %602, %605 : vector<16x32xf32>
    %c2_279 = arith.constant 2 : index
    %c0_280 = arith.constant 0 : index
    %c0_281 = arith.constant 0 : index
    %607 = vector.load %arg28[%c2_279, %c0_280, %c0_281] : memref<3x1x32xf32, #tpu.memory_space<vmem>>, vector<1x1x32xf32>
    %608 = vector.shape_cast %607 : vector<1x1x32xf32> to vector<1x32xf32>
    %609 = vector.broadcast %608 : vector<1x32xf32> to vector<16x32xf32>
    %610 = arith.addf %606, %609 : vector<16x32xf32>
    %611 = arith.addf %492, %610 : vector<16x32xf32>
    %cst_282 = arith.constant 0.000000e+00 : f32
    %612 = vector.broadcast %cst_282 : f32 to vector<16x32xf32>
    %613 = arith.maximumf %611, %612 : vector<16x32xf32>
    %614 = vector.broadcast %cst_282 : f32 to vector<16x32xf32>
    %615 = arith.subf %611, %614 : vector<16x32xf32>
    %616 = arith.cmpf one, %615, %615 : vector<16x32xf32>
    %617 = vector.broadcast %cst_282 : f32 to vector<16x32xf32>
    %618 = arith.addf %611, %617 : vector<16x32xf32>
    %619 = math.absf %615 : vector<16x32xf32>
    %cst_283 = arith.constant 0.000000e+00 : f32
    %620 = vector.broadcast %cst_283 : f32 to vector<16x32xf32>
    %621 = arith.subf %620, %619 : vector<16x32xf32>
    %622 = math.exp %621 : vector<16x32xf32>
    %623 = math.log1p %622 : vector<16x32xf32>
    %624 = arith.addf %613, %623 : vector<16x32xf32>
    %625 = arith.select %616, %618, %624 : vector<16x32xi1>, vector<16x32xf32>
    %c0_284 = arith.constant 0 : index
    %c0_285 = arith.constant 0 : index
    %626 = vector.load %arg5[%c0_284, %c0_285] : memref<16x2xf32, #tpu.memory_space<vmem>>, vector<16x2xf32>
    %627 = tpu.transpose %626, [1, 0] : vector<16x2xf32> -> vector<2x16xf32>
    %628 = arith.truncf %627 : vector<2x16xf32> to vector<2x16xbf16>
    %629 = arith.truncf %625 : vector<16x32xf32> to vector<16x32xbf16>
    %cst_286 = arith.constant dense<0.000000e+00> : vector<2x32xf32>
    %630 = tpu.matmul %628, %629, %cst_286 {dimension_numbers = #tpu.dot_dimension_numbers<[1], [0], [0], [1], [0, 0, 1, 1], [], []>} : vector<2x16xbf16>, vector<16x32xbf16>, vector<2x32xf32> -> vector<2x32xf32>
    %c0_287 = arith.constant 0 : index
    %c0_288 = arith.constant 0 : index
    %631 = vector.load %arg7[%c0_287, %c0_288] : memref<2x1xf32, #tpu.memory_space<vmem>>, vector<2x1xf32>
    %632 = vector.broadcast %631 : vector<2x1xf32> to vector<2x32xf32>
    %633 = arith.mulf %630, %632 : vector<2x32xf32>
    %c0_289 = arith.constant 0 : index
    %c0_290 = arith.constant 0 : index
    %634 = vector.load %arg41[%c0_289, %c0_290] : memref<32x32xf32, #tpu.memory_space<vmem>>, vector<32x32xf32>
    %635 = arith.truncf %633 : vector<2x32xf32> to vector<2x32xbf16>
    %636 = arith.truncf %634 : vector<32x32xf32> to vector<32x32xbf16>
    %cst_291 = arith.constant dense<0.000000e+00> : vector<2x32xf32>
    %637 = tpu.matmul %635, %636, %cst_291 {dimension_numbers = #tpu.dot_dimension_numbers<[1], [0], [0], [1], [0, 0, 1, 1], [], []>} : vector<2x32xbf16>, vector<32x32xbf16>, vector<2x32xf32> -> vector<2x32xf32>
    %c0_292 = arith.constant 0 : index
    %c0_293 = arith.constant 0 : index
    %638 = vector.load %arg42[%c0_292, %c0_293] : memref<1x32xf32, #tpu.memory_space<vmem>>, vector<1x32xf32>
    %639 = vector.broadcast %638 : vector<1x32xf32> to vector<2x32xf32>
    %640 = arith.addf %637, %639 : vector<2x32xf32>
    %641 = arith.negf %640 : vector<2x32xf32>
    %642 = math.exp %641 : vector<2x32xf32>
    %cst_294 = arith.constant 1.000000e+00 : f32
    %643 = vector.broadcast %cst_294 : f32 to vector<2x32xf32>
    %644 = arith.addf %643, %642 : vector<2x32xf32>
    %645 = arith.divf %643, %644 : vector<2x32xf32>
    %646 = arith.mulf %640, %645 : vector<2x32xf32>
    %c0_295 = arith.constant 0 : index
    %c0_296 = arith.constant 0 : index
    %647 = vector.load %arg43[%c0_295, %c0_296] : memref<32x1xf32, #tpu.memory_space<vmem>>, vector<32x1xf32>
    %cst_297 = arith.constant dense<0.000000e+00> : vector<2x1xf32>
    %648 = tpu.matmul %646, %647, %cst_297 {dimension_numbers = #tpu.dot_dimension_numbers<[1], [0], [0], [1], [0, 0, 1, 1], [], []>} : vector<2x32xf32>, vector<32x1xf32>, vector<2x1xf32> -> vector<2x1xf32>
    %c0_298 = arith.constant 0 : index
    %c0_299 = arith.constant 0 : index
    %649 = vector.load %arg44[%c0_298, %c0_299] : memref<1x1xf32, #tpu.memory_space<vmem>>, vector<1x1xf32>
    %650 = vector.broadcast %649 : vector<1x1xf32> to vector<2x1xf32>
    %651 = arith.addf %648, %650 : vector<2x1xf32>
    %c0_300 = arith.constant 0 : index
    %c0_301 = arith.constant 0 : index
    %652 = vector.load %arg45[%c0_300, %c0_301] : memref<2x1xf32, #tpu.memory_space<vmem>>, vector<2x1xf32>
    tpu.vector_store %arg45[%c0_300, %c0_301], %651 {strides = array<i32>} : memref<2x1xf32, #tpu.memory_space<vmem>>, vector<2x1xf32>,
    return
  }
  func.func @transform_0(%arg0: i32) -> (i32, i32) {
    %c0_i32 = arith.constant 0 : i32
    %c0_i32_0 = arith.constant 0 : i32
    %c0_i32_1 = arith.constant 0 : i32
    return %c0_i32, %c0_i32_0 : i32, i32
  }
  func.func @transform_1(%arg0: i32) -> (i32, i32) {
    %c0_i32 = arith.constant 0 : i32
    %c0_i32_0 = arith.constant 0 : i32
    %c0_i32_1 = arith.constant 0 : i32
    return %c0_i32, %c0_i32_0 : i32, i32
  }
  func.func @transform_2(%arg0: i32) -> (i32, i32) {
    %c0_i32 = arith.constant 0 : i32
    %c0_i32_0 = arith.constant 0 : i32
    %c0_i32_1 = arith.constant 0 : i32
    return %c0_i32, %c0_i32_0 : i32, i32
  }
  func.func @transform_3(%arg0: i32) -> (i32, i32) {
    %c0_i32 = arith.constant 0 : i32
    %c0_i32_0 = arith.constant 0 : i32
    %c0_i32_1 = arith.constant 0 : i32
    return %c0_i32, %c0_i32_0 : i32, i32
  }
  func.func @transform_4(%arg0: i32) -> (i32, i32) {
    %c0_i32 = arith.constant 0 : i32
    %c0_i32_0 = arith.constant 0 : i32
    %c0_i32_1 = arith.constant 0 : i32
    return %c0_i32, %c0_i32_0 : i32, i32
  }
  func.func @transform_5(%arg0: i32) -> (i32, i32) {
    %c0_i32 = arith.constant 0 : i32
    %c0_i32_0 = arith.constant 0 : i32
    %c0_i32_1 = arith.constant 0 : i32
    return %c0_i32, %c0_i32_0 : i32, i32
  }
  func.func @transform_6(%arg0: i32) -> (i32, i32) {
    %c0_i32 = arith.constant 0 : i32
    %c0_i32_0 = arith.constant 0 : i32
    %c0_i32_1 = arith.constant 0 : i32
    return %c0_i32, %c0_i32_0 : i32, i32
  }
  func.func @transform_7(%arg0: i32) -> (i32, i32) {
    %c0_i32 = arith.constant 0 : i32
    %c0_i32_0 = arith.constant 0 : i32
    %c0_i32_1 = arith.constant 0 : i32
    return %c0_i32, %c0_i32_0 : i32, i32
  }
  func.func @transform_8(%arg0: i32) -> (i32, i32) {
    %c0_i32 = arith.constant 0 : i32
    %c0_i32_0 = arith.constant 0 : i32
    %c0_i32_1 = arith.constant 0 : i32
    return %c0_i32, %c0_i32_0 : i32, i32
  }
  func.func @transform_9(%arg0: i32) -> (i32, i32) {
    %c0_i32 = arith.constant 0 : i32
    %c0_i32_0 = arith.constant 0 : i32
    %c0_i32_1 = arith.constant 0 : i32
    return %c0_i32, %c0_i32_0 : i32, i32
  }
  func.func @transform_10(%arg0: i32) -> (i32, i32) {
    %c0_i32 = arith.constant 0 : i32
    %c0_i32_0 = arith.constant 0 : i32
    %c0_i32_1 = arith.constant 0 : i32
    return %c0_i32, %c0_i32_0 : i32, i32
  }
  func.func @transform_11(%arg0: i32) -> (i32, i32) {
    %c0_i32 = arith.constant 0 : i32
    %c0_i32_0 = arith.constant 0 : i32
    %c0_i32_1 = arith.constant 0 : i32
    return %c0_i32, %c0_i32_0 : i32, i32
  }
  func.func @transform_12(%arg0: i32) -> (i32, i32, i32) {
    %c0_i32 = arith.constant 0 : i32
    %c0_i32_0 = arith.constant 0 : i32
    %c0_i32_1 = arith.constant 0 : i32
    %c0_i32_2 = arith.constant 0 : i32
    return %c0_i32, %c0_i32_0, %c0_i32_1 : i32, i32, i32
  }
  func.func @transform_13(%arg0: i32) -> (i32, i32, i32) {
    %c0_i32 = arith.constant 0 : i32
    %c0_i32_0 = arith.constant 0 : i32
    %c0_i32_1 = arith.constant 0 : i32
    %c0_i32_2 = arith.constant 0 : i32
    return %c0_i32, %c0_i32_0, %c0_i32_1 : i32, i32, i32
  }
  func.func @transform_14(%arg0: i32) -> (i32, i32, i32) {
    %c0_i32 = arith.constant 0 : i32
    %c0_i32_0 = arith.constant 0 : i32
    %c0_i32_1 = arith.constant 0 : i32
    %c0_i32_2 = arith.constant 0 : i32
    return %c0_i32, %c0_i32_0, %c0_i32_1 : i32, i32, i32
  }
  func.func @transform_15(%arg0: i32) -> (i32, i32, i32) {
    %c0_i32 = arith.constant 0 : i32
    %c0_i32_0 = arith.constant 0 : i32
    %c0_i32_1 = arith.constant 0 : i32
    %c0_i32_2 = arith.constant 0 : i32
    return %c0_i32, %c0_i32_0, %c0_i32_1 : i32, i32, i32
  }
  func.func @transform_16(%arg0: i32) -> (i32, i32, i32) {
    %c0_i32 = arith.constant 0 : i32
    %c0_i32_0 = arith.constant 0 : i32
    %c0_i32_1 = arith.constant 0 : i32
    %c0_i32_2 = arith.constant 0 : i32
    return %c0_i32, %c0_i32_0, %c0_i32_1 : i32, i32, i32
  }
  func.func @transform_17(%arg0: i32) -> (i32, i32, i32) {
    %c0_i32 = arith.constant 0 : i32
    %c0_i32_0 = arith.constant 0 : i32
    %c0_i32_1 = arith.constant 0 : i32
    %c0_i32_2 = arith.constant 0 : i32
    return %c0_i32, %c0_i32_0, %c0_i32_1 : i32, i32, i32
  }
  func.func @transform_18(%arg0: i32) -> (i32, i32, i32) {
    %c0_i32 = arith.constant 0 : i32
    %c0_i32_0 = arith.constant 0 : i32
    %c0_i32_1 = arith.constant 0 : i32
    %c0_i32_2 = arith.constant 0 : i32
    return %c0_i32, %c0_i32_0, %c0_i32_1 : i32, i32, i32
  }
  func.func @transform_19(%arg0: i32) -> (i32, i32, i32) {
    %c0_i32 = arith.constant 0 : i32
    %c0_i32_0 = arith.constant 0 : i32
    %c0_i32_1 = arith.constant 0 : i32
    %c0_i32_2 = arith.constant 0 : i32
    return %c0_i32, %c0_i32_0, %c0_i32_1 : i32, i32, i32
  }
  func.func @transform_20(%arg0: i32) -> (i32, i32, i32) {
    %c0_i32 = arith.constant 0 : i32
    %c0_i32_0 = arith.constant 0 : i32
    %c0_i32_1 = arith.constant 0 : i32
    %c0_i32_2 = arith.constant 0 : i32
    return %c0_i32, %c0_i32_0, %c0_i32_1 : i32, i32, i32
  }
  func.func @transform_21(%arg0: i32) -> (i32, i32, i32) {
    %c0_i32 = arith.constant 0 : i32
    %c0_i32_0 = arith.constant 0 : i32
    %c0_i32_1 = arith.constant 0 : i32
    %c0_i32_2 = arith.constant 0 : i32
    return %c0_i32, %c0_i32_0, %c0_i32_1 : i32, i32, i32
  }
  func.func @transform_22(%arg0: i32) -> (i32, i32, i32) {
    %c0_i32 = arith.constant 0 : i32
    %c0_i32_0 = arith.constant 0 : i32
    %c0_i32_1 = arith.constant 0 : i32
    %c0_i32_2 = arith.constant 0 : i32
    return %c0_i32, %c0_i32_0, %c0_i32_1 : i32, i32, i32
  }
  func.func @transform_23(%arg0: i32) -> (i32, i32, i32) {
    %c0_i32 = arith.constant 0 : i32
    %c0_i32_0 = arith.constant 0 : i32
    %c0_i32_1 = arith.constant 0 : i32
    %c0_i32_2 = arith.constant 0 : i32
    return %c0_i32, %c0_i32_0, %c0_i32_1 : i32, i32, i32
  }
  func.func @transform_24(%arg0: i32) -> (i32, i32, i32) {
    %c0_i32 = arith.constant 0 : i32
    %c0_i32_0 = arith.constant 0 : i32
    %c0_i32_1 = arith.constant 0 : i32
    %c0_i32_2 = arith.constant 0 : i32
    return %c0_i32, %c0_i32_0, %c0_i32_1 : i32, i32, i32
  }
  func.func @transform_25(%arg0: i32) -> (i32, i32, i32) {
    %c0_i32 = arith.constant 0 : i32
    %c0_i32_0 = arith.constant 0 : i32
    %c0_i32_1 = arith.constant 0 : i32
    %c0_i32_2 = arith.constant 0 : i32
    return %c0_i32, %c0_i32_0, %c0_i32_1 : i32, i32, i32
  }
  func.func @transform_26(%arg0: i32) -> (i32, i32, i32) {
    %c0_i32 = arith.constant 0 : i32
    %c0_i32_0 = arith.constant 0 : i32
    %c0_i32_1 = arith.constant 0 : i32
    %c0_i32_2 = arith.constant 0 : i32
    return %c0_i32, %c0_i32_0, %c0_i32_1 : i32, i32, i32
  }
  func.func @transform_27(%arg0: i32) -> (i32, i32, i32) {
    %c0_i32 = arith.constant 0 : i32
    %c0_i32_0 = arith.constant 0 : i32
    %c0_i32_1 = arith.constant 0 : i32
    %c0_i32_2 = arith.constant 0 : i32
    return %c0_i32, %c0_i32_0, %c0_i32_1 : i32, i32, i32
  }
  func.func @transform_28(%arg0: i32) -> (i32, i32) {
    %c0_i32 = arith.constant 0 : i32
    %c0_i32_0 = arith.constant 0 : i32
    %c0_i32_1 = arith.constant 0 : i32
    return %c0_i32, %c0_i32_0 : i32, i32
  }
  func.func @transform_29(%arg0: i32) -> (i32, i32) {
    %c0_i32 = arith.constant 0 : i32
    %c0_i32_0 = arith.constant 0 : i32
    %c0_i32_1 = arith.constant 0 : i32
    return %c0_i32, %c0_i32_0 : i32, i32
  }
  func.func @transform_30(%arg0: i32) -> (i32, i32) {
    %c0_i32 = arith.constant 0 : i32
    %c0_i32_0 = arith.constant 0 : i32
    %c0_i32_1 = arith.constant 0 : i32
    return %c0_i32, %c0_i32_0 : i32, i32
  }
  func.func @transform_31(%arg0: i32) -> (i32, i32) {
    %c0_i32 = arith.constant 0 : i32
    %c0_i32_0 = arith.constant 0 : i32
    %c0_i32_1 = arith.constant 0 : i32
    return %c0_i32, %c0_i32_0 : i32, i32
  }
  func.func @transform_32(%arg0: i32) -> (i32, i32) {
    %c0_i32 = arith.constant 0 : i32
    %c0_i32_0 = arith.constant 0 : i32
    %c0_i32_1 = arith.constant 0 : i32
    return %c0_i32, %c0_i32_0 : i32, i32
  }
  func.func @transform_33(%arg0: i32) -> (i32, i32) {
    %c0_i32 = arith.constant 0 : i32
    %c0_i32_0 = arith.constant 0 : i32
    %c0_i32_1 = arith.constant 0 : i32
    return %c0_i32, %c0_i32_0 : i32, i32
  }
  func.func @transform_34(%arg0: i32) -> (i32, i32) {
    %c0_i32 = arith.constant 0 : i32
    %c0_i32_0 = arith.constant 0 : i32
    %c0_i32_1 = arith.constant 0 : i32
    return %c0_i32, %c0_i32_0 : i32, i32
  }
  func.func @transform_35(%arg0: i32) -> (i32, i32) {
    %c0_i32 = arith.constant 0 : i32
    %c0_i32_0 = arith.constant 0 : i32
    %c0_i32_1 = arith.constant 0 : i32
    return %c0_i32, %c0_i32_0 : i32, i32
  }
  func.func @transform_36(%arg0: i32) -> (i32, i32) {
    %c0_i32 = arith.constant 0 : i32
    %c0_i32_0 = arith.constant 0 : i32
    %c0_i32_1 = arith.constant 0 : i32
    return %c0_i32, %c0_i32_0 : i32, i32
  }
  func.func @transform_37(%arg0: i32) -> (i32, i32) {
    %c0_i32 = arith.constant 0 : i32
    %c0_i32_0 = arith.constant 0 : i32
    %c0_i32_1 = arith.constant 0 : i32
    return %c0_i32, %c0_i32_0 : i32, i32
  }
  func.func @transform_38(%arg0: i32) -> (i32, i32) {
    %c0_i32 = arith.constant 0 : i32
    %c0_i32_0 = arith.constant 0 : i32
    %c0_i32_1 = arith.constant 0 : i32
    return %c0_i32, %c0_i32_0 : i32, i32
  }
  func.func @transform_39(%arg0: i32) -> (i32, i32) {
    %c0_i32 = arith.constant 0 : i32
    %c0_i32_0 = arith.constant 0 : i32
    %c0_i32_1 = arith.constant 0 : i32
    return %c0_i32, %c0_i32_0 : i32, i32
  }
  func.func @transform_40(%arg0: i32) -> (i32, i32) {
    %c0_i32 = arith.constant 0 : i32
    %c0_i32_0 = arith.constant 0 : i32
    %c0_i32_1 = arith.constant 0 : i32
    return %c0_i32, %c0_i32_0 : i32, i32
  }
  func.func @transform_41(%arg0: i32) -> (i32, i32) {
    %c0_i32 = arith.constant 0 : i32
    %c0_i32_0 = arith.constant 0 : i32
    %c0_i32_1 = arith.constant 0 : i32
    return %c0_i32, %c0_i32_0 : i32, i32
  }
  func.func @transform_42(%arg0: i32) -> (i32, i32) {
    %c0_i32 = arith.constant 0 : i32
    %c0_i32_0 = arith.constant 0 : i32
    %c0_i32_1 = arith.constant 0 : i32
    return %c0_i32, %c0_i32_0 : i32, i32
  }
  func.func @transform_43(%arg0: i32) -> (i32, i32) {
    %c0_i32 = arith.constant 0 : i32
    %c0_i32_0 = arith.constant 0 : i32
    %c0_i32_1 = arith.constant 0 : i32
    return %c0_i32, %c0_i32_0 : i32, i32
  }
  func.func @transform_44(%arg0: i32) -> (i32, i32) {
    %c0_i32 = arith.constant 0 : i32
    %c0_i32_0 = arith.constant 0 : i32
    %c0_i32_1 = arith.constant 0 : i32
    return %c0_i32, %c0_i32_0 : i32, i32
  }
}

</mosaic_0001>

<llo_original>
// kernel: ecomformer_forward.1
$region0: #{ecomformer_forward.1}
  #allocation0 [shape = 'u32[]', space=smem, size = 0x4, offset = 0x4, fixed_abs, tag = 'smem constant byte address 0x4 - core index']
  #allocation1 [shape = 'u32[144,128]{1,0:T(1,128)}', space=vmem, size = 0x12000, scoped, tag = 'internal scratch']
  #allocation2 [shape = 'f32[1,1]{1,0:T(1,128)S(1)}', space=vmem, size = 0x200, scoped, tag = 'scoped memory for ecomformer_forward.1']
  %s0 = inlined_call_operand.smem [shape: u32[45], index: -1, kind: input, shape index: {}]
  %s1 = sld [smem:[%s0]]
  %s2 = scalar_lea.smem %s0, 1
  %s3 = sld [smem:[%s2]]
  %s4 = scalar_lea.smem %s0, 2
  %s5 = sld [smem:[%s4]]
  %s6 = scalar_lea.smem %s0, 3
  %s7 = sld [smem:[%s6]]
  %s8 = scalar_lea.smem %s0, 4
  %s9 = sld [smem:[%s8]]
  %s10 = scalar_lea.smem %s0, 5
  %s11 = sld [smem:[%s10]]
  %s12 = scalar_lea.smem %s0, 6
  %s13 = sld [smem:[%s12]]
  %s14 = scalar_lea.smem %s0, 7
  %s15 = sld [smem:[%s14]]
  %s16 = scalar_lea.smem %s0, 8
  %s17 = sld [smem:[%s16]]
  %s18 = scalar_lea.smem %s0, 9
  %s19 = sld [smem:[%s18]]
  %s20 = scalar_lea.smem %s0, 10
  %s21 = sld [smem:[%s20]]
  %s22 = scalar_lea.smem %s0, 11
  %s23 = sld [smem:[%s22]]
  %s24 = scalar_lea.smem %s0, 12
  %s25 = sld [smem:[%s24]]
  %s26 = scalar_lea.smem %s0, 13
  %s27 = sld [smem:[%s26]]
  %s28 = scalar_lea.smem %s0, 14
  %s29 = sld [smem:[%s28]]
  %s30 = scalar_lea.smem %s0, 15
  %s31 = sld [smem:[%s30]]
  %s32 = scalar_lea.smem %s0, 16
  %s33 = sld [smem:[%s32]]
  %s34 = scalar_lea.smem %s0, 17
  %s35 = sld [smem:[%s34]]
  %s36 = scalar_lea.smem %s0, 18
  %s37 = sld [smem:[%s36]]
  %s38 = scalar_lea.smem %s0, 19
  %s39 = sld [smem:[%s38]]
  %s40 = scalar_lea.smem %s0, 20
  %s41 = sld [smem:[%s40]]
  %s42 = scalar_lea.smem %s0, 21
  %s43 = sld [smem:[%s42]]
  %s44 = scalar_lea.smem %s0, 22
  %s45 = sld [smem:[%s44]]
  %s46 = scalar_lea.smem %s0, 23
  %s47 = sld [smem:[%s46]]
  %s48 = scalar_lea.smem %s0, 24
  %s49 = sld [smem:[%s48]]
  %s50 = scalar_lea.smem %s0, 25
  %s51 = sld [smem:[%s50]]
  %s52 = scalar_lea.smem %s0, 26
  %s53 = sld [smem:[%s52]]
  %s54 = scalar_lea.smem %s0, 27
  %s55 = sld [smem:[%s54]]
  %s56 = scalar_lea.smem %s0, 28
  %s57 = sld [smem:[%s56]]
  %s58 = scalar_lea.smem %s0, 29
  %s59 = sld [smem:[%s58]]
  %s60 = scalar_lea.smem %s0, 30
  %s61 = sld [smem:[%s60]]
  %s62 = scalar_lea.smem %s0, 31
  %s63 = sld [smem:[%s62]]
  %s64 = scalar_lea.smem %s0, 32
  %s65 = sld [smem:[%s64]]
  %s66 = scalar_lea.smem %s0, 33
  %s67 = sld [smem:[%s66]]
  %s68 = scalar_lea.smem %s0, 34
  %s69 = sld [smem:[%s68]]
  %s70 = scalar_lea.smem %s0, 35
  %s71 = sld [smem:[%s70]]
  %s72 = scalar_lea.smem %s0, 36
  %s73 = sld [smem:[%s72]]
  %s74 = scalar_lea.smem %s0, 37
  %s75 = sld [smem:[%s74]]
  %s76 = scalar_lea.smem %s0, 38
  %s77 = sld [smem:[%s76]]
  %s78 = scalar_lea.smem %s0, 39
  %s79 = sld [smem:[%s78]]
  %s80 = scalar_lea.smem %s0, 40
  %s81 = sld [smem:[%s80]]
  %s82 = scalar_lea.smem %s0, 41
  %s83 = sld [smem:[%s82]]
  %s84 = scalar_lea.smem %s0, 42
  %s85 = sld [smem:[%s84]]
  %s86 = scalar_lea.smem %s0, 43
  %s87 = sld [smem:[%s86]]
  %s88 = scalar_lea.smem %s0, 44
  %s89 = sld [smem:[%s88]]
  %s90 = sld [smem:[#allocation0]]
  $region186: #{ecomformer_forward.1} parent=0
    _
  %s92 = ssub.s32 1, %s90
  %s93 = scalar_select 0, %s92, %s90
  %v94 = vstv %s87
  %95 = vst [vmem:[#allocation2] sm:$0x1] %v94
  // Predicated region
  $region2: #{ecomformer_forward.1} parent=0 // pred_check
    _
  $region3: #{ecomformer_forward.1} parent=0 // pred_check_branch
    %97 = sbr.rel (0) target = $region5
  $region4: #{ecomformer_forward.1} parent=0 // pred_region
    _
  $region5: #{ecomformer_forward.1} parent=0 // pred_fallthru
    _
  // Predicated region
  $region6: #{ecomformer_forward.1} parent=0 // pred_check
    _
  $region7: #{ecomformer_forward.1} parent=0 // pred_check_branch
    %99 = sbr.rel (0) target = $region9
  $region8: #{ecomformer_forward.1} parent=0 // pred_region
    _
  $region9: #{ecomformer_forward.1} parent=0 // pred_fallthru
    _
  // Predicated region
  $region10: #{ecomformer_forward.1} parent=0 // pred_check
    _
  $region11: #{ecomformer_forward.1} parent=0 // pred_check_branch
    %101 = sbr.rel (0) target = $region13
  $region12: #{ecomformer_forward.1} parent=0 // pred_region
    _
  $region13: #{ecomformer_forward.1} parent=0 // pred_fallthru
    _
  // Predicated region
  $region14: #{ecomformer_forward.1} parent=0 // pred_check
    _
  $region15: #{ecomformer_forward.1} parent=0 // pred_check_branch
    %103 = sbr.rel (0) target = $region17
  $region16: #{ecomformer_forward.1} parent=0 // pred_region
    _
  $region17: #{ecomformer_forward.1} parent=0 // pred_fallthru
    _
  // Predicated region
  $region18: #{ecomformer_forward.1} parent=0 // pred_check
    _
  $region19: #{ecomformer_forward.1} parent=0 // pred_check_branch
    %105 = sbr.rel (0) target = $region21
  $region20: #{ecomformer_forward.1} parent=0 // pred_region
    _
  $region21: #{ecomformer_forward.1} parent=0 // pred_fallthru
    _
  // Predicated region
  $region22: #{ecomformer_forward.1} parent=0 // pred_check
    _
  $region23: #{ecomformer_forward.1} parent=0 // pred_check_branch
    %107 = sbr.rel (0) target = $region25
  $region24: #{ecomformer_forward.1} parent=0 // pred_region
    _
  $region25: #{ecomformer_forward.1} parent=0 // pred_fallthru
    _
  // Predicated region
  $region26: #{ecomformer_forward.1} parent=0 // pred_check
    _
  $region27: #{ecomformer_forward.1} parent=0 // pred_check_branch
    %109 = sbr.rel (0) target = $region29
  $region28: #{ecomformer_forward.1} parent=0 // pred_region
    _
  $region29: #{ecomformer_forward.1} parent=0 // pred_fallthru
    _
  // Predicated region
  $region30: #{ecomformer_forward.1} parent=0 // pred_check
    _
  $region31: #{ecomformer_forward.1} parent=0 // pred_check_branch
    %111 = sbr.rel (0) target = $region33
  $region32: #{ecomformer_forward.1} parent=0 // pred_region
    _
  $region33: #{ecomformer_forward.1} parent=0 // pred_fallthru
    _
  // Predicated region
  $region34: #{ecomformer_forward.1} parent=0 // pred_check
    _
  $region35: #{ecomformer_forward.1} parent=0 // pred_check_branch
    %113 = sbr.rel (0) target = $region37
  $region36: #{ecomformer_forward.1} parent=0 // pred_region
    _
  $region37: #{ecomformer_forward.1} parent=0 // pred_fallthru
    _
  // Predicated region
  $region38: #{ecomformer_forward.1} parent=0 // pred_check
    _
  $region39: #{ecomformer_forward.1} parent=0 // pred_check_branch
    %115 = sbr.rel (0) target = $region41
  $region40: #{ecomformer_forward.1} parent=0 // pred_region
    _
  $region41: #{ecomformer_forward.1} parent=0 // pred_fallthru
    _
  // Predicated region
  $region42: #{ecomformer_forward.1} parent=0 // pred_check
    _
  $region43: #{ecomformer_forward.1} parent=0 // pred_check_branch
    %117 = sbr.rel (0) target = $region45
  $region44: #{ecomformer_forward.1} parent=0 // pred_region
    _
  $region45: #{ecomformer_forward.1} parent=0 // pred_fallthru
    _
  // Predicated region
  $region46: #{ecomformer_forward.1} parent=0 // pred_check
    _
  $region47: #{ecomformer_forward.1} parent=0 // pred_check_branch
    %119 = sbr.rel (0) target = $region49
  $region48: #{ecomformer_forward.1} parent=0 // pred_region
    _
  $region49: #{ecomformer_forward.1} parent=0 // pred_fallthru
    _
  // Predicated region
  $region50: #{ecomformer_forward.1} parent=0 // pred_check
    _
  $region51: #{ecomformer_forward.1} parent=0 // pred_check_branch
    %121 = sbr.rel (0) target = $region53
  $region52: #{ecomformer_forward.1} parent=0 // pred_region
    _
  $region53: #{ecomformer_forward.1} parent=0 // pred_fallthru
    _
  // Predicated region
  $region54: #{ecomformer_forward.1} parent=0 // pred_check
    _
  $region55: #{ecomformer_forward.1} parent=0 // pred_check_branch
    %123 = sbr.rel (0) target = $region57
  $region56: #{ecomformer_forward.1} parent=0 // pred_region
    _
  $region57: #{ecomformer_forward.1} parent=0 // pred_fallthru
    _
  // Predicated region
  $region58: #{ecomformer_forward.1} parent=0 // pred_check
    _
  $region59: #{ecomformer_forward.1} parent=0 // pred_check_branch
    %125 = sbr.rel (0) target = $region61
  $region60: #{ecomformer_forward.1} parent=0 // pred_region
    _
  $region61: #{ecomformer_forward.1} parent=0 // pred_fallthru
    _
  // Predicated region
  $region62: #{ecomformer_forward.1} parent=0 // pred_check
    _
  $region63: #{ecomformer_forward.1} parent=0 // pred_check_branch
    %127 = sbr.rel (0) target = $region65
  $region64: #{ecomformer_forward.1} parent=0 // pred_region
    _
  $region65: #{ecomformer_forward.1} parent=0 // pred_fallthru
    _
  // Predicated region
  $region66: #{ecomformer_forward.1} parent=0 // pred_check
    _
  $region67: #{ecomformer_forward.1} parent=0 // pred_check_branch
    %129 = sbr.rel (0) target = $region69
  $region68: #{ecomformer_forward.1} parent=0 // pred_region
    _
  $region69: #{ecomformer_forward.1} parent=0 // pred_fallthru
    _
  // Predicated region
  $region70: #{ecomformer_forward.1} parent=0 // pred_check
    _
  $region71: #{ecomformer_forward.1} parent=0 // pred_check_branch
    %131 = sbr.rel (0) target = $region73
  $region72: #{ecomformer_forward.1} parent=0 // pred_region
    _
  $region73: #{ecomformer_forward.1} parent=0 // pred_fallthru
    _
  // Predicated region
  $region74: #{ecomformer_forward.1} parent=0 // pred_check
    _
  $region75: #{ecomformer_forward.1} parent=0 // pred_check_branch
    %133 = sbr.rel (0) target = $region77
  $region76: #{ecomformer_forward.1} parent=0 // pred_region
    _
  $region77: #{ecomformer_forward.1} parent=0 // pred_fallthru
    _
  // Predicated region
  $region78: #{ecomformer_forward.1} parent=0 // pred_check
    _
  $region79: #{ecomformer_forward.1} parent=0 // pred_check_branch
    %135 = sbr.rel (0) target = $region81
  $region80: #{ecomformer_forward.1} parent=0 // pred_region
    _
  $region81: #{ecomformer_forward.1} parent=0 // pred_fallthru
    _
  // Predicated region
  $region82: #{ecomformer_forward.1} parent=0 // pred_check
    _
  $region83: #{ecomformer_forward.1} parent=0 // pred_check_branch
    %137 = sbr.rel (0) target = $region85
  $region84: #{ecomformer_forward.1} parent=0 // pred_region
    _
  $region85: #{ecomformer_forward.1} parent=0 // pred_fallthru
    _
  // Predicated region
  $region86: #{ecomformer_forward.1} parent=0 // pred_check
    _
  $region87: #{ecomformer_forward.1} parent=0 // pred_check_branch
    %139 = sbr.rel (0) target = $region89
  $region88: #{ecomformer_forward.1} parent=0 // pred_region
    _
  $region89: #{ecomformer_forward.1} parent=0 // pred_fallthru
    _
  // Predicated region
  $region90: #{ecomformer_forward.1} parent=0 // pred_check
    _
  $region91: #{ecomformer_forward.1} parent=0 // pred_check_branch
    %141 = sbr.rel (0) target = $region93
  $region92: #{ecomformer_forward.1} parent=0 // pred_region
    _
  $region93: #{ecomformer_forward.1} parent=0 // pred_fallthru
    _
  // Predicated region
  $region94: #{ecomformer_forward.1} parent=0 // pred_check
    _
  $region95: #{ecomformer_forward.1} parent=0 // pred_check_branch
    %143 = sbr.rel (0) target = $region97
  $region96: #{ecomformer_forward.1} parent=0 // pred_region
    _
  $region97: #{ecomformer_forward.1} parent=0 // pred_fallthru
    _
  // Predicated region
  $region98: #{ecomformer_forward.1} parent=0 // pred_check
    _
  $region99: #{ecomformer_forward.1} parent=0 // pred_check_branch
    %145 = sbr.rel (0) target = $region101
  $region100: #{ecomformer_forward.1} parent=0 // pred_region
    _
  $region101: #{ecomformer_forward.1} parent=0 // pred_fallthru
    _
  // Predicated region
  $region102: #{ecomformer_forward.1} parent=0 // pred_check
    _
  $region103: #{ecomformer_forward.1} parent=0 // pred_check_branch
    %147 = sbr.rel (0) target = $region105
  $region104: #{ecomformer_forward.1} parent=0 // pred_region
    _
  $region105: #{ecomformer_forward.1} parent=0 // pred_fallthru
    _
  // Predicated region
  $region106: #{ecomformer_forward.1} parent=0 // pred_check
    _
  $region107: #{ecomformer_forward.1} parent=0 // pred_check_branch
    %149 = sbr.rel (0) target = $region109
  $region108: #{ecomformer_forward.1} parent=0 // pred_region
    _
  $region109: #{ecomformer_forward.1} parent=0 // pred_fallthru
    _
  // Predicated region
  $region110: #{ecomformer_forward.1} parent=0 // pred_check
    _
  $region111: #{ecomformer_forward.1} parent=0 // pred_check_branch
    %151 = sbr.rel (0) target = $region113
  $region112: #{ecomformer_forward.1} parent=0 // pred_region
    _
  $region113: #{ecomformer_forward.1} parent=0 // pred_fallthru
    _
  // Predicated region
  $region114: #{ecomformer_forward.1} parent=0 // pred_check
    _
  $region115: #{ecomformer_forward.1} parent=0 // pred_check_branch
    %153 = sbr.rel (0) target = $region117
  $region116: #{ecomformer_forward.1} parent=0 // pred_region
    _
  $region117: #{ecomformer_forward.1} parent=0 // pred_fallthru
    _
  // Predicated region
  $region118: #{ecomformer_forward.1} parent=0 // pred_check
    _
  $region119: #{ecomformer_forward.1} parent=0 // pred_check_branch
    %155 = sbr.rel (0) target = $region121
  $region120: #{ecomformer_forward.1} parent=0 // pred_region
    _
  $region121: #{ecomformer_forward.1} parent=0 // pred_fallthru
    _
  // Predicated region
  $region122: #{ecomformer_forward.1} parent=0 // pred_check
    _
  $region123: #{ecomformer_forward.1} parent=0 // pred_check_branch
    %157 = sbr.rel (0) target = $region125
  $region124: #{ecomformer_forward.1} parent=0 // pred_region
    _
  $region125: #{ecomformer_forward.1} parent=0 // pred_fallthru
    _
  // Predicated region
  $region126: #{ecomformer_forward.1} parent=0 // pred_check
    _
  $region127: #{ecomformer_forward.1} parent=0 // pred_check_branch
    %159 = sbr.rel (0) target = $region129
  $region128: #{ecomformer_forward.1} parent=0 // pred_region
    _
  $region129: #{ecomformer_forward.1} parent=0 // pred_fallthru
    _
  // Predicated region
  $region130: #{ecomformer_forward.1} parent=0 // pred_check
    _
  $region131: #{ecomformer_forward.1} parent=0 // pred_check_branch
    %161 = sbr.rel (0) target = $region133
  $region132: #{ecomformer_forward.1} parent=0 // pred_region
    _
  $region133: #{ecomformer_forward.1} parent=0 // pred_fallthru
    _
  // Predicated region
  $region134: #{ecomformer_forward.1} parent=0 // pred_check
    _
  $region135: #{ecomformer_forward.1} parent=0 // pred_check_branch
    %163 = sbr.rel (0) target = $region137
  $region136: #{ecomformer_forward.1} parent=0 // pred_region
    _
  $region137: #{ecomformer_forward.1} parent=0 // pred_fallthru
    _
  // Predicated region
  $region138: #{ecomformer_forward.1} parent=0 // pred_check
    _
  $region139: #{ecomformer_forward.1} parent=0 // pred_check_branch
    %165 = sbr.rel (0) target = $region141
  $region140: #{ecomformer_forward.1} parent=0 // pred_region
    _
  $region141: #{ecomformer_forward.1} parent=0 // pred_fallthru
    _
  // Predicated region
  $region142: #{ecomformer_forward.1} parent=0 // pred_check
    _
  $region143: #{ecomformer_forward.1} parent=0 // pred_check_branch
    %167 = sbr.rel (0) target = $region145
  $region144: #{ecomformer_forward.1} parent=0 // pred_region
    _
  $region145: #{ecomformer_forward.1} parent=0 // pred_fallthru
    _
  // Predicated region
  $region146: #{ecomformer_forward.1} parent=0 // pred_check
    _
  $region147: #{ecomformer_forward.1} parent=0 // pred_check_branch
    %169 = sbr.rel (0) target = $region149
  $region148: #{ecomformer_forward.1} parent=0 // pred_region
    _
  $region149: #{ecomformer_forward.1} parent=0 // pred_fallthru
    _
  // Predicated region
  $region150: #{ecomformer_forward.1} parent=0 // pred_check
    _
  $region151: #{ecomformer_forward.1} parent=0 // pred_check_branch
    %171 = sbr.rel (0) target = $region153
  $region152: #{ecomformer_forward.1} parent=0 // pred_region
    _
  $region153: #{ecomformer_forward.1} parent=0 // pred_fallthru
    _
  // Predicated region
  $region154: #{ecomformer_forward.1} parent=0 // pred_check
    _
  $region155: #{ecomformer_forward.1} parent=0 // pred_check_branch
    %173 = sbr.rel (0) target = $region157
  $region156: #{ecomformer_forward.1} parent=0 // pred_region
    _
  $region157: #{ecomformer_forward.1} parent=0 // pred_fallthru
    _
  // Predicated region
  $region158: #{ecomformer_forward.1} parent=0 // pred_check
    _
  $region159: #{ecomformer_forward.1} parent=0 // pred_check_branch
    %175 = sbr.rel (0) target = $region161
  $region160: #{ecomformer_forward.1} parent=0 // pred_region
    _
  $region161: #{ecomformer_forward.1} parent=0 // pred_fallthru
    _
  // Predicated region
  $region162: #{ecomformer_forward.1} parent=0 // pred_check
    _
  $region163: #{ecomformer_forward.1} parent=0 // pred_check_branch
    %177 = sbr.rel (0) target = $region165
  $region164: #{ecomformer_forward.1} parent=0 // pred_region
    _
  $region165: #{ecomformer_forward.1} parent=0 // pred_fallthru
    _
  // Predicated region
  $region166: #{ecomformer_forward.1} parent=0 // pred_check
    _
  $region167: #{ecomformer_forward.1} parent=0 // pred_check_branch
    %179 = sbr.rel (0) target = $region169
  $region168: #{ecomformer_forward.1} parent=0 // pred_region
    _
  $region169: #{ecomformer_forward.1} parent=0 // pred_fallthru
    _
  // Predicated region
  $region170: #{ecomformer_forward.1} parent=0 // pred_check
    _
  $region171: #{ecomformer_forward.1} parent=0 // pred_check_branch
    %181 = sbr.rel (0) target = $region173
  $region172: #{ecomformer_forward.1} parent=0 // pred_region
    _
  $region173: #{ecomformer_forward.1} parent=0 // pred_fallthru
    _
  // Predicated region
  $region174: #{ecomformer_forward.1} parent=0 // pred_check
    _
  $region175: #{ecomformer_forward.1} parent=0 // pred_check_branch
    %183 = sbr.rel (0) target = $region177
  $region176: #{ecomformer_forward.1} parent=0 // pred_region
    _
  $region177: #{ecomformer_forward.1} parent=0 // pred_fallthru
    _
  %v185 = vld [vmem:[%s5] sm:$0xff]
  %v186 = vld [vmem:[%s5 + $0x8] sm:$0xff]
  %v187 = vld [vmem:[%s5 + $0x10] sm:$0xff]
  %v188 = vld [vmem:[%s5 + $0x18] sm:$0xff]
  %v189 = vld [vmem:[%s5 + $0x20] sm:$0xff]
  %v190 = vld [vmem:[%s5 + $0x28] sm:$0xff]
  %v191 = vld [vmem:[%s7] sm:$0xff]
  %v192 = vld [vmem:[%s7 + $0x8] sm:$0xff]
  %v193 = vld [vmem:[%s7 + $0x10] sm:$0xff]
  %v194 = vld [vmem:[%s7 + $0x18] sm:$0xff]
  %v195 = vld [vmem:[%s7 + $0x20] sm:$0xff]
  %v196 = vld [vmem:[%s7 + $0x28] sm:$0xff]
  %197 = vxpose.xlu0.b32.start [1/16] %v185, 128
  %198 = vxpose.xlu0.b32.cont [2/16] %v186, 128
  %199 = vxpose.xlu0.b32.cont [3/16] %v187, 128
  %200 = vxpose.xlu0.b32.cont [4/16] %v188, 128
  %201 = vxpose.xlu0.b32.cont [5/16] %v189, 128
  %202 = vxpose.xlu0.b32.cont [6/16] %v190, 128
  %203 = vxpose.xlu0.b32.cont [7/16] 0.0, 128
  %204 = vxpose.xlu0.b32.cont [8/16] 0.0, 128
  %205 = vxpose.xlu0.b32.cont [9/16] 0.0, 128
  %206 = vxpose.xlu0.b32.cont [10/16] 0.0, 128
  %207 = vxpose.xlu0.b32.cont [11/16] 0.0, 128
  %208 = vxpose.xlu0.b32.cont [12/16] 0.0, 128
  %209 = vxpose.xlu0.b32.cont [13/16] 0.0, 128
  %210 = vxpose.xlu0.b32.cont [14/16] 0.0, 128
  %211 = vxpose.xlu0.b32.cont [15/16] 0.0, 128
  %212 = vxpose.xlu0.b32.end [16/16] 0.0, 128
  %v213 = vpop.trf.xlu0
  %v214 = vpop.trf.xlu0
  %v215 = vpop.trf.xlu0
  %v216 = vpop.trf.xlu0
  %v217 = vpop.trf.xlu0
  %v218 = vpop.trf.xlu0
  %v219 = vpop.trf.xlu0
  %v220 = vpop.trf.xlu0
  %v221 = vpop.trf.xlu0
  %v222 = vpop.trf.xlu0
  %v223 = vpop.trf.xlu0
  %v224 = vpop.trf.xlu0
  %v225 = vpop.trf.xlu0
  %v226 = vpop.trf.xlu0
  %v227 = vpop.trf.xlu0
  %v228 = vpop.trf.xlu0
  %229 = vxpose.xlu0.b32.start [1/16] %v191, 128
  %230 = vxpose.xlu0.b32.cont [2/16] %v192, 128
  %231 = vxpose.xlu0.b32.cont [3/16] %v193, 128
  %232 = vxpose.xlu0.b32.cont [4/16] %v194, 128
  %233 = vxpose.xlu0.b32.cont [5/16] %v195, 128
  %234 = vxpose.xlu0.b32.cont [6/16] %v196, 128
  %235 = vxpose.xlu0.b32.cont [7/16] 0.0, 128
  %236 = vxpose.xlu0.b32.cont [8/16] 0.0, 128
  %237 = vxpose.xlu0.b32.cont [9/16] 0.0, 128
  %238 = vxpose.xlu0.b32.cont [10/16] 0.0, 128
  %239 = vxpose.xlu0.b32.cont [11/16] 0.0, 128
  %240 = vxpose.xlu0.b32.cont [12/16] 0.0, 128
  %241 = vxpose.xlu0.b32.cont [13/16] 0.0, 128
  %242 = vxpose.xlu0.b32.cont [14/16] 0.0, 128
  %243 = vxpose.xlu0.b32.cont [15/16] 0.0, 128
  %244 = vxpose.xlu0.b32.end [16/16] 0.0, 128
  %v245 = vpop.trf.xlu0
  %v246 = vpop.trf.xlu0
  %v247 = vpop.trf.xlu0
  %v248 = vpop.trf.xlu0
  %v249 = vpop.trf.xlu0
  %v250 = vpop.trf.xlu0
  %v251 = vpop.trf.xlu0
  %v252 = vpop.trf.xlu0
  %v253 = vpop.trf.xlu0
  %v254 = vpop.trf.xlu0
  %v255 = vpop.trf.xlu0
  %v256 = vpop.trf.xlu0
  %v257 = vpop.trf.xlu0
  %v258 = vpop.trf.xlu0
  %v259 = vpop.trf.xlu0
  %v260 = vpop.trf.xlu0
  %v261 = vld [vmem:[%s11] sm:$0xff]
  %v262 = vld [vmem:[%s11 + $0x8] sm:$0xff]
  %v263 = vld [vmem:[%s1] sm:$0xff]
  %v264 = vld [vmem:[%s1 + $0x8] sm:$0xff]
  %v265 = vld [vmem:[%s15] sm:$0xff]
  %v266 = vld [vmem:[%s15 + $0x8] sm:$0xff]
  %v267 = vpack.c.bf16 %v264, %v263
  %v268 = vpack.c.bf16 %v266, %v265
  %v269 = vld [vmem:[%s17] sm:$0x1]
  %v271 = vlaneseq
  %v272 = vshrl.u32 %v271, 7
  %v273 = vsub.s32 0, %v272
  %v274 = vrot.slane %v269, %v273
  %vm276 = vcmask 130048
  %v278 = vsel %vm276, %v267, 0
  %280 = vmatprep.subr.bf16.mxu0 0
  %281 = vmatpush1.bf16.msra.mxu0 %v268
  %282 = vmatprep.subr.bf16.mxu0 0
  %283 = vmatpush1.bf16.msra.mxu0 0
  %284 = vmatprep.subr.bf16.mxu0 0
  %285 = vmatpush1.bf16.msra.mxu0 0
  %286 = vmatprep.subr.bf16.mxu0 0
  %287 = vmatpush1.bf16.msra.mxu0 0
  %288 = vmatprep.subr.bf16.mxu0 0
  %289 = vmatpush1.bf16.msra.mxu0 0
  %290 = vmatprep.subr.bf16.mxu0 0
  %291 = vmatpush1.bf16.msra.mxu0 0
  %292 = vmatprep.subr.bf16.mxu0 0
  %293 = vmatpush1.bf16.msra.mxu0 0
  %294 = vmatprep.subr.bf16.mxu0 0
  %295 = vmatpush1.bf16.msra.mxu0 0
  %296 = vmatprep.subr.bf16.mxu0 0
  %297 = vmatpush1.bf16.msra.mxu0 0
  %298 = vmatprep.subr.bf16.mxu0 0
  %299 = vmatpush1.bf16.msra.mxu0 0
  %300 = vmatprep.subr.bf16.mxu0 0
  %301 = vmatpush1.bf16.msra.mxu0 0
  %302 = vmatprep.subr.bf16.mxu0 0
  %303 = vmatpush1.bf16.msra.mxu0 0
  %304 = vmatprep.subr.bf16.mxu0 0
  %305 = vmatpush1.bf16.msra.mxu0 0
  %306 = vmatprep.subr.bf16.mxu0 0
  %307 = vmatpush1.bf16.msra.mxu0 0
  %308 = vmatprep.subr.bf16.mxu0 0
  %309 = vmatpush1.bf16.msra.mxu0 0
  %310 = vmatprep.subr.bf16.mxu0 0
  %311 = vmatpush1.bf16.msra.mxu0 0
  %312 = vmatprep.mubr.bf16.mxu0 0
  %313 = vmatmul.mubr.bf16.gmra.mrb[0].mxu0 %v278
  %v314 = vpop.f32.mrb[0].mxu0
  %v315 = vadd.f32 %v274, %v314
  %v316 = vpop.f32.mrb[0].mxu0
  %v317 = vpop.f32.mrb[0].mxu0
  %v318 = vadd.f32 %v274, %v317
  %v319 = vpop.f32.mrb[0].mxu0
  %320 = vdwg.mxu0
  %v321 = vld [vmem:[%s3] sm:$0xff]
  %v322 = vld [vmem:[%s3 + $0x8] sm:$0xff]
  %v323 = vld [vmem:[%s3 + $0x10] sm:$0xff]
  %v324 = vld [vmem:[%s3 + $0x18] sm:$0xff]
  %v325 = vld [vmem:[%s3 + $0x20] sm:$0xff]
  %v326 = vld [vmem:[%s3 + $0x28] sm:$0xff]
  %v327 = vmul.f32 %v321, %v321
  %v328 = vmul.f32 %v322, %v322
  %v329 = vmul.f32 %v323, %v323
  %v330 = vmul.f32 %v324, %v324
  %v331 = vmul.f32 %v325, %v325
  %v332 = vmul.f32 %v326, %v326
  %vm333 = vcmask 23552
  %v334 = vsel %vm333, %v327, 0.0
  %335 = vadd.xlane.f32.xlu0 %v334
  %v336 = vpop.xlane.xlu0 %335
  %v337 = vsel %vm333, %v328, 0.0
  %338 = vadd.xlane.f32.xlu0 %v337
  %v339 = vpop.xlane.xlu0 %338
  %v340 = vsel %vm333, %v329, 0.0
  %341 = vadd.xlane.f32.xlu0 %v340
  %v342 = vpop.xlane.xlu0 %341
  %v343 = vsel %vm333, %v330, 0.0
  %344 = vadd.xlane.f32.xlu0 %v343
  %v345 = vpop.xlane.xlu0 %344
  %v346 = vsel %vm333, %v331, 0.0
  %347 = vadd.xlane.f32.xlu0 %v346
  %v348 = vpop.xlane.xlu0 %347
  %v349 = vsel %vm333, %v332, 0.0
  %350 = vadd.xlane.f32.xlu0 %v349
  %v351 = vpop.xlane.xlu0 %350
  %v352 = vadd.f32 %v336, 1e-12
  %v353 = vadd.f32 %v339, 1e-12
  %v354 = vadd.f32 %v342, 1e-12
  %v355 = vadd.f32 %v345, 1e-12
  %v356 = vadd.f32 %v348, 1e-12
  %v357 = vadd.f32 %v351, 1e-12
  %v358 = vrsqrt.pop %v352
  %v359 = vrsqrt.pop %v353
  %v360 = vrsqrt.pop %v354
  %v361 = vrsqrt.pop %v355
  %v362 = vrsqrt.pop %v356
  %v363 = vrsqrt.pop %v357
  %v364 = vmul.f32 %v358, -0.75
  %v365 = vmul.f32 %v359, -0.75
  %v366 = vmul.f32 %v360, -0.75
  %v367 = vmul.f32 %v361, -0.75
  %v368 = vmul.f32 %v362, -0.75
  %v369 = vmul.f32 %v363, -0.75
  %v370 = vld [vmem:[%s19] sm:$0x1]
  %v372 = vlaneseq
  %v373 = vshrl.u32 %v372, 7
  %v374 = vsub.s32 0, %v373
  %v375 = vrot.slane %v370, %v374
  %v377 = vsub.f32 %v364, %v375
  %v378 = vsub.f32 %v365, %v375
  %v379 = vsub.f32 %v366, %v375
  %v380 = vsub.f32 %v367, %v375
  %v381 = vsub.f32 %v368, %v375
  %v382 = vsub.f32 %v369, %v375
  %v383 = vmul.f32 %v377, %v377
  %v384 = vmul.f32 %v378, %v378
  %v385 = vmul.f32 %v379, %v379
  %v386 = vmul.f32 %v380, %v380
  %v387 = vmul.f32 %v381, %v381
  %v388 = vmul.f32 %v382, %v382
  %v389 = vmul.f32 %v383, -7.75
  %v390 = vmul.f32 %v384, -7.75
  %v391 = vmul.f32 %v385, -7.75
  %v392 = vmul.f32 %v386, -7.75
  %v393 = vmul.f32 %v387, -7.75
  %v394 = vmul.f32 %v388, -7.75
  %v395 = vmul.f32 %v389, 1.442695
  %v396 = vpow.pop %v395
  %v397 = vmul.f32 %v390, 1.442695
  %v398 = vpow.pop %v397
  %v399 = vmul.f32 %v391, 1.442695
  %v400 = vpow.pop %v399
  %v401 = vmul.f32 %v392, 1.442695
  %v402 = vpow.pop %v401
  %v403 = vmul.f32 %v393, 1.442695
  %v404 = vpow.pop %v403
  %v405 = vmul.f32 %v394, 1.442695
  %v406 = vpow.pop %v405
  %v407 = vld [vmem:[%s21] sm:$0xff]
  %v408 = vld [vmem:[%s21 + $0x8] sm:$0xff]
  %v409 = vld [vmem:[%s21 + $0x10] sm:$0xff]
  %v410 = vld [vmem:[%s21 + $0x18] sm:$0xff]
  %v411 = vpack.c.bf16 %v398, %v396
  %v412 = vpack.c.bf16 %v402, %v400
  %v413 = vpack.c.bf16 %v406, %v404
  %v414 = vpack.c.bf16 %v408, %v407
  %v415 = vpack.c.bf16 %v410, %v409
  %v416 = vld [vmem:[%s23] sm:$0x1]
  %v418 = vlaneseq
  %v419 = vshrl.u32 %v418, 7
  %v420 = vsub.s32 0, %v419
  %v421 = vrot.slane %v416, %v420
  %vm423 = vcmask 261120
  %v425 = vsel %vm423, %v411, 0
  %v428 = vsel %vm423, %v412, 0
  %v431 = vsel %vm423, %v413, 0
  %433 = vmatprep.subr.bf16.mxu0 0
  %434 = vmatpush1.bf16.msra.mxu0 %v414
  %435 = vmatprep.subr.bf16.mxu0 0
  %436 = vmatpush1.bf16.msra.mxu0 %v415
  %437 = vmatprep.subr.bf16.mxu0 0
  %438 = vmatpush1.bf16.msra.mxu0 0
  %439 = vmatprep.subr.bf16.mxu0 0
  %440 = vmatpush1.bf16.msra.mxu0 0
  %441 = vmatprep.subr.bf16.mxu0 0
  %442 = vmatpush1.bf16.msra.mxu0 0
  %443 = vmatprep.subr.bf16.mxu0 0
  %444 = vmatpush1.bf16.msra.mxu0 0
  %445 = vmatprep.subr.bf16.mxu0 0
  %446 = vmatpush1.bf16.msra.mxu0 0
  %447 = vmatprep.subr.bf16.mxu0 0
  %448 = vmatpush1.bf16.msra.mxu0 0
  %449 = vmatprep.subr.bf16.mxu0 0
  %450 = vmatpush1.bf16.msra.mxu0 0
  %451 = vmatprep.subr.bf16.mxu0 0
  %452 = vmatpush1.bf16.msra.mxu0 0
  %453 = vmatprep.subr.bf16.mxu0 0
  %454 = vmatpush1.bf16.msra.mxu0 0
  %455 = vmatprep.subr.bf16.mxu0 0
  %456 = vmatpush1.bf16.msra.mxu0 0
  %457 = vmatprep.subr.bf16.mxu0 0
  %458 = vmatpush1.bf16.msra.mxu0 0
  %459 = vmatprep.subr.bf16.mxu0 0
  %460 = vmatpush1.bf16.msra.mxu0 0
  %461 = vmatprep.subr.bf16.mxu0 0
  %462 = vmatpush1.bf16.msra.mxu0 0
  %463 = vmatprep.subr.bf16.mxu0 0
  %464 = vmatpush1.bf16.msra.mxu0 0
  %465 = vmatprep.mubr.bf16.mxu0 0
  %466 = vmatmul.mubr.bf16.gmra.mrb[0].mxu0 %v425
  %v467 = vpop.f32.mrb[0].mxu0
  %v468 = vadd.f32 %v421, %v467
  %v469 = vpop.f32.mrb[0].mxu0
  %v470 = vpop.f32.mrb[0].mxu0
  %v471 = vadd.f32 %v421, %v470
  %v472 = vpop.f32.mrb[0].mxu0
  %473 = vmatprep.mubr.bf16.mxu0 0
  %474 = vmatmul.mubr.bf16.gmra.mrb[0].mxu0 %v428
  %v475 = vpop.f32.mrb[0].mxu0
  %v476 = vadd.f32 %v421, %v475
  %v477 = vpop.f32.mrb[0].mxu0
  %v478 = vpop.f32.mrb[0].mxu0
  %v479 = vadd.f32 %v421, %v478
  %v480 = vpop.f32.mrb[0].mxu0
  %481 = vmatprep.mubr.bf16.mxu0 0
  %482 = vmatmul.mubr.bf16.gmra.mrb[0].mxu0 %v431
  %v483 = vpop.f32.mrb[0].mxu0
  %v484 = vadd.f32 %v421, %v483
  %v485 = vpop.f32.mrb[0].mxu0
  %v486 = vpop.f32.mrb[0].mxu0
  %v487 = vadd.f32 %v421, %v486
  %v488 = vpop.f32.mrb[0].mxu0
  %489 = vdwg.mxu0
  %v490 = vmax.f32 %v468, 0.0
  %v491 = vmax.f32 %v471, 0.0
  %v492 = vmax.f32 %v476, 0.0
  %v493 = vmax.f32 %v479, 0.0
  %v494 = vmax.f32 %v484, 0.0
  %v495 = vmax.f32 %v487, 0.0
  %vm496 = vcmp.ne.f32.partialorder %v468, %v468
  %vm497 = vcmp.ne.f32.partialorder %v471, %v471
  %vm498 = vcmp.ne.f32.partialorder %v476, %v476
  %vm499 = vcmp.ne.f32.partialorder %v479, %v479
  %vm500 = vcmp.ne.f32.partialorder %v484, %v484
  %vm501 = vcmp.ne.f32.partialorder %v487, %v487
  %v502 = vadd.f32 %v468, 0.0
  %v503 = vadd.f32 %v471, 0.0
  %v504 = vadd.f32 %v476, 0.0
  %v505 = vadd.f32 %v479, 0.0
  %v506 = vadd.f32 %v484, 0.0
  %v507 = vadd.f32 %v487, 0.0
  %v508 = vand.u32 2147483647, %v468
  %v509 = vand.u32 2147483647, %v471
  %v510 = vand.u32 2147483647, %v476
  %v511 = vand.u32 2147483647, %v479
  %v512 = vand.u32 2147483647, %v484
  %v513 = vand.u32 2147483647, %v487
  %v514 = vsub.f32 0.0, %v508
  %v515 = vsub.f32 0.0, %v509
  %v516 = vsub.f32 0.0, %v510
  %v517 = vsub.f32 0.0, %v511
  %v518 = vsub.f32 0.0, %v512
  %v519 = vsub.f32 0.0, %v513
  %v520 = vmul.f32 %v514, 1.442695
  %v521 = vpow.pop %v520
  %v522 = vmul.f32 %v515, 1.442695
  %v523 = vpow.pop %v522
  %v524 = vmul.f32 %v516, 1.442695
  %v525 = vpow.pop %v524
  %v526 = vmul.f32 %v517, 1.442695
  %v527 = vpow.pop %v526
  %v528 = vmul.f32 %v518, 1.442695
  %v529 = vpow.pop %v528
  %v530 = vmul.f32 %v519, 1.442695
  %v531 = vpow.pop %v530
  %v532 = vadd.f32 %v521, 1.0
  %v533 = vlog2.pop %v532
  %v534 = vmul.f32 %v533, 0.6931472
  %v535 = vmul.f32 -0.5, %v521
  %v536 = vadd.f32 %v535, 1.0
  %v537 = vmul.f32 %v536, %v521
  %v538 = vand.u32 2147483647, %v521
  %vm539 = vcmp.lt.f32.partialorder %v538, 0.0004427343
  %v540 = vsel %vm539, %v537, %v534
  %v541 = vadd.f32 %v523, 1.0
  %v542 = vlog2.pop %v541
  %v543 = vmul.f32 %v542, 0.6931472
  %v544 = vmul.f32 -0.5, %v523
  %v545 = vadd.f32 %v544, 1.0
  %v546 = vmul.f32 %v545, %v523
  %v547 = vand.u32 2147483647, %v523
  %vm548 = vcmp.lt.f32.partialorder %v547, 0.0004427343
  %v549 = vsel %vm548, %v546, %v543
  %v550 = vadd.f32 %v525, 1.0
  %v551 = vlog2.pop %v550
  %v552 = vmul.f32 %v551, 0.6931472
  %v553 = vmul.f32 -0.5, %v525
  %v554 = vadd.f32 %v553, 1.0
  %v555 = vmul.f32 %v554, %v525
  %v556 = vand.u32 2147483647, %v525
  %vm557 = vcmp.lt.f32.partialorder %v556, 0.0004427343
  %v558 = vsel %vm557, %v555, %v552
  %v559 = vadd.f32 %v527, 1.0
  %v560 = vlog2.pop %v559
  %v561 = vmul.f32 %v560, 0.6931472
  %v562 = vmul.f32 -0.5, %v527
  %v563 = vadd.f32 %v562, 1.0
  %v564 = vmul.f32 %v563, %v527
  %v565 = vand.u32 2147483647, %v527
  %vm566 = vcmp.lt.f32.partialorder %v565, 0.0004427343
  %v567 = vsel %vm566, %v564, %v561
  %v568 = vadd.f32 %v529, 1.0
  %v569 = vlog2.pop %v568
  %v570 = vmul.f32 %v569, 0.6931472
  %v571 = vmul.f32 -0.5, %v529
  %v572 = vadd.f32 %v571, 1.0
  %v573 = vmul.f32 %v572, %v529
  %v574 = vand.u32 2147483647, %v529
  %vm575 = vcmp.lt.f32.partialorder %v574, 0.0004427343
  %v576 = vsel %vm575, %v573, %v570
  %v577 = vadd.f32 %v531, 1.0
  %v578 = vlog2.pop %v577
  %v579 = vmul.f32 %v578, 0.6931472
  %v580 = vmul.f32 -0.5, %v531
  %v581 = vadd.f32 %v580, 1.0
  %v582 = vmul.f32 %v581, %v531
  %v583 = vand.u32 2147483647, %v531
  %vm584 = vcmp.lt.f32.partialorder %v583, 0.0004427343
  %v585 = vsel %vm584, %v582, %v579
  %v586 = vadd.f32 %v490, %v540
  %v587 = vadd.f32 %v491, %v549
  %v588 = vadd.f32 %v492, %v558
  %v589 = vadd.f32 %v493, %v567
  %v590 = vadd.f32 %v494, %v576
  %v591 = vadd.f32 %v495, %v585
  %v592 = vsel %vm496, %v502, %v586
  %v593 = vsel %vm497, %v503, %v587
  %v594 = vsel %vm498, %v504, %v588
  %v595 = vsel %vm499, %v505, %v589
  %v596 = vsel %vm500, %v506, %v590
  %v597 = vsel %vm501, %v507, %v591
  %v598 = vmul.f32 %v321, %v358
  %v599 = vmul.f32 %v322, %v359
  %v600 = vmul.f32 %v323, %v360
  %v601 = vmul.f32 %v324, %v361
  %v602 = vmul.f32 %v325, %v362
  %v603 = vmul.f32 %v326, %v363
  %v604 = vmul.f32 %v598, 1.7320508
  %v605 = vmul.f32 %v599, 1.7320508
  %v606 = vmul.f32 %v600, 1.7320508
  %v607 = vmul.f32 %v601, 1.7320508
  %v608 = vmul.f32 %v602, 1.7320508
  %v609 = vmul.f32 %v603, 1.7320508
  %v610 = vmul.f32 %v598, 3.8729835
  %v611 = vmul.f32 %v599, 3.8729835
  %v612 = vmul.f32 %v600, 3.8729835
  %v613 = vmul.f32 %v601, 3.8729835
  %v614 = vmul.f32 %v602, 3.8729835
  %v615 = vmul.f32 %v603, 3.8729835
  %622 = vrot.lane.b32.xlu0 %v598, 127
  %v623 = vpop.permute.xlu0 %622
  %624 = vrot.lane.b32.xlu0 %v599, 127
  %v625 = vpop.permute.xlu0 %624
  %626 = vrot.lane.b32.xlu0 %v600, 127
  %v627 = vpop.permute.xlu0 %626
  %628 = vrot.lane.b32.xlu0 %v601, 127
  %v629 = vpop.permute.xlu0 %628
  %630 = vrot.lane.b32.xlu0 %v602, 127
  %v631 = vpop.permute.xlu0 %630
  %632 = vrot.lane.b32.xlu0 %v603, 127
  %v633 = vpop.permute.xlu0 %632
  %v640 = vmul.f32 %v610, %v623
  %v641 = vmul.f32 %v611, %v625
  %v642 = vmul.f32 %v612, %v627
  %v643 = vmul.f32 %v613, %v629
  %v644 = vmul.f32 %v614, %v631
  %v645 = vmul.f32 %v615, %v633
  %v646 = vmul.f32 %v598, 3.0
  %v647 = vmul.f32 %v599, 3.0
  %v648 = vmul.f32 %v600, 3.0
  %v649 = vmul.f32 %v601, 3.0
  %v650 = vmul.f32 %v602, 3.0
  %v651 = vmul.f32 %v603, 3.0
  %v652 = vmul.f32 %v646, %v598
  %v653 = vmul.f32 %v647, %v599
  %v654 = vmul.f32 %v648, %v600
  %v655 = vmul.f32 %v649, %v601
  %v656 = vmul.f32 %v650, %v602
  %v657 = vmul.f32 %v651, %v603
  %v658 = vsub.f32 %v652, 1.0
  %v659 = vsub.f32 %v653, 1.0
  %v660 = vsub.f32 %v654, 1.0
  %v661 = vsub.f32 %v655, 1.0
  %v662 = vsub.f32 %v656, 1.0
  %v663 = vsub.f32 %v657, 1.0
  %v664 = vmul.f32 %v658, 1.118034
  %v665 = vmul.f32 %v659, 1.118034
  %v666 = vmul.f32 %v660, 1.118034
  %v667 = vmul.f32 %v661, 1.118034
  %v668 = vmul.f32 %v662, 1.118034
  %v669 = vmul.f32 %v663, 1.118034
  %670 = vrot.lane.b32.xlu0 %v598, 126
  %v671 = vpop.permute.xlu0 %670
  %672 = vrot.lane.b32.xlu0 %v599, 126
  %v673 = vpop.permute.xlu0 %672
  %674 = vrot.lane.b32.xlu0 %v600, 126
  %v675 = vpop.permute.xlu0 %674
  %676 = vrot.lane.b32.xlu0 %v601, 126
  %v677 = vpop.permute.xlu0 %676
  %678 = vrot.lane.b32.xlu0 %v602, 126
  %v679 = vpop.permute.xlu0 %678
  %680 = vrot.lane.b32.xlu0 %v603, 126
  %v681 = vpop.permute.xlu0 %680
  %v688 = vmul.f32 %v610, %v671
  %v689 = vmul.f32 %v611, %v673
  %v690 = vmul.f32 %v612, %v675
  %v691 = vmul.f32 %v613, %v677
  %v692 = vmul.f32 %v614, %v679
  %v693 = vmul.f32 %v615, %v681
  %v694 = vmul.f32 %v598, %v598
  %v695 = vmul.f32 %v599, %v599
  %v696 = vmul.f32 %v600, %v600
  %v697 = vmul.f32 %v601, %v601
  %v698 = vmul.f32 %v602, %v602
  %v699 = vmul.f32 %v603, %v603
  %706 = vrot.lane.b32.xlu0 %v694, 127
  %v707 = vpop.permute.xlu0 %706
  %708 = vrot.lane.b32.xlu0 %v695, 127
  %v709 = vpop.permute.xlu0 %708
  %710 = vrot.lane.b32.xlu0 %v696, 127
  %v711 = vpop.permute.xlu0 %710
  %712 = vrot.lane.b32.xlu0 %v697, 127
  %v713 = vpop.permute.xlu0 %712
  %714 = vrot.lane.b32.xlu0 %v698, 127
  %v715 = vpop.permute.xlu0 %714
  %716 = vrot.lane.b32.xlu0 %v699, 127
  %v717 = vpop.permute.xlu0 %716
  %v724 = vsub.f32 %v694, %v707
  %v725 = vsub.f32 %v695, %v709
  %v726 = vsub.f32 %v696, %v711
  %v727 = vsub.f32 %v697, %v713
  %v728 = vsub.f32 %v698, %v715
  %v729 = vsub.f32 %v699, %v717
  %v730 = vmul.f32 %v724, 1.9364917
  %v731 = vmul.f32 %v725, 1.9364917
  %v732 = vmul.f32 %v726, 1.9364917
  %v733 = vmul.f32 %v727, 1.9364917
  %v734 = vmul.f32 %v728, 1.9364917
  %v735 = vmul.f32 %v729, 1.9364917
  %737 = vset.pattern.permute.xlu0 0
  %738 = vperm.xlu0 %737, %v604
  %v739 = vpop.permute.xlu0 %738
  %742 = vset.pattern.permute.xlu0 0
  %743 = vperm.xlu0 %742, %v605
  %v744 = vpop.permute.xlu0 %743
  %747 = vset.pattern.permute.xlu0 0
  %748 = vperm.xlu0 %747, %v606
  %v749 = vpop.permute.xlu0 %748
  %752 = vset.pattern.permute.xlu0 0
  %753 = vperm.xlu0 %752, %v607
  %v754 = vpop.permute.xlu0 %753
  %757 = vset.pattern.permute.xlu0 0
  %758 = vperm.xlu0 %757, %v608
  %v759 = vpop.permute.xlu0 %758
  %762 = vset.pattern.permute.xlu0 0
  %763 = vperm.xlu0 %762, %v609
  %v764 = vpop.permute.xlu0 %763
  %766 = vset.pattern.permute.xlu0 1
  %767 = vperm.xlu0 %766, %v604
  %v768 = vpop.permute.xlu0 %767
  %770 = vset.pattern.permute.xlu0 1
  %771 = vperm.xlu0 %770, %v605
  %v772 = vpop.permute.xlu0 %771
  %774 = vset.pattern.permute.xlu0 1
  %775 = vperm.xlu0 %774, %v606
  %v776 = vpop.permute.xlu0 %775
  %778 = vset.pattern.permute.xlu0 1
  %779 = vperm.xlu0 %778, %v607
  %v780 = vpop.permute.xlu0 %779
  %782 = vset.pattern.permute.xlu0 1
  %783 = vperm.xlu0 %782, %v608
  %v784 = vpop.permute.xlu0 %783
  %786 = vset.pattern.permute.xlu0 1
  %787 = vperm.xlu0 %786, %v609
  %v788 = vpop.permute.xlu0 %787
  %790 = vset.pattern.permute.xlu0 2
  %791 = vperm.xlu0 %790, %v604
  %v792 = vpop.permute.xlu0 %791
  %794 = vset.pattern.permute.xlu0 2
  %795 = vperm.xlu0 %794, %v605
  %v796 = vpop.permute.xlu0 %795
  %798 = vset.pattern.permute.xlu0 2
  %799 = vperm.xlu0 %798, %v606
  %v800 = vpop.permute.xlu0 %799
  %802 = vset.pattern.permute.xlu0 2
  %803 = vperm.xlu0 %802, %v607
  %v804 = vpop.permute.xlu0 %803
  %806 = vset.pattern.permute.xlu0 2
  %807 = vperm.xlu0 %806, %v608
  %v808 = vpop.permute.xlu0 %807
  %810 = vset.pattern.permute.xlu0 2
  %811 = vperm.xlu0 %810, %v609
  %v812 = vpop.permute.xlu0 %811
  %vm814 = vcmask 64512
  %v815 = vsel %vm814, %v739, %v768
  %v816 = vsel %vm814, %v744, %v772
  %v817 = vsel %vm814, %v749, %v776
  %v818 = vsel %vm814, %v754, %v780
  %v819 = vsel %vm814, %v759, %v784
  %v820 = vsel %vm814, %v764, %v788
  %v821 = vsel %vm276, %v815, %v792
  %v822 = vsel %vm276, %v816, %v796
  %v823 = vsel %vm276, %v817, %v800
  %v824 = vsel %vm276, %v818, %v804
  %v825 = vsel %vm276, %v819, %v808
  %v826 = vsel %vm276, %v820, %v812
  %828 = vset.pattern.permute.xlu0 0
  %829 = vperm.xlu0 %828, %v640
  %v830 = vpop.permute.xlu0 %829
  %833 = vset.pattern.permute.xlu0 0
  %834 = vperm.xlu0 %833, %v641
  %v835 = vpop.permute.xlu0 %834
  %838 = vset.pattern.permute.xlu0 0
  %839 = vperm.xlu0 %838, %v642
  %v840 = vpop.permute.xlu0 %839
  %843 = vset.pattern.permute.xlu0 0
  %844 = vperm.xlu0 %843, %v643
  %v845 = vpop.permute.xlu0 %844
  %848 = vset.pattern.permute.xlu0 0
  %849 = vperm.xlu0 %848, %v644
  %v850 = vpop.permute.xlu0 %849
  %853 = vset.pattern.permute.xlu0 0
  %854 = vperm.xlu0 %853, %v645
  %v855 = vpop.permute.xlu0 %854
  %857 = vset.pattern.permute.xlu0 1
  %858 = vperm.xlu0 %857, %v640
  %v859 = vpop.permute.xlu0 %858
  %861 = vset.pattern.permute.xlu0 1
  %862 = vperm.xlu0 %861, %v641
  %v863 = vpop.permute.xlu0 %862
  %865 = vset.pattern.permute.xlu0 1
  %866 = vperm.xlu0 %865, %v642
  %v867 = vpop.permute.xlu0 %866
  %869 = vset.pattern.permute.xlu0 1
  %870 = vperm.xlu0 %869, %v643
  %v871 = vpop.permute.xlu0 %870
  %873 = vset.pattern.permute.xlu0 1
  %874 = vperm.xlu0 %873, %v644
  %v875 = vpop.permute.xlu0 %874
  %877 = vset.pattern.permute.xlu0 1
  %878 = vperm.xlu0 %877, %v645
  %v879 = vpop.permute.xlu0 %878
  %882 = vset.pattern.permute.xlu0 2
  %883 = vperm.xlu0 %882, %v664
  %v884 = vpop.permute.xlu0 %883
  %887 = vset.pattern.permute.xlu0 2
  %888 = vperm.xlu0 %887, %v665
  %v889 = vpop.permute.xlu0 %888
  %892 = vset.pattern.permute.xlu0 2
  %893 = vperm.xlu0 %892, %v666
  %v894 = vpop.permute.xlu0 %893
  %897 = vset.pattern.permute.xlu0 2
  %898 = vperm.xlu0 %897, %v667
  %v899 = vpop.permute.xlu0 %898
  %902 = vset.pattern.permute.xlu0 2
  %903 = vperm.xlu0 %902, %v668
  %v904 = vpop.permute.xlu0 %903
  %907 = vset.pattern.permute.xlu0 2
  %908 = vperm.xlu0 %907, %v669
  %v909 = vpop.permute.xlu0 %908
  %912 = vset.pattern.permute.xlu0 0
  %913 = vperm.xlu0 %912, %v688
  %v914 = vpop.permute.xlu0 %913
  %917 = vset.pattern.permute.xlu0 0
  %918 = vperm.xlu0 %917, %v689
  %v919 = vpop.permute.xlu0 %918
  %922 = vset.pattern.permute.xlu0 0
  %923 = vperm.xlu0 %922, %v690
  %v924 = vpop.permute.xlu0 %923
  %927 = vset.pattern.permute.xlu0 0
  %928 = vperm.xlu0 %927, %v691
  %v929 = vpop.permute.xlu0 %928
  %932 = vset.pattern.permute.xlu0 0
  %933 = vperm.xlu0 %932, %v692
  %v934 = vpop.permute.xlu0 %933
  %937 = vset.pattern.permute.xlu0 0
  %938 = vperm.xlu0 %937, %v693
  %v939 = vpop.permute.xlu0 %938
  %942 = vset.pattern.permute.xlu0 0
  %943 = vperm.xlu0 %942, %v730
  %v944 = vpop.permute.xlu0 %943
  %947 = vset.pattern.permute.xlu0 0
  %948 = vperm.xlu0 %947, %v731
  %v949 = vpop.permute.xlu0 %948
  %952 = vset.pattern.permute.xlu0 0
  %953 = vperm.xlu0 %952, %v732
  %v954 = vpop.permute.xlu0 %953
  %957 = vset.pattern.permute.xlu0 0
  %958 = vperm.xlu0 %957, %v733
  %v959 = vpop.permute.xlu0 %958
  %962 = vset.pattern.permute.xlu0 0
  %963 = vperm.xlu0 %962, %v734
  %v964 = vpop.permute.xlu0 %963
  %967 = vset.pattern.permute.xlu0 0
  %968 = vperm.xlu0 %967, %v735
  %v969 = vpop.permute.xlu0 %968
  %v971 = vsel %vm814, %v830, %v859
  %v972 = vsel %vm814, %v835, %v863
  %v973 = vsel %vm814, %v840, %v867
  %v974 = vsel %vm814, %v845, %v871
  %v975 = vsel %vm814, %v850, %v875
  %v976 = vsel %vm814, %v855, %v879
  %v977 = vsel %vm276, %v971, %v884
  %v978 = vsel %vm276, %v972, %v889
  %v979 = vsel %vm276, %v973, %v894
  %v980 = vsel %vm276, %v974, %v899
  %v981 = vsel %vm276, %v975, %v904
  %v982 = vsel %vm276, %v976, %v909
  %vm983 = vcmask 195584
  %v984 = vsel %vm983, %v977, %v914
  %v985 = vsel %vm983, %v978, %v919
  %v986 = vsel %vm983, %v979, %v924
  %v987 = vsel %vm983, %v980, %v929
  %v988 = vsel %vm983, %v981, %v934
  %v989 = vsel %vm983, %v982, %v939
  %v990 = vsel %vm423, %v984, %v944
  %v991 = vsel %vm423, %v985, %v949
  %v992 = vsel %vm423, %v986, %v954
  %v993 = vsel %vm423, %v987, %v959
  %v994 = vsel %vm423, %v988, %v964
  %v995 = vsel %vm423, %v989, %v969
  %v996 = vld [vmem:[%s25] sm:$0xff]
  %v997 = vld [vmem:[%s25 + $0x8] sm:$0xff]
  %v998 = vld [vmem:[%s25 + $0x10] sm:$0xff]
  %v999 = vld [vmem:[%s25 + $0x18] sm:$0xff]
  %v1000 = vpack.c.bf16 %v318, %v315
  %v1001 = vpack.c.bf16 %v997, %v996
  %v1002 = vpack.c.bf16 %v999, %v998
  %v1003 = vld [vmem:[%s27] sm:$0x1]
  %v1005 = vlaneseq
  %v1006 = vshrl.u32 %v1005, 7
  %v1007 = vsub.s32 0, %v1006
  %v1008 = vrot.slane %v1003, %v1007
  %v1011 = vsel %vm423, %v1000, 0
  %1013 = vmatprep.subr.bf16.mxu0 0
  %1014 = vmatpush1.bf16.msra.mxu0 %v1001
  %1015 = vmatprep.subr.bf16.mxu0 0
  %1016 = vmatpush1.bf16.msra.mxu0 %v1002
  %1017 = vmatprep.subr.bf16.mxu0 0
  %1018 = vmatpush1.bf16.msra.mxu0 0
  %1019 = vmatprep.subr.bf16.mxu0 0
  %1020 = vmatpush1.bf16.msra.mxu0 0
  %1021 = vmatprep.subr.bf16.mxu0 0
  %1022 = vmatpush1.bf16.msra.mxu0 0
  %1023 = vmatprep.subr.bf16.mxu0 0
  %1024 = vmatpush1.bf16.msra.mxu0 0
  %1025 = vmatprep.subr.bf16.mxu0 0
  %1026 = vmatpush1.bf16.msra.mxu0 0
  %1027 = vmatprep.subr.bf16.mxu0 0
  %1028 = vmatpush1.bf16.msra.mxu0 0
  %1029 = vmatprep.subr.bf16.mxu0 0
  %1030 = vmatpush1.bf16.msra.mxu0 0
  %1031 = vmatprep.subr.bf16.mxu0 0
  %1032 = vmatpush1.bf16.msra.mxu0 0
  %1033 = vmatprep.subr.bf16.mxu0 0
  %1034 = vmatpush1.bf16.msra.mxu0 0
  %1035 = vmatprep.subr.bf16.mxu0 0
  %1036 = vmatpush1.bf16.msra.mxu0 0
  %1037 = vmatprep.subr.bf16.mxu0 0
  %1038 = vmatpush1.bf16.msra.mxu0 0
  %1039 = vmatprep.subr.bf16.mxu0 0
  %1040 = vmatpush1.bf16.msra.mxu0 0
  %1041 = vmatprep.subr.bf16.mxu0 0
  %1042 = vmatpush1.bf16.msra.mxu0 0
  %1043 = vmatprep.subr.bf16.mxu0 0
  %1044 = vmatpush1.bf16.msra.mxu0 0
  %1045 = vmatprep.mubr.bf16.mxu0 0
  %1046 = vmatmul.mubr.bf16.gmra.mrb[0].mxu0 %v1011
  %v1047 = vpop.f32.mrb[0].mxu0
  %v1048 = vadd.f32 %v1008, %v1047
  %v1049 = vpop.f32.mrb[0].mxu0
  %v1050 = vpop.f32.mrb[0].mxu0
  %v1051 = vadd.f32 %v1008, %v1050
  %v1052 = vpop.f32.mrb[0].mxu0
  %1053 = vdwg.mxu0
  %v1054 = vld [vmem:[%s29] sm:$0xff]
  %v1055 = vld [vmem:[%s29 + $0x8] sm:$0xff]
  %v1056 = vld [vmem:[%s29 + $0x10] sm:$0xff]
  %v1057 = vld [vmem:[%s29 + $0x18] sm:$0xff]
  %v1058 = vpack.c.bf16 %v593, %v592
  %v1059 = vpack.c.bf16 %v595, %v594
  %v1060 = vpack.c.bf16 %v597, %v596
  %v1061 = vpack.c.bf16 %v1055, %v1054
  %v1062 = vpack.c.bf16 %v1057, %v1056
  %v1063 = vld [vmem:[%s31] sm:$0x1]
  %v1065 = vlaneseq
  %v1066 = vshrl.u32 %v1065, 7
  %v1067 = vsub.s32 0, %v1066
  %v1068 = vrot.slane %v1063, %v1067
  %v1071 = vsel %vm423, %v1058, 0
  %v1074 = vsel %vm423, %v1059, 0
  %v1077 = vsel %vm423, %v1060, 0
  %1079 = vmatprep.subr.bf16.mxu0 0
  %1080 = vmatpush1.bf16.msra.mxu0 %v1061
  %1081 = vmatprep.subr.bf16.mxu0 0
  %1082 = vmatpush1.bf16.msra.mxu0 %v1062
  %1083 = vmatprep.subr.bf16.mxu0 0
  %1084 = vmatpush1.bf16.msra.mxu0 0
  %1085 = vmatprep.subr.bf16.mxu0 0
  %1086 = vmatpush1.bf16.msra.mxu0 0
  %1087 = vmatprep.subr.bf16.mxu0 0
  %1088 = vmatpush1.bf16.msra.mxu0 0
  %1089 = vmatprep.subr.bf16.mxu0 0
  %1090 = vmatpush1.bf16.msra.mxu0 0
  %1091 = vmatprep.subr.bf16.mxu0 0
  %1092 = vmatpush1.bf16.msra.mxu0 0
  %1093 = vmatprep.subr.bf16.mxu0 0
  %1094 = vmatpush1.bf16.msra.mxu0 0
  %1095 = vmatprep.subr.bf16.mxu0 0
  %1096 = vmatpush1.bf16.msra.mxu0 0
  %1097 = vmatprep.subr.bf16.mxu0 0
  %1098 = vmatpush1.bf16.msra.mxu0 0
  %1099 = vmatprep.subr.bf16.mxu0 0
  %1100 = vmatpush1.bf16.msra.mxu0 0
  %1101 = vmatprep.subr.bf16.mxu0 0
  %1102 = vmatpush1.bf16.msra.mxu0 0
  %1103 = vmatprep.subr.bf16.mxu0 0
  %1104 = vmatpush1.bf16.msra.mxu0 0
  %1105 = vmatprep.subr.bf16.mxu0 0
  %1106 = vmatpush1.bf16.msra.mxu0 0
  %1107 = vmatprep.subr.bf16.mxu0 0
  %1108 = vmatpush1.bf16.msra.mxu0 0
  %1109 = vmatprep.subr.bf16.mxu0 0
  %1110 = vmatpush1.bf16.msra.mxu0 0
  %1111 = vmatprep.mubr.bf16.mxu0 0
  %1112 = vmatmul.mubr.bf16.gmra.mrb[0].mxu0 %v1071
  %v1113 = vpop.f32.mrb[0].mxu0
  %v1114 = vadd.f32 %v1068, %v1113
  %v1115 = vpop.f32.mrb[0].mxu0
  %v1116 = vpop.f32.mrb[0].mxu0
  %v1117 = vadd.f32 %v1068, %v1116
  %v1118 = vpop.f32.mrb[0].mxu0
  %1119 = vmatprep.mubr.bf16.mxu0 0
  %1120 = vmatmul.mubr.bf16.gmra.mrb[0].mxu0 %v1074
  %v1121 = vpop.f32.mrb[0].mxu0
  %v1122 = vadd.f32 %v1068, %v1121
  %v1123 = vpop.f32.mrb[0].mxu0
  %v1124 = vpop.f32.mrb[0].mxu0
  %v1125 = vadd.f32 %v1068, %v1124
  %v1126 = vpop.f32.mrb[0].mxu0
  %1127 = vmatprep.mubr.bf16.mxu0 0
  %1128 = vmatmul.mubr.bf16.gmra.mrb[0].mxu0 %v1077
  %v1129 = vpop.f32.mrb[0].mxu0
  %v1130 = vadd.f32 %v1068, %v1129
  %v1131 = vpop.f32.mrb[0].mxu0
  %v1132 = vpop.f32.mrb[0].mxu0
  %v1133 = vadd.f32 %v1068, %v1132
  %v1134 = vpop.f32.mrb[0].mxu0
  %1135 = vdwg.mxu0
  %v1136 = vpack.c.bf16 %v192, %v191
  %v1137 = vpack.c.bf16 %v194, %v193
  %v1138 = vpack.c.bf16 %v196, %v195
  %v1139 = vpack.c.bf16 %v1051, %v1048
  %v1141 = vsel %vm276, %v1136, 0
  %v1144 = vsel %vm276, %v1137, 0
  %v1147 = vsel %vm276, %v1138, 0
  %1149 = vmatprep.subr.bf16.mxu0 0
  %1150 = vmatpush1.bf16.msra.mxu0 %v1139
  %1151 = vmatprep.subr.bf16.mxu0 0
  %1152 = vmatpush1.bf16.msra.mxu0 0
  %1153 = vmatprep.subr.bf16.mxu0 0
  %1154 = vmatpush1.bf16.msra.mxu0 0
  %1155 = vmatprep.subr.bf16.mxu0 0
  %1156 = vmatpush1.bf16.msra.mxu0 0
  %1157 = vmatprep.subr.bf16.mxu0 0
  %1158 = vmatpush1.bf16.msra.mxu0 0
  %1159 = vmatprep.subr.bf16.mxu0 0
  %1160 = vmatpush1.bf16.msra.mxu0 0
  %1161 = vmatprep.subr.bf16.mxu0 0
  %1162 = vmatpush1.bf16.msra.mxu0 0
  %1163 = vmatprep.subr.bf16.mxu0 0
  %1164 = vmatpush1.bf16.msra.mxu0 0
  %1165 = vmatprep.subr.bf16.mxu0 0
  %1166 = vmatpush1.bf16.msra.mxu0 0
  %1167 = vmatprep.subr.bf16.mxu0 0
  %1168 = vmatpush1.bf16.msra.mxu0 0
  %1169 = vmatprep.subr.bf16.mxu0 0
  %1170 = vmatpush1.bf16.msra.mxu0 0
  %1171 = vmatprep.subr.bf16.mxu0 0
  %1172 = vmatpush1.bf16.msra.mxu0 0
  %1173 = vmatprep.subr.bf16.mxu0 0
  %1174 = vmatpush1.bf16.msra.mxu0 0
  %1175 = vmatprep.subr.bf16.mxu0 0
  %1176 = vmatpush1.bf16.msra.mxu0 0
  %1177 = vmatprep.subr.bf16.mxu0 0
  %1178 = vmatpush1.bf16.msra.mxu0 0
  %1179 = vmatprep.subr.bf16.mxu0 0
  %1180 = vmatpush1.bf16.msra.mxu0 0
  %1181 = vmatprep.mubr.bf16.mxu0 0
  %1182 = vmatmul.mubr.bf16.gmra.mrb[0].mxu0 %v1141
  %v1183 = vpop.f32.mrb[0].mxu0
  %v1184 = vadd.f32 0.0, %v1183
  %v1185 = vpop.f32.mrb[0].mxu0
  %v1186 = vpop.f32.mrb[0].mxu0
  %v1187 = vadd.f32 0.0, %v1186
  %v1188 = vpop.f32.mrb[0].mxu0
  %1189 = vmatprep.mubr.bf16.mxu0 0
  %1190 = vmatmul.mubr.bf16.gmra.mrb[0].mxu0 %v1144
  %v1191 = vpop.f32.mrb[0].mxu0
  %v1192 = vadd.f32 0.0, %v1191
  %v1193 = vpop.f32.mrb[0].mxu0
  %v1194 = vpop.f32.mrb[0].mxu0
  %v1195 = vadd.f32 0.0, %v1194
  %v1196 = vpop.f32.mrb[0].mxu0
  %1197 = vmatprep.mubr.bf16.mxu0 0
  %1198 = vmatmul.mubr.bf16.gmra.mrb[0].mxu0 %v1147
  %v1199 = vpop.f32.mrb[0].mxu0
  %v1200 = vadd.f32 0.0, %v1199
  %v1201 = vpop.f32.mrb[0].mxu0
  %v1202 = vpop.f32.mrb[0].mxu0
  %v1203 = vadd.f32 0.0, %v1202
  %v1204 = vpop.f32.mrb[0].mxu0
  %1205 = vdwg.mxu0
  %v1206 = vpack.c.bf16 %v186, %v185
  %v1207 = vpack.c.bf16 %v188, %v187
  %v1208 = vpack.c.bf16 %v190, %v189
  %v1210 = vsel %vm276, %v1206, 0
  %v1213 = vsel %vm276, %v1207, 0
  %v1216 = vsel %vm276, %v1208, 0
  %1218 = vmatprep.subr.bf16.mxu0 0
  %1219 = vmatpush1.bf16.msra.mxu0 %v1139
  %1220 = vmatprep.subr.bf16.mxu0 0
  %1221 = vmatpush1.bf16.msra.mxu0 0
  %1222 = vmatprep.subr.bf16.mxu0 0
  %1223 = vmatpush1.bf16.msra.mxu0 0
  %1224 = vmatprep.subr.bf16.mxu0 0
  %1225 = vmatpush1.bf16.msra.mxu0 0
  %1226 = vmatprep.subr.bf16.mxu0 0
  %1227 = vmatpush1.bf16.msra.mxu0 0
  %1228 = vmatprep.subr.bf16.mxu0 0
  %1229 = vmatpush1.bf16.msra.mxu0 0
  %1230 = vmatprep.subr.bf16.mxu0 0
  %1231 = vmatpush1.bf16.msra.mxu0 0
  %1232 = vmatprep.subr.bf16.mxu0 0
  %1233 = vmatpush1.bf16.msra.mxu0 0
  %1234 = vmatprep.subr.bf16.mxu0 0
  %1235 = vmatpush1.bf16.msra.mxu0 0
  %1236 = vmatprep.subr.bf16.mxu0 0
  %1237 = vmatpush1.bf16.msra.mxu0 0
  %1238 = vmatprep.subr.bf16.mxu0 0
  %1239 = vmatpush1.bf16.msra.mxu0 0
  %1240 = vmatprep.subr.bf16.mxu0 0
  %1241 = vmatpush1.bf16.msra.mxu0 0
  %1242 = vmatprep.subr.bf16.mxu0 0
  %1243 = vmatpush1.bf16.msra.mxu0 0
  %1244 = vmatprep.subr.bf16.mxu0 0
  %1245 = vmatpush1.bf16.msra.mxu0 0
  %1246 = vmatprep.subr.bf16.mxu0 0
  %1247 = vmatpush1.bf16.msra.mxu0 0
  %1248 = vmatprep.subr.bf16.mxu0 0
  %1249 = vmatpush1.bf16.msra.mxu0 0
  %1250 = vmatprep.mubr.bf16.mxu0 0
  %1251 = vmatmul.mubr.bf16.gmra.mrb[0].mxu0 %v1210
  %v1252 = vpop.f32.mrb[0].mxu0
  %v1253 = vadd.f32 0.0, %v1252
  %v1254 = vpop.f32.mrb[0].mxu0
  %v1255 = vpop.f32.mrb[0].mxu0
  %v1256 = vadd.f32 0.0, %v1255
  %v1257 = vpop.f32.mrb[0].mxu0
  %1258 = vmatprep.mubr.bf16.mxu0 0
  %1259 = vmatmul.mubr.bf16.gmra.mrb[0].mxu0 %v1213
  %v1260 = vpop.f32.mrb[0].mxu0
  %v1261 = vadd.f32 0.0, %v1260
  %v1262 = vpop.f32.mrb[0].mxu0
  %v1263 = vpop.f32.mrb[0].mxu0
  %v1264 = vadd.f32 0.0, %v1263
  %v1265 = vpop.f32.mrb[0].mxu0
  %1266 = vmatprep.mubr.bf16.mxu0 0
  %1267 = vmatmul.mubr.bf16.gmra.mrb[0].mxu0 %v1216
  %v1268 = vpop.f32.mrb[0].mxu0
  %v1269 = vadd.f32 0.0, %v1268
  %v1270 = vpop.f32.mrb[0].mxu0
  %v1271 = vpop.f32.mrb[0].mxu0
  %v1272 = vadd.f32 0.0, %v1271
  %v1273 = vpop.f32.mrb[0].mxu0
  %1274 = vdwg.mxu0
  %v1275 = vld [vmem:[%s33] sm:$0xff]
  %v1276 = vld [vmem:[%s33 + $0x8] sm:$0xff]
  %v1277 = vld [vmem:[%s33 + $0x10] sm:$0xff]
  %v1278 = vld [vmem:[%s33 + $0x18] sm:$0xff]
  %v1279 = vld [vmem:[%s33 + $0x20] sm:$0xff]
  %v1280 = vld [vmem:[%s33 + $0x28] sm:$0xff]
  %v1281 = vld [vmem:[%s33 + $0x30] sm:$0xff]
  %v1282 = vld [vmem:[%s33 + $0x38] sm:$0xff]
  %v1283 = vld [vmem:[%s33 + $0x40] sm:$0xff]
  %v1284 = vld [vmem:[%s33 + $0x48] sm:$0xff]
  %v1285 = vld [vmem:[%s33 + $0x50] sm:$0xff]
  %v1286 = vld [vmem:[%s33 + $0x58] sm:$0xff]
  %v1287 = vpack.c.bf16 %v1187, %v1184
  %v1288 = vpack.c.bf16 %v1195, %v1192
  %v1289 = vpack.c.bf16 %v1203, %v1200
  %v1290 = vpack.c.bf16 %v1276, %v1275
  %v1291 = vpack.c.bf16 %v1278, %v1277
  %v1292 = vpack.c.bf16 %v1280, %v1279
  %v1293 = vpack.c.bf16 %v1282, %v1281
  %v1294 = vpack.c.bf16 %v1284, %v1283
  %v1295 = vpack.c.bf16 %v1286, %v1285
  %v1296 = vld [vmem:[%s35] sm:$0xff]
  %v1297 = vld [vmem:[%s35 + $0x8] sm:$0xff]
  %v1298 = vld [vmem:[%s35 + $0x10] sm:$0xff]
  %v1299 = vld [vmem:[%s35 + $0x18] sm:$0xff]
  %v1300 = vld [vmem:[%s35 + $0x20] sm:$0xff]
  %v1301 = vld [vmem:[%s35 + $0x28] sm:$0xff]
  %v1302 = vld [vmem:[%s35 + $0x30] sm:$0xff]
  %v1303 = vld [vmem:[%s35 + $0x38] sm:$0xff]
  %v1304 = vld [vmem:[%s35 + $0x40] sm:$0xff]
  %v1305 = vld [vmem:[%s35 + $0x48] sm:$0xff]
  %v1306 = vld [vmem:[%s35 + $0x50] sm:$0xff]
  %v1307 = vld [vmem:[%s35 + $0x58] sm:$0xff]
  %v1308 = vpack.c.bf16 %v1256, %v1253
  %v1309 = vpack.c.bf16 %v1264, %v1261
  %v1310 = vpack.c.bf16 %v1272, %v1269
  %v1311 = vpack.c.bf16 %v1297, %v1296
  %v1312 = vpack.c.bf16 %v1299, %v1298
  %v1313 = vpack.c.bf16 %v1301, %v1300
  %v1314 = vpack.c.bf16 %v1303, %v1302
  %v1315 = vpack.c.bf16 %v1305, %v1304
  %v1316 = vpack.c.bf16 %v1307, %v1306
  %vm1317 = vcmask 785408
  %v1319 = vsel %vm1317, %v1308, 0
  %v1322 = vsel %vm1317, %v1309, 0
  %v1325 = vsel %vm1317, %v1310, 0
  %1327 = vmatprep.subr.bf16.mxu0 0
  %1328 = vmatpush1.bf16.msra.mxu0 %v1311
  %1329 = vmatprep.subr.bf16.mxu0 0
  %1330 = vmatpush1.bf16.msra.mxu0 %v1312
  %1331 = vmatprep.subr.bf16.mxu0 0
  %1332 = vmatpush1.bf16.msra.mxu0 %v1313
  %1333 = vmatprep.subr.bf16.mxu0 0
  %1334 = vmatpush1.bf16.msra.mxu0 %v1314
  %1335 = vmatprep.subr.bf16.mxu0 0
  %1336 = vmatpush1.bf16.msra.mxu0 %v1315
  %1337 = vmatprep.subr.bf16.mxu0 0
  %1338 = vmatpush1.bf16.msra.mxu0 %v1316
  %1339 = vmatprep.subr.bf16.mxu0 0
  %1340 = vmatpush1.bf16.msra.mxu0 0
  %1341 = vmatprep.subr.bf16.mxu0 0
  %1342 = vmatpush1.bf16.msra.mxu0 0
  %1343 = vmatprep.subr.bf16.mxu0 0
  %1344 = vmatpush1.bf16.msra.mxu0 0
  %1345 = vmatprep.subr.bf16.mxu0 0
  %1346 = vmatpush1.bf16.msra.mxu0 0
  %1347 = vmatprep.subr.bf16.mxu0 0
  %1348 = vmatpush1.bf16.msra.mxu0 0
  %1349 = vmatprep.subr.bf16.mxu0 0
  %1350 = vmatpush1.bf16.msra.mxu0 0
  %1351 = vmatprep.subr.bf16.mxu0 0
  %1352 = vmatpush1.bf16.msra.mxu0 0
  %1353 = vmatprep.subr.bf16.mxu0 0
  %1354 = vmatpush1.bf16.msra.mxu0 0
  %1355 = vmatprep.subr.bf16.mxu0 0
  %1356 = vmatpush1.bf16.msra.mxu0 0
  %1357 = vmatprep.subr.bf16.mxu0 0
  %1358 = vmatpush1.bf16.msra.mxu0 0
  %1359 = vmatprep.mubr.bf16.mxu0 0
  %1360 = vmatmul.mubr.bf16.gmra.mrb[0].mxu0 %v1319
  %v1361 = vpop.f32.mrb[0].mxu0
  %v1362 = vadd.f32 0.0, %v1361
  %v1363 = vpop.f32.mrb[0].mxu0
  %v1364 = vpop.f32.mrb[0].mxu0
  %v1365 = vadd.f32 0.0, %v1364
  %v1366 = vpop.f32.mrb[0].mxu0
  %1367 = vmatprep.mubr.bf16.mxu0 0
  %1368 = vmatmul.mubr.bf16.gmra.mrb[0].mxu0 %v1322
  %v1369 = vpop.f32.mrb[0].mxu0
  %v1370 = vadd.f32 0.0, %v1369
  %v1371 = vpop.f32.mrb[0].mxu0
  %v1372 = vpop.f32.mrb[0].mxu0
  %v1373 = vadd.f32 0.0, %v1372
  %v1374 = vpop.f32.mrb[0].mxu0
  %1375 = vmatprep.mubr.bf16.mxu0 0
  %1376 = vmatmul.mubr.bf16.gmra.mrb[0].mxu0 %v1325
  %v1377 = vpop.f32.mrb[0].mxu0
  %v1378 = vadd.f32 0.0, %v1377
  %v1379 = vpop.f32.mrb[0].mxu0
  %v1380 = vpop.f32.mrb[0].mxu0
  %v1381 = vadd.f32 0.0, %v1380
  %v1382 = vpop.f32.mrb[0].mxu0
  %1383 = vdwg.mxu0
  %v1385 = vsel %vm1317, %v1287, 0
  %v1388 = vsel %vm1317, %v1288, 0
  %v1391 = vsel %vm1317, %v1289, 0
  %1393 = vmatprep.subr.bf16.mxu0 0
  %1394 = vmatpush1.bf16.msra.mxu0 %v1290
  %1395 = vmatprep.subr.bf16.mxu0 0
  %1396 = vmatpush1.bf16.msra.mxu0 %v1291
  %1397 = vmatprep.subr.bf16.mxu0 0
  %1398 = vmatpush1.bf16.msra.mxu0 %v1292
  %1399 = vmatprep.subr.bf16.mxu0 0
  %1400 = vmatpush1.bf16.msra.mxu0 %v1293
  %1401 = vmatprep.subr.bf16.mxu0 0
  %1402 = vmatpush1.bf16.msra.mxu0 %v1294
  %1403 = vmatprep.subr.bf16.mxu0 0
  %1404 = vmatpush1.bf16.msra.mxu0 %v1295
  %1405 = vmatprep.subr.bf16.mxu0 0
  %1406 = vmatpush1.bf16.msra.mxu0 0
  %1407 = vmatprep.subr.bf16.mxu0 0
  %1408 = vmatpush1.bf16.msra.mxu0 0
  %1409 = vmatprep.subr.bf16.mxu0 0
  %1410 = vmatpush1.bf16.msra.mxu0 0
  %1411 = vmatprep.subr.bf16.mxu0 0
  %1412 = vmatpush1.bf16.msra.mxu0 0
  %1413 = vmatprep.subr.bf16.mxu0 0
  %1414 = vmatpush1.bf16.msra.mxu0 0
  %1415 = vmatprep.subr.bf16.mxu0 0
  %1416 = vmatpush1.bf16.msra.mxu0 0
  %1417 = vmatprep.subr.bf16.mxu0 0
  %1418 = vmatpush1.bf16.msra.mxu0 0
  %1419 = vmatprep.subr.bf16.mxu0 0
  %1420 = vmatpush1.bf16.msra.mxu0 0
  %1421 = vmatprep.subr.bf16.mxu0 0
  %1422 = vmatpush1.bf16.msra.mxu0 0
  %1423 = vmatprep.subr.bf16.mxu0 0
  %1424 = vmatpush1.bf16.msra.mxu0 0
  %1425 = vmatprep.mubr.bf16.mxu0 0
  %1426 = vmatmul.mubr.bf16.gmra.mrb[0].mxu0 %v1385
  %v1427 = vpop.f32.mrb[0].mxu0
  %v1428 = vadd.f32 %v1362, %v1427
  %v1429 = vpop.f32.mrb[0].mxu0
  %v1430 = vpop.f32.mrb[0].mxu0
  %v1431 = vadd.f32 %v1365, %v1430
  %v1432 = vpop.f32.mrb[0].mxu0
  %1433 = vmatprep.mubr.bf16.mxu0 0
  %1434 = vmatmul.mubr.bf16.gmra.mrb[0].mxu0 %v1388
  %v1435 = vpop.f32.mrb[0].mxu0
  %v1436 = vadd.f32 %v1370, %v1435
  %v1437 = vpop.f32.mrb[0].mxu0
  %v1438 = vpop.f32.mrb[0].mxu0
  %v1439 = vadd.f32 %v1373, %v1438
  %v1440 = vpop.f32.mrb[0].mxu0
  %1441 = vmatprep.mubr.bf16.mxu0 0
  %1442 = vmatmul.mubr.bf16.gmra.mrb[0].mxu0 %v1391
  %v1443 = vpop.f32.mrb[0].mxu0
  %v1444 = vadd.f32 %v1378, %v1443
  %v1445 = vpop.f32.mrb[0].mxu0
  %v1446 = vpop.f32.mrb[0].mxu0
  %v1447 = vadd.f32 %v1381, %v1446
  %v1448 = vpop.f32.mrb[0].mxu0
  %1449 = vdwg.mxu0
  %v1450 = vld [vmem:[%s37] sm:$0xff]
  %v1451 = vld [vmem:[%s37 + $0x8] sm:$0xff]
  %v1452 = vld [vmem:[%s37 + $0x10] sm:$0xff]
  %v1453 = vld [vmem:[%s37 + $0x18] sm:$0xff]
  %v1454 = vpack.c.bf16 %v1117, %v1114
  %v1455 = vpack.c.bf16 %v1125, %v1122
  %v1456 = vpack.c.bf16 %v1133, %v1130
  %v1457 = vpack.c.bf16 %v1451, %v1450
  %v1458 = vpack.c.bf16 %v1453, %v1452
  %v1460 = vsel %vm423, %v1454, 0
  %v1463 = vsel %vm423, %v1455, 0
  %v1466 = vsel %vm423, %v1456, 0
  %1468 = vmatprep.subr.bf16.mxu0 0
  %1469 = vmatpush1.bf16.msra.mxu0 %v1457
  %1470 = vmatprep.subr.bf16.mxu0 0
  %1471 = vmatpush1.bf16.msra.mxu0 %v1458
  %1472 = vmatprep.subr.bf16.mxu0 0
  %1473 = vmatpush1.bf16.msra.mxu0 0
  %1474 = vmatprep.subr.bf16.mxu0 0
  %1475 = vmatpush1.bf16.msra.mxu0 0
  %1476 = vmatprep.subr.bf16.mxu0 0
  %1477 = vmatpush1.bf16.msra.mxu0 0
  %1478 = vmatprep.subr.bf16.mxu0 0
  %1479 = vmatpush1.bf16.msra.mxu0 0
  %1480 = vmatprep.subr.bf16.mxu0 0
  %1481 = vmatpush1.bf16.msra.mxu0 0
  %1482 = vmatprep.subr.bf16.mxu0 0
  %1483 = vmatpush1.bf16.msra.mxu0 0
  %1484 = vmatprep.subr.bf16.mxu0 0
  %1485 = vmatpush1.bf16.msra.mxu0 0
  %1486 = vmatprep.subr.bf16.mxu0 0
  %1487 = vmatpush1.bf16.msra.mxu0 0
  %1488 = vmatprep.subr.bf16.mxu0 0
  %1489 = vmatpush1.bf16.msra.mxu0 0
  %1490 = vmatprep.subr.bf16.mxu0 0
  %1491 = vmatpush1.bf16.msra.mxu0 0
  %1492 = vmatprep.subr.bf16.mxu0 0
  %1493 = vmatpush1.bf16.msra.mxu0 0
  %1494 = vmatprep.subr.bf16.mxu0 0
  %1495 = vmatpush1.bf16.msra.mxu0 0
  %1496 = vmatprep.subr.bf16.mxu0 0
  %1497 = vmatpush1.bf16.msra.mxu0 0
  %1498 = vmatprep.subr.bf16.mxu0 0
  %1499 = vmatpush1.bf16.msra.mxu0 0
  %1500 = vmatprep.mubr.bf16.mxu0 0
  %1501 = vmatmul.mubr.bf16.gmra.mrb[0].mxu0 %v1460
  %v1502 = vpop.f32.mrb[0].mxu0
  %v1503 = vadd.f32 0.0, %v1502
  %v1504 = vpop.f32.mrb[0].mxu0
  %v1505 = vpop.f32.mrb[0].mxu0
  %v1506 = vadd.f32 0.0, %v1505
  %v1507 = vpop.f32.mrb[0].mxu0
  %1508 = vmatprep.mubr.bf16.mxu0 0
  %1509 = vmatmul.mubr.bf16.gmra.mrb[0].mxu0 %v1463
  %v1510 = vpop.f32.mrb[0].mxu0
  %v1511 = vadd.f32 0.0, %v1510
  %v1512 = vpop.f32.mrb[0].mxu0
  %v1513 = vpop.f32.mrb[0].mxu0
  %v1514 = vadd.f32 0.0, %v1513
  %v1515 = vpop.f32.mrb[0].mxu0
  %1516 = vmatprep.mubr.bf16.mxu0 0
  %1517 = vmatmul.mubr.bf16.gmra.mrb[0].mxu0 %v1466
  %v1518 = vpop.f32.mrb[0].mxu0
  %v1519 = vadd.f32 0.0, %v1518
  %v1520 = vpop.f32.mrb[0].mxu0
  %v1521 = vpop.f32.mrb[0].mxu0
  %v1522 = vadd.f32 0.0, %v1521
  %v1523 = vpop.f32.mrb[0].mxu0
  %1524 = vdwg.mxu0
  %v1525 = vadd.f32 %v1428, %v1503
  %v1526 = vadd.f32 %v1431, %v1506
  %v1527 = vadd.f32 %v1436, %v1511
  %v1528 = vadd.f32 %v1439, %v1514
  %v1529 = vadd.f32 %v1444, %v1519
  %v1530 = vadd.f32 %v1447, %v1522
  %v1531 = vld [vmem:[%s39] sm:$0x1]
  %v1533 = vlaneseq
  %v1534 = vshrl.u32 %v1533, 7
  %v1535 = vsub.s32 0, %v1534
  %v1536 = vrot.slane %v1531, %v1535
  %v1538 = vadd.f32 %v1525, %v1536
  %v1539 = vadd.f32 %v1526, %v1536
  %v1540 = vadd.f32 %v1527, %v1536
  %v1541 = vadd.f32 %v1528, %v1536
  %v1542 = vadd.f32 %v1529, %v1536
  %v1543 = vadd.f32 %v1530, %v1536
  %v1544 = vxor.u32 %v1538, 2147483648
  %v1545 = vxor.u32 %v1539, 2147483648
  %v1546 = vxor.u32 %v1540, 2147483648
  %v1547 = vxor.u32 %v1541, 2147483648
  %v1548 = vxor.u32 %v1542, 2147483648
  %v1549 = vxor.u32 %v1543, 2147483648
  %v1550 = vmul.f32 %v1544, 1.442695
  %v1551 = vpow.pop %v1550
  %v1552 = vmul.f32 %v1545, 1.442695
  %v1553 = vpow.pop %v1552
  %v1554 = vmul.f32 %v1546, 1.442695
  %v1555 = vpow.pop %v1554
  %v1556 = vmul.f32 %v1547, 1.442695
  %v1557 = vpow.pop %v1556
  %v1558 = vmul.f32 %v1548, 1.442695
  %v1559 = vpow.pop %v1558
  %v1560 = vmul.f32 %v1549, 1.442695
  %v1561 = vpow.pop %v1560
  %v1562 = vadd.f32 %v1551, 1.0
  %v1563 = vadd.f32 %v1553, 1.0
  %v1564 = vadd.f32 %v1555, 1.0
  %v1565 = vadd.f32 %v1557, 1.0
  %v1566 = vadd.f32 %v1559, 1.0
  %v1567 = vadd.f32 %v1561, 1.0
  %v1568 = vrcp.pop %v1562
  %v1569 = vmul.f32 1.0, %v1568
  %v1570 = vrcp.pop %v1563
  %v1571 = vmul.f32 1.0, %v1570
  %v1572 = vrcp.pop %v1564
  %v1573 = vmul.f32 1.0, %v1572
  %v1574 = vrcp.pop %v1565
  %v1575 = vmul.f32 1.0, %v1574
  %v1576 = vrcp.pop %v1566
  %v1577 = vmul.f32 1.0, %v1576
  %v1578 = vrcp.pop %v1567
  %v1579 = vmul.f32 1.0, %v1578
  %v1580 = vmul.f32 %v1538, %v1569
  %v1581 = vmul.f32 %v1539, %v1571
  %v1582 = vmul.f32 %v1540, %v1573
  %v1583 = vmul.f32 %v1541, %v1575
  %v1584 = vmul.f32 %v1542, %v1577
  %v1585 = vmul.f32 %v1543, %v1579
  %v1586 = vld [vmem:[%s41] sm:$0xff]
  %v1587 = vld [vmem:[%s41 + $0x8] sm:$0xff]
  %v1588 = vld [vmem:[%s41 + $0x10] sm:$0xff]
  %v1589 = vld [vmem:[%s41 + $0x18] sm:$0xff]
  %v1590 = vld [vmem:[%s41 + $0x20] sm:$0xff]
  %v1591 = vld [vmem:[%s41 + $0x28] sm:$0xff]
  %v1592 = vld [vmem:[%s41 + $0x30] sm:$0xff]
  %v1593 = vld [vmem:[%s41 + $0x38] sm:$0xff]
  %v1594 = vpack.c.bf16 %v1581, %v1580
  %v1595 = vpack.c.bf16 %v1583, %v1582
  %v1596 = vpack.c.bf16 %v1585, %v1584
  %v1597 = vpack.c.bf16 %v1587, %v1586
  %v1598 = vpack.c.bf16 %v1589, %v1588
  %v1599 = vpack.c.bf16 %v1591, %v1590
  %v1600 = vpack.c.bf16 %v1593, %v1592
  %v1601 = vld [vmem:[%s43] sm:$0x1]
  %v1603 = vlaneseq
  %v1604 = vshrl.u32 %v1603, 7
  %v1605 = vsub.s32 0, %v1604
  %v1606 = vrot.slane %v1601, %v1605
  %vm1608 = vcmask 523264
  %v1610 = vsel %vm1608, %v1594, 0
  %v1613 = vsel %vm1608, %v1595, 0
  %v1616 = vsel %vm1608, %v1596, 0
  %1618 = vmatprep.subr.bf16.mxu0 0
  %1619 = vmatpush1.bf16.msra.mxu0 %v1597
  %1620 = vmatprep.subr.bf16.mxu0 0
  %1621 = vmatpush1.bf16.msra.mxu0 %v1598
  %1622 = vmatprep.subr.bf16.mxu0 0
  %1623 = vmatpush1.bf16.msra.mxu0 %v1599
  %1624 = vmatprep.subr.bf16.mxu0 0
  %1625 = vmatpush1.bf16.msra.mxu0 %v1600
  %1626 = vmatprep.subr.bf16.mxu0 0
  %1627 = vmatpush1.bf16.msra.mxu0 0
  %1628 = vmatprep.subr.bf16.mxu0 0
  %1629 = vmatpush1.bf16.msra.mxu0 0
  %1630 = vmatprep.subr.bf16.mxu0 0
  %1631 = vmatpush1.bf16.msra.mxu0 0
  %1632 = vmatprep.subr.bf16.mxu0 0
  %1633 = vmatpush1.bf16.msra.mxu0 0
  %1634 = vmatprep.subr.bf16.mxu0 0
  %1635 = vmatpush1.bf16.msra.mxu0 0
  %1636 = vmatprep.subr.bf16.mxu0 0
  %1637 = vmatpush1.bf16.msra.mxu0 0
  %1638 = vmatprep.subr.bf16.mxu0 0
  %1639 = vmatpush1.bf16.msra.mxu0 0
  %1640 = vmatprep.subr.bf16.mxu0 0
  %1641 = vmatpush1.bf16.msra.mxu0 0
  %1642 = vmatprep.subr.bf16.mxu0 0
  %1643 = vmatpush1.bf16.msra.mxu0 0
  %1644 = vmatprep.subr.bf16.mxu0 0
  %1645 = vmatpush1.bf16.msra.mxu0 0
  %1646 = vmatprep.subr.bf16.mxu0 0
  %1647 = vmatpush1.bf16.msra.mxu0 0
  %1648 = vmatprep.subr.bf16.mxu0 0
  %1649 = vmatpush1.bf16.msra.mxu0 0
  %1650 = vmatprep.mubr.bf16.mxu0 0
  %1651 = vmatmul.mubr.bf16.gmra.mrb[0].mxu0 %v1610
  %v1652 = vpop.f32.mrb[0].mxu0
  %v1653 = vadd.f32 %v1606, %v1652
  %v1654 = vpop.f32.mrb[0].mxu0
  %v1655 = vpop.f32.mrb[0].mxu0
  %v1656 = vadd.f32 %v1606, %v1655
  %v1657 = vpop.f32.mrb[0].mxu0
  %1658 = vmatprep.mubr.bf16.mxu0 0
  %1659 = vmatmul.mubr.bf16.gmra.mrb[0].mxu0 %v1613
  %v1660 = vpop.f32.mrb[0].mxu0
  %v1661 = vadd.f32 %v1606, %v1660
  %v1662 = vpop.f32.mrb[0].mxu0
  %v1663 = vpop.f32.mrb[0].mxu0
  %v1664 = vadd.f32 %v1606, %v1663
  %v1665 = vpop.f32.mrb[0].mxu0
  %1666 = vmatprep.mubr.bf16.mxu0 0
  %1667 = vmatmul.mubr.bf16.gmra.mrb[0].mxu0 %v1616
  %v1668 = vpop.f32.mrb[0].mxu0
  %v1669 = vadd.f32 %v1606, %v1668
  %v1670 = vpop.f32.mrb[0].mxu0
  %v1671 = vpop.f32.mrb[0].mxu0
  %v1672 = vadd.f32 %v1606, %v1671
  %v1673 = vpop.f32.mrb[0].mxu0
  %1674 = vdwg.mxu0
  %v1675 = vmul.f32 %v1184, %v1653
  %v1676 = vmul.f32 %v1187, %v1656
  %v1677 = vmul.f32 %v1192, %v1661
  %v1678 = vmul.f32 %v1195, %v1664
  %v1679 = vmul.f32 %v1200, %v1669
  %v1680 = vmul.f32 %v1203, %v1672
  %v1681 = vmul.f32 %v1675, 0.17677669
  %v1682 = vmul.f32 %v1676, 0.17677669
  %v1683 = vmul.f32 %v1677, 0.17677669
  %v1684 = vmul.f32 %v1678, 0.17677669
  %v1685 = vmul.f32 %v1679, 0.17677669
  %v1686 = vmul.f32 %v1680, 0.17677669
  %v1687 = vsel %vm423, %v1681, 0.0
  %1688 = vadd.xlane.f32.xlu0 %v1687
  %v1689 = vpop.xlane.xlu0 %1688
  %v1690 = vsel %vm423, %v1682, 0.0
  %1691 = vadd.xlane.f32.xlu0 %v1690
  %v1692 = vpop.xlane.xlu0 %1691
  %v1693 = vsel %vm423, %v1683, 0.0
  %1694 = vadd.xlane.f32.xlu0 %v1693
  %v1695 = vpop.xlane.xlu0 %1694
  %v1696 = vsel %vm423, %v1684, 0.0
  %1697 = vadd.xlane.f32.xlu0 %v1696
  %v1698 = vpop.xlane.xlu0 %1697
  %v1699 = vsel %vm423, %v1685, 0.0
  %1700 = vadd.xlane.f32.xlu0 %v1699
  %v1701 = vpop.xlane.xlu0 %1700
  %v1702 = vsel %vm423, %v1686, 0.0
  %1703 = vadd.xlane.f32.xlu0 %v1702
  %v1704 = vpop.xlane.xlu0 %1703
  %v1705 = vrcp.pop 32.0
  %v1706 = vmul.f32 %v1689, %v1705
  %v1707 = vmul.f32 %v1692, %v1705
  %v1708 = vmul.f32 %v1695, %v1705
  %v1709 = vmul.f32 %v1698, %v1705
  %v1710 = vmul.f32 %v1701, %v1705
  %v1711 = vmul.f32 %v1704, %v1705
  %v1712 = vsub.f32 %v1681, %v1706
  %v1713 = vsub.f32 %v1682, %v1707
  %v1714 = vsub.f32 %v1683, %v1708
  %v1715 = vsub.f32 %v1684, %v1709
  %v1716 = vsub.f32 %v1685, %v1710
  %v1717 = vsub.f32 %v1686, %v1711
  %v1718 = vmul.f32 %v1712, %v1712
  %v1719 = vmul.f32 %v1713, %v1713
  %v1720 = vmul.f32 %v1714, %v1714
  %v1721 = vmul.f32 %v1715, %v1715
  %v1722 = vmul.f32 %v1716, %v1716
  %v1723 = vmul.f32 %v1717, %v1717
  %v1724 = vsel %vm423, %v1718, 0.0
  %1725 = vadd.xlane.f32.xlu0 %v1724
  %v1726 = vpop.xlane.xlu0 %1725
  %v1727 = vsel %vm423, %v1719, 0.0
  %1728 = vadd.xlane.f32.xlu0 %v1727
  %v1729 = vpop.xlane.xlu0 %1728
  %v1730 = vsel %vm423, %v1720, 0.0
  %1731 = vadd.xlane.f32.xlu0 %v1730
  %v1732 = vpop.xlane.xlu0 %1731
  %v1733 = vsel %vm423, %v1721, 0.0
  %1734 = vadd.xlane.f32.xlu0 %v1733
  %v1735 = vpop.xlane.xlu0 %1734
  %v1736 = vsel %vm423, %v1722, 0.0
  %1737 = vadd.xlane.f32.xlu0 %v1736
  %v1738 = vpop.xlane.xlu0 %1737
  %v1739 = vsel %vm423, %v1723, 0.0
  %1740 = vadd.xlane.f32.xlu0 %v1739
  %v1741 = vpop.xlane.xlu0 %1740
  %v1742 = vmul.f32 %v1726, %v1705
  %v1743 = vmul.f32 %v1729, %v1705
  %v1744 = vmul.f32 %v1732, %v1705
  %v1745 = vmul.f32 %v1735, %v1705
  %v1746 = vmul.f32 %v1738, %v1705
  %v1747 = vmul.f32 %v1741, %v1705
  %v1748 = vadd.f32 %v1742, 1e-05
  %v1749 = vadd.f32 %v1743, 1e-05
  %v1750 = vadd.f32 %v1744, 1e-05
  %v1751 = vadd.f32 %v1745, 1e-05
  %v1752 = vadd.f32 %v1746, 1e-05
  %v1753 = vadd.f32 %v1747, 1e-05
  %v1754 = vrsqrt.pop %v1748
  %v1755 = vrsqrt.pop %v1749
  %v1756 = vrsqrt.pop %v1750
  %v1757 = vrsqrt.pop %v1751
  %v1758 = vrsqrt.pop %v1752
  %v1759 = vrsqrt.pop %v1753
  %v1760 = vmul.f32 %v1712, %v1754
  %v1761 = vmul.f32 %v1713, %v1755
  %v1762 = vmul.f32 %v1714, %v1756
  %v1763 = vmul.f32 %v1715, %v1757
  %v1764 = vmul.f32 %v1716, %v1758
  %v1765 = vmul.f32 %v1717, %v1759
  %v1766 = vld [vmem:[%s49] sm:$0x1]
  %v1768 = vlaneseq
  %v1769 = vshrl.u32 %v1768, 7
  %v1770 = vsub.s32 0, %v1769
  %v1771 = vrot.slane %v1766, %v1770
  %v1773 = vmul.f32 %v1760, %v1771
  %v1774 = vmul.f32 %v1761, %v1771
  %v1775 = vmul.f32 %v1762, %v1771
  %v1776 = vmul.f32 %v1763, %v1771
  %v1777 = vmul.f32 %v1764, %v1771
  %v1778 = vmul.f32 %v1765, %v1771
  %v1779 = vld [vmem:[%s51] sm:$0x1]
  %v1781 = vlaneseq
  %v1782 = vshrl.u32 %v1781, 7
  %v1783 = vsub.s32 0, %v1782
  %v1784 = vrot.slane %v1779, %v1783
  %v1786 = vadd.f32 %v1773, %v1784
  %v1787 = vadd.f32 %v1774, %v1784
  %v1788 = vadd.f32 %v1775, %v1784
  %v1789 = vadd.f32 %v1776, %v1784
  %v1790 = vadd.f32 %v1777, %v1784
  %v1791 = vadd.f32 %v1778, %v1784
  %v1792 = vxor.u32 %v1786, 2147483648
  %v1793 = vxor.u32 %v1787, 2147483648
  %v1794 = vxor.u32 %v1788, 2147483648
  %v1795 = vxor.u32 %v1789, 2147483648
  %v1796 = vxor.u32 %v1790, 2147483648
  %v1797 = vxor.u32 %v1791, 2147483648
  %v1798 = vmul.f32 %v1792, 1.442695
  %v1799 = vpow.pop %v1798
  %v1800 = vmul.f32 %v1793, 1.442695
  %v1801 = vpow.pop %v1800
  %v1802 = vmul.f32 %v1794, 1.442695
  %v1803 = vpow.pop %v1802
  %v1804 = vmul.f32 %v1795, 1.442695
  %v1805 = vpow.pop %v1804
  %v1806 = vmul.f32 %v1796, 1.442695
  %v1807 = vpow.pop %v1806
  %v1808 = vmul.f32 %v1797, 1.442695
  %v1809 = vpow.pop %v1808
  %v1810 = vadd.f32 %v1799, 1.0
  %v1811 = vadd.f32 %v1801, 1.0
  %v1812 = vadd.f32 %v1803, 1.0
  %v1813 = vadd.f32 %v1805, 1.0
  %v1814 = vadd.f32 %v1807, 1.0
  %v1815 = vadd.f32 %v1809, 1.0
  %v1816 = vrcp.pop %v1810
  %v1817 = vmul.f32 1.0, %v1816
  %v1818 = vrcp.pop %v1811
  %v1819 = vmul.f32 1.0, %v1818
  %v1820 = vrcp.pop %v1812
  %v1821 = vmul.f32 1.0, %v1820
  %v1822 = vrcp.pop %v1813
  %v1823 = vmul.f32 1.0, %v1822
  %v1824 = vrcp.pop %v1814
  %v1825 = vmul.f32 1.0, %v1824
  %v1826 = vrcp.pop %v1815
  %v1827 = vmul.f32 1.0, %v1826
  %1834 = vrot.lane.b32.xlu0 %v1817, 32
  %v1835 = vpop.permute.xlu0 %1834
  %1836 = vrot.lane.b32.xlu0 %v1819, 32
  %v1837 = vpop.permute.xlu0 %1836
  %1838 = vrot.lane.b32.xlu0 %v1821, 32
  %v1839 = vpop.permute.xlu0 %1838
  %1840 = vrot.lane.b32.xlu0 %v1823, 32
  %v1841 = vpop.permute.xlu0 %1840
  %1842 = vrot.lane.b32.xlu0 %v1825, 32
  %v1843 = vpop.permute.xlu0 %1842
  %1844 = vrot.lane.b32.xlu0 %v1827, 32
  %v1845 = vpop.permute.xlu0 %1844
  %v1852 = vmul.f32 %v1653, %v1835
  %v1853 = vmul.f32 %v1656, %v1837
  %v1854 = vmul.f32 %v1661, %v1839
  %v1855 = vmul.f32 %v1664, %v1841
  %v1856 = vmul.f32 %v1669, %v1843
  %v1857 = vmul.f32 %v1672, %v1845
  %v1858 = vpack.c.bf16 %v246, %v245
  %v1859 = vpack.c.bf16 %v1853, %v1852
  %v1860 = vpack.c.bf16 %v1855, %v1854
  %v1861 = vpack.c.bf16 %v1857, %v1856
  %1865 = vrot.lane.b32.xlu0 %v1859, 96
  %v1866 = vpop.permute.xlu0 %1865
  %1867 = vrot.lane.b32.xlu0 %v1860, 96
  %v1868 = vpop.permute.xlu0 %1867
  %1869 = vrot.lane.b32.xlu0 %v1861, 96
  %v1870 = vpop.permute.xlu0 %1869
  %vm1874 = vcmask 392192
  %v1876 = vsel %vm1874, %v1858, 0
  %1878 = vmatprep.subr.bf16.mxu0 0
  %1879 = vmatpush1.bf16.msra.mxu0 %v1866
  %1880 = vmatprep.subr.bf16.mxu0 0
  %1881 = vmatpush1.bf16.msra.mxu0 %v1868
  %1882 = vmatprep.subr.bf16.mxu0 0
  %1883 = vmatpush1.bf16.msra.mxu0 %v1870
  %1884 = vmatprep.subr.bf16.mxu0 0
  %1885 = vmatpush1.bf16.msra.mxu0 0
  %1886 = vmatprep.subr.bf16.mxu0 0
  %1887 = vmatpush1.bf16.msra.mxu0 0
  %1888 = vmatprep.subr.bf16.mxu0 0
  %1889 = vmatpush1.bf16.msra.mxu0 0
  %1890 = vmatprep.subr.bf16.mxu0 0
  %1891 = vmatpush1.bf16.msra.mxu0 0
  %1892 = vmatprep.subr.bf16.mxu0 0
  %1893 = vmatpush1.bf16.msra.mxu0 0
  %1894 = vmatprep.subr.bf16.mxu0 0
  %1895 = vmatpush1.bf16.msra.mxu0 0
  %1896 = vmatprep.subr.bf16.mxu0 0
  %1897 = vmatpush1.bf16.msra.mxu0 0
  %1898 = vmatprep.subr.bf16.mxu0 0
  %1899 = vmatpush1.bf16.msra.mxu0 0
  %1900 = vmatprep.subr.bf16.mxu0 0
  %1901 = vmatpush1.bf16.msra.mxu0 0
  %1902 = vmatprep.subr.bf16.mxu0 0
  %1903 = vmatpush1.bf16.msra.mxu0 0
  %1904 = vmatprep.subr.bf16.mxu0 0
  %1905 = vmatpush1.bf16.msra.mxu0 0
  %1906 = vmatprep.subr.bf16.mxu0 0
  %1907 = vmatpush1.bf16.msra.mxu0 0
  %1908 = vmatprep.subr.bf16.mxu0 0
  %1909 = vmatpush1.bf16.msra.mxu0 0
  %1910 = vmatprep.mubr.bf16.mxu0 0
  %1911 = vmatmul.mubr.bf16.gmra.mrb[0].mxu0 %v1876
  %v1912 = vpop.f32.mrb[0].mxu0
  %v1913 = vadd.f32 0.0, %v1912
  %v1914 = vpop.f32.mrb[0].mxu0
  %v1915 = vpop.f32.mrb[0].mxu0
  %v1916 = vadd.f32 0.0, %v1915
  %v1917 = vpop.f32.mrb[0].mxu0
  %1918 = vdwg.mxu0
  %v1919 = vld [vmem:[%s45] sm:$0xff]
  %v1920 = vld [vmem:[%s45 + $0x8] sm:$0xff]
  %v1921 = vld [vmem:[%s45 + $0x10] sm:$0xff]
  %v1922 = vld [vmem:[%s45 + $0x18] sm:$0xff]
  %v1923 = vpack.c.bf16 %v1916, %v1913
  %v1924 = vpack.c.bf16 %v1920, %v1919
  %v1925 = vpack.c.bf16 %v1922, %v1921
  %v1926 = vld [vmem:[%s47] sm:$0x1]
  %v1928 = vlaneseq
  %v1929 = vshrl.u32 %v1928, 7
  %v1930 = vsub.s32 0, %v1929
  %v1931 = vrot.slane %v1926, %v1930
  %v1934 = vsel %vm423, %v1923, 0
  %1936 = vmatprep.subr.bf16.mxu0 0
  %1937 = vmatpush1.bf16.msra.mxu0 %v1924
  %1938 = vmatprep.subr.bf16.mxu0 0
  %1939 = vmatpush1.bf16.msra.mxu0 %v1925
  %1940 = vmatprep.subr.bf16.mxu0 0
  %1941 = vmatpush1.bf16.msra.mxu0 0
  %1942 = vmatprep.subr.bf16.mxu0 0
  %1943 = vmatpush1.bf16.msra.mxu0 0
  %1944 = vmatprep.subr.bf16.mxu0 0
  %1945 = vmatpush1.bf16.msra.mxu0 0
  %1946 = vmatprep.subr.bf16.mxu0 0
  %1947 = vmatpush1.bf16.msra.mxu0 0
  %1948 = vmatprep.subr.bf16.mxu0 0
  %1949 = vmatpush1.bf16.msra.mxu0 0
  %1950 = vmatprep.subr.bf16.mxu0 0
  %1951 = vmatpush1.bf16.msra.mxu0 0
  %1952 = vmatprep.subr.bf16.mxu0 0
  %1953 = vmatpush1.bf16.msra.mxu0 0
  %1954 = vmatprep.subr.bf16.mxu0 0
  %1955 = vmatpush1.bf16.msra.mxu0 0
  %1956 = vmatprep.subr.bf16.mxu0 0
  %1957 = vmatpush1.bf16.msra.mxu0 0
  %1958 = vmatprep.subr.bf16.mxu0 0
  %1959 = vmatpush1.bf16.msra.mxu0 0
  %1960 = vmatprep.subr.bf16.mxu0 0
  %1961 = vmatpush1.bf16.msra.mxu0 0
  %1962 = vmatprep.subr.bf16.mxu0 0
  %1963 = vmatpush1.bf16.msra.mxu0 0
  %1964 = vmatprep.subr.bf16.mxu0 0
  %1965 = vmatpush1.bf16.msra.mxu0 0
  %1966 = vmatprep.subr.bf16.mxu0 0
  %1967 = vmatpush1.bf16.msra.mxu0 0
  %1968 = vmatprep.mubr.bf16.mxu0 0
  %1969 = vmatmul.mubr.bf16.gmra.mrb[0].mxu0 %v1934
  %v1970 = vpop.f32.mrb[0].mxu0
  %v1971 = vadd.f32 %v1931, %v1970
  %v1972 = vpop.f32.mrb[0].mxu0
  %v1973 = vpop.f32.mrb[0].mxu0
  %v1974 = vadd.f32 %v1931, %v1973
  %v1975 = vpop.f32.mrb[0].mxu0
  %1976 = vdwg.mxu0
  %v1977 = vld [vmem:[%s53] sm:$0x1]
  %v1979 = vlaneseq
  %v1980 = vshrl.u32 %v1979, 7
  %v1981 = vsub.s32 0, %v1980
  %v1982 = vrot.slane %v1977, %v1981
  %v1984 = vmul.f32 %v1971, %v1982
  %v1985 = vmul.f32 %v1974, %v1982
  %v1986 = vld [vmem:[%s55] sm:$0x1]
  %v1988 = vlaneseq
  %v1989 = vshrl.u32 %v1988, 7
  %v1990 = vsub.s32 0, %v1989
  %v1991 = vrot.slane %v1986, %v1990
  %v1993 = vadd.f32 %v1984, %v1991
  %v1994 = vadd.f32 %v1985, %v1991
  %v1995 = vadd.f32 %v315, %v1993
  %v1996 = vadd.f32 %v318, %v1994
  %v1997 = vmax.f32 %v1995, 0.0
  %v1998 = vmax.f32 %v1996, 0.0
  %vm1999 = vcmp.ne.f32.partialorder %v1995, %v1995
  %vm2000 = vcmp.ne.f32.partialorder %v1996, %v1996
  %v2001 = vadd.f32 %v1995, 0.0
  %v2002 = vadd.f32 %v1996, 0.0
  %v2003 = vand.u32 2147483647, %v1995
  %v2004 = vand.u32 2147483647, %v1996
  %v2005 = vsub.f32 0.0, %v2003
  %v2006 = vsub.f32 0.0, %v2004
  %v2007 = vmul.f32 %v2005, 1.442695
  %v2008 = vpow.pop %v2007
  %v2009 = vmul.f32 %v2006, 1.442695
  %v2010 = vpow.pop %v2009
  %v2011 = vadd.f32 %v2008, 1.0
  %v2012 = vlog2.pop %v2011
  %v2013 = vmul.f32 %v2012, 0.6931472
  %v2014 = vmul.f32 -0.5, %v2008
  %v2015 = vadd.f32 %v2014, 1.0
  %v2016 = vmul.f32 %v2015, %v2008
  %v2017 = vand.u32 2147483647, %v2008
  %vm2018 = vcmp.lt.f32.partialorder %v2017, 0.0004427343
  %v2019 = vsel %vm2018, %v2016, %v2013
  %v2020 = vadd.f32 %v2010, 1.0
  %v2021 = vlog2.pop %v2020
  %v2022 = vmul.f32 %v2021, 0.6931472
  %v2023 = vmul.f32 -0.5, %v2010
  %v2024 = vadd.f32 %v2023, 1.0
  %v2025 = vmul.f32 %v2024, %v2010
  %v2026 = vand.u32 2147483647, %v2010
  %vm2027 = vcmp.lt.f32.partialorder %v2026, 0.0004427343
  %v2028 = vsel %vm2027, %v2025, %v2022
  %v2029 = vadd.f32 %v1997, %v2019
  %v2030 = vadd.f32 %v1998, %v2028
  %v2031 = vsel %vm1999, %v2001, %v2029
  %v2032 = vsel %vm2000, %v2002, %v2030
  %v2033 = vld [vmem:[%s57] sm:$0xff]
  %v2034 = vld [vmem:[%s57 + $0x8] sm:$0xff]
  %v2035 = vld [vmem:[%s57 + $0x10] sm:$0xff]
  %v2036 = vld [vmem:[%s57 + $0x18] sm:$0xff]
  %v2037 = vpack.c.bf16 %v2034, %v2033
  %v2038 = vpack.c.bf16 %v2036, %v2035
  %v2039 = vld [vmem:[%s59] sm:$0x1]
  %v2041 = vlaneseq
  %v2042 = vshrl.u32 %v2041, 7
  %v2043 = vsub.s32 0, %v2042
  %v2044 = vrot.slane %v2039, %v2043
  %2046 = vmatprep.subr.bf16.mxu0 0
  %2047 = vmatpush1.bf16.msra.mxu0 %v2037
  %2048 = vmatprep.subr.bf16.mxu0 0
  %2049 = vmatpush1.bf16.msra.mxu0 %v2038
  %2050 = vmatprep.subr.bf16.mxu0 0
  %2051 = vmatpush1.bf16.msra.mxu0 0
  %2052 = vmatprep.subr.bf16.mxu0 0
  %2053 = vmatpush1.bf16.msra.mxu0 0
  %2054 = vmatprep.subr.bf16.mxu0 0
  %2055 = vmatpush1.bf16.msra.mxu0 0
  %2056 = vmatprep.subr.bf16.mxu0 0
  %2057 = vmatpush1.bf16.msra.mxu0 0
  %2058 = vmatprep.subr.bf16.mxu0 0
  %2059 = vmatpush1.bf16.msra.mxu0 0
  %2060 = vmatprep.subr.bf16.mxu0 0
  %2061 = vmatpush1.bf16.msra.mxu0 0
  %2062 = vmatprep.subr.bf16.mxu0 0
  %2063 = vmatpush1.bf16.msra.mxu0 0
  %2064 = vmatprep.subr.bf16.mxu0 0
  %2065 = vmatpush1.bf16.msra.mxu0 0
  %2066 = vmatprep.subr.bf16.mxu0 0
  %2067 = vmatpush1.bf16.msra.mxu0 0
  %2068 = vmatprep.subr.bf16.mxu0 0
  %2069 = vmatpush1.bf16.msra.mxu0 0
  %2070 = vmatprep.subr.bf16.mxu0 0
  %2071 = vmatpush1.bf16.msra.mxu0 0
  %2072 = vmatprep.subr.bf16.mxu0 0
  %2073 = vmatpush1.bf16.msra.mxu0 0
  %2074 = vmatprep.subr.bf16.mxu0 0
  %2075 = vmatpush1.bf16.msra.mxu0 0
  %2076 = vmatprep.subr.bf16.mxu0 0
  %2077 = vmatpush1.bf16.msra.mxu0 0
  %2078 = vmatprep.mubr.bf16.mxu0 0
  %2079 = vmatmul.mubr.bf16.gmra.mrb[0].mxu0 %v1071
  %v2080 = vpop.f32.mrb[0].mxu0
  %v2081 = vadd.f32 %v2044, %v2080
  %v2082 = vpop.f32.mrb[0].mxu0
  %v2083 = vpop.f32.mrb[0].mxu0
  %v2084 = vadd.f32 %v2044, %v2083
  %v2085 = vpop.f32.mrb[0].mxu0
  %2086 = vmatprep.mubr.bf16.mxu0 0
  %2087 = vmatmul.mubr.bf16.gmra.mrb[0].mxu0 %v1074
  %v2088 = vpop.f32.mrb[0].mxu0
  %v2089 = vadd.f32 %v2044, %v2088
  %v2090 = vpop.f32.mrb[0].mxu0
  %v2091 = vpop.f32.mrb[0].mxu0
  %v2092 = vadd.f32 %v2044, %v2091
  %v2093 = vpop.f32.mrb[0].mxu0
  %2094 = vmatprep.mubr.bf16.mxu0 0
  %2095 = vmatmul.mubr.bf16.gmra.mrb[0].mxu0 %v1077
  %v2096 = vpop.f32.mrb[0].mxu0
  %v2097 = vadd.f32 %v2044, %v2096
  %v2098 = vpop.f32.mrb[0].mxu0
  %v2099 = vpop.f32.mrb[0].mxu0
  %v2100 = vadd.f32 %v2044, %v2099
  %v2101 = vpop.f32.mrb[0].mxu0
  %2102 = vdwg.mxu0
  %v2103 = vmax.f32 %v2081, 0.0
  %v2104 = vmax.f32 %v2084, 0.0
  %v2105 = vmax.f32 %v2089, 0.0
  %v2106 = vmax.f32 %v2092, 0.0
  %v2107 = vmax.f32 %v2097, 0.0
  %v2108 = vmax.f32 %v2100, 0.0
  %v2109 = vld [vmem:[%s61] sm:$0xff]
  %v2110 = vld [vmem:[%s61 + $0x8] sm:$0xff]
  %v2111 = vld [vmem:[%s61 + $0x10] sm:$0xff]
  %v2112 = vld [vmem:[%s61 + $0x18] sm:$0xff]
  %v2113 = vld [vmem:[%s61 + $0x20] sm:$0xff]
  %v2114 = vld [vmem:[%s61 + $0x28] sm:$0xff]
  %v2115 = vld [vmem:[%s61 + $0x30] sm:$0xff]
  %v2116 = vld [vmem:[%s61 + $0x38] sm:$0xff]
  %v2117 = vld [vmem:[%s61 + $0x40] sm:$0xff]
  %v2118 = vld [vmem:[%s61 + $0x48] sm:$0xff]
  %v2119 = vld [vmem:[%s61 + $0x50] sm:$0xff]
  %v2120 = vld [vmem:[%s61 + $0x58] sm:$0xff]
  %v2121 = vld [vmem:[%s61 + $0x60] sm:$0xff]
  %v2122 = vld [vmem:[%s61 + $0x68] sm:$0xff]
  %v2123 = vld [vmem:[%s61 + $0x70] sm:$0xff]
  %v2124 = vld [vmem:[%s61 + $0x78] sm:$0xff]
  %v2125 = vld [vmem:[%s61 + $0x80] sm:$0xff]
  %v2126 = vld [vmem:[%s61 + $0x88] sm:$0xff]
  %v2127 = vld [vmem:[%s61 + $0x90] sm:$0xff]
  %v2128 = vld [vmem:[%s61 + $0x98] sm:$0xff]
  %v2129 = vld [vmem:[%s61 + $0xa0] sm:$0xff]
  %v2130 = vld [vmem:[%s61 + $0xa8] sm:$0xff]
  %v2131 = vld [vmem:[%s61 + $0xb0] sm:$0xff]
  %v2132 = vld [vmem:[%s61 + $0xb8] sm:$0xff]
  %v2133 = vld [vmem:[%s61 + $0xc0] sm:$0xff]
  %v2134 = vld [vmem:[%s61 + $0xc8] sm:$0xff]
  %v2135 = vld [vmem:[%s61 + $0xd0] sm:$0xff]
  %v2136 = vld [vmem:[%s61 + $0xd8] sm:$0xff]
  %v2137 = vld [vmem:[%s61 + $0xe0] sm:$0xff]
  %v2138 = vld [vmem:[%s61 + $0xe8] sm:$0xff]
  %v2139 = vld [vmem:[%s61 + $0xf0] sm:$0xff]
  %v2140 = vld [vmem:[%s61 + $0xf8] sm:$0xff]
  %v2141 = vld [vmem:[%s61 + $0x100] sm:$0xff]
  %v2142 = vld [vmem:[%s61 + $0x108] sm:$0xff]
  %v2143 = vld [vmem:[%s61 + $0x110] sm:$0xff]
  %v2144 = vld [vmem:[%s61 + $0x118] sm:$0xff]
  %v2145 = vld [vmem:[%s61 + $0x120] sm:$0xff]
  %v2146 = vld [vmem:[%s61 + $0x128] sm:$0xff]
  %v2147 = vld [vmem:[%s61 + $0x130] sm:$0xff]
  %v2148 = vld [vmem:[%s61 + $0x138] sm:$0xff]
  %v2149 = vld [vmem:[%s61 + $0x140] sm:$0xff]
  %v2150 = vld [vmem:[%s61 + $0x148] sm:$0xff]
  %v2151 = vld [vmem:[%s61 + $0x150] sm:$0xff]
  %v2152 = vld [vmem:[%s61 + $0x158] sm:$0xff]
  %v2153 = vld [vmem:[%s61 + $0x160] sm:$0xff]
  %v2154 = vld [vmem:[%s61 + $0x168] sm:$0xff]
  %v2155 = vld [vmem:[%s61 + $0x170] sm:$0xff]
  %v2156 = vld [vmem:[%s61 + $0x178] sm:$0xff]
  %v2157 = vpack.c.bf16 %v2104, %v2103
  %v2158 = vpack.c.bf16 %v2106, %v2105
  %v2159 = vpack.c.bf16 %v2108, %v2107
  %v2160 = vpack.c.bf16 %v2121, %v2109
  %v2161 = vpack.c.bf16 %v2122, %v2110
  %v2162 = vpack.c.bf16 %v2123, %v2111
  %v2163 = vpack.c.bf16 %v2124, %v2112
  %v2164 = vpack.c.bf16 %v2125, %v2113
  %v2165 = vpack.c.bf16 %v2126, %v2114
  %v2166 = vpack.c.bf16 %v2127, %v2115
  %v2167 = vpack.c.bf16 %v2128, %v2116
  %v2168 = vpack.c.bf16 %v2129, %v2117
  %v2169 = vpack.c.bf16 %v2130, %v2118
  %v2170 = vpack.c.bf16 %v2131, %v2119
  %v2171 = vpack.c.bf16 %v2132, %v2120
  %v2172 = vpack.c.bf16 %v2145, %v2133
  %v2173 = vpack.c.bf16 %v2146, %v2134
  %v2174 = vpack.c.bf16 %v2147, %v2135
  %v2175 = vpack.c.bf16 %v2148, %v2136
  %v2176 = vpack.c.bf16 %v2149, %v2137
  %v2177 = vpack.c.bf16 %v2150, %v2138
  %v2178 = vpack.c.bf16 %v2151, %v2139
  %v2179 = vpack.c.bf16 %v2152, %v2140
  %v2180 = vpack.c.bf16 %v2153, %v2141
  %v2181 = vpack.c.bf16 %v2154, %v2142
  %v2182 = vpack.c.bf16 %v2155, %v2143
  %v2183 = vpack.c.bf16 %v2156, %v2144
  %v2184 = vld [vmem:[%s63] sm:$0xff]
  %v2185 = vld [vmem:[%s63 + $0x8] sm:$0xf]
  %v2188 = vlaneseq
  %v2189 = vshrl.u32 %v2188, 7
  %v2190 = vsub.s32 0, %v2189
  %v2191 = vrot.slane %v2184, %v2190
  %v2192 = vlaneseq
  %v2193 = vshrl.u32 %v2192, 7
  %v2194 = vsub.s32 1, %v2193
  %v2195 = vrot.slane %v2184, %v2194
  %v2196 = vlaneseq
  %v2197 = vshrl.u32 %v2196, 7
  %v2198 = vsub.s32 2, %v2197
  %v2199 = vrot.slane %v2184, %v2198
  %v2200 = vlaneseq
  %v2201 = vshrl.u32 %v2200, 7
  %v2202 = vsub.s32 3, %v2201
  %v2203 = vrot.slane %v2184, %v2202
  %v2204 = vlaneseq
  %v2205 = vshrl.u32 %v2204, 7
  %v2206 = vsub.s32 4, %v2205
  %v2207 = vrot.slane %v2184, %v2206
  %v2208 = vlaneseq
  %v2209 = vshrl.u32 %v2208, 7
  %v2210 = vsub.s32 5, %v2209
  %v2211 = vrot.slane %v2184, %v2210
  %v2212 = vlaneseq
  %v2213 = vshrl.u32 %v2212, 7
  %v2214 = vsub.s32 6, %v2213
  %v2215 = vrot.slane %v2184, %v2214
  %v2216 = vlaneseq
  %v2217 = vshrl.u32 %v2216, 7
  %v2218 = vsub.s32 7, %v2217
  %v2219 = vrot.slane %v2184, %v2218
  %v2220 = vlaneseq
  %v2221 = vshrl.u32 %v2220, 7
  %v2222 = vsub.s32 0, %v2221
  %v2223 = vrot.slane %v2185, %v2222
  %v2224 = vlaneseq
  %v2225 = vshrl.u32 %v2224, 7
  %v2226 = vsub.s32 1, %v2225
  %v2227 = vrot.slane %v2185, %v2226
  %v2228 = vlaneseq
  %v2229 = vshrl.u32 %v2228, 7
  %v2230 = vsub.s32 2, %v2229
  %v2231 = vrot.slane %v2185, %v2230
  %v2232 = vlaneseq
  %v2233 = vshrl.u32 %v2232, 7
  %v2234 = vsub.s32 3, %v2233
  %v2235 = vrot.slane %v2185, %v2234
  %v2249 = vsel %vm423, %v2157, 0
  %v2252 = vsel %vm423, %v2158, 0
  %v2255 = vsel %vm423, %v2159, 0
  %2257 = vmatprep.subr.bf16.mxu0 %v2161
  %2258 = vmatpush1.bf16.msra.mxu0 %v2160
  %2259 = vmatprep.subr.bf16.mxu0 %v2173
  %2260 = vmatpush1.bf16.msra.mxu0 %v2172
  %2261 = vmatprep.subr.bf16.mxu0 0
  %2262 = vmatpush1.bf16.msra.mxu0 0
  %2263 = vmatprep.subr.bf16.mxu0 0
  %2264 = vmatpush1.bf16.msra.mxu0 0
  %2265 = vmatprep.subr.bf16.mxu0 0
  %2266 = vmatpush1.bf16.msra.mxu0 0
  %2267 = vmatprep.subr.bf16.mxu0 0
  %2268 = vmatpush1.bf16.msra.mxu0 0
  %2269 = vmatprep.subr.bf16.mxu0 0
  %2270 = vmatpush1.bf16.msra.mxu0 0
  %2271 = vmatprep.subr.bf16.mxu0 0
  %2272 = vmatpush1.bf16.msra.mxu0 0
  %2273 = vmatprep.subr.bf16.mxu0 0
  %2274 = vmatpush1.bf16.msra.mxu0 0
  %2275 = vmatprep.subr.bf16.mxu0 0
  %2276 = vmatpush1.bf16.msra.mxu0 0
  %2277 = vmatprep.subr.bf16.mxu0 0
  %2278 = vmatpush1.bf16.msra.mxu0 0
  %2279 = vmatprep.subr.bf16.mxu0 0
  %2280 = vmatpush1.bf16.msra.mxu0 0
  %2281 = vmatprep.subr.bf16.mxu0 0
  %2282 = vmatpush1.bf16.msra.mxu0 0
  %2283 = vmatprep.subr.bf16.mxu0 0
  %2284 = vmatpush1.bf16.msra.mxu0 0
  %2285 = vmatprep.subr.bf16.mxu0 0
  %2286 = vmatpush1.bf16.msra.mxu0 0
  %2287 = vmatprep.subr.bf16.mxu0 0
  %2288 = vmatpush1.bf16.msra.mxu0 0
  %2289 = vmatprep.mubr.bf16.mxu0 0
  %2290 = vmatmul.mubr.bf16.gmra.mrb[0].mxu0 %v2249
  %v2291 = vpop.f32.mrb[0].mxu0
  %v2292 = vadd.f32 %v2191, %v2291
  %v2293 = vpop.f32.mrb[0].mxu0
  %v2294 = vadd.f32 %v2195, %v2293
  %v2295 = vpop.f32.mrb[0].mxu0
  %v2296 = vadd.f32 %v2191, %v2295
  %v2297 = vpop.f32.mrb[0].mxu0
  %v2298 = vadd.f32 %v2195, %v2297
  %2299 = vmatprep.mubr.bf16.mxu0 0
  %2300 = vmatmul.mubr.bf16.gmra.mrb[0].mxu0 %v2252
  %v2301 = vpop.f32.mrb[0].mxu0
  %v2302 = vadd.f32 %v2191, %v2301
  %v2303 = vpop.f32.mrb[0].mxu0
  %v2304 = vadd.f32 %v2195, %v2303
  %v2305 = vpop.f32.mrb[0].mxu0
  %v2306 = vadd.f32 %v2191, %v2305
  %v2307 = vpop.f32.mrb[0].mxu0
  %v2308 = vadd.f32 %v2195, %v2307
  %2309 = vmatprep.mubr.bf16.mxu0 0
  %2310 = vmatmul.mubr.bf16.gmra.mrb[0].mxu0 %v2255
  %v2311 = vpop.f32.mrb[0].mxu0
  %v2312 = vadd.f32 %v2191, %v2311
  %v2313 = vpop.f32.mrb[0].mxu0
  %v2314 = vadd.f32 %v2195, %v2313
  %v2315 = vpop.f32.mrb[0].mxu0
  %v2316 = vadd.f32 %v2191, %v2315
  %v2317 = vpop.f32.mrb[0].mxu0
  %v2318 = vadd.f32 %v2195, %v2317
  %2319 = vdwg.mxu0
  %2320 = vmatprep.subr.bf16.mxu0 %v2163
  %2321 = vmatpush1.bf16.msra.mxu0 %v2162
  %2322 = vmatprep.subr.bf16.mxu0 %v2175
  %2323 = vmatpush1.bf16.msra.mxu0 %v2174
  %2324 = vmatprep.subr.bf16.mxu0 0
  %2325 = vmatpush1.bf16.msra.mxu0 0
  %2326 = vmatprep.subr.bf16.mxu0 0
  %2327 = vmatpush1.bf16.msra.mxu0 0
  %2328 = vmatprep.subr.bf16.mxu0 0
  %2329 = vmatpush1.bf16.msra.mxu0 0
  %2330 = vmatprep.subr.bf16.mxu0 0
  %2331 = vmatpush1.bf16.msra.mxu0 0
  %2332 = vmatprep.subr.bf16.mxu0 0
  %2333 = vmatpush1.bf16.msra.mxu0 0
  %2334 = vmatprep.subr.bf16.mxu0 0
  %2335 = vmatpush1.bf16.msra.mxu0 0
  %2336 = vmatprep.subr.bf16.mxu0 0
  %2337 = vmatpush1.bf16.msra.mxu0 0
  %2338 = vmatprep.subr.bf16.mxu0 0
  %2339 = vmatpush1.bf16.msra.mxu0 0
  %2340 = vmatprep.subr.bf16.mxu0 0
  %2341 = vmatpush1.bf16.msra.mxu0 0
  %2342 = vmatprep.subr.bf16.mxu0 0
  %2343 = vmatpush1.bf16.msra.mxu0 0
  %2344 = vmatprep.subr.bf16.mxu0 0
  %2345 = vmatpush1.bf16.msra.mxu0 0
  %2346 = vmatprep.subr.bf16.mxu0 0
  %2347 = vmatpush1.bf16.msra.mxu0 0
  %2348 = vmatprep.subr.bf16.mxu0 0
  %2349 = vmatpush1.bf16.msra.mxu0 0
  %2350 = vmatprep.subr.bf16.mxu0 0
  %2351 = vmatpush1.bf16.msra.mxu0 0
  %2352 = vmatprep.mubr.bf16.mxu0 0
  %2353 = vmatmul.mubr.bf16.gmra.mrb[0].mxu0 %v2249
  %v2354 = vpop.f32.mrb[0].mxu0
  %v2355 = vadd.f32 %v2199, %v2354
  %v2356 = vpop.f32.mrb[0].mxu0
  %v2357 = vadd.f32 %v2203, %v2356
  %v2358 = vpop.f32.mrb[0].mxu0
  %v2359 = vadd.f32 %v2199, %v2358
  %v2360 = vpop.f32.mrb[0].mxu0
  %v2361 = vadd.f32 %v2203, %v2360
  %2362 = vmatprep.mubr.bf16.mxu0 0
  %2363 = vmatmul.mubr.bf16.gmra.mrb[0].mxu0 %v2252
  %v2364 = vpop.f32.mrb[0].mxu0
  %v2365 = vadd.f32 %v2199, %v2364
  %v2366 = vpop.f32.mrb[0].mxu0
  %v2367 = vadd.f32 %v2203, %v2366
  %v2368 = vpop.f32.mrb[0].mxu0
  %v2369 = vadd.f32 %v2199, %v2368
  %v2370 = vpop.f32.mrb[0].mxu0
  %v2371 = vadd.f32 %v2203, %v2370
  %2372 = vmatprep.mubr.bf16.mxu0 0
  %2373 = vmatmul.mubr.bf16.gmra.mrb[0].mxu0 %v2255
  %v2374 = vpop.f32.mrb[0].mxu0
  %v2375 = vadd.f32 %v2199, %v2374
  %v2376 = vpop.f32.mrb[0].mxu0
  %v2377 = vadd.f32 %v2203, %v2376
  %v2378 = vpop.f32.mrb[0].mxu0
  %v2379 = vadd.f32 %v2199, %v2378
  %v2380 = vpop.f32.mrb[0].mxu0
  %v2381 = vadd.f32 %v2203, %v2380
  %2382 = vdwg.mxu0
  %2383 = vmatprep.subr.bf16.mxu0 %v2165
  %2384 = vmatpush1.bf16.msra.mxu0 %v2164
  %2385 = vmatprep.subr.bf16.mxu0 %v2177
  %2386 = vmatpush1.bf16.msra.mxu0 %v2176
  %2387 = vmatprep.subr.bf16.mxu0 0
  %2388 = vmatpush1.bf16.msra.mxu0 0
  %2389 = vmatprep.subr.bf16.mxu0 0
  %2390 = vmatpush1.bf16.msra.mxu0 0
  %2391 = vmatprep.subr.bf16.mxu0 0
  %2392 = vmatpush1.bf16.msra.mxu0 0
  %2393 = vmatprep.subr.bf16.mxu0 0
  %2394 = vmatpush1.bf16.msra.mxu0 0
  %2395 = vmatprep.subr.bf16.mxu0 0
  %2396 = vmatpush1.bf16.msra.mxu0 0
  %2397 = vmatprep.subr.bf16.mxu0 0
  %2398 = vmatpush1.bf16.msra.mxu0 0
  %2399 = vmatprep.subr.bf16.mxu0 0
  %2400 = vmatpush1.bf16.msra.mxu0 0
  %2401 = vmatprep.subr.bf16.mxu0 0
  %2402 = vmatpush1.bf16.msra.mxu0 0
  %2403 = vmatprep.subr.bf16.mxu0 0
  %2404 = vmatpush1.bf16.msra.mxu0 0
  %2405 = vmatprep.subr.bf16.mxu0 0
  %2406 = vmatpush1.bf16.msra.mxu0 0
  %2407 = vmatprep.subr.bf16.mxu0 0
  %2408 = vmatpush1.bf16.msra.mxu0 0
  %2409 = vmatprep.subr.bf16.mxu0 0
  %2410 = vmatpush1.bf16.msra.mxu0 0
  %2411 = vmatprep.subr.bf16.mxu0 0
  %2412 = vmatpush1.bf16.msra.mxu0 0
  %2413 = vmatprep.subr.bf16.mxu0 0
  %2414 = vmatpush1.bf16.msra.mxu0 0
  %2415 = vmatprep.mubr.bf16.mxu0 0
  %2416 = vmatmul.mubr.bf16.gmra.mrb[0].mxu0 %v2249
  %v2417 = vpop.f32.mrb[0].mxu0
  %v2418 = vadd.f32 %v2207, %v2417
  %v2419 = vpop.f32.mrb[0].mxu0
  %v2420 = vadd.f32 %v2211, %v2419
  %v2421 = vpop.f32.mrb[0].mxu0
  %v2422 = vadd.f32 %v2207, %v2421
  %v2423 = vpop.f32.mrb[0].mxu0
  %v2424 = vadd.f32 %v2211, %v2423
  %2425 = vmatprep.mubr.bf16.mxu0 0
  %2426 = vmatmul.mubr.bf16.gmra.mrb[0].mxu0 %v2252
  %v2427 = vpop.f32.mrb[0].mxu0
  %v2428 = vadd.f32 %v2207, %v2427
  %v2429 = vpop.f32.mrb[0].mxu0
  %v2430 = vadd.f32 %v2211, %v2429
  %v2431 = vpop.f32.mrb[0].mxu0
  %v2432 = vadd.f32 %v2207, %v2431
  %v2433 = vpop.f32.mrb[0].mxu0
  %v2434 = vadd.f32 %v2211, %v2433
  %2435 = vmatprep.mubr.bf16.mxu0 0
  %2436 = vmatmul.mubr.bf16.gmra.mrb[0].mxu0 %v2255
  %v2437 = vpop.f32.mrb[0].mxu0
  %v2438 = vadd.f32 %v2207, %v2437
  %v2439 = vpop.f32.mrb[0].mxu0
  %v2440 = vadd.f32 %v2211, %v2439
  %v2441 = vpop.f32.mrb[0].mxu0
  %v2442 = vadd.f32 %v2207, %v2441
  %v2443 = vpop.f32.mrb[0].mxu0
  %v2444 = vadd.f32 %v2211, %v2443
  %2445 = vdwg.mxu0
  %2446 = vmatprep.subr.bf16.mxu0 %v2167
  %2447 = vmatpush1.bf16.msra.mxu0 %v2166
  %2448 = vmatprep.subr.bf16.mxu0 %v2179
  %2449 = vmatpush1.bf16.msra.mxu0 %v2178
  %2450 = vmatprep.subr.bf16.mxu0 0
  %2451 = vmatpush1.bf16.msra.mxu0 0
  %2452 = vmatprep.subr.bf16.mxu0 0
  %2453 = vmatpush1.bf16.msra.mxu0 0
  %2454 = vmatprep.subr.bf16.mxu0 0
  %2455 = vmatpush1.bf16.msra.mxu0 0
  %2456 = vmatprep.subr.bf16.mxu0 0
  %2457 = vmatpush1.bf16.msra.mxu0 0
  %2458 = vmatprep.subr.bf16.mxu0 0
  %2459 = vmatpush1.bf16.msra.mxu0 0
  %2460 = vmatprep.subr.bf16.mxu0 0
  %2461 = vmatpush1.bf16.msra.mxu0 0
  %2462 = vmatprep.subr.bf16.mxu0 0
  %2463 = vmatpush1.bf16.msra.mxu0 0
  %2464 = vmatprep.subr.bf16.mxu0 0
  %2465 = vmatpush1.bf16.msra.mxu0 0
  %2466 = vmatprep.subr.bf16.mxu0 0
  %2467 = vmatpush1.bf16.msra.mxu0 0
  %2468 = vmatprep.subr.bf16.mxu0 0
  %2469 = vmatpush1.bf16.msra.mxu0 0
  %2470 = vmatprep.subr.bf16.mxu0 0
  %2471 = vmatpush1.bf16.msra.mxu0 0
  %2472 = vmatprep.subr.bf16.mxu0 0
  %2473 = vmatpush1.bf16.msra.mxu0 0
  %2474 = vmatprep.subr.bf16.mxu0 0
  %2475 = vmatpush1.bf16.msra.mxu0 0
  %2476 = vmatprep.subr.bf16.mxu0 0
  %2477 = vmatpush1.bf16.msra.mxu0 0
  %2478 = vmatprep.mubr.bf16.mxu0 0
  %2479 = vmatmul.mubr.bf16.gmra.mrb[0].mxu0 %v2249
  %v2480 = vpop.f32.mrb[0].mxu0
  %v2481 = vadd.f32 %v2215, %v2480
  %v2482 = vpop.f32.mrb[0].mxu0
  %v2483 = vadd.f32 %v2219, %v2482
  %v2484 = vpop.f32.mrb[0].mxu0
  %v2485 = vadd.f32 %v2215, %v2484
  %v2486 = vpop.f32.mrb[0].mxu0
  %v2487 = vadd.f32 %v2219, %v2486
  %2488 = vmatprep.mubr.bf16.mxu0 0
  %2489 = vmatmul.mubr.bf16.gmra.mrb[0].mxu0 %v2252
  %v2490 = vpop.f32.mrb[0].mxu0
  %v2491 = vadd.f32 %v2215, %v2490
  %v2492 = vpop.f32.mrb[0].mxu0
  %v2493 = vadd.f32 %v2219, %v2492
  %v2494 = vpop.f32.mrb[0].mxu0
  %v2495 = vadd.f32 %v2215, %v2494
  %v2496 = vpop.f32.mrb[0].mxu0
  %v2497 = vadd.f32 %v2219, %v2496
  %2498 = vmatprep.mubr.bf16.mxu0 0
  %2499 = vmatmul.mubr.bf16.gmra.mrb[0].mxu0 %v2255
  %v2500 = vpop.f32.mrb[0].mxu0
  %v2501 = vadd.f32 %v2215, %v2500
  %v2502 = vpop.f32.mrb[0].mxu0
  %v2503 = vadd.f32 %v2219, %v2502
  %v2504 = vpop.f32.mrb[0].mxu0
  %v2505 = vadd.f32 %v2215, %v2504
  %v2506 = vpop.f32.mrb[0].mxu0
  %v2507 = vadd.f32 %v2219, %v2506
  %2508 = vdwg.mxu0
  %2509 = vmatprep.subr.bf16.mxu0 %v2169
  %2510 = vmatpush1.bf16.msra.mxu0 %v2168
  %2511 = vmatprep.subr.bf16.mxu0 %v2181
  %2512 = vmatpush1.bf16.msra.mxu0 %v2180
  %2513 = vmatprep.subr.bf16.mxu0 0
  %2514 = vmatpush1.bf16.msra.mxu0 0
  %2515 = vmatprep.subr.bf16.mxu0 0
  %2516 = vmatpush1.bf16.msra.mxu0 0
  %2517 = vmatprep.subr.bf16.mxu0 0
  %2518 = vmatpush1.bf16.msra.mxu0 0
  %2519 = vmatprep.subr.bf16.mxu0 0
  %2520 = vmatpush1.bf16.msra.mxu0 0
  %2521 = vmatprep.subr.bf16.mxu0 0
  %2522 = vmatpush1.bf16.msra.mxu0 0
  %2523 = vmatprep.subr.bf16.mxu0 0
  %2524 = vmatpush1.bf16.msra.mxu0 0
  %2525 = vmatprep.subr.bf16.mxu0 0
  %2526 = vmatpush1.bf16.msra.mxu0 0
  %2527 = vmatprep.subr.bf16.mxu0 0
  %2528 = vmatpush1.bf16.msra.mxu0 0
  %2529 = vmatprep.subr.bf16.mxu0 0
  %2530 = vmatpush1.bf16.msra.mxu0 0
  %2531 = vmatprep.subr.bf16.mxu0 0
  %2532 = vmatpush1.bf16.msra.mxu0 0
  %2533 = vmatprep.subr.bf16.mxu0 0
  %2534 = vmatpush1.bf16.msra.mxu0 0
  %2535 = vmatprep.subr.bf16.mxu0 0
  %2536 = vmatpush1.bf16.msra.mxu0 0
  %2537 = vmatprep.subr.bf16.mxu0 0
  %2538 = vmatpush1.bf16.msra.mxu0 0
  %2539 = vmatprep.subr.bf16.mxu0 0
  %2540 = vmatpush1.bf16.msra.mxu0 0
  %2541 = vmatprep.mubr.bf16.mxu0 0
  %2542 = vmatmul.mubr.bf16.gmra.mrb[0].mxu0 %v2249
  %v2543 = vpop.f32.mrb[0].mxu0
  %v2544 = vadd.f32 %v2223, %v2543
  %v2545 = vpop.f32.mrb[0].mxu0
  %v2546 = vadd.f32 %v2227, %v2545
  %v2547 = vpop.f32.mrb[0].mxu0
  %v2548 = vadd.f32 %v2223, %v2547
  %v2549 = vpop.f32.mrb[0].mxu0
  %v2550 = vadd.f32 %v2227, %v2549
  %2551 = vmatprep.mubr.bf16.mxu0 0
  %2552 = vmatmul.mubr.bf16.gmra.mrb[0].mxu0 %v2252
  %v2553 = vpop.f32.mrb[0].mxu0
  %v2554 = vadd.f32 %v2223, %v2553
  %v2555 = vpop.f32.mrb[0].mxu0
  %v2556 = vadd.f32 %v2227, %v2555
  %v2557 = vpop.f32.mrb[0].mxu0
  %v2558 = vadd.f32 %v2223, %v2557
  %v2559 = vpop.f32.mrb[0].mxu0
  %v2560 = vadd.f32 %v2227, %v2559
  %2561 = vmatprep.mubr.bf16.mxu0 0
  %2562 = vmatmul.mubr.bf16.gmra.mrb[0].mxu0 %v2255
  %v2563 = vpop.f32.mrb[0].mxu0
  %v2564 = vadd.f32 %v2223, %v2563
  %v2565 = vpop.f32.mrb[0].mxu0
  %v2566 = vadd.f32 %v2227, %v2565
  %v2567 = vpop.f32.mrb[0].mxu0
  %v2568 = vadd.f32 %v2223, %v2567
  %v2569 = vpop.f32.mrb[0].mxu0
  %v2570 = vadd.f32 %v2227, %v2569
  %2571 = vdwg.mxu0
  %2572 = vmatprep.subr.bf16.mxu0 %v2171
  %2573 = vmatpush1.bf16.msra.mxu0 %v2170
  %2574 = vmatprep.subr.bf16.mxu0 %v2183
  %2575 = vmatpush1.bf16.msra.mxu0 %v2182
  %2576 = vmatprep.subr.bf16.mxu0 0
  %2577 = vmatpush1.bf16.msra.mxu0 0
  %2578 = vmatprep.subr.bf16.mxu0 0
  %2579 = vmatpush1.bf16.msra.mxu0 0
  %2580 = vmatprep.subr.bf16.mxu0 0
  %2581 = vmatpush1.bf16.msra.mxu0 0
  %2582 = vmatprep.subr.bf16.mxu0 0
  %2583 = vmatpush1.bf16.msra.mxu0 0
  %2584 = vmatprep.subr.bf16.mxu0 0
  %2585 = vmatpush1.bf16.msra.mxu0 0
  %2586 = vmatprep.subr.bf16.mxu0 0
  %2587 = vmatpush1.bf16.msra.mxu0 0
  %2588 = vmatprep.subr.bf16.mxu0 0
  %2589 = vmatpush1.bf16.msra.mxu0 0
  %2590 = vmatprep.subr.bf16.mxu0 0
  %2591 = vmatpush1.bf16.msra.mxu0 0
  %2592 = vmatprep.subr.bf16.mxu0 0
  %2593 = vmatpush1.bf16.msra.mxu0 0
  %2594 = vmatprep.subr.bf16.mxu0 0
  %2595 = vmatpush1.bf16.msra.mxu0 0
  %2596 = vmatprep.subr.bf16.mxu0 0
  %2597 = vmatpush1.bf16.msra.mxu0 0
  %2598 = vmatprep.subr.bf16.mxu0 0
  %2599 = vmatpush1.bf16.msra.mxu0 0
  %2600 = vmatprep.subr.bf16.mxu0 0
  %2601 = vmatpush1.bf16.msra.mxu0 0
  %2602 = vmatprep.subr.bf16.mxu0 0
  %2603 = vmatpush1.bf16.msra.mxu0 0
  %2604 = vmatprep.mubr.bf16.mxu0 0
  %2605 = vmatmul.mubr.bf16.gmra.mrb[0].mxu0 %v2249
  %v2606 = vpop.f32.mrb[0].mxu0
  %v2607 = vadd.f32 %v2231, %v2606
  %v2608 = vpop.f32.mrb[0].mxu0
  %v2609 = vadd.f32 %v2235, %v2608
  %v2610 = vpop.f32.mrb[0].mxu0
  %v2611 = vadd.f32 %v2231, %v2610
  %v2612 = vpop.f32.mrb[0].mxu0
  %v2613 = vadd.f32 %v2235, %v2612
  %2614 = vmatprep.mubr.bf16.mxu0 0
  %2615 = vmatmul.mubr.bf16.gmra.mrb[0].mxu0 %v2252
  %v2616 = vpop.f32.mrb[0].mxu0
  %v2617 = vadd.f32 %v2231, %v2616
  %v2618 = vpop.f32.mrb[0].mxu0
  %v2619 = vadd.f32 %v2235, %v2618
  %v2620 = vpop.f32.mrb[0].mxu0
  %v2621 = vadd.f32 %v2231, %v2620
  %v2622 = vpop.f32.mrb[0].mxu0
  %v2623 = vadd.f32 %v2235, %v2622
  %2624 = vmatprep.mubr.bf16.mxu0 0
  %2625 = vmatmul.mubr.bf16.gmra.mrb[0].mxu0 %v2255
  %v2626 = vpop.f32.mrb[0].mxu0
  %v2627 = vadd.f32 %v2231, %v2626
  %v2628 = vpop.f32.mrb[0].mxu0
  %v2629 = vadd.f32 %v2235, %v2628
  %v2630 = vpop.f32.mrb[0].mxu0
  %v2631 = vadd.f32 %v2231, %v2630
  %v2632 = vpop.f32.mrb[0].mxu0
  %v2633 = vadd.f32 %v2235, %v2632
  %2634 = vdwg.mxu0
  %v2635 = vld [vmem:[%s65] sm:$0xff]
  %v2636 = vld [vmem:[%s65 + $0x8] sm:$0xff]
  %v2637 = vld [vmem:[%s65 + $0x10] sm:$0xff]
  %v2638 = vld [vmem:[%s65 + $0x18] sm:$0xff]
  %v2639 = vld [vmem:[%s65 + $0x20] sm:$0xff]
  %v2640 = vld [vmem:[%s65 + $0x28] sm:$0xff]
  %v2641 = vld [vmem:[%s65 + $0x30] sm:$0xff]
  %v2642 = vld [vmem:[%s65 + $0x38] sm:$0xff]
  %v2643 = vld [vmem:[%s65 + $0x40] sm:$0xff]
  %v2644 = vld [vmem:[%s65 + $0x48] sm:$0xff]
  %v2645 = vld [vmem:[%s65 + $0x50] sm:$0xff]
  %v2646 = vld [vmem:[%s65 + $0x58] sm:$0xff]
  %v2647 = vld [vmem:[%s65 + $0x60] sm:$0xff]
  %v2648 = vld [vmem:[%s65 + $0x68] sm:$0xff]
  %v2649 = vld [vmem:[%s65 + $0x70] sm:$0xff]
  %v2650 = vld [vmem:[%s65 + $0x78] sm:$0xff]
  %v2651 = vld [vmem:[%s65 + $0x80] sm:$0xff]
  %v2652 = vld [vmem:[%s65 + $0x88] sm:$0xff]
  %v2653 = vld [vmem:[%s65 + $0x90] sm:$0xff]
  %v2654 = vld [vmem:[%s65 + $0x98] sm:$0xff]
  %v2655 = vld [vmem:[%s65 + $0xa0] sm:$0xff]
  %v2656 = vld [vmem:[%s65 + $0xa8] sm:$0xff]
  %v2657 = vld [vmem:[%s65 + $0xb0] sm:$0xff]
  %v2658 = vld [vmem:[%s65 + $0xb8] sm:$0xff]
  %v2659 = vld [vmem:[%s65 + $0xc0] sm:$0xff]
  %v2660 = vld [vmem:[%s65 + $0xc8] sm:$0xff]
  %v2661 = vld [vmem:[%s65 + $0xd0] sm:$0xff]
  %v2662 = vld [vmem:[%s65 + $0xd8] sm:$0xff]
  %v2663 = vld [vmem:[%s65 + $0xe0] sm:$0xff]
  %v2664 = vld [vmem:[%s65 + $0xe8] sm:$0xff]
  %v2665 = vld [vmem:[%s65 + $0xf0] sm:$0xff]
  %v2666 = vld [vmem:[%s65 + $0xf8] sm:$0xff]
  %v2667 = vld [vmem:[%s65 + $0x100] sm:$0xff]
  %v2668 = vld [vmem:[%s65 + $0x108] sm:$0xff]
  %v2669 = vld [vmem:[%s65 + $0x110] sm:$0xff]
  %v2670 = vld [vmem:[%s65 + $0x118] sm:$0xff]
  %v2671 = vld [vmem:[%s65 + $0x120] sm:$0xff]
  %v2672 = vld [vmem:[%s65 + $0x128] sm:$0xff]
  %v2673 = vld [vmem:[%s65 + $0x130] sm:$0xff]
  %v2674 = vld [vmem:[%s65 + $0x138] sm:$0xff]
  %v2675 = vld [vmem:[%s65 + $0x140] sm:$0xff]
  %v2676 = vld [vmem:[%s65 + $0x148] sm:$0xff]
  %v2677 = vld [vmem:[%s65 + $0x150] sm:$0xff]
  %v2678 = vld [vmem:[%s65 + $0x158] sm:$0xff]
  %v2679 = vld [vmem:[%s65 + $0x160] sm:$0xff]
  %v2680 = vld [vmem:[%s65 + $0x168] sm:$0xff]
  %v2681 = vld [vmem:[%s65 + $0x170] sm:$0xff]
  %v2682 = vld [vmem:[%s65 + $0x178] sm:$0xff]
  %v2683 = vpack.c.bf16 %v2647, %v2635
  %v2684 = vpack.c.bf16 %v2648, %v2636
  %v2685 = vpack.c.bf16 %v2649, %v2637
  %v2686 = vpack.c.bf16 %v2650, %v2638
  %v2687 = vpack.c.bf16 %v2651, %v2639
  %v2688 = vpack.c.bf16 %v2652, %v2640
  %v2689 = vpack.c.bf16 %v2653, %v2641
  %v2690 = vpack.c.bf16 %v2654, %v2642
  %v2691 = vpack.c.bf16 %v2655, %v2643
  %v2692 = vpack.c.bf16 %v2656, %v2644
  %v2693 = vpack.c.bf16 %v2657, %v2645
  %v2694 = vpack.c.bf16 %v2658, %v2646
  %v2695 = vpack.c.bf16 %v2671, %v2659
  %v2696 = vpack.c.bf16 %v2672, %v2660
  %v2697 = vpack.c.bf16 %v2673, %v2661
  %v2698 = vpack.c.bf16 %v2674, %v2662
  %v2699 = vpack.c.bf16 %v2675, %v2663
  %v2700 = vpack.c.bf16 %v2676, %v2664
  %v2701 = vpack.c.bf16 %v2677, %v2665
  %v2702 = vpack.c.bf16 %v2678, %v2666
  %v2703 = vpack.c.bf16 %v2679, %v2667
  %v2704 = vpack.c.bf16 %v2680, %v2668
  %v2705 = vpack.c.bf16 %v2681, %v2669
  %v2706 = vpack.c.bf16 %v2682, %v2670
  %v2707 = vld [vmem:[%s67] sm:$0xff]
  %v2708 = vld [vmem:[%s67 + $0x8] sm:$0xf]
  %v2711 = vlaneseq
  %v2712 = vshrl.u32 %v2711, 7
  %v2713 = vsub.s32 0, %v2712
  %v2714 = vrot.slane %v2707, %v2713
  %v2715 = vlaneseq
  %v2716 = vshrl.u32 %v2715, 7
  %v2717 = vsub.s32 1, %v2716
  %v2718 = vrot.slane %v2707, %v2717
  %v2719 = vlaneseq
  %v2720 = vshrl.u32 %v2719, 7
  %v2721 = vsub.s32 2, %v2720
  %v2722 = vrot.slane %v2707, %v2721
  %v2723 = vlaneseq
  %v2724 = vshrl.u32 %v2723, 7
  %v2725 = vsub.s32 3, %v2724
  %v2726 = vrot.slane %v2707, %v2725
  %v2727 = vlaneseq
  %v2728 = vshrl.u32 %v2727, 7
  %v2729 = vsub.s32 4, %v2728
  %v2730 = vrot.slane %v2707, %v2729
  %v2731 = vlaneseq
  %v2732 = vshrl.u32 %v2731, 7
  %v2733 = vsub.s32 5, %v2732
  %v2734 = vrot.slane %v2707, %v2733
  %v2735 = vlaneseq
  %v2736 = vshrl.u32 %v2735, 7
  %v2737 = vsub.s32 6, %v2736
  %v2738 = vrot.slane %v2707, %v2737
  %v2739 = vlaneseq
  %v2740 = vshrl.u32 %v2739, 7
  %v2741 = vsub.s32 7, %v2740
  %v2742 = vrot.slane %v2707, %v2741
  %v2743 = vlaneseq
  %v2744 = vshrl.u32 %v2743, 7
  %v2745 = vsub.s32 0, %v2744
  %v2746 = vrot.slane %v2708, %v2745
  %v2747 = vlaneseq
  %v2748 = vshrl.u32 %v2747, 7
  %v2749 = vsub.s32 1, %v2748
  %v2750 = vrot.slane %v2708, %v2749
  %v2751 = vlaneseq
  %v2752 = vshrl.u32 %v2751, 7
  %v2753 = vsub.s32 2, %v2752
  %v2754 = vrot.slane %v2708, %v2753
  %v2755 = vlaneseq
  %v2756 = vshrl.u32 %v2755, 7
  %v2757 = vsub.s32 3, %v2756
  %v2758 = vrot.slane %v2708, %v2757
  %2774 = vrot.lane.b32.xlu0 %v2157, 96
  %v2775 = vpop.permute.xlu0 %2774
  %2776 = vrot.lane.b32.xlu0 %v2158, 96
  %v2777 = vpop.permute.xlu0 %2776
  %2778 = vrot.lane.b32.xlu0 %v2159, 96
  %v2779 = vpop.permute.xlu0 %2778
  %v2781 = vsel %vm423, %v2775, 0
  %v2784 = vsel %vm423, %v2777, 0
  %v2787 = vsel %vm423, %v2779, 0
  %2789 = vmatprep.subr.bf16.mxu0 %v2684
  %2790 = vmatpush1.bf16.msra.mxu0 %v2683
  %2791 = vmatprep.subr.bf16.mxu0 %v2696
  %2792 = vmatpush1.bf16.msra.mxu0 %v2695
  %2793 = vmatprep.subr.bf16.mxu0 0
  %2794 = vmatpush1.bf16.msra.mxu0 0
  %2795 = vmatprep.subr.bf16.mxu0 0
  %2796 = vmatpush1.bf16.msra.mxu0 0
  %2797 = vmatprep.subr.bf16.mxu0 0
  %2798 = vmatpush1.bf16.msra.mxu0 0
  %2799 = vmatprep.subr.bf16.mxu0 0
  %2800 = vmatpush1.bf16.msra.mxu0 0
  %2801 = vmatprep.subr.bf16.mxu0 0
  %2802 = vmatpush1.bf16.msra.mxu0 0
  %2803 = vmatprep.subr.bf16.mxu0 0
  %2804 = vmatpush1.bf16.msra.mxu0 0
  %2805 = vmatprep.subr.bf16.mxu0 0
  %2806 = vmatpush1.bf16.msra.mxu0 0
  %2807 = vmatprep.subr.bf16.mxu0 0
  %2808 = vmatpush1.bf16.msra.mxu0 0
  %2809 = vmatprep.subr.bf16.mxu0 0
  %2810 = vmatpush1.bf16.msra.mxu0 0
  %2811 = vmatprep.subr.bf16.mxu0 0
  %2812 = vmatpush1.bf16.msra.mxu0 0
  %2813 = vmatprep.subr.bf16.mxu0 0
  %2814 = vmatpush1.bf16.msra.mxu0 0
  %2815 = vmatprep.subr.bf16.mxu0 0
  %2816 = vmatpush1.bf16.msra.mxu0 0
  %2817 = vmatprep.subr.bf16.mxu0 0
  %2818 = vmatpush1.bf16.msra.mxu0 0
  %2819 = vmatprep.subr.bf16.mxu0 0
  %2820 = vmatpush1.bf16.msra.mxu0 0
  %2821 = vmatprep.mubr.bf16.mxu0 0
  %2822 = vmatmul.mubr.bf16.gmra.mrb[0].mxu0 %v2781
  %v2823 = vpop.f32.mrb[0].mxu0
  %v2824 = vadd.f32 %v2714, %v2823
  %v2825 = vpop.f32.mrb[0].mxu0
  %v2826 = vadd.f32 %v2718, %v2825
  %v2827 = vpop.f32.mrb[0].mxu0
  %v2828 = vadd.f32 %v2714, %v2827
  %v2829 = vpop.f32.mrb[0].mxu0
  %v2830 = vadd.f32 %v2718, %v2829
  %2831 = vmatprep.mubr.bf16.mxu0 0
  %2832 = vmatmul.mubr.bf16.gmra.mrb[0].mxu0 %v2784
  %v2833 = vpop.f32.mrb[0].mxu0
  %v2834 = vadd.f32 %v2714, %v2833
  %v2835 = vpop.f32.mrb[0].mxu0
  %v2836 = vadd.f32 %v2718, %v2835
  %v2837 = vpop.f32.mrb[0].mxu0
  %v2838 = vadd.f32 %v2714, %v2837
  %v2839 = vpop.f32.mrb[0].mxu0
  %v2840 = vadd.f32 %v2718, %v2839
  %2841 = vmatprep.mubr.bf16.mxu0 0
  %2842 = vmatmul.mubr.bf16.gmra.mrb[0].mxu0 %v2787
  %v2843 = vpop.f32.mrb[0].mxu0
  %v2844 = vadd.f32 %v2714, %v2843
  %v2845 = vpop.f32.mrb[0].mxu0
  %v2846 = vadd.f32 %v2718, %v2845
  %v2847 = vpop.f32.mrb[0].mxu0
  %v2848 = vadd.f32 %v2714, %v2847
  %v2849 = vpop.f32.mrb[0].mxu0
  %v2850 = vadd.f32 %v2718, %v2849
  %2851 = vdwg.mxu0
  %2852 = vmatprep.subr.bf16.mxu0 %v2686
  %2853 = vmatpush1.bf16.msra.mxu0 %v2685
  %2854 = vmatprep.subr.bf16.mxu0 %v2698
  %2855 = vmatpush1.bf16.msra.mxu0 %v2697
  %2856 = vmatprep.subr.bf16.mxu0 0
  %2857 = vmatpush1.bf16.msra.mxu0 0
  %2858 = vmatprep.subr.bf16.mxu0 0
  %2859 = vmatpush1.bf16.msra.mxu0 0
  %2860 = vmatprep.subr.bf16.mxu0 0
  %2861 = vmatpush1.bf16.msra.mxu0 0
  %2862 = vmatprep.subr.bf16.mxu0 0
  %2863 = vmatpush1.bf16.msra.mxu0 0
  %2864 = vmatprep.subr.bf16.mxu0 0
  %2865 = vmatpush1.bf16.msra.mxu0 0
  %2866 = vmatprep.subr.bf16.mxu0 0
  %2867 = vmatpush1.bf16.msra.mxu0 0
  %2868 = vmatprep.subr.bf16.mxu0 0
  %2869 = vmatpush1.bf16.msra.mxu0 0
  %2870 = vmatprep.subr.bf16.mxu0 0
  %2871 = vmatpush1.bf16.msra.mxu0 0
  %2872 = vmatprep.subr.bf16.mxu0 0
  %2873 = vmatpush1.bf16.msra.mxu0 0
  %2874 = vmatprep.subr.bf16.mxu0 0
  %2875 = vmatpush1.bf16.msra.mxu0 0
  %2876 = vmatprep.subr.bf16.mxu0 0
  %2877 = vmatpush1.bf16.msra.mxu0 0
  %2878 = vmatprep.subr.bf16.mxu0 0
  %2879 = vmatpush1.bf16.msra.mxu0 0
  %2880 = vmatprep.subr.bf16.mxu0 0
  %2881 = vmatpush1.bf16.msra.mxu0 0
  %2882 = vmatprep.subr.bf16.mxu0 0
  %2883 = vmatpush1.bf16.msra.mxu0 0
  %2884 = vmatprep.mubr.bf16.mxu0 0
  %2885 = vmatmul.mubr.bf16.gmra.mrb[0].mxu0 %v2781
  %v2886 = vpop.f32.mrb[0].mxu0
  %v2887 = vadd.f32 %v2722, %v2886
  %v2888 = vpop.f32.mrb[0].mxu0
  %v2889 = vadd.f32 %v2726, %v2888
  %v2890 = vpop.f32.mrb[0].mxu0
  %v2891 = vadd.f32 %v2722, %v2890
  %v2892 = vpop.f32.mrb[0].mxu0
  %v2893 = vadd.f32 %v2726, %v2892
  %2894 = vmatprep.mubr.bf16.mxu0 0
  %2895 = vmatmul.mubr.bf16.gmra.mrb[0].mxu0 %v2784
  %v2896 = vpop.f32.mrb[0].mxu0
  %v2897 = vadd.f32 %v2722, %v2896
  %v2898 = vpop.f32.mrb[0].mxu0
  %v2899 = vadd.f32 %v2726, %v2898
  %v2900 = vpop.f32.mrb[0].mxu0
  %v2901 = vadd.f32 %v2722, %v2900
  %v2902 = vpop.f32.mrb[0].mxu0
  %v2903 = vadd.f32 %v2726, %v2902
  %2904 = vmatprep.mubr.bf16.mxu0 0
  %2905 = vmatmul.mubr.bf16.gmra.mrb[0].mxu0 %v2787
  %v2906 = vpop.f32.mrb[0].mxu0
  %v2907 = vadd.f32 %v2722, %v2906
  %v2908 = vpop.f32.mrb[0].mxu0
  %v2909 = vadd.f32 %v2726, %v2908
  %v2910 = vpop.f32.mrb[0].mxu0
  %v2911 = vadd.f32 %v2722, %v2910
  %v2912 = vpop.f32.mrb[0].mxu0
  %v2913 = vadd.f32 %v2726, %v2912
  %2914 = vdwg.mxu0
  %2915 = vmatprep.subr.bf16.mxu0 %v2688
  %2916 = vmatpush1.bf16.msra.mxu0 %v2687
  %2917 = vmatprep.subr.bf16.mxu0 %v2700
  %2918 = vmatpush1.bf16.msra.mxu0 %v2699
  %2919 = vmatprep.subr.bf16.mxu0 0
  %2920 = vmatpush1.bf16.msra.mxu0 0
  %2921 = vmatprep.subr.bf16.mxu0 0
  %2922 = vmatpush1.bf16.msra.mxu0 0
  %2923 = vmatprep.subr.bf16.mxu0 0
  %2924 = vmatpush1.bf16.msra.mxu0 0
  %2925 = vmatprep.subr.bf16.mxu0 0
  %2926 = vmatpush1.bf16.msra.mxu0 0
  %2927 = vmatprep.subr.bf16.mxu0 0
  %2928 = vmatpush1.bf16.msra.mxu0 0
  %2929 = vmatprep.subr.bf16.mxu0 0
  %2930 = vmatpush1.bf16.msra.mxu0 0
  %2931 = vmatprep.subr.bf16.mxu0 0
  %2932 = vmatpush1.bf16.msra.mxu0 0
  %2933 = vmatprep.subr.bf16.mxu0 0
  %2934 = vmatpush1.bf16.msra.mxu0 0
  %2935 = vmatprep.subr.bf16.mxu0 0
  %2936 = vmatpush1.bf16.msra.mxu0 0
  %2937 = vmatprep.subr.bf16.mxu0 0
  %2938 = vmatpush1.bf16.msra.mxu0 0
  %2939 = vmatprep.subr.bf16.mxu0 0
  %2940 = vmatpush1.bf16.msra.mxu0 0
  %2941 = vmatprep.subr.bf16.mxu0 0
  %2942 = vmatpush1.bf16.msra.mxu0 0
  %2943 = vmatprep.subr.bf16.mxu0 0
  %2944 = vmatpush1.bf16.msra.mxu0 0
  %2945 = vmatprep.subr.bf16.mxu0 0
  %2946 = vmatpush1.bf16.msra.mxu0 0
  %2947 = vmatprep.mubr.bf16.mxu0 0
  %2948 = vmatmul.mubr.bf16.gmra.mrb[0].mxu0 %v2781
  %v2949 = vpop.f32.mrb[0].mxu0
  %v2950 = vadd.f32 %v2730, %v2949
  %v2951 = vpop.f32.mrb[0].mxu0
  %v2952 = vadd.f32 %v2734, %v2951
  %v2953 = vpop.f32.mrb[0].mxu0
  %v2954 = vadd.f32 %v2730, %v2953
  %v2955 = vpop.f32.mrb[0].mxu0
  %v2956 = vadd.f32 %v2734, %v2955
  %2957 = vmatprep.mubr.bf16.mxu0 0
  %2958 = vmatmul.mubr.bf16.gmra.mrb[0].mxu0 %v2784
  %v2959 = vpop.f32.mrb[0].mxu0
  %v2960 = vadd.f32 %v2730, %v2959
  %v2961 = vpop.f32.mrb[0].mxu0
  %v2962 = vadd.f32 %v2734, %v2961
  %v2963 = vpop.f32.mrb[0].mxu0
  %v2964 = vadd.f32 %v2730, %v2963
  %v2965 = vpop.f32.mrb[0].mxu0
  %v2966 = vadd.f32 %v2734, %v2965
  %2967 = vmatprep.mubr.bf16.mxu0 0
  %2968 = vmatmul.mubr.bf16.gmra.mrb[0].mxu0 %v2787
  %v2969 = vpop.f32.mrb[0].mxu0
  %v2970 = vadd.f32 %v2730, %v2969
  %v2971 = vpop.f32.mrb[0].mxu0
  %v2972 = vadd.f32 %v2734, %v2971
  %v2973 = vpop.f32.mrb[0].mxu0
  %v2974 = vadd.f32 %v2730, %v2973
  %v2975 = vpop.f32.mrb[0].mxu0
  %v2976 = vadd.f32 %v2734, %v2975
  %2977 = vdwg.mxu0
  %2978 = vmatprep.subr.bf16.mxu0 %v2690
  %2979 = vmatpush1.bf16.msra.mxu0 %v2689
  %2980 = vmatprep.subr.bf16.mxu0 %v2702
  %2981 = vmatpush1.bf16.msra.mxu0 %v2701
  %2982 = vmatprep.subr.bf16.mxu0 0
  %2983 = vmatpush1.bf16.msra.mxu0 0
  %2984 = vmatprep.subr.bf16.mxu0 0
  %2985 = vmatpush1.bf16.msra.mxu0 0
  %2986 = vmatprep.subr.bf16.mxu0 0
  %2987 = vmatpush1.bf16.msra.mxu0 0
  %2988 = vmatprep.subr.bf16.mxu0 0
  %2989 = vmatpush1.bf16.msra.mxu0 0
  %2990 = vmatprep.subr.bf16.mxu0 0
  %2991 = vmatpush1.bf16.msra.mxu0 0
  %2992 = vmatprep.subr.bf16.mxu0 0
  %2993 = vmatpush1.bf16.msra.mxu0 0
  %2994 = vmatprep.subr.bf16.mxu0 0
  %2995 = vmatpush1.bf16.msra.mxu0 0
  %2996 = vmatprep.subr.bf16.mxu0 0
  %2997 = vmatpush1.bf16.msra.mxu0 0
  %2998 = vmatprep.subr.bf16.mxu0 0
  %2999 = vmatpush1.bf16.msra.mxu0 0
  %3000 = vmatprep.subr.bf16.mxu0 0
  %3001 = vmatpush1.bf16.msra.mxu0 0
  %3002 = vmatprep.subr.bf16.mxu0 0
  %3003 = vmatpush1.bf16.msra.mxu0 0
  %3004 = vmatprep.subr.bf16.mxu0 0
  %3005 = vmatpush1.bf16.msra.mxu0 0
  %3006 = vmatprep.subr.bf16.mxu0 0
  %3007 = vmatpush1.bf16.msra.mxu0 0
  %3008 = vmatprep.subr.bf16.mxu0 0
  %3009 = vmatpush1.bf16.msra.mxu0 0
  %3010 = vmatprep.mubr.bf16.mxu0 0
  %3011 = vmatmul.mubr.bf16.gmra.mrb[0].mxu0 %v2781
  %v3012 = vpop.f32.mrb[0].mxu0
  %v3013 = vadd.f32 %v2738, %v3012
  %v3014 = vpop.f32.mrb[0].mxu0
  %v3015 = vadd.f32 %v2742, %v3014
  %v3016 = vpop.f32.mrb[0].mxu0
  %v3017 = vadd.f32 %v2738, %v3016
  %v3018 = vpop.f32.mrb[0].mxu0
  %v3019 = vadd.f32 %v2742, %v3018
  %3020 = vmatprep.mubr.bf16.mxu0 0
  %3021 = vmatmul.mubr.bf16.gmra.mrb[0].mxu0 %v2784
  %v3022 = vpop.f32.mrb[0].mxu0
  %v3023 = vadd.f32 %v2738, %v3022
  %v3024 = vpop.f32.mrb[0].mxu0
  %v3025 = vadd.f32 %v2742, %v3024
  %v3026 = vpop.f32.mrb[0].mxu0
  %v3027 = vadd.f32 %v2738, %v3026
  %v3028 = vpop.f32.mrb[0].mxu0
  %v3029 = vadd.f32 %v2742, %v3028
  %3030 = vmatprep.mubr.bf16.mxu0 0
  %3031 = vmatmul.mubr.bf16.gmra.mrb[0].mxu0 %v2787
  %v3032 = vpop.f32.mrb[0].mxu0
  %v3033 = vadd.f32 %v2738, %v3032
  %v3034 = vpop.f32.mrb[0].mxu0
  %v3035 = vadd.f32 %v2742, %v3034
  %v3036 = vpop.f32.mrb[0].mxu0
  %v3037 = vadd.f32 %v2738, %v3036
  %v3038 = vpop.f32.mrb[0].mxu0
  %v3039 = vadd.f32 %v2742, %v3038
  %3040 = vdwg.mxu0
  %3041 = vmatprep.subr.bf16.mxu0 %v2692
  %3042 = vmatpush1.bf16.msra.mxu0 %v2691
  %3043 = vmatprep.subr.bf16.mxu0 %v2704
  %3044 = vmatpush1.bf16.msra.mxu0 %v2703
  %3045 = vmatprep.subr.bf16.mxu0 0
  %3046 = vmatpush1.bf16.msra.mxu0 0
  %3047 = vmatprep.subr.bf16.mxu0 0
  %3048 = vmatpush1.bf16.msra.mxu0 0
  %3049 = vmatprep.subr.bf16.mxu0 0
  %3050 = vmatpush1.bf16.msra.mxu0 0
  %3051 = vmatprep.subr.bf16.mxu0 0
  %3052 = vmatpush1.bf16.msra.mxu0 0
  %3053 = vmatprep.subr.bf16.mxu0 0
  %3054 = vmatpush1.bf16.msra.mxu0 0
  %3055 = vmatprep.subr.bf16.mxu0 0
  %3056 = vmatpush1.bf16.msra.mxu0 0
  %3057 = vmatprep.subr.bf16.mxu0 0
  %3058 = vmatpush1.bf16.msra.mxu0 0
  %3059 = vmatprep.subr.bf16.mxu0 0
  %3060 = vmatpush1.bf16.msra.mxu0 0
  %3061 = vmatprep.subr.bf16.mxu0 0
  %3062 = vmatpush1.bf16.msra.mxu0 0
  %3063 = vmatprep.subr.bf16.mxu0 0
  %3064 = vmatpush1.bf16.msra.mxu0 0
  %3065 = vmatprep.subr.bf16.mxu0 0
  %3066 = vmatpush1.bf16.msra.mxu0 0
  %3067 = vmatprep.subr.bf16.mxu0 0
  %3068 = vmatpush1.bf16.msra.mxu0 0
  %3069 = vmatprep.subr.bf16.mxu0 0
  %3070 = vmatpush1.bf16.msra.mxu0 0
  %3071 = vmatprep.subr.bf16.mxu0 0
  %3072 = vmatpush1.bf16.msra.mxu0 0
  %3073 = vmatprep.mubr.bf16.mxu0 0
  %3074 = vmatmul.mubr.bf16.gmra.mrb[0].mxu0 %v2781
  %v3075 = vpop.f32.mrb[0].mxu0
  %v3076 = vadd.f32 %v2746, %v3075
  %v3077 = vpop.f32.mrb[0].mxu0
  %v3078 = vadd.f32 %v2750, %v3077
  %v3079 = vpop.f32.mrb[0].mxu0
  %v3080 = vadd.f32 %v2746, %v3079
  %v3081 = vpop.f32.mrb[0].mxu0
  %v3082 = vadd.f32 %v2750, %v3081
  %3083 = vmatprep.mubr.bf16.mxu0 0
  %3084 = vmatmul.mubr.bf16.gmra.mrb[0].mxu0 %v2784
  %v3085 = vpop.f32.mrb[0].mxu0
  %v3086 = vadd.f32 %v2746, %v3085
  %v3087 = vpop.f32.mrb[0].mxu0
  %v3088 = vadd.f32 %v2750, %v3087
  %v3089 = vpop.f32.mrb[0].mxu0
  %v3090 = vadd.f32 %v2746, %v3089
  %v3091 = vpop.f32.mrb[0].mxu0
  %v3092 = vadd.f32 %v2750, %v3091
  %3093 = vmatprep.mubr.bf16.mxu0 0
  %3094 = vmatmul.mubr.bf16.gmra.mrb[0].mxu0 %v2787
  %v3095 = vpop.f32.mrb[0].mxu0
  %v3096 = vadd.f32 %v2746, %v3095
  %v3097 = vpop.f32.mrb[0].mxu0
  %v3098 = vadd.f32 %v2750, %v3097
  %v3099 = vpop.f32.mrb[0].mxu0
  %v3100 = vadd.f32 %v2746, %v3099
  %v3101 = vpop.f32.mrb[0].mxu0
  %v3102 = vadd.f32 %v2750, %v3101
  %3103 = vdwg.mxu0
  %3104 = vmatprep.subr.bf16.mxu0 %v2694
  %3105 = vmatpush1.bf16.msra.mxu0 %v2693
  %3106 = vmatprep.subr.bf16.mxu0 %v2706
  %3107 = vmatpush1.bf16.msra.mxu0 %v2705
  %3108 = vmatprep.subr.bf16.mxu0 0
  %3109 = vmatpush1.bf16.msra.mxu0 0
  %3110 = vmatprep.subr.bf16.mxu0 0
  %3111 = vmatpush1.bf16.msra.mxu0 0
  %3112 = vmatprep.subr.bf16.mxu0 0
  %3113 = vmatpush1.bf16.msra.mxu0 0
  %3114 = vmatprep.subr.bf16.mxu0 0
  %3115 = vmatpush1.bf16.msra.mxu0 0
  %3116 = vmatprep.subr.bf16.mxu0 0
  %3117 = vmatpush1.bf16.msra.mxu0 0
  %3118 = vmatprep.subr.bf16.mxu0 0
  %3119 = vmatpush1.bf16.msra.mxu0 0
  %3120 = vmatprep.subr.bf16.mxu0 0
  %3121 = vmatpush1.bf16.msra.mxu0 0
  %3122 = vmatprep.subr.bf16.mxu0 0
  %3123 = vmatpush1.bf16.msra.mxu0 0
  %3124 = vmatprep.subr.bf16.mxu0 0
  %3125 = vmatpush1.bf16.msra.mxu0 0
  %3126 = vmatprep.subr.bf16.mxu0 0
  %3127 = vmatpush1.bf16.msra.mxu0 0
  %3128 = vmatprep.subr.bf16.mxu0 0
  %3129 = vmatpush1.bf16.msra.mxu0 0
  %3130 = vmatprep.subr.bf16.mxu0 0
  %3131 = vmatpush1.bf16.msra.mxu0 0
  %3132 = vmatprep.subr.bf16.mxu0 0
  %3133 = vmatpush1.bf16.msra.mxu0 0
  %3134 = vmatprep.subr.bf16.mxu0 0
  %3135 = vmatpush1.bf16.msra.mxu0 0
  %3136 = vmatprep.mubr.bf16.mxu0 0
  %3137 = vmatmul.mubr.bf16.gmra.mrb[0].mxu0 %v2781
  %v3138 = vpop.f32.mrb[0].mxu0
  %v3139 = vadd.f32 %v2754, %v3138
  %v3140 = vpop.f32.mrb[0].mxu0
  %v3141 = vadd.f32 %v2758, %v3140
  %v3142 = vpop.f32.mrb[0].mxu0
  %v3143 = vadd.f32 %v2754, %v3142
  %v3144 = vpop.f32.mrb[0].mxu0
  %v3145 = vadd.f32 %v2758, %v3144
  %3146 = vmatprep.mubr.bf16.mxu0 0
  %3147 = vmatmul.mubr.bf16.gmra.mrb[0].mxu0 %v2784
  %v3148 = vpop.f32.mrb[0].mxu0
  %v3149 = vadd.f32 %v2754, %v3148
  %v3150 = vpop.f32.mrb[0].mxu0
  %v3151 = vadd.f32 %v2758, %v3150
  %v3152 = vpop.f32.mrb[0].mxu0
  %v3153 = vadd.f32 %v2754, %v3152
  %v3154 = vpop.f32.mrb[0].mxu0
  %v3155 = vadd.f32 %v2758, %v3154
  %3156 = vmatprep.mubr.bf16.mxu0 0
  %3157 = vmatmul.mubr.bf16.gmra.mrb[0].mxu0 %v2787
  %v3158 = vpop.f32.mrb[0].mxu0
  %v3159 = vadd.f32 %v2754, %v3158
  %v3160 = vpop.f32.mrb[0].mxu0
  %v3161 = vadd.f32 %v2758, %v3160
  %v3162 = vpop.f32.mrb[0].mxu0
  %v3163 = vadd.f32 %v2754, %v3162
  %v3164 = vpop.f32.mrb[0].mxu0
  %v3165 = vadd.f32 %v2758, %v3164
  %3166 = vdwg.mxu0
  %v3167 = vpack.c.bf16 %v2032, %v2031
  %3168 = vmatprep.subr.bf16.mxu0 0
  %3169 = vmatpush1.bf16.msra.mxu0 %v3167
  %3170 = vmatprep.subr.bf16.mxu0 0
  %3171 = vmatpush1.bf16.msra.mxu0 0
  %3172 = vmatprep.subr.bf16.mxu0 0
  %3173 = vmatpush1.bf16.msra.mxu0 0
  %3174 = vmatprep.subr.bf16.mxu0 0
  %3175 = vmatpush1.bf16.msra.mxu0 0
  %3176 = vmatprep.subr.bf16.mxu0 0
  %3177 = vmatpush1.bf16.msra.mxu0 0
  %3178 = vmatprep.subr.bf16.mxu0 0
  %3179 = vmatpush1.bf16.msra.mxu0 0
  %3180 = vmatprep.subr.bf16.mxu0 0
  %3181 = vmatpush1.bf16.msra.mxu0 0
  %3182 = vmatprep.subr.bf16.mxu0 0
  %3183 = vmatpush1.bf16.msra.mxu0 0
  %3184 = vmatprep.subr.bf16.mxu0 0
  %3185 = vmatpush1.bf16.msra.mxu0 0
  %3186 = vmatprep.subr.bf16.mxu0 0
  %3187 = vmatpush1.bf16.msra.mxu0 0
  %3188 = vmatprep.subr.bf16.mxu0 0
  %3189 = vmatpush1.bf16.msra.mxu0 0
  %3190 = vmatprep.subr.bf16.mxu0 0
  %3191 = vmatpush1.bf16.msra.mxu0 0
  %3192 = vmatprep.subr.bf16.mxu0 0
  %3193 = vmatpush1.bf16.msra.mxu0 0
  %3194 = vmatprep.subr.bf16.mxu0 0
  %3195 = vmatpush1.bf16.msra.mxu0 0
  %3196 = vmatprep.subr.bf16.mxu0 0
  %3197 = vmatpush1.bf16.msra.mxu0 0
  %3198 = vmatprep.subr.bf16.mxu0 0
  %3199 = vmatpush1.bf16.msra.mxu0 0
  %3200 = vmatprep.mubr.bf16.mxu0 0
  %3201 = vmatmul.mubr.bf16.gmra.mrb[0].mxu0 %v1141
  %v3202 = vpop.f32.mrb[0].mxu0
  %v3203 = vadd.f32 0.0, %v3202
  %v3204 = vpop.f32.mrb[0].mxu0
  %v3205 = vpop.f32.mrb[0].mxu0
  %v3206 = vadd.f32 0.0, %v3205
  %v3207 = vpop.f32.mrb[0].mxu0
  %3208 = vmatprep.mubr.bf16.mxu0 0
  %3209 = vmatmul.mubr.bf16.gmra.mrb[0].mxu0 %v1144
  %v3210 = vpop.f32.mrb[0].mxu0
  %v3211 = vadd.f32 0.0, %v3210
  %v3212 = vpop.f32.mrb[0].mxu0
  %v3213 = vpop.f32.mrb[0].mxu0
  %v3214 = vadd.f32 0.0, %v3213
  %v3215 = vpop.f32.mrb[0].mxu0
  %3216 = vmatprep.mubr.bf16.mxu0 0
  %3217 = vmatmul.mubr.bf16.gmra.mrb[0].mxu0 %v1147
  %v3218 = vpop.f32.mrb[0].mxu0
  %v3219 = vadd.f32 0.0, %v3218
  %v3220 = vpop.f32.mrb[0].mxu0
  %v3221 = vpop.f32.mrb[0].mxu0
  %v3222 = vadd.f32 0.0, %v3221
  %v3223 = vpop.f32.mrb[0].mxu0
  %3224 = vdwg.mxu0
  %v3225 = vld [vmem:[%s73] sm:$0xff]
  %v3226 = vld [vmem:[%s73 + $0x8] sm:$0xff]
  %v3227 = vld [vmem:[%s73 + $0x10] sm:$0xff]
  %v3228 = vld [vmem:[%s73 + $0x18] sm:$0xff]
  %v3229 = vld [vmem:[%s73 + $0x20] sm:$0xff]
  %v3230 = vld [vmem:[%s73 + $0x28] sm:$0xff]
  %v3231 = vld [vmem:[%s73 + $0x30] sm:$0xff]
  %v3232 = vld [vmem:[%s73 + $0x38] sm:$0xff]
  %v3233 = vld [vmem:[%s73 + $0x40] sm:$0xff]
  %v3234 = vld [vmem:[%s73 + $0x48] sm:$0xff]
  %v3235 = vld [vmem:[%s73 + $0x50] sm:$0xff]
  %v3236 = vld [vmem:[%s73 + $0x58] sm:$0xff]
  %v3237 = vld [vmem:[%s73 + $0x60] sm:$0xff]
  %v3238 = vld [vmem:[%s73 + $0x68] sm:$0xff]
  %v3239 = vld [vmem:[%s73 + $0x70] sm:$0xff]
  %v3240 = vld [vmem:[%s73 + $0x78] sm:$0xff]
  %v3241 = vld [vmem:[%s73 + $0x80] sm:$0xff]
  %v3242 = vld [vmem:[%s73 + $0x88] sm:$0xff]
  %v3243 = vld [vmem:[%s73 + $0x90] sm:$0xff]
  %v3244 = vld [vmem:[%s73 + $0x98] sm:$0xff]
  %v3245 = vld [vmem:[%s73 + $0xa0] sm:$0xff]
  %v3246 = vld [vmem:[%s73 + $0xa8] sm:$0xff]
  %v3247 = vld [vmem:[%s73 + $0xb0] sm:$0xff]
  %v3248 = vld [vmem:[%s73 + $0xb8] sm:$0xff]
  %v3249 = vpack.c.bf16 %v3206, %v3203
  %v3250 = vpack.c.bf16 %v3214, %v3211
  %v3251 = vpack.c.bf16 %v3222, %v3219
  %v3276 = vunpack.c.l.b16 %v3225
  %v3277 = vunpack.c.h.b16 %v3225
  %v3278 = vunpack.c.l.b16 %v3226
  %v3279 = vunpack.c.h.b16 %v3226
  %v3280 = vunpack.c.l.b16 %v3227
  %v3281 = vunpack.c.h.b16 %v3227
  %v3282 = vunpack.c.l.b16 %v3228
  %v3283 = vunpack.c.h.b16 %v3228
  %v3284 = vunpack.c.l.b16 %v3229
  %v3285 = vunpack.c.h.b16 %v3229
  %v3286 = vunpack.c.l.b16 %v3230
  %v3287 = vunpack.c.h.b16 %v3230
  %v3288 = vunpack.c.l.b16 %v3231
  %v3289 = vunpack.c.h.b16 %v3231
  %v3290 = vunpack.c.l.b16 %v3232
  %v3291 = vunpack.c.h.b16 %v3232
  %v3292 = vunpack.c.l.b16 %v3233
  %v3293 = vunpack.c.h.b16 %v3233
  %v3294 = vunpack.c.l.b16 %v3234
  %v3295 = vunpack.c.h.b16 %v3234
  %v3296 = vunpack.c.l.b16 %v3235
  %v3297 = vunpack.c.h.b16 %v3235
  %v3298 = vunpack.c.l.b16 %v3236
  %v3299 = vunpack.c.h.b16 %v3236
  %v3300 = vunpack.c.l.b16 %v3237
  %v3301 = vunpack.c.h.b16 %v3237
  %v3302 = vunpack.c.l.b16 %v3238
  %v3303 = vunpack.c.h.b16 %v3238
  %v3304 = vunpack.c.l.b16 %v3239
  %v3305 = vunpack.c.h.b16 %v3239
  %v3306 = vunpack.c.l.b16 %v3240
  %v3307 = vunpack.c.h.b16 %v3240
  %v3308 = vunpack.c.l.b16 %v3241
  %v3309 = vunpack.c.h.b16 %v3241
  %v3310 = vunpack.c.l.b16 %v3242
  %v3311 = vunpack.c.h.b16 %v3242
  %v3312 = vunpack.c.l.b16 %v3243
  %v3313 = vunpack.c.h.b16 %v3243
  %v3314 = vunpack.c.l.b16 %v3244
  %v3315 = vunpack.c.h.b16 %v3244
  %v3316 = vunpack.c.l.b16 %v3245
  %v3317 = vunpack.c.h.b16 %v3245
  %v3318 = vunpack.c.l.b16 %v3246
  %v3319 = vunpack.c.h.b16 %v3246
  %v3320 = vunpack.c.l.b16 %v3247
  %v3321 = vunpack.c.h.b16 %v3247
  %v3322 = vunpack.c.l.b16 %v3248
  %v3323 = vunpack.c.h.b16 %v3248
  %v3324 = vpack.c.b16 %v3288, %v3276
  %v3325 = vpack.c.b16 %v3289, %v3277
  %v3326 = vpack.c.b16 %v3290, %v3278
  %v3327 = vpack.c.b16 %v3291, %v3279
  %v3328 = vpack.c.b16 %v3292, %v3280
  %v3329 = vpack.c.b16 %v3293, %v3281
  %v3330 = vpack.c.b16 %v3294, %v3282
  %v3331 = vpack.c.b16 %v3295, %v3283
  %v3332 = vpack.c.b16 %v3296, %v3284
  %v3333 = vpack.c.b16 %v3297, %v3285
  %v3334 = vpack.c.b16 %v3298, %v3286
  %v3335 = vpack.c.b16 %v3299, %v3287
  %v3336 = vpack.c.b16 %v3312, %v3300
  %v3337 = vpack.c.b16 %v3313, %v3301
  %v3338 = vpack.c.b16 %v3314, %v3302
  %v3339 = vpack.c.b16 %v3315, %v3303
  %v3340 = vpack.c.b16 %v3316, %v3304
  %v3341 = vpack.c.b16 %v3317, %v3305
  %v3342 = vpack.c.b16 %v3318, %v3306
  %v3343 = vpack.c.b16 %v3319, %v3307
  %v3344 = vpack.c.b16 %v3320, %v3308
  %v3345 = vpack.c.b16 %v3321, %v3309
  %v3346 = vpack.c.b16 %v3322, %v3310
  %v3347 = vpack.c.b16 %v3323, %v3311
  %v3373 = vsel %vm423, %v3249, 0
  %v3376 = vsel %vm423, %v3250, 0
  %v3379 = vsel %vm423, %v3251, 0
  %3381 = vmatprep.subr.bf16.mxu0 %v3325
  %3382 = vmatpush1.bf16.msra.mxu0 %v3324
  %3383 = vmatprep.subr.bf16.mxu0 %v3337
  %3384 = vmatpush1.bf16.msra.mxu0 %v3336
  %3385 = vmatprep.subr.bf16.mxu0 0
  %3386 = vmatpush1.bf16.msra.mxu0 0
  %3387 = vmatprep.subr.bf16.mxu0 0
  %3388 = vmatpush1.bf16.msra.mxu0 0
  %3389 = vmatprep.subr.bf16.mxu0 0
  %3390 = vmatpush1.bf16.msra.mxu0 0
  %3391 = vmatprep.subr.bf16.mxu0 0
  %3392 = vmatpush1.bf16.msra.mxu0 0
  %3393 = vmatprep.subr.bf16.mxu0 0
  %3394 = vmatpush1.bf16.msra.mxu0 0
  %3395 = vmatprep.subr.bf16.mxu0 0
  %3396 = vmatpush1.bf16.msra.mxu0 0
  %3397 = vmatprep.subr.bf16.mxu0 0
  %3398 = vmatpush1.bf16.msra.mxu0 0
  %3399 = vmatprep.subr.bf16.mxu0 0
  %3400 = vmatpush1.bf16.msra.mxu0 0
  %3401 = vmatprep.subr.bf16.mxu0 0
  %3402 = vmatpush1.bf16.msra.mxu0 0
  %3403 = vmatprep.subr.bf16.mxu0 0
  %3404 = vmatpush1.bf16.msra.mxu0 0
  %3405 = vmatprep.subr.bf16.mxu0 0
  %3406 = vmatpush1.bf16.msra.mxu0 0
  %3407 = vmatprep.subr.bf16.mxu0 0
  %3408 = vmatpush1.bf16.msra.mxu0 0
  %3409 = vmatprep.subr.bf16.mxu0 0
  %3410 = vmatpush1.bf16.msra.mxu0 0
  %3411 = vmatprep.subr.bf16.mxu0 0
  %3412 = vmatpush1.bf16.msra.mxu0 0
  %3413 = vmatprep.mubr.bf16.mxu0 0
  %3414 = vmatmul.mubr.bf16.gmra.mrb[0].mxu0 %v3373
  %v3415 = vpop.f32.mrb[0].mxu0
  %v3416 = vadd.f32 0.0, %v3415
  %v3417 = vpop.f32.mrb[0].mxu0
  %v3418 = vadd.f32 0.0, %v3417
  %v3419 = vpop.f32.mrb[0].mxu0
  %v3420 = vadd.f32 0.0, %v3419
  %v3421 = vpop.f32.mrb[0].mxu0
  %v3422 = vadd.f32 0.0, %v3421
  %3423 = vmatprep.mubr.bf16.mxu0 0
  %3424 = vmatmul.mubr.bf16.gmra.mrb[0].mxu0 %v3376
  %v3425 = vpop.f32.mrb[0].mxu0
  %v3426 = vadd.f32 0.0, %v3425
  %v3427 = vpop.f32.mrb[0].mxu0
  %v3428 = vadd.f32 0.0, %v3427
  %v3429 = vpop.f32.mrb[0].mxu0
  %v3430 = vadd.f32 0.0, %v3429
  %v3431 = vpop.f32.mrb[0].mxu0
  %v3432 = vadd.f32 0.0, %v3431
  %3433 = vmatprep.mubr.bf16.mxu0 0
  %3434 = vmatmul.mubr.bf16.gmra.mrb[0].mxu0 %v3379
  %v3435 = vpop.f32.mrb[0].mxu0
  %v3436 = vadd.f32 0.0, %v3435
  %v3437 = vpop.f32.mrb[0].mxu0
  %v3438 = vadd.f32 0.0, %v3437
  %v3439 = vpop.f32.mrb[0].mxu0
  %v3440 = vadd.f32 0.0, %v3439
  %v3441 = vpop.f32.mrb[0].mxu0
  %v3442 = vadd.f32 0.0, %v3441
  %3443 = vdwg.mxu0
  %3444 = vmatprep.subr.bf16.mxu0 %v3327
  %3445 = vmatpush1.bf16.msra.mxu0 %v3326
  %3446 = vmatprep.subr.bf16.mxu0 %v3339
  %3447 = vmatpush1.bf16.msra.mxu0 %v3338
  %3448 = vmatprep.subr.bf16.mxu0 0
  %3449 = vmatpush1.bf16.msra.mxu0 0
  %3450 = vmatprep.subr.bf16.mxu0 0
  %3451 = vmatpush1.bf16.msra.mxu0 0
  %3452 = vmatprep.subr.bf16.mxu0 0
  %3453 = vmatpush1.bf16.msra.mxu0 0
  %3454 = vmatprep.subr.bf16.mxu0 0
  %3455 = vmatpush1.bf16.msra.mxu0 0
  %3456 = vmatprep.subr.bf16.mxu0 0
  %3457 = vmatpush1.bf16.msra.mxu0 0
  %3458 = vmatprep.subr.bf16.mxu0 0
  %3459 = vmatpush1.bf16.msra.mxu0 0
  %3460 = vmatprep.subr.bf16.mxu0 0
  %3461 = vmatpush1.bf16.msra.mxu0 0
  %3462 = vmatprep.subr.bf16.mxu0 0
  %3463 = vmatpush1.bf16.msra.mxu0 0
  %3464 = vmatprep.subr.bf16.mxu0 0
  %3465 = vmatpush1.bf16.msra.mxu0 0
  %3466 = vmatprep.subr.bf16.mxu0 0
  %3467 = vmatpush1.bf16.msra.mxu0 0
  %3468 = vmatprep.subr.bf16.mxu0 0
  %3469 = vmatpush1.bf16.msra.mxu0 0
  %3470 = vmatprep.subr.bf16.mxu0 0
  %3471 = vmatpush1.bf16.msra.mxu0 0
  %3472 = vmatprep.subr.bf16.mxu0 0
  %3473 = vmatpush1.bf16.msra.mxu0 0
  %3474 = vmatprep.subr.bf16.mxu0 0
  %3475 = vmatpush1.bf16.msra.mxu0 0
  %3476 = vmatprep.mubr.bf16.mxu0 0
  %3477 = vmatmul.mubr.bf16.gmra.mrb[0].mxu0 %v3373
  %v3478 = vpop.f32.mrb[0].mxu0
  %v3479 = vadd.f32 0.0, %v3478
  %v3480 = vpop.f32.mrb[0].mxu0
  %v3481 = vadd.f32 0.0, %v3480
  %v3482 = vpop.f32.mrb[0].mxu0
  %v3483 = vadd.f32 0.0, %v3482
  %v3484 = vpop.f32.mrb[0].mxu0
  %v3485 = vadd.f32 0.0, %v3484
  %3486 = vmatprep.mubr.bf16.mxu0 0
  %3487 = vmatmul.mubr.bf16.gmra.mrb[0].mxu0 %v3376
  %v3488 = vpop.f32.mrb[0].mxu0
  %v3489 = vadd.f32 0.0, %v3488
  %v3490 = vpop.f32.mrb[0].mxu0
  %v3491 = vadd.f32 0.0, %v3490
  %v3492 = vpop.f32.mrb[0].mxu0
  %v3493 = vadd.f32 0.0, %v3492
  %v3494 = vpop.f32.mrb[0].mxu0
  %v3495 = vadd.f32 0.0, %v3494
  %3496 = vmatprep.mubr.bf16.mxu0 0
  %3497 = vmatmul.mubr.bf16.gmra.mrb[0].mxu0 %v3379
  %v3498 = vpop.f32.mrb[0].mxu0
  %v3499 = vadd.f32 0.0, %v3498
  %v3500 = vpop.f32.mrb[0].mxu0
  %v3501 = vadd.f32 0.0, %v3500
  %v3502 = vpop.f32.mrb[0].mxu0
  %v3503 = vadd.f32 0.0, %v3502
  %v3504 = vpop.f32.mrb[0].mxu0
  %v3505 = vadd.f32 0.0, %v3504
  %3506 = vdwg.mxu0
  %3507 = vmatprep.subr.bf16.mxu0 %v3329
  %3508 = vmatpush1.bf16.msra.mxu0 %v3328
  %3509 = vmatprep.subr.bf16.mxu0 %v3341
  %3510 = vmatpush1.bf16.msra.mxu0 %v3340
  %3511 = vmatprep.subr.bf16.mxu0 0
  %3512 = vmatpush1.bf16.msra.mxu0 0
  %3513 = vmatprep.subr.bf16.mxu0 0
  %3514 = vmatpush1.bf16.msra.mxu0 0
  %3515 = vmatprep.subr.bf16.mxu0 0
  %3516 = vmatpush1.bf16.msra.mxu0 0
  %3517 = vmatprep.subr.bf16.mxu0 0
  %3518 = vmatpush1.bf16.msra.mxu0 0
  %3519 = vmatprep.subr.bf16.mxu0 0
  %3520 = vmatpush1.bf16.msra.mxu0 0
  %3521 = vmatprep.subr.bf16.mxu0 0
  %3522 = vmatpush1.bf16.msra.mxu0 0
  %3523 = vmatprep.subr.bf16.mxu0 0
  %3524 = vmatpush1.bf16.msra.mxu0 0
  %3525 = vmatprep.subr.bf16.mxu0 0
  %3526 = vmatpush1.bf16.msra.mxu0 0
  %3527 = vmatprep.subr.bf16.mxu0 0
  %3528 = vmatpush1.bf16.msra.mxu0 0
  %3529 = vmatprep.subr.bf16.mxu0 0
  %3530 = vmatpush1.bf16.msra.mxu0 0
  %3531 = vmatprep.subr.bf16.mxu0 0
  %3532 = vmatpush1.bf16.msra.mxu0 0
  %3533 = vmatprep.subr.bf16.mxu0 0
  %3534 = vmatpush1.bf16.msra.mxu0 0
  %3535 = vmatprep.subr.bf16.mxu0 0
  %3536 = vmatpush1.bf16.msra.mxu0 0
  %3537 = vmatprep.subr.bf16.mxu0 0
  %3538 = vmatpush1.bf16.msra.mxu0 0
  %3539 = vmatprep.mubr.bf16.mxu0 0
  %3540 = vmatmul.mubr.bf16.gmra.mrb[0].mxu0 %v3373
  %v3541 = vpop.f32.mrb[0].mxu0
  %v3542 = vadd.f32 0.0, %v3541
  %v3543 = vpop.f32.mrb[0].mxu0
  %v3544 = vadd.f32 0.0, %v3543
  %v3545 = vpop.f32.mrb[0].mxu0
  %v3546 = vadd.f32 0.0, %v3545
  %v3547 = vpop.f32.mrb[0].mxu0
  %v3548 = vadd.f32 0.0, %v3547
  %3549 = vmatprep.mubr.bf16.mxu0 0
  %3550 = vmatmul.mubr.bf16.gmra.mrb[0].mxu0 %v3376
  %v3551 = vpop.f32.mrb[0].mxu0
  %v3552 = vadd.f32 0.0, %v3551
  %v3553 = vpop.f32.mrb[0].mxu0
  %v3554 = vadd.f32 0.0, %v3553
  %v3555 = vpop.f32.mrb[0].mxu0
  %v3556 = vadd.f32 0.0, %v3555
  %v3557 = vpop.f32.mrb[0].mxu0
  %v3558 = vadd.f32 0.0, %v3557
  %3559 = vmatprep.mubr.bf16.mxu0 0
  %3560 = vmatmul.mubr.bf16.gmra.mrb[0].mxu0 %v3379
  %v3561 = vpop.f32.mrb[0].mxu0
  %v3562 = vadd.f32 0.0, %v3561
  %v3563 = vpop.f32.mrb[0].mxu0
  %v3564 = vadd.f32 0.0, %v3563
  %v3565 = vpop.f32.mrb[0].mxu0
  %v3566 = vadd.f32 0.0, %v3565
  %v3567 = vpop.f32.mrb[0].mxu0
  %v3568 = vadd.f32 0.0, %v3567
  %3569 = vdwg.mxu0
  %3570 = vmatprep.subr.bf16.mxu0 %v3331
  %3571 = vmatpush1.bf16.msra.mxu0 %v3330
  %3572 = vmatprep.subr.bf16.mxu0 %v3343
  %3573 = vmatpush1.bf16.msra.mxu0 %v3342
  %3574 = vmatprep.subr.bf16.mxu0 0
  %3575 = vmatpush1.bf16.msra.mxu0 0
  %3576 = vmatprep.subr.bf16.mxu0 0
  %3577 = vmatpush1.bf16.msra.mxu0 0
  %3578 = vmatprep.subr.bf16.mxu0 0
  %3579 = vmatpush1.bf16.msra.mxu0 0
  %3580 = vmatprep.subr.bf16.mxu0 0
  %3581 = vmatpush1.bf16.msra.mxu0 0
  %3582 = vmatprep.subr.bf16.mxu0 0
  %3583 = vmatpush1.bf16.msra.mxu0 0
  %3584 = vmatprep.subr.bf16.mxu0 0
  %3585 = vmatpush1.bf16.msra.mxu0 0
  %3586 = vmatprep.subr.bf16.mxu0 0
  %3587 = vmatpush1.bf16.msra.mxu0 0
  %3588 = vmatprep.subr.bf16.mxu0 0
  %3589 = vmatpush1.bf16.msra.mxu0 0
  %3590 = vmatprep.subr.bf16.mxu0 0
  %3591 = vmatpush1.bf16.msra.mxu0 0
  %3592 = vmatprep.subr.bf16.mxu0 0
  %3593 = vmatpush1.bf16.msra.mxu0 0
  %3594 = vmatprep.subr.bf16.mxu0 0
  %3595 = vmatpush1.bf16.msra.mxu0 0
  %3596 = vmatprep.subr.bf16.mxu0 0
  %3597 = vmatpush1.bf16.msra.mxu0 0
  %3598 = vmatprep.subr.bf16.mxu0 0
  %3599 = vmatpush1.bf16.msra.mxu0 0
  %3600 = vmatprep.subr.bf16.mxu0 0
  %3601 = vmatpush1.bf16.msra.mxu0 0
  %3602 = vmatprep.mubr.bf16.mxu0 0
  %3603 = vmatmul.mubr.bf16.gmra.mrb[0].mxu0 %v3373
  %v3604 = vpop.f32.mrb[0].mxu0
  %v3605 = vadd.f32 0.0, %v3604
  %v3606 = vpop.f32.mrb[0].mxu0
  %v3607 = vadd.f32 0.0, %v3606
  %v3608 = vpop.f32.mrb[0].mxu0
  %v3609 = vadd.f32 0.0, %v3608
  %v3610 = vpop.f32.mrb[0].mxu0
  %v3611 = vadd.f32 0.0, %v3610
  %3612 = vmatprep.mubr.bf16.mxu0 0
  %3613 = vmatmul.mubr.bf16.gmra.mrb[0].mxu0 %v3376
  %v3614 = vpop.f32.mrb[0].mxu0
  %v3615 = vadd.f32 0.0, %v3614
  %v3616 = vpop.f32.mrb[0].mxu0
  %v3617 = vadd.f32 0.0, %v3616
  %v3618 = vpop.f32.mrb[0].mxu0
  %v3619 = vadd.f32 0.0, %v3618
  %v3620 = vpop.f32.mrb[0].mxu0
  %v3621 = vadd.f32 0.0, %v3620
  %3622 = vmatprep.mubr.bf16.mxu0 0
  %3623 = vmatmul.mubr.bf16.gmra.mrb[0].mxu0 %v3379
  %v3624 = vpop.f32.mrb[0].mxu0
  %v3625 = vadd.f32 0.0, %v3624
  %v3626 = vpop.f32.mrb[0].mxu0
  %v3627 = vadd.f32 0.0, %v3626
  %v3628 = vpop.f32.mrb[0].mxu0
  %v3629 = vadd.f32 0.0, %v3628
  %v3630 = vpop.f32.mrb[0].mxu0
  %v3631 = vadd.f32 0.0, %v3630
  %3632 = vdwg.mxu0
  %3633 = vmatprep.subr.bf16.mxu0 %v3333
  %3634 = vmatpush1.bf16.msra.mxu0 %v3332
  %3635 = vmatprep.subr.bf16.mxu0 %v3345
  %3636 = vmatpush1.bf16.msra.mxu0 %v3344
  %3637 = vmatprep.subr.bf16.mxu0 0
  %3638 = vmatpush1.bf16.msra.mxu0 0
  %3639 = vmatprep.subr.bf16.mxu0 0
  %3640 = vmatpush1.bf16.msra.mxu0 0
  %3641 = vmatprep.subr.bf16.mxu0 0
  %3642 = vmatpush1.bf16.msra.mxu0 0
  %3643 = vmatprep.subr.bf16.mxu0 0
  %3644 = vmatpush1.bf16.msra.mxu0 0
  %3645 = vmatprep.subr.bf16.mxu0 0
  %3646 = vmatpush1.bf16.msra.mxu0 0
  %3647 = vmatprep.subr.bf16.mxu0 0
  %3648 = vmatpush1.bf16.msra.mxu0 0
  %3649 = vmatprep.subr.bf16.mxu0 0
  %3650 = vmatpush1.bf16.msra.mxu0 0
  %3651 = vmatprep.subr.bf16.mxu0 0
  %3652 = vmatpush1.bf16.msra.mxu0 0
  %3653 = vmatprep.subr.bf16.mxu0 0
  %3654 = vmatpush1.bf16.msra.mxu0 0
  %3655 = vmatprep.subr.bf16.mxu0 0
  %3656 = vmatpush1.bf16.msra.mxu0 0
  %3657 = vmatprep.subr.bf16.mxu0 0
  %3658 = vmatpush1.bf16.msra.mxu0 0
  %3659 = vmatprep.subr.bf16.mxu0 0
  %3660 = vmatpush1.bf16.msra.mxu0 0
  %3661 = vmatprep.subr.bf16.mxu0 0
  %3662 = vmatpush1.bf16.msra.mxu0 0
  %3663 = vmatprep.subr.bf16.mxu0 0
  %3664 = vmatpush1.bf16.msra.mxu0 0
  %3665 = vmatprep.mubr.bf16.mxu0 0
  %3666 = vmatmul.mubr.bf16.gmra.mrb[0].mxu0 %v3373
  %v3667 = vpop.f32.mrb[0].mxu0
  %v3668 = vadd.f32 0.0, %v3667
  %v3669 = vpop.f32.mrb[0].mxu0
  %v3670 = vadd.f32 0.0, %v3669
  %v3671 = vpop.f32.mrb[0].mxu0
  %v3672 = vadd.f32 0.0, %v3671
  %v3673 = vpop.f32.mrb[0].mxu0
  %v3674 = vadd.f32 0.0, %v3673
  %3675 = vmatprep.mubr.bf16.mxu0 0
  %3676 = vmatmul.mubr.bf16.gmra.mrb[0].mxu0 %v3376
  %v3677 = vpop.f32.mrb[0].mxu0
  %v3678 = vadd.f32 0.0, %v3677
  %v3679 = vpop.f32.mrb[0].mxu0
  %v3680 = vadd.f32 0.0, %v3679
  %v3681 = vpop.f32.mrb[0].mxu0
  %v3682 = vadd.f32 0.0, %v3681
  %v3683 = vpop.f32.mrb[0].mxu0
  %v3684 = vadd.f32 0.0, %v3683
  %3685 = vmatprep.mubr.bf16.mxu0 0
  %3686 = vmatmul.mubr.bf16.gmra.mrb[0].mxu0 %v3379
  %v3687 = vpop.f32.mrb[0].mxu0
  %v3688 = vadd.f32 0.0, %v3687
  %v3689 = vpop.f32.mrb[0].mxu0
  %v3690 = vadd.f32 0.0, %v3689
  %v3691 = vpop.f32.mrb[0].mxu0
  %v3692 = vadd.f32 0.0, %v3691
  %v3693 = vpop.f32.mrb[0].mxu0
  %v3694 = vadd.f32 0.0, %v3693
  %3695 = vdwg.mxu0
  %3696 = vmatprep.subr.bf16.mxu0 %v3335
  %3697 = vmatpush1.bf16.msra.mxu0 %v3334
  %3698 = vmatprep.subr.bf16.mxu0 %v3347
  %3699 = vmatpush1.bf16.msra.mxu0 %v3346
  %3700 = vmatprep.subr.bf16.mxu0 0
  %3701 = vmatpush1.bf16.msra.mxu0 0
  %3702 = vmatprep.subr.bf16.mxu0 0
  %3703 = vmatpush1.bf16.msra.mxu0 0
  %3704 = vmatprep.subr.bf16.mxu0 0
  %3705 = vmatpush1.bf16.msra.mxu0 0
  %3706 = vmatprep.subr.bf16.mxu0 0
  %3707 = vmatpush1.bf16.msra.mxu0 0
  %3708 = vmatprep.subr.bf16.mxu0 0
  %3709 = vmatpush1.bf16.msra.mxu0 0
  %3710 = vmatprep.subr.bf16.mxu0 0
  %3711 = vmatpush1.bf16.msra.mxu0 0
  %3712 = vmatprep.subr.bf16.mxu0 0
  %3713 = vmatpush1.bf16.msra.mxu0 0
  %3714 = vmatprep.subr.bf16.mxu0 0
  %3715 = vmatpush1.bf16.msra.mxu0 0
  %3716 = vmatprep.subr.bf16.mxu0 0
  %3717 = vmatpush1.bf16.msra.mxu0 0
  %3718 = vmatprep.subr.bf16.mxu0 0
  %3719 = vmatpush1.bf16.msra.mxu0 0
  %3720 = vmatprep.subr.bf16.mxu0 0
  %3721 = vmatpush1.bf16.msra.mxu0 0
  %3722 = vmatprep.subr.bf16.mxu0 0
  %3723 = vmatpush1.bf16.msra.mxu0 0
  %3724 = vmatprep.subr.bf16.mxu0 0
  %3725 = vmatpush1.bf16.msra.mxu0 0
  %3726 = vmatprep.subr.bf16.mxu0 0
  %3727 = vmatpush1.bf16.msra.mxu0 0
  %3728 = vmatprep.mubr.bf16.mxu0 0
  %3729 = vmatmul.mubr.bf16.gmra.mrb[0].mxu0 %v3373
  %v3730 = vpop.f32.mrb[0].mxu0
  %v3731 = vadd.f32 0.0, %v3730
  %v3732 = vpop.f32.mrb[0].mxu0
  %v3733 = vadd.f32 0.0, %v3732
  %v3734 = vpop.f32.mrb[0].mxu0
  %v3735 = vadd.f32 0.0, %v3734
  %v3736 = vpop.f32.mrb[0].mxu0
  %v3737 = vadd.f32 0.0, %v3736
  %3738 = vmatprep.mubr.bf16.mxu0 0
  %3739 = vmatmul.mubr.bf16.gmra.mrb[0].mxu0 %v3376
  %v3740 = vpop.f32.mrb[0].mxu0
  %v3741 = vadd.f32 0.0, %v3740
  %v3742 = vpop.f32.mrb[0].mxu0
  %v3743 = vadd.f32 0.0, %v3742
  %v3744 = vpop.f32.mrb[0].mxu0
  %v3745 = vadd.f32 0.0, %v3744
  %v3746 = vpop.f32.mrb[0].mxu0
  %v3747 = vadd.f32 0.0, %v3746
  %3748 = vmatprep.mubr.bf16.mxu0 0
  %3749 = vmatmul.mubr.bf16.gmra.mrb[0].mxu0 %v3379
  %v3750 = vpop.f32.mrb[0].mxu0
  %v3751 = vadd.f32 0.0, %v3750
  %v3752 = vpop.f32.mrb[0].mxu0
  %v3753 = vadd.f32 0.0, %v3752
  %v3754 = vpop.f32.mrb[0].mxu0
  %v3755 = vadd.f32 0.0, %v3754
  %v3756 = vpop.f32.mrb[0].mxu0
  %v3757 = vadd.f32 0.0, %v3756
  %3758 = vdwg.mxu0
  %v3759 = vmul.f32 %v2292, %v3416
  %v3760 = vmul.f32 %v2294, %v3418
  %v3761 = vmul.f32 %v2355, %v3479
  %v3762 = vmul.f32 %v2357, %v3481
  %v3763 = vmul.f32 %v2418, %v3542
  %v3764 = vmul.f32 %v2420, %v3544
  %v3765 = vmul.f32 %v2481, %v3605
  %v3766 = vmul.f32 %v2483, %v3607
  %v3767 = vmul.f32 %v2544, %v3668
  %v3768 = vmul.f32 %v2546, %v3670
  %v3769 = vmul.f32 %v2607, %v3731
  %v3770 = vmul.f32 %v2609, %v3733
  %v3771 = vmul.f32 %v2296, %v3420
  %v3772 = vmul.f32 %v2298, %v3422
  %v3773 = vmul.f32 %v2359, %v3483
  %v3774 = vmul.f32 %v2361, %v3485
  %v3775 = vmul.f32 %v2422, %v3546
  %v3776 = vmul.f32 %v2424, %v3548
  %v3777 = vmul.f32 %v2485, %v3609
  %v3778 = vmul.f32 %v2487, %v3611
  %v3779 = vmul.f32 %v2548, %v3672
  %v3780 = vmul.f32 %v2550, %v3674
  %v3781 = vmul.f32 %v2611, %v3735
  %v3782 = vmul.f32 %v2613, %v3737
  %v3783 = vmul.f32 %v2302, %v3426
  %v3784 = vmul.f32 %v2304, %v3428
  %v3785 = vmul.f32 %v2365, %v3489
  %v3786 = vmul.f32 %v2367, %v3491
  %v3787 = vmul.f32 %v2428, %v3552
  %v3788 = vmul.f32 %v2430, %v3554
  %v3789 = vmul.f32 %v2491, %v3615
  %v3790 = vmul.f32 %v2493, %v3617
  %v3791 = vmul.f32 %v2554, %v3678
  %v3792 = vmul.f32 %v2556, %v3680
  %v3793 = vmul.f32 %v2617, %v3741
  %v3794 = vmul.f32 %v2619, %v3743
  %v3795 = vmul.f32 %v2306, %v3430
  %v3796 = vmul.f32 %v2308, %v3432
  %v3797 = vmul.f32 %v2369, %v3493
  %v3798 = vmul.f32 %v2371, %v3495
  %v3799 = vmul.f32 %v2432, %v3556
  %v3800 = vmul.f32 %v2434, %v3558
  %v3801 = vmul.f32 %v2495, %v3619
  %v3802 = vmul.f32 %v2497, %v3621
  %v3803 = vmul.f32 %v2558, %v3682
  %v3804 = vmul.f32 %v2560, %v3684
  %v3805 = vmul.f32 %v2621, %v3745
  %v3806 = vmul.f32 %v2623, %v3747
  %v3807 = vmul.f32 %v2312, %v3436
  %v3808 = vmul.f32 %v2314, %v3438
  %v3809 = vmul.f32 %v2375, %v3499
  %v3810 = vmul.f32 %v2377, %v3501
  %v3811 = vmul.f32 %v2438, %v3562
  %v3812 = vmul.f32 %v2440, %v3564
  %v3813 = vmul.f32 %v2501, %v3625
  %v3814 = vmul.f32 %v2503, %v3627
  %v3815 = vmul.f32 %v2564, %v3688
  %v3816 = vmul.f32 %v2566, %v3690
  %v3817 = vmul.f32 %v2627, %v3751
  %v3818 = vmul.f32 %v2629, %v3753
  %v3819 = vmul.f32 %v2316, %v3440
  %v3820 = vmul.f32 %v2318, %v3442
  %v3821 = vmul.f32 %v2379, %v3503
  %v3822 = vmul.f32 %v2381, %v3505
  %v3823 = vmul.f32 %v2442, %v3566
  %v3824 = vmul.f32 %v2444, %v3568
  %v3825 = vmul.f32 %v2505, %v3629
  %v3826 = vmul.f32 %v2507, %v3631
  %v3827 = vmul.f32 %v2568, %v3692
  %v3828 = vmul.f32 %v2570, %v3694
  %v3829 = vmul.f32 %v2631, %v3755
  %v3830 = vmul.f32 %v2633, %v3757
  %v3831 = vld [vmem:[%s75] sm:$0xf]
  %v3832 = vld [vmem:[%s75 + $0x4] sm:$0xf]
  %v3833 = vld [vmem:[%s75 + $0x8] sm:$0xf]
  %v3834 = vld [vmem:[%s75 + $0xc] sm:$0xf]
  %v3835 = vld [vmem:[%s75 + $0x10] sm:$0xf]
  %v3836 = vld [vmem:[%s75 + $0x14] sm:$0xf]
  %v3837 = vld [vmem:[%s75 + $0x18] sm:$0xf]
  %v3838 = vld [vmem:[%s75 + $0x1c] sm:$0xf]
  %v3839 = vld [vmem:[%s75 + $0x20] sm:$0xf]
  %v3840 = vld [vmem:[%s75 + $0x24] sm:$0xf]
  %v3841 = vld [vmem:[%s75 + $0x28] sm:$0xf]
  %v3842 = vld [vmem:[%s75 + $0x2c] sm:$0xf]
  %v3843 = vld [vmem:[%s75 + $0x30] sm:$0xf]
  %v3844 = vld [vmem:[%s75 + $0x34] sm:$0xf]
  %v3845 = vld [vmem:[%s75 + $0x38] sm:$0xf]
  %v3846 = vld [vmem:[%s75 + $0x3c] sm:$0xf]
  %v3847 = vld [vmem:[%s75 + $0x40] sm:$0xf]
  %v3848 = vld [vmem:[%s75 + $0x44] sm:$0xf]
  %v3849 = vld [vmem:[%s75 + $0x48] sm:$0xf]
  %v3850 = vld [vmem:[%s75 + $0x4c] sm:$0xf]
  %v3851 = vld [vmem:[%s75 + $0x50] sm:$0xf]
  %v3852 = vld [vmem:[%s75 + $0x54] sm:$0xf]
  %v3853 = vld [vmem:[%s75 + $0x58] sm:$0xf]
  %v3854 = vld [vmem:[%s75 + $0x5c] sm:$0xf]
  %v3855 = vld [vmem:[%s75 + $0x60] sm:$0xf]
  %v3856 = vld [vmem:[%s75 + $0x64] sm:$0xf]
  %v3857 = vld [vmem:[%s75 + $0x68] sm:$0xf]
  %v3858 = vld [vmem:[%s75 + $0x6c] sm:$0xf]
  %v3859 = vld [vmem:[%s75 + $0x70] sm:$0xf]
  %v3860 = vld [vmem:[%s75 + $0x74] sm:$0xf]
  %v3861 = vld [vmem:[%s75 + $0x78] sm:$0xf]
  %v3862 = vld [vmem:[%s75 + $0x7c] sm:$0xf]
  %v3863 = vld [vmem:[%s75 + $0x80] sm:$0xf]
  %v3864 = vld [vmem:[%s75 + $0x84] sm:$0xf]
  %v3865 = vld [vmem:[%s75 + $0x88] sm:$0xf]
  %v3866 = vld [vmem:[%s75 + $0x8c] sm:$0xf]
  %v3867 = vld [vmem:[%s75 + $0x90] sm:$0xf]
  %v3868 = vld [vmem:[%s75 + $0x94] sm:$0xf]
  %v3869 = vld [vmem:[%s75 + $0x98] sm:$0xf]
  %v3870 = vld [vmem:[%s75 + $0x9c] sm:$0xf]
  %v3871 = vld [vmem:[%s75 + $0xa0] sm:$0xf]
  %v3872 = vld [vmem:[%s75 + $0xa4] sm:$0xf]
  %v3873 = vld [vmem:[%s75 + $0xa8] sm:$0xf]
  %v3874 = vld [vmem:[%s75 + $0xac] sm:$0xf]
  %v3875 = vld [vmem:[%s75 + $0xb0] sm:$0xf]
  %v3876 = vld [vmem:[%s75 + $0xb4] sm:$0xf]
  %v3877 = vld [vmem:[%s75 + $0xb8] sm:$0xf]
  %v3878 = vld [vmem:[%s75 + $0xbc] sm:$0xf]
  %v3879 = vld [vmem:[%s75 + $0xc0] sm:$0xf]
  %v3880 = vld [vmem:[%s75 + $0xc4] sm:$0xf]
  %v3881 = vld [vmem:[%s75 + $0xc8] sm:$0xf]
  %v3882 = vld [vmem:[%s75 + $0xcc] sm:$0xf]
  %v3883 = vld [vmem:[%s75 + $0xd0] sm:$0xf]
  %v3884 = vld [vmem:[%s75 + $0xd4] sm:$0xf]
  %v3885 = vld [vmem:[%s75 + $0xd8] sm:$0xf]
  %v3886 = vld [vmem:[%s75 + $0xdc] sm:$0xf]
  %v3887 = vld [vmem:[%s75 + $0xe0] sm:$0xf]
  %v3888 = vld [vmem:[%s75 + $0xe4] sm:$0xf]
  %v3889 = vld [vmem:[%s75 + $0xe8] sm:$0xf]
  %v3890 = vld [vmem:[%s75 + $0xec] sm:$0xf]
  %v3891 = vld [vmem:[%s75 + $0xf0] sm:$0xf]
  %v3892 = vld [vmem:[%s75 + $0xf4] sm:$0xf]
  %v3893 = vld [vmem:[%s75 + $0xf8] sm:$0xf]
  %v3894 = vld [vmem:[%s75 + $0xfc] sm:$0xf]
  %v3895 = vld [vmem:[%s75 + $0x100] sm:$0xf]
  %v3896 = vld [vmem:[%s75 + $0x104] sm:$0xf]
  %v3897 = vld [vmem:[%s75 + $0x108] sm:$0xf]
  %v3898 = vld [vmem:[%s75 + $0x10c] sm:$0xf]
  %v3899 = vld [vmem:[%s75 + $0x110] sm:$0xf]
  %v3900 = vld [vmem:[%s75 + $0x114] sm:$0xf]
  %v3901 = vld [vmem:[%s75 + $0x118] sm:$0xf]
  %v3902 = vld [vmem:[%s75 + $0x11c] sm:$0xf]
  %v3903 = vld [vmem:[%s75 + $0x120] sm:$0xf]
  %v3904 = vld [vmem:[%s75 + $0x124] sm:$0xf]
  %v3905 = vld [vmem:[%s75 + $0x128] sm:$0xf]
  %v3906 = vld [vmem:[%s75 + $0x12c] sm:$0xf]
  %v3907 = vld [vmem:[%s75 + $0x130] sm:$0xf]
  %v3908 = vld [vmem:[%s75 + $0x134] sm:$0xf]
  %v3909 = vld [vmem:[%s75 + $0x138] sm:$0xf]
  %v3910 = vld [vmem:[%s75 + $0x13c] sm:$0xf]
  %v3911 = vld [vmem:[%s75 + $0x140] sm:$0xf]
  %v3912 = vld [vmem:[%s75 + $0x144] sm:$0xf]
  %v3913 = vld [vmem:[%s75 + $0x148] sm:$0xf]
  %v3914 = vld [vmem:[%s75 + $0x14c] sm:$0xf]
  %v3915 = vld [vmem:[%s75 + $0x150] sm:$0xf]
  %v3916 = vld [vmem:[%s75 + $0x154] sm:$0xf]
  %v3917 = vld [vmem:[%s75 + $0x158] sm:$0xf]
  %v3918 = vld [vmem:[%s75 + $0x15c] sm:$0xf]
  %v3919 = vld [vmem:[%s75 + $0x160] sm:$0xf]
  %v3920 = vld [vmem:[%s75 + $0x164] sm:$0xf]
  %v3921 = vld [vmem:[%s75 + $0x168] sm:$0xf]
  %v3922 = vld [vmem:[%s75 + $0x16c] sm:$0xf]
  %v3923 = vld [vmem:[%s75 + $0x170] sm:$0xf]
  %v3924 = vld [vmem:[%s75 + $0x174] sm:$0xf]
  %v3925 = vld [vmem:[%s75 + $0x178] sm:$0xf]
  %v3926 = vld [vmem:[%s75 + $0x17c] sm:$0xf]
  %v3927 = vld [vmem:[%s75 + $0x180] sm:$0xf]
  %v3928 = vld [vmem:[%s75 + $0x184] sm:$0xf]
  %v3929 = vld [vmem:[%s75 + $0x188] sm:$0xf]
  %v3930 = vld [vmem:[%s75 + $0x18c] sm:$0xf]
  %v3931 = vld [vmem:[%s75 + $0x190] sm:$0xf]
  %v3932 = vld [vmem:[%s75 + $0x194] sm:$0xf]
  %v3933 = vld [vmem:[%s75 + $0x198] sm:$0xf]
  %v3934 = vld [vmem:[%s75 + $0x19c] sm:$0xf]
  %v3935 = vld [vmem:[%s75 + $0x1a0] sm:$0xf]
  %v3936 = vld [vmem:[%s75 + $0x1a4] sm:$0xf]
  %v3937 = vld [vmem:[%s75 + $0x1a8] sm:$0xf]
  %v3938 = vld [vmem:[%s75 + $0x1ac] sm:$0xf]
  %v3939 = vld [vmem:[%s75 + $0x1b0] sm:$0xf]
  %v3940 = vld [vmem:[%s75 + $0x1b4] sm:$0xf]
  %v3941 = vld [vmem:[%s75 + $0x1b8] sm:$0xf]
  %v3942 = vld [vmem:[%s75 + $0x1bc] sm:$0xf]
  %v3943 = vld [vmem:[%s75 + $0x1c0] sm:$0xf]
  %v3944 = vld [vmem:[%s75 + $0x1c4] sm:$0xf]
  %v3945 = vld [vmem:[%s75 + $0x1c8] sm:$0xf]
  %v3946 = vld [vmem:[%s75 + $0x1cc] sm:$0xf]
  %v3947 = vld [vmem:[%s75 + $0x1d0] sm:$0xf]
  %v3948 = vld [vmem:[%s75 + $0x1d4] sm:$0xf]
  %v3949 = vld [vmem:[%s75 + $0x1d8] sm:$0xf]
  %v3950 = vld [vmem:[%s75 + $0x1dc] sm:$0xf]
  %v3951 = vld [vmem:[%s75 + $0x1e0] sm:$0xf]
  %v3952 = vld [vmem:[%s75 + $0x1e4] sm:$0xf]
  %v3953 = vld [vmem:[%s75 + $0x1e8] sm:$0xf]
  %v3954 = vld [vmem:[%s75 + $0x1ec] sm:$0xf]
  %v3955 = vld [vmem:[%s75 + $0x1f0] sm:$0xf]
  %v3956 = vld [vmem:[%s75 + $0x1f4] sm:$0xf]
  %v3957 = vld [vmem:[%s75 + $0x1f8] sm:$0xf]
  %v3958 = vld [vmem:[%s75 + $0x1fc] sm:$0xf]
  %v3959 = vld [vmem:[%s75 + $0x200] sm:$0xf]
  %v3960 = vld [vmem:[%s75 + $0x204] sm:$0xf]
  %v3961 = vld [vmem:[%s75 + $0x208] sm:$0xf]
  %v3962 = vld [vmem:[%s75 + $0x20c] sm:$0xf]
  %v3963 = vld [vmem:[%s75 + $0x210] sm:$0xf]
  %v3964 = vld [vmem:[%s75 + $0x214] sm:$0xf]
  %v3965 = vld [vmem:[%s75 + $0x218] sm:$0xf]
  %v3966 = vld [vmem:[%s75 + $0x21c] sm:$0xf]
  %v3967 = vld [vmem:[%s75 + $0x220] sm:$0xf]
  %v3968 = vld [vmem:[%s75 + $0x224] sm:$0xf]
  %v3969 = vld [vmem:[%s75 + $0x228] sm:$0xf]
  %v3970 = vld [vmem:[%s75 + $0x22c] sm:$0xf]
  %v3971 = vld [vmem:[%s75 + $0x230] sm:$0xf]
  %v3972 = vld [vmem:[%s75 + $0x234] sm:$0xf]
  %v3973 = vld [vmem:[%s75 + $0x238] sm:$0xf]
  %v3974 = vld [vmem:[%s75 + $0x23c] sm:$0xf]
  %v3975 = vld [vmem:[%s75 + $0x240] sm:$0xf]
  %v3976 = vld [vmem:[%s75 + $0x244] sm:$0xf]
  %v3977 = vld [vmem:[%s75 + $0x248] sm:$0xf]
  %v3978 = vld [vmem:[%s75 + $0x24c] sm:$0xf]
  %v3979 = vld [vmem:[%s75 + $0x250] sm:$0xf]
  %v3980 = vld [vmem:[%s75 + $0x254] sm:$0xf]
  %v3981 = vld [vmem:[%s75 + $0x258] sm:$0xf]
  %v3982 = vld [vmem:[%s75 + $0x25c] sm:$0xf]
  %v3983 = vld [vmem:[%s75 + $0x260] sm:$0xf]
  %v3984 = vld [vmem:[%s75 + $0x264] sm:$0xf]
  %v3985 = vld [vmem:[%s75 + $0x268] sm:$0xf]
  %v3986 = vld [vmem:[%s75 + $0x26c] sm:$0xf]
  %v3987 = vld [vmem:[%s75 + $0x270] sm:$0xf]
  %v3988 = vld [vmem:[%s75 + $0x274] sm:$0xf]
  %v3989 = vld [vmem:[%s75 + $0x278] sm:$0xf]
  %v3990 = vld [vmem:[%s75 + $0x27c] sm:$0xf]
  %v3991 = vld [vmem:[%s75 + $0x280] sm:$0xf]
  %v3992 = vld [vmem:[%s75 + $0x284] sm:$0xf]
  %v3993 = vld [vmem:[%s75 + $0x288] sm:$0xf]
  %v3994 = vld [vmem:[%s75 + $0x28c] sm:$0xf]
  %v3995 = vld [vmem:[%s75 + $0x290] sm:$0xf]
  %v3996 = vld [vmem:[%s75 + $0x294] sm:$0xf]
  %v3997 = vld [vmem:[%s75 + $0x298] sm:$0xf]
  %v3998 = vld [vmem:[%s75 + $0x29c] sm:$0xf]
  %v3999 = vld [vmem:[%s75 + $0x2a0] sm:$0xf]
  %v4000 = vld [vmem:[%s75 + $0x2a4] sm:$0xf]
  %v4001 = vld [vmem:[%s75 + $0x2a8] sm:$0xf]
  %v4002 = vld [vmem:[%s75 + $0x2ac] sm:$0xf]
  %v4003 = vld [vmem:[%s75 + $0x2b0] sm:$0xf]
  %v4004 = vld [vmem:[%s75 + $0x2b4] sm:$0xf]
  %v4005 = vld [vmem:[%s75 + $0x2b8] sm:$0xf]
  %v4006 = vld [vmem:[%s75 + $0x2bc] sm:$0xf]
  %v4007 = vld [vmem:[%s75 + $0x2c0] sm:$0xf]
  %v4008 = vld [vmem:[%s75 + $0x2c4] sm:$0xf]
  %v4009 = vld [vmem:[%s75 + $0x2c8] sm:$0xf]
  %v4010 = vld [vmem:[%s75 + $0x2cc] sm:$0xf]
  %v4011 = vld [vmem:[%s75 + $0x2d0] sm:$0xf]
  %v4012 = vld [vmem:[%s75 + $0x2d4] sm:$0xf]
  %v4013 = vld [vmem:[%s75 + $0x2d8] sm:$0xf]
  %v4014 = vld [vmem:[%s75 + $0x2dc] sm:$0xf]
  %v4015 = vld [vmem:[%s75 + $0x2e0] sm:$0xf]
  %v4016 = vld [vmem:[%s75 + $0x2e4] sm:$0xf]
  %v4017 = vld [vmem:[%s75 + $0x2e8] sm:$0xf]
  %v4018 = vld [vmem:[%s75 + $0x2ec] sm:$0xf]
  %v4019 = vld [vmem:[%s75 + $0x2f0] sm:$0xf]
  %v4020 = vld [vmem:[%s75 + $0x2f4] sm:$0xf]
  %v4021 = vld [vmem:[%s75 + $0x2f8] sm:$0xf]
  %v4022 = vld [vmem:[%s75 + $0x2fc] sm:$0xf]
  %v4023 = vpack.c.bf16 %v3771, %v3759
  %v4024 = vpack.c.bf16 %v3772, %v3760
  %v4025 = vpack.c.bf16 %v3773, %v3761
  %v4026 = vpack.c.bf16 %v3774, %v3762
  %v4027 = vpack.c.bf16 %v3775, %v3763
  %v4028 = vpack.c.bf16 %v3776, %v3764
  %v4029 = vpack.c.bf16 %v3777, %v3765
  %v4030 = vpack.c.bf16 %v3778, %v3766
  %v4031 = vpack.c.bf16 %v3779, %v3767
  %v4032 = vpack.c.bf16 %v3780, %v3768
  %v4033 = vpack.c.bf16 %v3781, %v3769
  %v4034 = vpack.c.bf16 %v3782, %v3770
  %v4035 = vpack.c.bf16 %v3795, %v3783
  %v4036 = vpack.c.bf16 %v3796, %v3784
  %v4037 = vpack.c.bf16 %v3797, %v3785
  %v4038 = vpack.c.bf16 %v3798, %v3786
  %v4039 = vpack.c.bf16 %v3799, %v3787
  %v4040 = vpack.c.bf16 %v3800, %v3788
  %v4041 = vpack.c.bf16 %v3801, %v3789
  %v4042 = vpack.c.bf16 %v3802, %v3790
  %v4043 = vpack.c.bf16 %v3803, %v3791
  %v4044 = vpack.c.bf16 %v3804, %v3792
  %v4045 = vpack.c.bf16 %v3805, %v3793
  %v4046 = vpack.c.bf16 %v3806, %v3794
  %v4047 = vpack.c.bf16 %v3819, %v3807
  %v4048 = vpack.c.bf16 %v3820, %v3808
  %v4049 = vpack.c.bf16 %v3821, %v3809
  %v4050 = vpack.c.bf16 %v3822, %v3810
  %v4051 = vpack.c.bf16 %v3823, %v3811
  %v4052 = vpack.c.bf16 %v3824, %v3812
  %v4053 = vpack.c.bf16 %v3825, %v3813
  %v4054 = vpack.c.bf16 %v3826, %v3814
  %v4055 = vpack.c.bf16 %v3827, %v3815
  %v4056 = vpack.c.bf16 %v3828, %v3816
  %v4057 = vpack.c.bf16 %v3829, %v3817
  %v4058 = vpack.c.bf16 %v3830, %v3818
  %v4251 = vunpack.c.l.b16 %v3831
  %v4252 = vunpack.c.l.b16 %v3832
  %v4253 = vunpack.c.l.b16 %v3833
  %v4254 = vunpack.c.l.b16 %v3834
  %v4255 = vunpack.c.l.b16 %v3835
  %v4256 = vunpack.c.l.b16 %v3836
  %v4257 = vunpack.c.l.b16 %v3837
  %v4258 = vunpack.c.l.b16 %v3838
  %v4259 = vunpack.c.l.b16 %v3839
  %v4260 = vunpack.c.l.b16 %v3840
  %v4261 = vunpack.c.l.b16 %v3841
  %v4262 = vunpack.c.l.b16 %v3842
  %v4263 = vunpack.c.l.b16 %v3843
  %v4264 = vunpack.c.l.b16 %v3844
  %v4265 = vunpack.c.l.b16 %v3845
  %v4266 = vunpack.c.l.b16 %v3846
  %v4267 = vunpack.c.l.b16 %v3847
  %v4268 = vunpack.c.l.b16 %v3848
  %v4269 = vunpack.c.l.b16 %v3849
  %v4270 = vunpack.c.l.b16 %v3850
  %v4271 = vunpack.c.l.b16 %v3851
  %v4272 = vunpack.c.l.b16 %v3852
  %v4273 = vunpack.c.l.b16 %v3853
  %v4274 = vunpack.c.l.b16 %v3854
  %v4275 = vunpack.c.l.b16 %v3855
  %v4276 = vunpack.c.l.b16 %v3856
  %v4277 = vunpack.c.l.b16 %v3857
  %v4278 = vunpack.c.l.b16 %v3858
  %v4279 = vunpack.c.l.b16 %v3859
  %v4280 = vunpack.c.l.b16 %v3860
  %v4281 = vunpack.c.l.b16 %v3861
  %v4282 = vunpack.c.l.b16 %v3862
  %v4283 = vunpack.c.l.b16 %v3863
  %v4284 = vunpack.c.l.b16 %v3864
  %v4285 = vunpack.c.l.b16 %v3865
  %v4286 = vunpack.c.l.b16 %v3866
  %v4287 = vunpack.c.l.b16 %v3867
  %v4288 = vunpack.c.l.b16 %v3868
  %v4289 = vunpack.c.l.b16 %v3869
  %v4290 = vunpack.c.l.b16 %v3870
  %v4291 = vunpack.c.l.b16 %v3871
  %v4292 = vunpack.c.l.b16 %v3872
  %v4293 = vunpack.c.l.b16 %v3873
  %v4294 = vunpack.c.l.b16 %v3874
  %v4295 = vunpack.c.l.b16 %v3875
  %v4296 = vunpack.c.l.b16 %v3876
  %v4297 = vunpack.c.l.b16 %v3877
  %v4298 = vunpack.c.l.b16 %v3878
  %v4299 = vunpack.c.l.b16 %v3879
  %v4300 = vunpack.c.l.b16 %v3880
  %v4301 = vunpack.c.l.b16 %v3881
  %v4302 = vunpack.c.l.b16 %v3882
  %v4303 = vunpack.c.l.b16 %v3883
  %v4304 = vunpack.c.l.b16 %v3884
  %v4305 = vunpack.c.l.b16 %v3885
  %v4306 = vunpack.c.l.b16 %v3886
  %v4307 = vunpack.c.l.b16 %v3887
  %v4308 = vunpack.c.l.b16 %v3888
  %v4309 = vunpack.c.l.b16 %v3889
  %v4310 = vunpack.c.l.b16 %v3890
  %v4311 = vunpack.c.l.b16 %v3891
  %v4312 = vunpack.c.l.b16 %v3892
  %v4313 = vunpack.c.l.b16 %v3893
  %v4314 = vunpack.c.l.b16 %v3894
  %v4315 = vunpack.c.l.b16 %v3895
  %v4316 = vunpack.c.l.b16 %v3896
  %v4317 = vunpack.c.l.b16 %v3897
  %v4318 = vunpack.c.l.b16 %v3898
  %v4319 = vunpack.c.l.b16 %v3899
  %v4320 = vunpack.c.l.b16 %v3900
  %v4321 = vunpack.c.l.b16 %v3901
  %v4322 = vunpack.c.l.b16 %v3902
  %v4323 = vunpack.c.l.b16 %v3903
  %v4324 = vunpack.c.l.b16 %v3904
  %v4325 = vunpack.c.l.b16 %v3905
  %v4326 = vunpack.c.l.b16 %v3906
  %v4327 = vunpack.c.l.b16 %v3907
  %v4328 = vunpack.c.l.b16 %v3908
  %v4329 = vunpack.c.l.b16 %v3909
  %v4330 = vunpack.c.l.b16 %v3910
  %v4331 = vunpack.c.l.b16 %v3911
  %v4332 = vunpack.c.l.b16 %v3912
  %v4333 = vunpack.c.l.b16 %v3913
  %v4334 = vunpack.c.l.b16 %v3914
  %v4335 = vunpack.c.l.b16 %v3915
  %v4336 = vunpack.c.l.b16 %v3916
  %v4337 = vunpack.c.l.b16 %v3917
  %v4338 = vunpack.c.l.b16 %v3918
  %v4339 = vunpack.c.l.b16 %v3919
  %v4340 = vunpack.c.l.b16 %v3920
  %v4341 = vunpack.c.l.b16 %v3921
  %v4342 = vunpack.c.l.b16 %v3922
  %v4343 = vunpack.c.l.b16 %v3923
  %v4344 = vunpack.c.l.b16 %v3924
  %v4345 = vunpack.c.l.b16 %v3925
  %v4346 = vunpack.c.l.b16 %v3926
  %v4347 = vunpack.c.l.b16 %v3927
  %v4348 = vunpack.c.l.b16 %v3928
  %v4349 = vunpack.c.l.b16 %v3929
  %v4350 = vunpack.c.l.b16 %v3930
  %v4351 = vunpack.c.l.b16 %v3931
  %v4352 = vunpack.c.l.b16 %v3932
  %v4353 = vunpack.c.l.b16 %v3933
  %v4354 = vunpack.c.l.b16 %v3934
  %v4355 = vunpack.c.l.b16 %v3935
  %v4356 = vunpack.c.l.b16 %v3936
  %v4357 = vunpack.c.l.b16 %v3937
  %v4358 = vunpack.c.l.b16 %v3938
  %v4359 = vunpack.c.l.b16 %v3939
  %v4360 = vunpack.c.l.b16 %v3940
  %v4361 = vunpack.c.l.b16 %v3941
  %v4362 = vunpack.c.l.b16 %v3942
  %v4363 = vunpack.c.l.b16 %v3943
  %v4364 = vunpack.c.l.b16 %v3944
  %v4365 = vunpack.c.l.b16 %v3945
  %v4366 = vunpack.c.l.b16 %v3946
  %v4367 = vunpack.c.l.b16 %v3947
  %v4368 = vunpack.c.l.b16 %v3948
  %v4369 = vunpack.c.l.b16 %v3949
  %v4370 = vunpack.c.l.b16 %v3950
  %v4371 = vunpack.c.l.b16 %v3951
  %v4372 = vunpack.c.l.b16 %v3952
  %v4373 = vunpack.c.l.b16 %v3953
  %v4374 = vunpack.c.l.b16 %v3954
  %v4375 = vunpack.c.l.b16 %v3955
  %v4376 = vunpack.c.l.b16 %v3956
  %v4377 = vunpack.c.l.b16 %v3957
  %v4378 = vunpack.c.l.b16 %v3958
  %v4379 = vunpack.c.l.b16 %v3959
  %v4380 = vunpack.c.l.b16 %v3960
  %v4381 = vunpack.c.l.b16 %v3961
  %v4382 = vunpack.c.l.b16 %v3962
  %v4383 = vunpack.c.l.b16 %v3963
  %v4384 = vunpack.c.l.b16 %v3964
  %v4385 = vunpack.c.l.b16 %v3965
  %v4386 = vunpack.c.l.b16 %v3966
  %v4387 = vunpack.c.l.b16 %v3967
  %v4388 = vunpack.c.l.b16 %v3968
  %v4389 = vunpack.c.l.b16 %v3969
  %v4390 = vunpack.c.l.b16 %v3970
  %v4391 = vunpack.c.l.b16 %v3971
  %v4392 = vunpack.c.l.b16 %v3972
  %v4393 = vunpack.c.l.b16 %v3973
  %v4394 = vunpack.c.l.b16 %v3974
  %v4395 = vunpack.c.l.b16 %v3975
  %v4396 = vunpack.c.l.b16 %v3976
  %v4397 = vunpack.c.l.b16 %v3977
  %v4398 = vunpack.c.l.b16 %v3978
  %v4399 = vunpack.c.l.b16 %v3979
  %v4400 = vunpack.c.l.b16 %v3980
  %v4401 = vunpack.c.l.b16 %v3981
  %v4402 = vunpack.c.l.b16 %v3982
  %v4403 = vunpack.c.l.b16 %v3983
  %v4404 = vunpack.c.l.b16 %v3984
  %v4405 = vunpack.c.l.b16 %v3985
  %v4406 = vunpack.c.l.b16 %v3986
  %v4407 = vunpack.c.l.b16 %v3987
  %v4408 = vunpack.c.l.b16 %v3988
  %v4409 = vunpack.c.l.b16 %v3989
  %v4410 = vunpack.c.l.b16 %v3990
  %v4411 = vunpack.c.l.b16 %v3991
  %v4412 = vunpack.c.l.b16 %v3992
  %v4413 = vunpack.c.l.b16 %v3993
  %v4414 = vunpack.c.l.b16 %v3994
  %v4415 = vunpack.c.l.b16 %v3995
  %v4416 = vunpack.c.l.b16 %v3996
  %v4417 = vunpack.c.l.b16 %v3997
  %v4418 = vunpack.c.l.b16 %v3998
  %v4419 = vunpack.c.l.b16 %v3999
  %v4420 = vunpack.c.l.b16 %v4000
  %v4421 = vunpack.c.l.b16 %v4001
  %v4422 = vunpack.c.l.b16 %v4002
  %v4423 = vunpack.c.l.b16 %v4003
  %v4424 = vunpack.c.l.b16 %v4004
  %v4425 = vunpack.c.l.b16 %v4005
  %v4426 = vunpack.c.l.b16 %v4006
  %v4427 = vunpack.c.l.b16 %v4007
  %v4428 = vunpack.c.l.b16 %v4008
  %v4429 = vunpack.c.l.b16 %v4009
  %v4430 = vunpack.c.l.b16 %v4010
  %v4431 = vunpack.c.l.b16 %v4011
  %v4432 = vunpack.c.l.b16 %v4012
  %v4433 = vunpack.c.l.b16 %v4013
  %v4434 = vunpack.c.l.b16 %v4014
  %v4435 = vunpack.c.l.b16 %v4015
  %v4436 = vunpack.c.l.b16 %v4016
  %v4437 = vunpack.c.l.b16 %v4017
  %v4438 = vunpack.c.l.b16 %v4018
  %v4439 = vunpack.c.l.b16 %v4019
  %v4440 = vunpack.c.l.b16 %v4020
  %v4441 = vunpack.c.l.b16 %v4021
  %v4442 = vunpack.c.l.b16 %v4022
  %v4443 = vpack.c.b16 %v4252, %v4251
  %v4444 = vpack.c.b16 %v4254, %v4253
  %v4445 = vpack.c.b16 %v4256, %v4255
  %v4446 = vpack.c.b16 %v4258, %v4257
  %v4447 = vpack.c.b16 %v4260, %v4259
  %v4448 = vpack.c.b16 %v4262, %v4261
  %v4449 = vpack.c.b16 %v4264, %v4263
  %v4450 = vpack.c.b16 %v4266, %v4265
  %v4451 = vpack.c.b16 %v4268, %v4267
  %v4452 = vpack.c.b16 %v4270, %v4269
  %v4453 = vpack.c.b16 %v4272, %v4271
  %v4454 = vpack.c.b16 %v4274, %v4273
  %v4455 = vpack.c.b16 %v4276, %v4275
  %v4456 = vpack.c.b16 %v4278, %v4277
  %v4457 = vpack.c.b16 %v4280, %v4279
  %v4458 = vpack.c.b16 %v4282, %v4281
  %v4459 = vpack.c.b16 %v4284, %v4283
  %v4460 = vpack.c.b16 %v4286, %v4285
  %v4461 = vpack.c.b16 %v4288, %v4287
  %v4462 = vpack.c.b16 %v4290, %v4289
  %v4463 = vpack.c.b16 %v4292, %v4291
  %v4464 = vpack.c.b16 %v4294, %v4293
  %v4465 = vpack.c.b16 %v4296, %v4295
  %v4466 = vpack.c.b16 %v4298, %v4297
  %v4467 = vpack.c.b16 %v4300, %v4299
  %v4468 = vpack.c.b16 %v4302, %v4301
  %v4469 = vpack.c.b16 %v4304, %v4303
  %v4470 = vpack.c.b16 %v4306, %v4305
  %v4471 = vpack.c.b16 %v4308, %v4307
  %v4472 = vpack.c.b16 %v4310, %v4309
  %v4473 = vpack.c.b16 %v4312, %v4311
  %v4474 = vpack.c.b16 %v4314, %v4313
  %v4475 = vpack.c.b16 %v4316, %v4315
  %v4476 = vpack.c.b16 %v4318, %v4317
  %v4477 = vpack.c.b16 %v4320, %v4319
  %v4478 = vpack.c.b16 %v4322, %v4321
  %v4479 = vpack.c.b16 %v4324, %v4323
  %v4480 = vpack.c.b16 %v4326, %v4325
  %v4481 = vpack.c.b16 %v4328, %v4327
  %v4482 = vpack.c.b16 %v4330, %v4329
  %v4483 = vpack.c.b16 %v4332, %v4331
  %v4484 = vpack.c.b16 %v4334, %v4333
  %v4485 = vpack.c.b16 %v4336, %v4335
  %v4486 = vpack.c.b16 %v4338, %v4337
  %v4487 = vpack.c.b16 %v4340, %v4339
  %v4488 = vpack.c.b16 %v4342, %v4341
  %v4489 = vpack.c.b16 %v4344, %v4343
  %v4490 = vpack.c.b16 %v4346, %v4345
  %v4491 = vpack.c.b16 %v4348, %v4347
  %v4492 = vpack.c.b16 %v4350, %v4349
  %v4493 = vpack.c.b16 %v4352, %v4351
  %v4494 = vpack.c.b16 %v4354, %v4353
  %v4495 = vpack.c.b16 %v4356, %v4355
  %v4496 = vpack.c.b16 %v4358, %v4357
  %v4497 = vpack.c.b16 %v4360, %v4359
  %v4498 = vpack.c.b16 %v4362, %v4361
  %v4499 = vpack.c.b16 %v4364, %v4363
  %v4500 = vpack.c.b16 %v4366, %v4365
  %v4501 = vpack.c.b16 %v4368, %v4367
  %v4502 = vpack.c.b16 %v4370, %v4369
  %v4503 = vpack.c.b16 %v4372, %v4371
  %v4504 = vpack.c.b16 %v4374, %v4373
  %v4505 = vpack.c.b16 %v4376, %v4375
  %v4506 = vpack.c.b16 %v4378, %v4377
  %v4507 = vpack.c.b16 %v4380, %v4379
  %v4508 = vpack.c.b16 %v4382, %v4381
  %v4509 = vpack.c.b16 %v4384, %v4383
  %v4510 = vpack.c.b16 %v4386, %v4385
  %v4511 = vpack.c.b16 %v4388, %v4387
  %v4512 = vpack.c.b16 %v4390, %v4389
  %v4513 = vpack.c.b16 %v4392, %v4391
  %v4514 = vpack.c.b16 %v4394, %v4393
  %v4515 = vpack.c.b16 %v4396, %v4395
  %v4516 = vpack.c.b16 %v4398, %v4397
  %v4517 = vpack.c.b16 %v4400, %v4399
  %v4518 = vpack.c.b16 %v4402, %v4401
  %v4519 = vpack.c.b16 %v4404, %v4403
  %v4520 = vpack.c.b16 %v4406, %v4405
  %v4521 = vpack.c.b16 %v4408, %v4407
  %v4522 = vpack.c.b16 %v4410, %v4409
  %v4523 = vpack.c.b16 %v4412, %v4411
  %v4524 = vpack.c.b16 %v4414, %v4413
  %v4525 = vpack.c.b16 %v4416, %v4415
  %v4526 = vpack.c.b16 %v4418, %v4417
  %v4527 = vpack.c.b16 %v4420, %v4419
  %v4528 = vpack.c.b16 %v4422, %v4421
  %v4529 = vpack.c.b16 %v4424, %v4423
  %v4530 = vpack.c.b16 %v4426, %v4425
  %v4531 = vpack.c.b16 %v4428, %v4427
  %v4532 = vpack.c.b16 %v4430, %v4429
  %v4533 = vpack.c.b16 %v4432, %v4431
  %v4534 = vpack.c.b16 %v4434, %v4433
  %v4535 = vpack.c.b16 %v4436, %v4435
  %v4536 = vpack.c.b16 %v4438, %v4437
  %v4537 = vpack.c.b16 %v4440, %v4439
  %v4538 = vpack.c.b16 %v4442, %v4441
  %4635 = vmatprep.subr.bf16.mxu0 0
  %4636 = vmatpush1.bf16.msra.mxu0 %v4443
  %4637 = vmatprep.subr.bf16.mxu0 0
  %4638 = vmatpush1.bf16.msra.mxu0 %v4444
  %4639 = vmatprep.subr.bf16.mxu0 0
  %4640 = vmatpush1.bf16.msra.mxu0 %v4445
  %4641 = vmatprep.subr.bf16.mxu0 0
  %4642 = vmatpush1.bf16.msra.mxu0 %v4446
  %4643 = vmatprep.subr.bf16.mxu0 0
  %4644 = vmatpush1.bf16.msra.mxu0 %v4447
  %4645 = vmatprep.subr.bf16.mxu0 0
  %4646 = vmatpush1.bf16.msra.mxu0 %v4448
  %4647 = vmatprep.subr.bf16.mxu0 0
  %4648 = vmatpush1.bf16.msra.mxu0 %v4449
  %4649 = vmatprep.subr.bf16.mxu0 0
  %4650 = vmatpush1.bf16.msra.mxu0 %v4450
  %4651 = vmatprep.subr.bf16.mxu0 0
  %4652 = vmatpush1.bf16.msra.mxu0 %v4451
  %4653 = vmatprep.subr.bf16.mxu0 0
  %4654 = vmatpush1.bf16.msra.mxu0 %v4452
  %4655 = vmatprep.subr.bf16.mxu0 0
  %4656 = vmatpush1.bf16.msra.mxu0 %v4453
  %4657 = vmatprep.subr.bf16.mxu0 0
  %4658 = vmatpush1.bf16.msra.mxu0 %v4454
  %4659 = vmatprep.subr.bf16.mxu0 0
  %4660 = vmatpush1.bf16.msra.mxu0 %v4455
  %4661 = vmatprep.subr.bf16.mxu0 0
  %4662 = vmatpush1.bf16.msra.mxu0 %v4456
  %4663 = vmatprep.subr.bf16.mxu0 0
  %4664 = vmatpush1.bf16.msra.mxu0 %v4457
  %4665 = vmatprep.subr.bf16.mxu0 0
  %4666 = vmatpush1.bf16.msra.mxu0 %v4458
  %4667 = vmatprep.mubr.bf16.mxu0 %v4024
  %4668 = vmatmul.mubr.bf16.gmra.mrb[0].mxu0 %v4023
  %v4669 = vpop.f32.mrb[0].mxu0
  %v4670 = vadd.f32 0.0, %v4669
  %v4671 = vpop.f32.mrb[0].mxu0
  %v4672 = vpop.f32.mrb[0].mxu0
  %v4673 = vadd.f32 0.0, %v4672
  %v4674 = vpop.f32.mrb[0].mxu0
  %4675 = vmatprep.mubr.bf16.mxu0 %v4036
  %4676 = vmatmul.mubr.bf16.gmra.mrb[0].mxu0 %v4035
  %v4677 = vpop.f32.mrb[0].mxu0
  %v4678 = vadd.f32 0.0, %v4677
  %v4679 = vpop.f32.mrb[0].mxu0
  %v4680 = vpop.f32.mrb[0].mxu0
  %v4681 = vadd.f32 0.0, %v4680
  %v4682 = vpop.f32.mrb[0].mxu0
  %4683 = vmatprep.mubr.bf16.mxu0 %v4048
  %4684 = vmatmul.mubr.bf16.gmra.mrb[0].mxu0 %v4047
  %v4685 = vpop.f32.mrb[0].mxu0
  %v4686 = vadd.f32 0.0, %v4685
  %v4687 = vpop.f32.mrb[0].mxu0
  %v4688 = vpop.f32.mrb[0].mxu0
  %v4689 = vadd.f32 0.0, %v4688
  %v4690 = vpop.f32.mrb[0].mxu0
  %4691 = vdwg.mxu0
  %4692 = vmatprep.subr.bf16.mxu0 0
  %4693 = vmatpush1.bf16.msra.mxu0 %v4459
  %4694 = vmatprep.subr.bf16.mxu0 0
  %4695 = vmatpush1.bf16.msra.mxu0 %v4460
  %4696 = vmatprep.subr.bf16.mxu0 0
  %4697 = vmatpush1.bf16.msra.mxu0 %v4461
  %4698 = vmatprep.subr.bf16.mxu0 0
  %4699 = vmatpush1.bf16.msra.mxu0 %v4462
  %4700 = vmatprep.subr.bf16.mxu0 0
  %4701 = vmatpush1.bf16.msra.mxu0 %v4463
  %4702 = vmatprep.subr.bf16.mxu0 0
  %4703 = vmatpush1.bf16.msra.mxu0 %v4464
  %4704 = vmatprep.subr.bf16.mxu0 0
  %4705 = vmatpush1.bf16.msra.mxu0 %v4465
  %4706 = vmatprep.subr.bf16.mxu0 0
  %4707 = vmatpush1.bf16.msra.mxu0 %v4466
  %4708 = vmatprep.subr.bf16.mxu0 0
  %4709 = vmatpush1.bf16.msra.mxu0 %v4467
  %4710 = vmatprep.subr.bf16.mxu0 0
  %4711 = vmatpush1.bf16.msra.mxu0 %v4468
  %4712 = vmatprep.subr.bf16.mxu0 0
  %4713 = vmatpush1.bf16.msra.mxu0 %v4469
  %4714 = vmatprep.subr.bf16.mxu0 0
  %4715 = vmatpush1.bf16.msra.mxu0 %v4470
  %4716 = vmatprep.subr.bf16.mxu0 0
  %4717 = vmatpush1.bf16.msra.mxu0 %v4471
  %4718 = vmatprep.subr.bf16.mxu0 0
  %4719 = vmatpush1.bf16.msra.mxu0 %v4472
  %4720 = vmatprep.subr.bf16.mxu0 0
  %4721 = vmatpush1.bf16.msra.mxu0 %v4473
  %4722 = vmatprep.subr.bf16.mxu0 0
  %4723 = vmatpush1.bf16.msra.mxu0 %v4474
  %4724 = vmatprep.mubr.bf16.mxu0 %v4026
  %4725 = vmatmul.mubr.bf16.gmra.mrb[0].mxu0 %v4025
  %v4726 = vpop.f32.mrb[0].mxu0
  %v4727 = vadd.f32 %v4670, %v4726
  %v4728 = vpop.f32.mrb[0].mxu0
  %v4729 = vpop.f32.mrb[0].mxu0
  %v4730 = vadd.f32 %v4673, %v4729
  %v4731 = vpop.f32.mrb[0].mxu0
  %4732 = vmatprep.mubr.bf16.mxu0 %v4038
  %4733 = vmatmul.mubr.bf16.gmra.mrb[0].mxu0 %v4037
  %v4734 = vpop.f32.mrb[0].mxu0
  %v4735 = vadd.f32 %v4678, %v4734
  %v4736 = vpop.f32.mrb[0].mxu0
  %v4737 = vpop.f32.mrb[0].mxu0
  %v4738 = vadd.f32 %v4681, %v4737
  %v4739 = vpop.f32.mrb[0].mxu0
  %4740 = vmatprep.mubr.bf16.mxu0 %v4050
  %4741 = vmatmul.mubr.bf16.gmra.mrb[0].mxu0 %v4049
  %v4742 = vpop.f32.mrb[0].mxu0
  %v4743 = vadd.f32 %v4686, %v4742
  %v4744 = vpop.f32.mrb[0].mxu0
  %v4745 = vpop.f32.mrb[0].mxu0
  %v4746 = vadd.f32 %v4689, %v4745
  %v4747 = vpop.f32.mrb[0].mxu0
  %4748 = vdwg.mxu0
  %4749 = vmatprep.subr.bf16.mxu0 0
  %4750 = vmatpush1.bf16.msra.mxu0 %v4475
  %4751 = vmatprep.subr.bf16.mxu0 0
  %4752 = vmatpush1.bf16.msra.mxu0 %v4476
  %4753 = vmatprep.subr.bf16.mxu0 0
  %4754 = vmatpush1.bf16.msra.mxu0 %v4477
  %4755 = vmatprep.subr.bf16.mxu0 0
  %4756 = vmatpush1.bf16.msra.mxu0 %v4478
  %4757 = vmatprep.subr.bf16.mxu0 0
  %4758 = vmatpush1.bf16.msra.mxu0 %v4479
  %4759 = vmatprep.subr.bf16.mxu0 0
  %4760 = vmatpush1.bf16.msra.mxu0 %v4480
  %4761 = vmatprep.subr.bf16.mxu0 0
  %4762 = vmatpush1.bf16.msra.mxu0 %v4481
  %4763 = vmatprep.subr.bf16.mxu0 0
  %4764 = vmatpush1.bf16.msra.mxu0 %v4482
  %4765 = vmatprep.subr.bf16.mxu0 0
  %4766 = vmatpush1.bf16.msra.mxu0 %v4483
  %4767 = vmatprep.subr.bf16.mxu0 0
  %4768 = vmatpush1.bf16.msra.mxu0 %v4484
  %4769 = vmatprep.subr.bf16.mxu0 0
  %4770 = vmatpush1.bf16.msra.mxu0 %v4485
  %4771 = vmatprep.subr.bf16.mxu0 0
  %4772 = vmatpush1.bf16.msra.mxu0 %v4486
  %4773 = vmatprep.subr.bf16.mxu0 0
  %4774 = vmatpush1.bf16.msra.mxu0 %v4487
  %4775 = vmatprep.subr.bf16.mxu0 0
  %4776 = vmatpush1.bf16.msra.mxu0 %v4488
  %4777 = vmatprep.subr.bf16.mxu0 0
  %4778 = vmatpush1.bf16.msra.mxu0 %v4489
  %4779 = vmatprep.subr.bf16.mxu0 0
  %4780 = vmatpush1.bf16.msra.mxu0 %v4490
  %4781 = vmatprep.mubr.bf16.mxu0 %v4028
  %4782 = vmatmul.mubr.bf16.gmra.mrb[0].mxu0 %v4027
  %v4783 = vpop.f32.mrb[0].mxu0
  %v4784 = vadd.f32 %v4727, %v4783
  %v4785 = vpop.f32.mrb[0].mxu0
  %v4786 = vpop.f32.mrb[0].mxu0
  %v4787 = vadd.f32 %v4730, %v4786
  %v4788 = vpop.f32.mrb[0].mxu0
  %4789 = vmatprep.mubr.bf16.mxu0 %v4040
  %4790 = vmatmul.mubr.bf16.gmra.mrb[0].mxu0 %v4039
  %v4791 = vpop.f32.mrb[0].mxu0
  %v4792 = vadd.f32 %v4735, %v4791
  %v4793 = vpop.f32.mrb[0].mxu0
  %v4794 = vpop.f32.mrb[0].mxu0
  %v4795 = vadd.f32 %v4738, %v4794
  %v4796 = vpop.f32.mrb[0].mxu0
  %4797 = vmatprep.mubr.bf16.mxu0 %v4052
  %4798 = vmatmul.mubr.bf16.gmra.mrb[0].mxu0 %v4051
  %v4799 = vpop.f32.mrb[0].mxu0
  %v4800 = vadd.f32 %v4743, %v4799
  %v4801 = vpop.f32.mrb[0].mxu0
  %v4802 = vpop.f32.mrb[0].mxu0
  %v4803 = vadd.f32 %v4746, %v4802
  %v4804 = vpop.f32.mrb[0].mxu0
  %4805 = vdwg.mxu0
  %4806 = vmatprep.subr.bf16.mxu0 0
  %4807 = vmatpush1.bf16.msra.mxu0 %v4491
  %4808 = vmatprep.subr.bf16.mxu0 0
  %4809 = vmatpush1.bf16.msra.mxu0 %v4492
  %4810 = vmatprep.subr.bf16.mxu0 0
  %4811 = vmatpush1.bf16.msra.mxu0 %v4493
  %4812 = vmatprep.subr.bf16.mxu0 0
  %4813 = vmatpush1.bf16.msra.mxu0 %v4494
  %4814 = vmatprep.subr.bf16.mxu0 0
  %4815 = vmatpush1.bf16.msra.mxu0 %v4495
  %4816 = vmatprep.subr.bf16.mxu0 0
  %4817 = vmatpush1.bf16.msra.mxu0 %v4496
  %4818 = vmatprep.subr.bf16.mxu0 0
  %4819 = vmatpush1.bf16.msra.mxu0 %v4497
  %4820 = vmatprep.subr.bf16.mxu0 0
  %4821 = vmatpush1.bf16.msra.mxu0 %v4498
  %4822 = vmatprep.subr.bf16.mxu0 0
  %4823 = vmatpush1.bf16.msra.mxu0 %v4499
  %4824 = vmatprep.subr.bf16.mxu0 0
  %4825 = vmatpush1.bf16.msra.mxu0 %v4500
  %4826 = vmatprep.subr.bf16.mxu0 0
  %4827 = vmatpush1.bf16.msra.mxu0 %v4501
  %4828 = vmatprep.subr.bf16.mxu0 0
  %4829 = vmatpush1.bf16.msra.mxu0 %v4502
  %4830 = vmatprep.subr.bf16.mxu0 0
  %4831 = vmatpush1.bf16.msra.mxu0 %v4503
  %4832 = vmatprep.subr.bf16.mxu0 0
  %4833 = vmatpush1.bf16.msra.mxu0 %v4504
  %4834 = vmatprep.subr.bf16.mxu0 0
  %4835 = vmatpush1.bf16.msra.mxu0 %v4505
  %4836 = vmatprep.subr.bf16.mxu0 0
  %4837 = vmatpush1.bf16.msra.mxu0 %v4506
  %4838 = vmatprep.mubr.bf16.mxu0 %v4030
  %4839 = vmatmul.mubr.bf16.gmra.mrb[0].mxu0 %v4029
  %v4840 = vpop.f32.mrb[0].mxu0
  %v4841 = vadd.f32 %v4784, %v4840
  %v4842 = vpop.f32.mrb[0].mxu0
  %v4843 = vpop.f32.mrb[0].mxu0
  %v4844 = vadd.f32 %v4787, %v4843
  %v4845 = vpop.f32.mrb[0].mxu0
  %4846 = vmatprep.mubr.bf16.mxu0 %v4042
  %4847 = vmatmul.mubr.bf16.gmra.mrb[0].mxu0 %v4041
  %v4848 = vpop.f32.mrb[0].mxu0
  %v4849 = vadd.f32 %v4792, %v4848
  %v4850 = vpop.f32.mrb[0].mxu0
  %v4851 = vpop.f32.mrb[0].mxu0
  %v4852 = vadd.f32 %v4795, %v4851
  %v4853 = vpop.f32.mrb[0].mxu0
  %4854 = vmatprep.mubr.bf16.mxu0 %v4054
  %4855 = vmatmul.mubr.bf16.gmra.mrb[0].mxu0 %v4053
  %v4856 = vpop.f32.mrb[0].mxu0
  %v4857 = vadd.f32 %v4800, %v4856
  %v4858 = vpop.f32.mrb[0].mxu0
  %v4859 = vpop.f32.mrb[0].mxu0
  %v4860 = vadd.f32 %v4803, %v4859
  %v4861 = vpop.f32.mrb[0].mxu0
  %4862 = vdwg.mxu0
  %4863 = vmatprep.subr.bf16.mxu0 0
  %4864 = vmatpush1.bf16.msra.mxu0 %v4507
  %4865 = vmatprep.subr.bf16.mxu0 0
  %4866 = vmatpush1.bf16.msra.mxu0 %v4508
  %4867 = vmatprep.subr.bf16.mxu0 0
  %4868 = vmatpush1.bf16.msra.mxu0 %v4509
  %4869 = vmatprep.subr.bf16.mxu0 0
  %4870 = vmatpush1.bf16.msra.mxu0 %v4510
  %4871 = vmatprep.subr.bf16.mxu0 0
  %4872 = vmatpush1.bf16.msra.mxu0 %v4511
  %4873 = vmatprep.subr.bf16.mxu0 0
  %4874 = vmatpush1.bf16.msra.mxu0 %v4512
  %4875 = vmatprep.subr.bf16.mxu0 0
  %4876 = vmatpush1.bf16.msra.mxu0 %v4513
  %4877 = vmatprep.subr.bf16.mxu0 0
  %4878 = vmatpush1.bf16.msra.mxu0 %v4514
  %4879 = vmatprep.subr.bf16.mxu0 0
  %4880 = vmatpush1.bf16.msra.mxu0 %v4515
  %4881 = vmatprep.subr.bf16.mxu0 0
  %4882 = vmatpush1.bf16.msra.mxu0 %v4516
  %4883 = vmatprep.subr.bf16.mxu0 0
  %4884 = vmatpush1.bf16.msra.mxu0 %v4517
  %4885 = vmatprep.subr.bf16.mxu0 0
  %4886 = vmatpush1.bf16.msra.mxu0 %v4518
  %4887 = vmatprep.subr.bf16.mxu0 0
  %4888 = vmatpush1.bf16.msra.mxu0 %v4519
  %4889 = vmatprep.subr.bf16.mxu0 0
  %4890 = vmatpush1.bf16.msra.mxu0 %v4520
  %4891 = vmatprep.subr.bf16.mxu0 0
  %4892 = vmatpush1.bf16.msra.mxu0 %v4521
  %4893 = vmatprep.subr.bf16.mxu0 0
  %4894 = vmatpush1.bf16.msra.mxu0 %v4522
  %4895 = vmatprep.mubr.bf16.mxu0 %v4032
  %4896 = vmatmul.mubr.bf16.gmra.mrb[0].mxu0 %v4031
  %v4897 = vpop.f32.mrb[0].mxu0
  %v4898 = vadd.f32 %v4841, %v4897
  %v4899 = vpop.f32.mrb[0].mxu0
  %v4900 = vpop.f32.mrb[0].mxu0
  %v4901 = vadd.f32 %v4844, %v4900
  %v4902 = vpop.f32.mrb[0].mxu0
  %4903 = vmatprep.mubr.bf16.mxu0 %v4044
  %4904 = vmatmul.mubr.bf16.gmra.mrb[0].mxu0 %v4043
  %v4905 = vpop.f32.mrb[0].mxu0
  %v4906 = vadd.f32 %v4849, %v4905
  %v4907 = vpop.f32.mrb[0].mxu0
  %v4908 = vpop.f32.mrb[0].mxu0
  %v4909 = vadd.f32 %v4852, %v4908
  %v4910 = vpop.f32.mrb[0].mxu0
  %4911 = vmatprep.mubr.bf16.mxu0 %v4056
  %4912 = vmatmul.mubr.bf16.gmra.mrb[0].mxu0 %v4055
  %v4913 = vpop.f32.mrb[0].mxu0
  %v4914 = vadd.f32 %v4857, %v4913
  %v4915 = vpop.f32.mrb[0].mxu0
  %v4916 = vpop.f32.mrb[0].mxu0
  %v4917 = vadd.f32 %v4860, %v4916
  %v4918 = vpop.f32.mrb[0].mxu0
  %4919 = vdwg.mxu0
  %4920 = vmatprep.subr.bf16.mxu0 0
  %4921 = vmatpush1.bf16.msra.mxu0 %v4523
  %4922 = vmatprep.subr.bf16.mxu0 0
  %4923 = vmatpush1.bf16.msra.mxu0 %v4524
  %4924 = vmatprep.subr.bf16.mxu0 0
  %4925 = vmatpush1.bf16.msra.mxu0 %v4525
  %4926 = vmatprep.subr.bf16.mxu0 0
  %4927 = vmatpush1.bf16.msra.mxu0 %v4526
  %4928 = vmatprep.subr.bf16.mxu0 0
  %4929 = vmatpush1.bf16.msra.mxu0 %v4527
  %4930 = vmatprep.subr.bf16.mxu0 0
  %4931 = vmatpush1.bf16.msra.mxu0 %v4528
  %4932 = vmatprep.subr.bf16.mxu0 0
  %4933 = vmatpush1.bf16.msra.mxu0 %v4529
  %4934 = vmatprep.subr.bf16.mxu0 0
  %4935 = vmatpush1.bf16.msra.mxu0 %v4530
  %4936 = vmatprep.subr.bf16.mxu0 0
  %4937 = vmatpush1.bf16.msra.mxu0 %v4531
  %4938 = vmatprep.subr.bf16.mxu0 0
  %4939 = vmatpush1.bf16.msra.mxu0 %v4532
  %4940 = vmatprep.subr.bf16.mxu0 0
  %4941 = vmatpush1.bf16.msra.mxu0 %v4533
  %4942 = vmatprep.subr.bf16.mxu0 0
  %4943 = vmatpush1.bf16.msra.mxu0 %v4534
  %4944 = vmatprep.subr.bf16.mxu0 0
  %4945 = vmatpush1.bf16.msra.mxu0 %v4535
  %4946 = vmatprep.subr.bf16.mxu0 0
  %4947 = vmatpush1.bf16.msra.mxu0 %v4536
  %4948 = vmatprep.subr.bf16.mxu0 0
  %4949 = vmatpush1.bf16.msra.mxu0 %v4537
  %4950 = vmatprep.subr.bf16.mxu0 0
  %4951 = vmatpush1.bf16.msra.mxu0 %v4538
  %4952 = vmatprep.mubr.bf16.mxu0 %v4034
  %4953 = vmatmul.mubr.bf16.gmra.mrb[0].mxu0 %v4033
  %v4954 = vpop.f32.mrb[0].mxu0
  %v4955 = vadd.f32 %v4898, %v4954
  %v4956 = vpop.f32.mrb[0].mxu0
  %v4957 = vpop.f32.mrb[0].mxu0
  %v4958 = vadd.f32 %v4901, %v4957
  %v4959 = vpop.f32.mrb[0].mxu0
  %4960 = vmatprep.mubr.bf16.mxu0 %v4046
  %4961 = vmatmul.mubr.bf16.gmra.mrb[0].mxu0 %v4045
  %v4962 = vpop.f32.mrb[0].mxu0
  %v4963 = vadd.f32 %v4906, %v4962
  %v4964 = vpop.f32.mrb[0].mxu0
  %v4965 = vpop.f32.mrb[0].mxu0
  %v4966 = vadd.f32 %v4909, %v4965
  %v4967 = vpop.f32.mrb[0].mxu0
  %4968 = vmatprep.mubr.bf16.mxu0 %v4058
  %4969 = vmatmul.mubr.bf16.gmra.mrb[0].mxu0 %v4057
  %v4970 = vpop.f32.mrb[0].mxu0
  %v4971 = vadd.f32 %v4914, %v4970
  %v4972 = vpop.f32.mrb[0].mxu0
  %v4973 = vpop.f32.mrb[0].mxu0
  %v4974 = vadd.f32 %v4917, %v4973
  %v4975 = vpop.f32.mrb[0].mxu0
  %4976 = vdwg.mxu0
  %v4977 = vmul.f32 %v4955, 0.17677669
  %v4978 = vmul.f32 %v4958, 0.17677669
  %v4979 = vmul.f32 %v4963, 0.17677669
  %v4980 = vmul.f32 %v4966, 0.17677669
  %v4981 = vmul.f32 %v4971, 0.17677669
  %v4982 = vmul.f32 %v4974, 0.17677669
  %4989 = vrot.lane.b32.xlu0 %v4977, 96
  %v4990 = vpop.permute.xlu0 %4989
  %4991 = vrot.lane.b32.xlu0 %v4978, 96
  %v4992 = vpop.permute.xlu0 %4991
  %4993 = vrot.lane.b32.xlu0 %v4979, 96
  %v4994 = vpop.permute.xlu0 %4993
  %4995 = vrot.lane.b32.xlu0 %v4980, 96
  %v4996 = vpop.permute.xlu0 %4995
  %4997 = vrot.lane.b32.xlu0 %v4981, 96
  %v4998 = vpop.permute.xlu0 %4997
  %4999 = vrot.lane.b32.xlu0 %v4982, 96
  %v5000 = vpop.permute.xlu0 %4999
  %5007 = vrot.lane.b32.xlu0 %v4977, 104
  %v5008 = vpop.permute.xlu0 %5007
  %5009 = vrot.lane.b32.xlu0 %v4978, 104
  %v5010 = vpop.permute.xlu0 %5009
  %5011 = vrot.lane.b32.xlu0 %v4979, 104
  %v5012 = vpop.permute.xlu0 %5011
  %5013 = vrot.lane.b32.xlu0 %v4980, 104
  %v5014 = vpop.permute.xlu0 %5013
  %5015 = vrot.lane.b32.xlu0 %v4981, 104
  %v5016 = vpop.permute.xlu0 %5015
  %5017 = vrot.lane.b32.xlu0 %v4982, 104
  %v5018 = vpop.permute.xlu0 %5017
  %5025 = vrot.lane.b32.xlu0 %v4977, 112
  %v5026 = vpop.permute.xlu0 %5025
  %5027 = vrot.lane.b32.xlu0 %v4978, 112
  %v5028 = vpop.permute.xlu0 %5027
  %5029 = vrot.lane.b32.xlu0 %v4979, 112
  %v5030 = vpop.permute.xlu0 %5029
  %5031 = vrot.lane.b32.xlu0 %v4980, 112
  %v5032 = vpop.permute.xlu0 %5031
  %5033 = vrot.lane.b32.xlu0 %v4981, 112
  %v5034 = vpop.permute.xlu0 %5033
  %5035 = vrot.lane.b32.xlu0 %v4982, 112
  %v5036 = vpop.permute.xlu0 %5035
  %v5043 = vsel %vm814, %v4990, %v5008
  %v5044 = vsel %vm814, %v4992, %v5010
  %v5045 = vsel %vm814, %v4994, %v5012
  %v5046 = vsel %vm814, %v4996, %v5014
  %v5047 = vsel %vm814, %v4998, %v5016
  %v5048 = vsel %vm814, %v5000, %v5018
  %v5049 = vsel %vm276, %v5043, %v5026
  %v5050 = vsel %vm276, %v5044, %v5028
  %v5051 = vsel %vm276, %v5045, %v5030
  %v5052 = vsel %vm276, %v5046, %v5032
  %v5053 = vsel %vm276, %v5047, %v5034
  %v5054 = vsel %vm276, %v5048, %v5036
  %v5055 = vmul.f32 %v5049, %v821
  %v5056 = vmul.f32 %v5050, %v822
  %v5057 = vmul.f32 %v5051, %v823
  %v5058 = vmul.f32 %v5052, %v824
  %v5059 = vmul.f32 %v5053, %v825
  %v5060 = vmul.f32 %v5054, %v826
  %5061 = vrot.lane.b32.xlu0 %v4977, 88
  %v5062 = vpop.permute.xlu0 %5061
  %5063 = vrot.lane.b32.xlu0 %v4978, 88
  %v5064 = vpop.permute.xlu0 %5063
  %5065 = vrot.lane.b32.xlu0 %v4979, 88
  %v5066 = vpop.permute.xlu0 %5065
  %5067 = vrot.lane.b32.xlu0 %v4980, 88
  %v5068 = vpop.permute.xlu0 %5067
  %5069 = vrot.lane.b32.xlu0 %v4981, 88
  %v5070 = vpop.permute.xlu0 %5069
  %5071 = vrot.lane.b32.xlu0 %v4982, 88
  %v5072 = vpop.permute.xlu0 %5071
  %5079 = vrot.lane.b32.xlu0 %v4977, 120
  %v5080 = vpop.permute.xlu0 %5079
  %5081 = vrot.lane.b32.xlu0 %v4978, 120
  %v5082 = vpop.permute.xlu0 %5081
  %5083 = vrot.lane.b32.xlu0 %v4979, 120
  %v5084 = vpop.permute.xlu0 %5083
  %5085 = vrot.lane.b32.xlu0 %v4980, 120
  %v5086 = vpop.permute.xlu0 %5085
  %5087 = vrot.lane.b32.xlu0 %v4981, 120
  %v5088 = vpop.permute.xlu0 %5087
  %5089 = vrot.lane.b32.xlu0 %v4982, 120
  %v5090 = vpop.permute.xlu0 %5089
  %v5097 = vsel %vm814, %v5062, %v4990
  %v5098 = vsel %vm814, %v5064, %v4992
  %v5099 = vsel %vm814, %v5066, %v4994
  %v5100 = vsel %vm814, %v5068, %v4996
  %v5101 = vsel %vm814, %v5070, %v4998
  %v5102 = vsel %vm814, %v5072, %v5000
  %v5103 = vsel %vm276, %v5097, %v5008
  %v5104 = vsel %vm276, %v5098, %v5010
  %v5105 = vsel %vm276, %v5099, %v5012
  %v5106 = vsel %vm276, %v5100, %v5014
  %v5107 = vsel %vm276, %v5101, %v5016
  %v5108 = vsel %vm276, %v5102, %v5018
  %v5109 = vsel %vm983, %v5103, %v5026
  %v5110 = vsel %vm983, %v5104, %v5028
  %v5111 = vsel %vm983, %v5105, %v5030
  %v5112 = vsel %vm983, %v5106, %v5032
  %v5113 = vsel %vm983, %v5107, %v5034
  %v5114 = vsel %vm983, %v5108, %v5036
  %v5115 = vsel %vm423, %v5109, %v5080
  %v5116 = vsel %vm423, %v5110, %v5082
  %v5117 = vsel %vm423, %v5111, %v5084
  %v5118 = vsel %vm423, %v5112, %v5086
  %v5119 = vsel %vm423, %v5113, %v5088
  %v5120 = vsel %vm423, %v5114, %v5090
  %v5121 = vmul.f32 %v5115, %v990
  %v5122 = vmul.f32 %v5116, %v991
  %v5123 = vmul.f32 %v5117, %v992
  %v5124 = vmul.f32 %v5118, %v993
  %v5125 = vmul.f32 %v5119, %v994
  %v5126 = vmul.f32 %v5120, %v995
  %5133 = vrot.lane.b32.xlu0 %v5055, 32
  %v5134 = vpop.permute.xlu0 %5133
  %5135 = vrot.lane.b32.xlu0 %v5056, 32
  %v5136 = vpop.permute.xlu0 %5135
  %5137 = vrot.lane.b32.xlu0 %v5057, 32
  %v5138 = vpop.permute.xlu0 %5137
  %5139 = vrot.lane.b32.xlu0 %v5058, 32
  %v5140 = vpop.permute.xlu0 %5139
  %5141 = vrot.lane.b32.xlu0 %v5059, 32
  %v5142 = vpop.permute.xlu0 %5141
  %5143 = vrot.lane.b32.xlu0 %v5060, 32
  %v5144 = vpop.permute.xlu0 %5143
  %5157 = vrot.lane.b32.xlu0 %v5121, 56
  %v5158 = vpop.permute.xlu0 %5157
  %5159 = vrot.lane.b32.xlu0 %v5122, 56
  %v5160 = vpop.permute.xlu0 %5159
  %5161 = vrot.lane.b32.xlu0 %v5123, 56
  %v5162 = vpop.permute.xlu0 %5161
  %5163 = vrot.lane.b32.xlu0 %v5124, 56
  %v5164 = vpop.permute.xlu0 %5163
  %5165 = vrot.lane.b32.xlu0 %v5125, 56
  %v5166 = vpop.permute.xlu0 %5165
  %5167 = vrot.lane.b32.xlu0 %v5126, 56
  %v5168 = vpop.permute.xlu0 %5167
  %v5175 = vsel %vm423, %v4977, %v5134
  %v5176 = vsel %vm423, %v4978, %v5136
  %v5177 = vsel %vm423, %v4979, %v5138
  %v5178 = vsel %vm423, %v4980, %v5140
  %v5179 = vsel %vm423, %v4981, %v5142
  %v5180 = vsel %vm423, %v4982, %v5144
  %vm5181 = vcmask 457728
  %v5182 = vsel %vm5181, %v5175, %v5158
  %v5183 = vsel %vm5181, %v5176, %v5160
  %v5184 = vsel %vm5181, %v5177, %v5162
  %v5185 = vsel %vm5181, %v5178, %v5164
  %v5186 = vsel %vm5181, %v5179, %v5166
  %v5187 = vsel %vm5181, %v5180, %v5168
  %v5188 = vpack.c.bf16 %v214, %v213
  %v5189 = vpack.c.bf16 %v5183, %v5182
  %v5190 = vpack.c.bf16 %v5185, %v5184
  %v5191 = vpack.c.bf16 %v5187, %v5186
  %v5193 = vsel %vm1874, %v5188, 0
  %5195 = vmatprep.subr.bf16.mxu0 0
  %5196 = vmatpush1.bf16.msra.mxu0 %v5189
  %5197 = vmatprep.subr.bf16.mxu0 0
  %5198 = vmatpush1.bf16.msra.mxu0 %v5190
  %5199 = vmatprep.subr.bf16.mxu0 0
  %5200 = vmatpush1.bf16.msra.mxu0 %v5191
  %5201 = vmatprep.subr.bf16.mxu0 0
  %5202 = vmatpush1.bf16.msra.mxu0 0
  %5203 = vmatprep.subr.bf16.mxu0 0
  %5204 = vmatpush1.bf16.msra.mxu0 0
  %5205 = vmatprep.subr.bf16.mxu0 0
  %5206 = vmatpush1.bf16.msra.mxu0 0
  %5207 = vmatprep.subr.bf16.mxu0 0
  %5208 = vmatpush1.bf16.msra.mxu0 0
  %5209 = vmatprep.subr.bf16.mxu0 0
  %5210 = vmatpush1.bf16.msra.mxu0 0
  %5211 = vmatprep.subr.bf16.mxu0 0
  %5212 = vmatpush1.bf16.msra.mxu0 0
  %5213 = vmatprep.subr.bf16.mxu0 0
  %5214 = vmatpush1.bf16.msra.mxu0 0
  %5215 = vmatprep.subr.bf16.mxu0 0
  %5216 = vmatpush1.bf16.msra.mxu0 0
  %5217 = vmatprep.subr.bf16.mxu0 0
  %5218 = vmatpush1.bf16.msra.mxu0 0
  %5219 = vmatprep.subr.bf16.mxu0 0
  %5220 = vmatpush1.bf16.msra.mxu0 0
  %5221 = vmatprep.subr.bf16.mxu0 0
  %5222 = vmatpush1.bf16.msra.mxu0 0
  %5223 = vmatprep.subr.bf16.mxu0 0
  %5224 = vmatpush1.bf16.msra.mxu0 0
  %5225 = vmatprep.subr.bf16.mxu0 0
  %5226 = vmatpush1.bf16.msra.mxu0 0
  %5227 = vmatprep.mubr.bf16.mxu0 0
  %5228 = vmatmul.mubr.bf16.gmra.mrb[0].mxu0 %v5193
  %v5229 = vpop.f32.mrb[0].mxu0
  %v5230 = vadd.f32 0.0, %v5229
  %v5231 = vpop.f32.mrb[0].mxu0
  %v5232 = vpop.f32.mrb[0].mxu0
  %v5233 = vadd.f32 0.0, %v5232
  %v5234 = vpop.f32.mrb[0].mxu0
  %5235 = vdwg.mxu0
  %5237 = vset.pattern.permute.xlu0 0
  %5238 = vperm.xlu0 %5237, %v261
  %v5239 = vpop.permute.xlu0 %5238
  %5242 = vset.pattern.permute.xlu0 0
  %5243 = vperm.xlu0 %5242, %v262
  %v5244 = vpop.permute.xlu0 %5243
  %v5246 = vmul.f32 %v5230, %v5239
  %v5247 = vmul.f32 %v5233, %v5244
  %v5248 = vpack.c.bf16 %v5247, %v5246
  %5249 = vmatprep.subr.bf16.mxu0 0
  %5250 = vmatpush1.bf16.msra.mxu0 %v5248
  %5251 = vmatprep.subr.bf16.mxu0 0
  %5252 = vmatpush1.bf16.msra.mxu0 0
  %5253 = vmatprep.subr.bf16.mxu0 0
  %5254 = vmatpush1.bf16.msra.mxu0 0
  %5255 = vmatprep.subr.bf16.mxu0 0
  %5256 = vmatpush1.bf16.msra.mxu0 0
  %5257 = vmatprep.subr.bf16.mxu0 0
  %5258 = vmatpush1.bf16.msra.mxu0 0
  %5259 = vmatprep.subr.bf16.mxu0 0
  %5260 = vmatpush1.bf16.msra.mxu0 0
  %5261 = vmatprep.subr.bf16.mxu0 0
  %5262 = vmatpush1.bf16.msra.mxu0 0
  %5263 = vmatprep.subr.bf16.mxu0 0
  %5264 = vmatpush1.bf16.msra.mxu0 0
  %5265 = vmatprep.subr.bf16.mxu0 0
  %5266 = vmatpush1.bf16.msra.mxu0 0
  %5267 = vmatprep.subr.bf16.mxu0 0
  %5268 = vmatpush1.bf16.msra.mxu0 0
  %5269 = vmatprep.subr.bf16.mxu0 0
  %5270 = vmatpush1.bf16.msra.mxu0 0
  %5271 = vmatprep.subr.bf16.mxu0 0
  %5272 = vmatpush1.bf16.msra.mxu0 0
  %5273 = vmatprep.subr.bf16.mxu0 0
  %5274 = vmatpush1.bf16.msra.mxu0 0
  %5275 = vmatprep.subr.bf16.mxu0 0
  %5276 = vmatpush1.bf16.msra.mxu0 0
  %5277 = vmatprep.subr.bf16.mxu0 0
  %5278 = vmatpush1.bf16.msra.mxu0 0
  %5279 = vmatprep.subr.bf16.mxu0 0
  %5280 = vmatpush1.bf16.msra.mxu0 0
  %5281 = vmatprep.mubr.bf16.mxu0 0
  %5282 = vmatmul.mubr.bf16.gmra.mrb[0].mxu0 %v1141
  %v5283 = vpop.f32.mrb[0].mxu0
  %v5284 = vadd.f32 0.0, %v5283
  %v5285 = vpop.f32.mrb[0].mxu0
  %v5286 = vpop.f32.mrb[0].mxu0
  %v5287 = vadd.f32 0.0, %v5286
  %v5288 = vpop.f32.mrb[0].mxu0
  %5289 = vmatprep.mubr.bf16.mxu0 0
  %5290 = vmatmul.mubr.bf16.gmra.mrb[0].mxu0 %v1144
  %v5291 = vpop.f32.mrb[0].mxu0
  %v5292 = vadd.f32 0.0, %v5291
  %v5293 = vpop.f32.mrb[0].mxu0
  %v5294 = vpop.f32.mrb[0].mxu0
  %v5295 = vadd.f32 0.0, %v5294
  %v5296 = vpop.f32.mrb[0].mxu0
  %5297 = vmatprep.mubr.bf16.mxu0 0
  %5298 = vmatmul.mubr.bf16.gmra.mrb[0].mxu0 %v1147
  %v5299 = vpop.f32.mrb[0].mxu0
  %v5300 = vadd.f32 0.0, %v5299
  %v5301 = vpop.f32.mrb[0].mxu0
  %v5302 = vpop.f32.mrb[0].mxu0
  %v5303 = vadd.f32 0.0, %v5302
  %v5304 = vpop.f32.mrb[0].mxu0
  %5305 = vdwg.mxu0
  %5312 = vrot.lane.b32.xlu0 %v821, 32
  %v5313 = vpop.permute.xlu0 %5312
  %5314 = vrot.lane.b32.xlu0 %v822, 32
  %v5315 = vpop.permute.xlu0 %5314
  %5316 = vrot.lane.b32.xlu0 %v823, 32
  %v5317 = vpop.permute.xlu0 %5316
  %5318 = vrot.lane.b32.xlu0 %v824, 32
  %v5319 = vpop.permute.xlu0 %5318
  %5320 = vrot.lane.b32.xlu0 %v825, 32
  %v5321 = vpop.permute.xlu0 %5320
  %5322 = vrot.lane.b32.xlu0 %v826, 32
  %v5323 = vpop.permute.xlu0 %5322
  %v5330 = vmul.f32 %v5284, %v5313
  %v5331 = vmul.f32 %v5287, %v5315
  %v5332 = vmul.f32 %v5292, %v5317
  %v5333 = vmul.f32 %v5295, %v5319
  %v5334 = vmul.f32 %v5300, %v5321
  %v5335 = vmul.f32 %v5303, %v5323
  %5342 = vrot.lane.b32.xlu0 %v5330, 120
  %v5343 = vpop.permute.xlu0 %5342
  %5344 = vrot.lane.b32.xlu0 %v5331, 120
  %v5345 = vpop.permute.xlu0 %5344
  %5346 = vrot.lane.b32.xlu0 %v5332, 120
  %v5347 = vpop.permute.xlu0 %5346
  %5348 = vrot.lane.b32.xlu0 %v5333, 120
  %v5349 = vpop.permute.xlu0 %5348
  %5350 = vrot.lane.b32.xlu0 %v5334, 120
  %v5351 = vpop.permute.xlu0 %5350
  %5352 = vrot.lane.b32.xlu0 %v5335, 120
  %v5353 = vpop.permute.xlu0 %5352
  %v5360 = vadd.f32 %v5330, %v5343
  %v5361 = vadd.f32 %v5331, %v5345
  %v5362 = vadd.f32 %v5332, %v5347
  %v5363 = vadd.f32 %v5333, %v5349
  %v5364 = vadd.f32 %v5334, %v5351
  %v5365 = vadd.f32 %v5335, %v5353
  %5366 = vrot.lane.b32.xlu0 %v5330, 112
  %v5367 = vpop.permute.xlu0 %5366
  %5368 = vrot.lane.b32.xlu0 %v5331, 112
  %v5369 = vpop.permute.xlu0 %5368
  %5370 = vrot.lane.b32.xlu0 %v5332, 112
  %v5371 = vpop.permute.xlu0 %5370
  %5372 = vrot.lane.b32.xlu0 %v5333, 112
  %v5373 = vpop.permute.xlu0 %5372
  %5374 = vrot.lane.b32.xlu0 %v5334, 112
  %v5375 = vpop.permute.xlu0 %5374
  %5376 = vrot.lane.b32.xlu0 %v5335, 112
  %v5377 = vpop.permute.xlu0 %5376
  %v5384 = vadd.f32 %v5360, %v5367
  %v5385 = vadd.f32 %v5361, %v5369
  %v5386 = vadd.f32 %v5362, %v5371
  %v5387 = vadd.f32 %v5363, %v5373
  %v5388 = vadd.f32 %v5364, %v5375
  %v5389 = vadd.f32 %v5365, %v5377
  %v5390 = vmul.f32 %v5384, 0.57735026
  %v5391 = vmul.f32 %v5385, 0.57735026
  %v5392 = vmul.f32 %v5386, 0.57735026
  %v5393 = vmul.f32 %v5387, 0.57735026
  %v5394 = vmul.f32 %v5388, 0.57735026
  %v5395 = vmul.f32 %v5389, 0.57735026
  %5402 = vrot.lane.b32.xlu0 %v990, 56
  %v5403 = vpop.permute.xlu0 %5402
  %5404 = vrot.lane.b32.xlu0 %v991, 56
  %v5405 = vpop.permute.xlu0 %5404
  %5406 = vrot.lane.b32.xlu0 %v992, 56
  %v5407 = vpop.permute.xlu0 %5406
  %5408 = vrot.lane.b32.xlu0 %v993, 56
  %v5409 = vpop.permute.xlu0 %5408
  %5410 = vrot.lane.b32.xlu0 %v994, 56
  %v5411 = vpop.permute.xlu0 %5410
  %5412 = vrot.lane.b32.xlu0 %v995, 56
  %v5413 = vpop.permute.xlu0 %5412
  %v5420 = vmul.f32 %v5284, %v5403
  %v5421 = vmul.f32 %v5287, %v5405
  %v5422 = vmul.f32 %v5292, %v5407
  %v5423 = vmul.f32 %v5295, %v5409
  %v5424 = vmul.f32 %v5300, %v5411
  %v5425 = vmul.f32 %v5303, %v5413
  %5432 = vrot.lane.b32.xlu0 %v5420, 120
  %v5433 = vpop.permute.xlu0 %5432
  %5434 = vrot.lane.b32.xlu0 %v5421, 120
  %v5435 = vpop.permute.xlu0 %5434
  %5436 = vrot.lane.b32.xlu0 %v5422, 120
  %v5437 = vpop.permute.xlu0 %5436
  %5438 = vrot.lane.b32.xlu0 %v5423, 120
  %v5439 = vpop.permute.xlu0 %5438
  %5440 = vrot.lane.b32.xlu0 %v5424, 120
  %v5441 = vpop.permute.xlu0 %5440
  %5442 = vrot.lane.b32.xlu0 %v5425, 120
  %v5443 = vpop.permute.xlu0 %5442
  %v5450 = vadd.f32 %v5420, %v5433
  %v5451 = vadd.f32 %v5421, %v5435
  %v5452 = vadd.f32 %v5422, %v5437
  %v5453 = vadd.f32 %v5423, %v5439
  %v5454 = vadd.f32 %v5424, %v5441
  %v5455 = vadd.f32 %v5425, %v5443
  %5456 = vrot.lane.b32.xlu0 %v5420, 112
  %v5457 = vpop.permute.xlu0 %5456
  %5458 = vrot.lane.b32.xlu0 %v5421, 112
  %v5459 = vpop.permute.xlu0 %5458
  %5460 = vrot.lane.b32.xlu0 %v5422, 112
  %v5461 = vpop.permute.xlu0 %5460
  %5462 = vrot.lane.b32.xlu0 %v5423, 112
  %v5463 = vpop.permute.xlu0 %5462
  %5464 = vrot.lane.b32.xlu0 %v5424, 112
  %v5465 = vpop.permute.xlu0 %5464
  %5466 = vrot.lane.b32.xlu0 %v5425, 112
  %v5467 = vpop.permute.xlu0 %5466
  %v5474 = vadd.f32 %v5450, %v5457
  %v5475 = vadd.f32 %v5451, %v5459
  %v5476 = vadd.f32 %v5452, %v5461
  %v5477 = vadd.f32 %v5453, %v5463
  %v5478 = vadd.f32 %v5454, %v5465
  %v5479 = vadd.f32 %v5455, %v5467
  %5480 = vrot.lane.b32.xlu0 %v5420, 104
  %v5481 = vpop.permute.xlu0 %5480
  %5482 = vrot.lane.b32.xlu0 %v5421, 104
  %v5483 = vpop.permute.xlu0 %5482
  %5484 = vrot.lane.b32.xlu0 %v5422, 104
  %v5485 = vpop.permute.xlu0 %5484
  %5486 = vrot.lane.b32.xlu0 %v5423, 104
  %v5487 = vpop.permute.xlu0 %5486
  %5488 = vrot.lane.b32.xlu0 %v5424, 104
  %v5489 = vpop.permute.xlu0 %5488
  %5490 = vrot.lane.b32.xlu0 %v5425, 104
  %v5491 = vpop.permute.xlu0 %5490
  %v5498 = vadd.f32 %v5474, %v5481
  %v5499 = vadd.f32 %v5475, %v5483
  %v5500 = vadd.f32 %v5476, %v5485
  %v5501 = vadd.f32 %v5477, %v5487
  %v5502 = vadd.f32 %v5478, %v5489
  %v5503 = vadd.f32 %v5479, %v5491
  %5504 = vrot.lane.b32.xlu0 %v5420, 96
  %v5505 = vpop.permute.xlu0 %5504
  %5506 = vrot.lane.b32.xlu0 %v5421, 96
  %v5507 = vpop.permute.xlu0 %5506
  %5508 = vrot.lane.b32.xlu0 %v5422, 96
  %v5509 = vpop.permute.xlu0 %5508
  %5510 = vrot.lane.b32.xlu0 %v5423, 96
  %v5511 = vpop.permute.xlu0 %5510
  %5512 = vrot.lane.b32.xlu0 %v5424, 96
  %v5513 = vpop.permute.xlu0 %5512
  %5514 = vrot.lane.b32.xlu0 %v5425, 96
  %v5515 = vpop.permute.xlu0 %5514
  %v5522 = vadd.f32 %v5498, %v5505
  %v5523 = vadd.f32 %v5499, %v5507
  %v5524 = vadd.f32 %v5500, %v5509
  %v5525 = vadd.f32 %v5501, %v5511
  %v5526 = vadd.f32 %v5502, %v5513
  %v5527 = vadd.f32 %v5503, %v5515
  %v5528 = vmul.f32 %v5522, 0.4472136
  %v5529 = vmul.f32 %v5523, 0.4472136
  %v5530 = vmul.f32 %v5524, 0.4472136
  %v5531 = vmul.f32 %v5525, 0.4472136
  %v5532 = vmul.f32 %v5526, 0.4472136
  %v5533 = vmul.f32 %v5527, 0.4472136
  %5540 = vrot.lane.b32.xlu0 %v5528, 112
  %v5541 = vpop.permute.xlu0 %5540
  %5542 = vrot.lane.b32.xlu0 %v5529, 112
  %v5543 = vpop.permute.xlu0 %5542
  %5544 = vrot.lane.b32.xlu0 %v5530, 112
  %v5545 = vpop.permute.xlu0 %5544
  %5546 = vrot.lane.b32.xlu0 %v5531, 112
  %v5547 = vpop.permute.xlu0 %5546
  %5548 = vrot.lane.b32.xlu0 %v5532, 112
  %v5549 = vpop.permute.xlu0 %5548
  %5550 = vrot.lane.b32.xlu0 %v5533, 112
  %v5551 = vpop.permute.xlu0 %5550
  %v5558 = vsel %vm423, %v5284, %v5390
  %v5559 = vsel %vm423, %v5287, %v5391
  %v5560 = vsel %vm423, %v5292, %v5392
  %v5561 = vsel %vm423, %v5295, %v5393
  %v5562 = vsel %vm423, %v5300, %v5394
  %v5563 = vsel %vm423, %v5303, %v5395
  %vm5564 = vcmask 326656
  %v5565 = vsel %vm5564, %v5558, %v5541
  %v5566 = vsel %vm5564, %v5559, %v5543
  %v5567 = vsel %vm5564, %v5560, %v5545
  %v5568 = vsel %vm5564, %v5561, %v5547
  %v5569 = vsel %vm5564, %v5562, %v5549
  %v5570 = vsel %vm5564, %v5563, %v5551
  %v5571 = vld [vmem:[%s77] sm:$0xff]
  %v5572 = vld [vmem:[%s77 + $0x8] sm:$0xff]
  %v5573 = vld [vmem:[%s77 + $0x10] sm:$0xff]
  %v5574 = vld [vmem:[%s77 + $0x18] sm:$0xff]
  %v5575 = vld [vmem:[%s77 + $0x20] sm:$0xff]
  %v5576 = vld [vmem:[%s77 + $0x28] sm:$0xff]
  %v5577 = vld [vmem:[%s77 + $0x30] sm:$0xff]
  %v5578 = vld [vmem:[%s77 + $0x38] sm:$0xff]
  %v5579 = vld [vmem:[%s77 + $0x40] sm:$0xff]
  %v5580 = vld [vmem:[%s77 + $0x48] sm:$0xff]
  %v5581 = vld [vmem:[%s77 + $0x50] sm:$0xff]
  %v5582 = vld [vmem:[%s77 + $0x58] sm:$0xff]
  %v5583 = vld [vmem:[%s77 + $0x60] sm:$0xff]
  %v5584 = vld [vmem:[%s77 + $0x68] sm:$0xff]
  %v5585 = vld [vmem:[%s77 + $0x70] sm:$0xff]
  %v5586 = vld [vmem:[%s77 + $0x78] sm:$0xff]
  %v5587 = vld [vmem:[%s77 + $0x80] sm:$0xff]
  %v5588 = vld [vmem:[%s77 + $0x88] sm:$0xff]
  %v5589 = vld [vmem:[%s77 + $0x90] sm:$0xff]
  %v5590 = vld [vmem:[%s77 + $0x98] sm:$0xff]
  %v5591 = vld [vmem:[%s77 + $0xa0] sm:$0xff]
  %v5592 = vld [vmem:[%s77 + $0xa8] sm:$0xff]
  %v5593 = vld [vmem:[%s77 + $0xb0] sm:$0xff]
  %v5594 = vld [vmem:[%s77 + $0xb8] sm:$0xff]
  %v5595 = vld [vmem:[%s77 + $0xc0] sm:$0xff]
  %v5596 = vld [vmem:[%s77 + $0xc8] sm:$0xff]
  %v5597 = vld [vmem:[%s77 + $0xd0] sm:$0xff]
  %v5598 = vld [vmem:[%s77 + $0xd8] sm:$0xff]
  %v5599 = vld [vmem:[%s77 + $0xe0] sm:$0xff]
  %v5600 = vld [vmem:[%s77 + $0xe8] sm:$0xff]
  %v5601 = vld [vmem:[%s77 + $0xf0] sm:$0xff]
  %v5602 = vld [vmem:[%s77 + $0xf8] sm:$0xff]
  %v5603 = vld [vmem:[%s77 + $0x100] sm:$0xff]
  %v5604 = vld [vmem:[%s77 + $0x108] sm:$0xff]
  %v5605 = vld [vmem:[%s77 + $0x110] sm:$0xff]
  %v5606 = vld [vmem:[%s77 + $0x118] sm:$0xff]
  %v5607 = vpack.c.bf16 %v5566, %v5565
  %v5608 = vpack.c.bf16 %v5568, %v5567
  %v5609 = vpack.c.bf16 %v5570, %v5569
  %v5646 = vunpack.c.l.b16 %v5571
  %v5647 = vunpack.c.h.b16 %v5571
  %v5648 = vunpack.c.l.b16 %v5572
  %v5649 = vunpack.c.h.b16 %v5572
  %v5650 = vunpack.c.l.b16 %v5573
  %v5651 = vunpack.c.h.b16 %v5573
  %v5652 = vunpack.c.l.b16 %v5574
  %v5653 = vunpack.c.h.b16 %v5574
  %v5654 = vunpack.c.l.b16 %v5575
  %v5655 = vunpack.c.h.b16 %v5575
  %v5656 = vunpack.c.l.b16 %v5576
  %v5657 = vunpack.c.h.b16 %v5576
  %v5658 = vunpack.c.l.b16 %v5577
  %v5659 = vunpack.c.h.b16 %v5577
  %v5660 = vunpack.c.l.b16 %v5578
  %v5661 = vunpack.c.h.b16 %v5578
  %v5662 = vunpack.c.l.b16 %v5579
  %v5663 = vunpack.c.h.b16 %v5579
  %v5664 = vunpack.c.l.b16 %v5580
  %v5665 = vunpack.c.h.b16 %v5580
  %v5666 = vunpack.c.l.b16 %v5581
  %v5667 = vunpack.c.h.b16 %v5581
  %v5668 = vunpack.c.l.b16 %v5582
  %v5669 = vunpack.c.h.b16 %v5582
  %v5670 = vunpack.c.l.b16 %v5583
  %v5671 = vunpack.c.h.b16 %v5583
  %v5672 = vunpack.c.l.b16 %v5584
  %v5673 = vunpack.c.h.b16 %v5584
  %v5674 = vunpack.c.l.b16 %v5585
  %v5675 = vunpack.c.h.b16 %v5585
  %v5676 = vunpack.c.l.b16 %v5586
  %v5677 = vunpack.c.h.b16 %v5586
  %v5678 = vunpack.c.l.b16 %v5587
  %v5679 = vunpack.c.h.b16 %v5587
  %v5680 = vunpack.c.l.b16 %v5588
  %v5681 = vunpack.c.h.b16 %v5588
  %v5682 = vunpack.c.l.b16 %v5589
  %v5683 = vunpack.c.h.b16 %v5589
  %v5684 = vunpack.c.l.b16 %v5590
  %v5685 = vunpack.c.h.b16 %v5590
  %v5686 = vunpack.c.l.b16 %v5591
  %v5687 = vunpack.c.h.b16 %v5591
  %v5688 = vunpack.c.l.b16 %v5592
  %v5689 = vunpack.c.h.b16 %v5592
  %v5690 = vunpack.c.l.b16 %v5593
  %v5691 = vunpack.c.h.b16 %v5593
  %v5692 = vunpack.c.l.b16 %v5594
  %v5693 = vunpack.c.h.b16 %v5594
  %v5694 = vunpack.c.l.b16 %v5595
  %v5695 = vunpack.c.h.b16 %v5595
  %v5696 = vunpack.c.l.b16 %v5596
  %v5697 = vunpack.c.h.b16 %v5596
  %v5698 = vunpack.c.l.b16 %v5597
  %v5699 = vunpack.c.h.b16 %v5597
  %v5700 = vunpack.c.l.b16 %v5598
  %v5701 = vunpack.c.h.b16 %v5598
  %v5702 = vunpack.c.l.b16 %v5599
  %v5703 = vunpack.c.h.b16 %v5599
  %v5704 = vunpack.c.l.b16 %v5600
  %v5705 = vunpack.c.h.b16 %v5600
  %v5706 = vunpack.c.l.b16 %v5601
  %v5707 = vunpack.c.h.b16 %v5601
  %v5708 = vunpack.c.l.b16 %v5602
  %v5709 = vunpack.c.h.b16 %v5602
  %v5710 = vunpack.c.l.b16 %v5603
  %v5711 = vunpack.c.h.b16 %v5603
  %v5712 = vunpack.c.l.b16 %v5604
  %v5713 = vunpack.c.h.b16 %v5604
  %v5714 = vunpack.c.l.b16 %v5605
  %v5715 = vunpack.c.h.b16 %v5605
  %v5716 = vunpack.c.l.b16 %v5606
  %v5717 = vunpack.c.h.b16 %v5606
  %v5718 = vpack.c.b16 %v5658, %v5646
  %v5719 = vpack.c.b16 %v5659, %v5647
  %v5720 = vpack.c.b16 %v5660, %v5648
  %v5721 = vpack.c.b16 %v5661, %v5649
  %v5722 = vpack.c.b16 %v5662, %v5650
  %v5723 = vpack.c.b16 %v5663, %v5651
  %v5724 = vpack.c.b16 %v5664, %v5652
  %v5725 = vpack.c.b16 %v5665, %v5653
  %v5726 = vpack.c.b16 %v5666, %v5654
  %v5727 = vpack.c.b16 %v5667, %v5655
  %v5728 = vpack.c.b16 %v5668, %v5656
  %v5729 = vpack.c.b16 %v5669, %v5657
  %v5730 = vpack.c.b16 %v5682, %v5670
  %v5731 = vpack.c.b16 %v5683, %v5671
  %v5732 = vpack.c.b16 %v5684, %v5672
  %v5733 = vpack.c.b16 %v5685, %v5673
  %v5734 = vpack.c.b16 %v5686, %v5674
  %v5735 = vpack.c.b16 %v5687, %v5675
  %v5736 = vpack.c.b16 %v5688, %v5676
  %v5737 = vpack.c.b16 %v5689, %v5677
  %v5738 = vpack.c.b16 %v5690, %v5678
  %v5739 = vpack.c.b16 %v5691, %v5679
  %v5740 = vpack.c.b16 %v5692, %v5680
  %v5741 = vpack.c.b16 %v5693, %v5681
  %v5742 = vpack.c.b16 %v5706, %v5694
  %v5743 = vpack.c.b16 %v5707, %v5695
  %v5744 = vpack.c.b16 %v5708, %v5696
  %v5745 = vpack.c.b16 %v5709, %v5697
  %v5746 = vpack.c.b16 %v5710, %v5698
  %v5747 = vpack.c.b16 %v5711, %v5699
  %v5748 = vpack.c.b16 %v5712, %v5700
  %v5749 = vpack.c.b16 %v5713, %v5701
  %v5750 = vpack.c.b16 %v5714, %v5702
  %v5751 = vpack.c.b16 %v5715, %v5703
  %v5752 = vpack.c.b16 %v5716, %v5704
  %v5753 = vpack.c.b16 %v5717, %v5705
  %v5791 = vsel %vm1874, %v5607, 0
  %v5794 = vsel %vm1874, %v5608, 0
  %v5797 = vsel %vm1874, %v5609, 0
  %5799 = vmatprep.subr.bf16.mxu0 %v5719
  %5800 = vmatpush1.bf16.msra.mxu0 %v5718
  %5801 = vmatprep.subr.bf16.mxu0 %v5731
  %5802 = vmatpush1.bf16.msra.mxu0 %v5730
  %5803 = vmatprep.subr.bf16.mxu0 %v5743
  %5804 = vmatpush1.bf16.msra.mxu0 %v5742
  %5805 = vmatprep.subr.bf16.mxu0 0
  %5806 = vmatpush1.bf16.msra.mxu0 0
  %5807 = vmatprep.subr.bf16.mxu0 0
  %5808 = vmatpush1.bf16.msra.mxu0 0
  %5809 = vmatprep.subr.bf16.mxu0 0
  %5810 = vmatpush1.bf16.msra.mxu0 0
  %5811 = vmatprep.subr.bf16.mxu0 0
  %5812 = vmatpush1.bf16.msra.mxu0 0
  %5813 = vmatprep.subr.bf16.mxu0 0
  %5814 = vmatpush1.bf16.msra.mxu0 0
  %5815 = vmatprep.subr.bf16.mxu0 0
  %5816 = vmatpush1.bf16.msra.mxu0 0
  %5817 = vmatprep.subr.bf16.mxu0 0
  %5818 = vmatpush1.bf16.msra.mxu0 0
  %5819 = vmatprep.subr.bf16.mxu0 0
  %5820 = vmatpush1.bf16.msra.mxu0 0
  %5821 = vmatprep.subr.bf16.mxu0 0
  %5822 = vmatpush1.bf16.msra.mxu0 0
  %5823 = vmatprep.subr.bf16.mxu0 0
  %5824 = vmatpush1.bf16.msra.mxu0 0
  %5825 = vmatprep.subr.bf16.mxu0 0
  %5826 = vmatpush1.bf16.msra.mxu0 0
  %5827 = vmatprep.subr.bf16.mxu0 0
  %5828 = vmatpush1.bf16.msra.mxu0 0
  %5829 = vmatprep.subr.bf16.mxu0 0
  %5830 = vmatpush1.bf16.msra.mxu0 0
  %5831 = vmatprep.mubr.bf16.mxu0 0
  %5832 = vmatmul.mubr.bf16.gmra.mrb[0].mxu0 %v5791
  %v5833 = vpop.f32.mrb[0].mxu0
  %v5834 = vadd.f32 0.0, %v5833
  %v5835 = vpop.f32.mrb[0].mxu0
  %v5836 = vadd.f32 0.0, %v5835
  %v5837 = vpop.f32.mrb[0].mxu0
  %v5838 = vadd.f32 0.0, %v5837
  %v5839 = vpop.f32.mrb[0].mxu0
  %v5840 = vadd.f32 0.0, %v5839
  %5841 = vmatprep.mubr.bf16.mxu0 0
  %5842 = vmatmul.mubr.bf16.gmra.mrb[0].mxu0 %v5794
  %v5843 = vpop.f32.mrb[0].mxu0
  %v5844 = vadd.f32 0.0, %v5843
  %v5845 = vpop.f32.mrb[0].mxu0
  %v5846 = vadd.f32 0.0, %v5845
  %v5847 = vpop.f32.mrb[0].mxu0
  %v5848 = vadd.f32 0.0, %v5847
  %v5849 = vpop.f32.mrb[0].mxu0
  %v5850 = vadd.f32 0.0, %v5849
  %5851 = vmatprep.mubr.bf16.mxu0 0
  %5852 = vmatmul.mubr.bf16.gmra.mrb[0].mxu0 %v5797
  %v5853 = vpop.f32.mrb[0].mxu0
  %v5854 = vadd.f32 0.0, %v5853
  %v5855 = vpop.f32.mrb[0].mxu0
  %v5856 = vadd.f32 0.0, %v5855
  %v5857 = vpop.f32.mrb[0].mxu0
  %v5858 = vadd.f32 0.0, %v5857
  %v5859 = vpop.f32.mrb[0].mxu0
  %v5860 = vadd.f32 0.0, %v5859
  %5861 = vdwg.mxu0
  %5862 = vmatprep.subr.bf16.mxu0 %v5721
  %5863 = vmatpush1.bf16.msra.mxu0 %v5720
  %5864 = vmatprep.subr.bf16.mxu0 %v5733
  %5865 = vmatpush1.bf16.msra.mxu0 %v5732
  %5866 = vmatprep.subr.bf16.mxu0 %v5745
  %5867 = vmatpush1.bf16.msra.mxu0 %v5744
  %5868 = vmatprep.subr.bf16.mxu0 0
  %5869 = vmatpush1.bf16.msra.mxu0 0
  %5870 = vmatprep.subr.bf16.mxu0 0
  %5871 = vmatpush1.bf16.msra.mxu0 0
  %5872 = vmatprep.subr.bf16.mxu0 0
  %5873 = vmatpush1.bf16.msra.mxu0 0
  %5874 = vmatprep.subr.bf16.mxu0 0
  %5875 = vmatpush1.bf16.msra.mxu0 0
  %5876 = vmatprep.subr.bf16.mxu0 0
  %5877 = vmatpush1.bf16.msra.mxu0 0
  %5878 = vmatprep.subr.bf16.mxu0 0
  %5879 = vmatpush1.bf16.msra.mxu0 0
  %5880 = vmatprep.subr.bf16.mxu0 0
  %5881 = vmatpush1.bf16.msra.mxu0 0
  %5882 = vmatprep.subr.bf16.mxu0 0
  %5883 = vmatpush1.bf16.msra.mxu0 0
  %5884 = vmatprep.subr.bf16.mxu0 0
  %5885 = vmatpush1.bf16.msra.mxu0 0
  %5886 = vmatprep.subr.bf16.mxu0 0
  %5887 = vmatpush1.bf16.msra.mxu0 0
  %5888 = vmatprep.subr.bf16.mxu0 0
  %5889 = vmatpush1.bf16.msra.mxu0 0
  %5890 = vmatprep.subr.bf16.mxu0 0
  %5891 = vmatpush1.bf16.msra.mxu0 0
  %5892 = vmatprep.subr.bf16.mxu0 0
  %5893 = vmatpush1.bf16.msra.mxu0 0
  %5894 = vmatprep.mubr.bf16.mxu0 0
  %5895 = vmatmul.mubr.bf16.gmra.mrb[0].mxu0 %v5791
  %v5896 = vpop.f32.mrb[0].mxu0
  %v5897 = vadd.f32 0.0, %v5896
  %v5898 = vpop.f32.mrb[0].mxu0
  %v5899 = vadd.f32 0.0, %v5898
  %v5900 = vpop.f32.mrb[0].mxu0
  %v5901 = vadd.f32 0.0, %v5900
  %v5902 = vpop.f32.mrb[0].mxu0
  %v5903 = vadd.f32 0.0, %v5902
  %5904 = vmatprep.mubr.bf16.mxu0 0
  %5905 = vmatmul.mubr.bf16.gmra.mrb[0].mxu0 %v5794
  %v5906 = vpop.f32.mrb[0].mxu0
  %v5907 = vadd.f32 0.0, %v5906
  %v5908 = vpop.f32.mrb[0].mxu0
  %v5909 = vadd.f32 0.0, %v5908
  %v5910 = vpop.f32.mrb[0].mxu0
  %v5911 = vadd.f32 0.0, %v5910
  %v5912 = vpop.f32.mrb[0].mxu0
  %v5913 = vadd.f32 0.0, %v5912
  %5914 = vmatprep.mubr.bf16.mxu0 0
  %5915 = vmatmul.mubr.bf16.gmra.mrb[0].mxu0 %v5797
  %v5916 = vpop.f32.mrb[0].mxu0
  %v5917 = vadd.f32 0.0, %v5916
  %v5918 = vpop.f32.mrb[0].mxu0
  %v5919 = vadd.f32 0.0, %v5918
  %v5920 = vpop.f32.mrb[0].mxu0
  %v5921 = vadd.f32 0.0, %v5920
  %v5922 = vpop.f32.mrb[0].mxu0
  %v5923 = vadd.f32 0.0, %v5922
  %5924 = vdwg.mxu0
  %5925 = vmatprep.subr.bf16.mxu0 %v5723
  %5926 = vmatpush1.bf16.msra.mxu0 %v5722
  %5927 = vmatprep.subr.bf16.mxu0 %v5735
  %5928 = vmatpush1.bf16.msra.mxu0 %v5734
  %5929 = vmatprep.subr.bf16.mxu0 %v5747
  %5930 = vmatpush1.bf16.msra.mxu0 %v5746
  %5931 = vmatprep.subr.bf16.mxu0 0
  %5932 = vmatpush1.bf16.msra.mxu0 0
  %5933 = vmatprep.subr.bf16.mxu0 0
  %5934 = vmatpush1.bf16.msra.mxu0 0
  %5935 = vmatprep.subr.bf16.mxu0 0
  %5936 = vmatpush1.bf16.msra.mxu0 0
  %5937 = vmatprep.subr.bf16.mxu0 0
  %5938 = vmatpush1.bf16.msra.mxu0 0
  %5939 = vmatprep.subr.bf16.mxu0 0
  %5940 = vmatpush1.bf16.msra.mxu0 0
  %5941 = vmatprep.subr.bf16.mxu0 0
  %5942 = vmatpush1.bf16.msra.mxu0 0
  %5943 = vmatprep.subr.bf16.mxu0 0
  %5944 = vmatpush1.bf16.msra.mxu0 0
  %5945 = vmatprep.subr.bf16.mxu0 0
  %5946 = vmatpush1.bf16.msra.mxu0 0
  %5947 = vmatprep.subr.bf16.mxu0 0
  %5948 = vmatpush1.bf16.msra.mxu0 0
  %5949 = vmatprep.subr.bf16.mxu0 0
  %5950 = vmatpush1.bf16.msra.mxu0 0
  %5951 = vmatprep.subr.bf16.mxu0 0
  %5952 = vmatpush1.bf16.msra.mxu0 0
  %5953 = vmatprep.subr.bf16.mxu0 0
  %5954 = vmatpush1.bf16.msra.mxu0 0
  %5955 = vmatprep.subr.bf16.mxu0 0
  %5956 = vmatpush1.bf16.msra.mxu0 0
  %5957 = vmatprep.mubr.bf16.mxu0 0
  %5958 = vmatmul.mubr.bf16.gmra.mrb[0].mxu0 %v5791
  %v5959 = vpop.f32.mrb[0].mxu0
  %v5960 = vadd.f32 0.0, %v5959
  %v5961 = vpop.f32.mrb[0].mxu0
  %v5962 = vadd.f32 0.0, %v5961
  %v5963 = vpop.f32.mrb[0].mxu0
  %v5964 = vadd.f32 0.0, %v5963
  %v5965 = vpop.f32.mrb[0].mxu0
  %v5966 = vadd.f32 0.0, %v5965
  %5967 = vmatprep.mubr.bf16.mxu0 0
  %5968 = vmatmul.mubr.bf16.gmra.mrb[0].mxu0 %v5794
  %v5969 = vpop.f32.mrb[0].mxu0
  %v5970 = vadd.f32 0.0, %v5969
  %v5971 = vpop.f32.mrb[0].mxu0
  %v5972 = vadd.f32 0.0, %v5971
  %v5973 = vpop.f32.mrb[0].mxu0
  %v5974 = vadd.f32 0.0, %v5973
  %v5975 = vpop.f32.mrb[0].mxu0
  %v5976 = vadd.f32 0.0, %v5975
  %5977 = vmatprep.mubr.bf16.mxu0 0
  %5978 = vmatmul.mubr.bf16.gmra.mrb[0].mxu0 %v5797
  %v5979 = vpop.f32.mrb[0].mxu0
  %v5980 = vadd.f32 0.0, %v5979
  %v5981 = vpop.f32.mrb[0].mxu0
  %v5982 = vadd.f32 0.0, %v5981
  %v5983 = vpop.f32.mrb[0].mxu0
  %v5984 = vadd.f32 0.0, %v5983
  %v5985 = vpop.f32.mrb[0].mxu0
  %v5986 = vadd.f32 0.0, %v5985
  %5987 = vdwg.mxu0
  %5988 = vmatprep.subr.bf16.mxu0 %v5725
  %5989 = vmatpush1.bf16.msra.mxu0 %v5724
  %5990 = vmatprep.subr.bf16.mxu0 %v5737
  %5991 = vmatpush1.bf16.msra.mxu0 %v5736
  %5992 = vmatprep.subr.bf16.mxu0 %v5749
  %5993 = vmatpush1.bf16.msra.mxu0 %v5748
  %5994 = vmatprep.subr.bf16.mxu0 0
  %5995 = vmatpush1.bf16.msra.mxu0 0
  %5996 = vmatprep.subr.bf16.mxu0 0
  %5997 = vmatpush1.bf16.msra.mxu0 0
  %5998 = vmatprep.subr.bf16.mxu0 0
  %5999 = vmatpush1.bf16.msra.mxu0 0
  %6000 = vmatprep.subr.bf16.mxu0 0
  %6001 = vmatpush1.bf16.msra.mxu0 0
  %6002 = vmatprep.subr.bf16.mxu0 0
  %6003 = vmatpush1.bf16.msra.mxu0 0
  %6004 = vmatprep.subr.bf16.mxu0 0
  %6005 = vmatpush1.bf16.msra.mxu0 0
  %6006 = vmatprep.subr.bf16.mxu0 0
  %6007 = vmatpush1.bf16.msra.mxu0 0
  %6008 = vmatprep.subr.bf16.mxu0 0
  %6009 = vmatpush1.bf16.msra.mxu0 0
  %6010 = vmatprep.subr.bf16.mxu0 0
  %6011 = vmatpush1.bf16.msra.mxu0 0
  %6012 = vmatprep.subr.bf16.mxu0 0
  %6013 = vmatpush1.bf16.msra.mxu0 0
  %6014 = vmatprep.subr.bf16.mxu0 0
  %6015 = vmatpush1.bf16.msra.mxu0 0
  %6016 = vmatprep.subr.bf16.mxu0 0
  %6017 = vmatpush1.bf16.msra.mxu0 0
  %6018 = vmatprep.subr.bf16.mxu0 0
  %6019 = vmatpush1.bf16.msra.mxu0 0
  %6020 = vmatprep.mubr.bf16.mxu0 0
  %6021 = vmatmul.mubr.bf16.gmra.mrb[0].mxu0 %v5791
  %v6022 = vpop.f32.mrb[0].mxu0
  %v6023 = vadd.f32 0.0, %v6022
  %v6024 = vpop.f32.mrb[0].mxu0
  %v6025 = vadd.f32 0.0, %v6024
  %v6026 = vpop.f32.mrb[0].mxu0
  %v6027 = vadd.f32 0.0, %v6026
  %v6028 = vpop.f32.mrb[0].mxu0
  %v6029 = vadd.f32 0.0, %v6028
  %6030 = vmatprep.mubr.bf16.mxu0 0
  %6031 = vmatmul.mubr.bf16.gmra.mrb[0].mxu0 %v5794
  %v6032 = vpop.f32.mrb[0].mxu0
  %v6033 = vadd.f32 0.0, %v6032
  %v6034 = vpop.f32.mrb[0].mxu0
  %v6035 = vadd.f32 0.0, %v6034
  %v6036 = vpop.f32.mrb[0].mxu0
  %v6037 = vadd.f32 0.0, %v6036
  %v6038 = vpop.f32.mrb[0].mxu0
  %v6039 = vadd.f32 0.0, %v6038
  %6040 = vmatprep.mubr.bf16.mxu0 0
  %6041 = vmatmul.mubr.bf16.gmra.mrb[0].mxu0 %v5797
  %v6042 = vpop.f32.mrb[0].mxu0
  %v6043 = vadd.f32 0.0, %v6042
  %v6044 = vpop.f32.mrb[0].mxu0
  %v6045 = vadd.f32 0.0, %v6044
  %v6046 = vpop.f32.mrb[0].mxu0
  %v6047 = vadd.f32 0.0, %v6046
  %v6048 = vpop.f32.mrb[0].mxu0
  %v6049 = vadd.f32 0.0, %v6048
  %6050 = vdwg.mxu0
  %6051 = vmatprep.subr.bf16.mxu0 %v5727
  %6052 = vmatpush1.bf16.msra.mxu0 %v5726
  %6053 = vmatprep.subr.bf16.mxu0 %v5739
  %6054 = vmatpush1.bf16.msra.mxu0 %v5738
  %6055 = vmatprep.subr.bf16.mxu0 %v5751
  %6056 = vmatpush1.bf16.msra.mxu0 %v5750
  %6057 = vmatprep.subr.bf16.mxu0 0
  %6058 = vmatpush1.bf16.msra.mxu0 0
  %6059 = vmatprep.subr.bf16.mxu0 0
  %6060 = vmatpush1.bf16.msra.mxu0 0
  %6061 = vmatprep.subr.bf16.mxu0 0
  %6062 = vmatpush1.bf16.msra.mxu0 0
  %6063 = vmatprep.subr.bf16.mxu0 0
  %6064 = vmatpush1.bf16.msra.mxu0 0
  %6065 = vmatprep.subr.bf16.mxu0 0
  %6066 = vmatpush1.bf16.msra.mxu0 0
  %6067 = vmatprep.subr.bf16.mxu0 0
  %6068 = vmatpush1.bf16.msra.mxu0 0
  %6069 = vmatprep.subr.bf16.mxu0 0
  %6070 = vmatpush1.bf16.msra.mxu0 0
  %6071 = vmatprep.subr.bf16.mxu0 0
  %6072 = vmatpush1.bf16.msra.mxu0 0
  %6073 = vmatprep.subr.bf16.mxu0 0
  %6074 = vmatpush1.bf16.msra.mxu0 0
  %6075 = vmatprep.subr.bf16.mxu0 0
  %6076 = vmatpush1.bf16.msra.mxu0 0
  %6077 = vmatprep.subr.bf16.mxu0 0
  %6078 = vmatpush1.bf16.msra.mxu0 0
  %6079 = vmatprep.subr.bf16.mxu0 0
  %6080 = vmatpush1.bf16.msra.mxu0 0
  %6081 = vmatprep.subr.bf16.mxu0 0
  %6082 = vmatpush1.bf16.msra.mxu0 0
  %6083 = vmatprep.mubr.bf16.mxu0 0
  %6084 = vmatmul.mubr.bf16.gmra.mrb[0].mxu0 %v5791
  %v6085 = vpop.f32.mrb[0].mxu0
  %v6086 = vadd.f32 0.0, %v6085
  %v6087 = vpop.f32.mrb[0].mxu0
  %v6088 = vadd.f32 0.0, %v6087
  %v6089 = vpop.f32.mrb[0].mxu0
  %v6090 = vadd.f32 0.0, %v6089
  %v6091 = vpop.f32.mrb[0].mxu0
  %v6092 = vadd.f32 0.0, %v6091
  %6093 = vmatprep.mubr.bf16.mxu0 0
  %6094 = vmatmul.mubr.bf16.gmra.mrb[0].mxu0 %v5794
  %v6095 = vpop.f32.mrb[0].mxu0
  %v6096 = vadd.f32 0.0, %v6095
  %v6097 = vpop.f32.mrb[0].mxu0
  %v6098 = vadd.f32 0.0, %v6097
  %v6099 = vpop.f32.mrb[0].mxu0
  %v6100 = vadd.f32 0.0, %v6099
  %v6101 = vpop.f32.mrb[0].mxu0
  %v6102 = vadd.f32 0.0, %v6101
  %6103 = vmatprep.mubr.bf16.mxu0 0
  %6104 = vmatmul.mubr.bf16.gmra.mrb[0].mxu0 %v5797
  %v6105 = vpop.f32.mrb[0].mxu0
  %v6106 = vadd.f32 0.0, %v6105
  %v6107 = vpop.f32.mrb[0].mxu0
  %v6108 = vadd.f32 0.0, %v6107
  %v6109 = vpop.f32.mrb[0].mxu0
  %v6110 = vadd.f32 0.0, %v6109
  %v6111 = vpop.f32.mrb[0].mxu0
  %v6112 = vadd.f32 0.0, %v6111
  %6113 = vdwg.mxu0
  %6114 = vmatprep.subr.bf16.mxu0 %v5729
  %6115 = vmatpush1.bf16.msra.mxu0 %v5728
  %6116 = vmatprep.subr.bf16.mxu0 %v5741
  %6117 = vmatpush1.bf16.msra.mxu0 %v5740
  %6118 = vmatprep.subr.bf16.mxu0 %v5753
  %6119 = vmatpush1.bf16.msra.mxu0 %v5752
  %6120 = vmatprep.subr.bf16.mxu0 0
  %6121 = vmatpush1.bf16.msra.mxu0 0
  %6122 = vmatprep.subr.bf16.mxu0 0
  %6123 = vmatpush1.bf16.msra.mxu0 0
  %6124 = vmatprep.subr.bf16.mxu0 0
  %6125 = vmatpush1.bf16.msra.mxu0 0
  %6126 = vmatprep.subr.bf16.mxu0 0
  %6127 = vmatpush1.bf16.msra.mxu0 0
  %6128 = vmatprep.subr.bf16.mxu0 0
  %6129 = vmatpush1.bf16.msra.mxu0 0
  %6130 = vmatprep.subr.bf16.mxu0 0
  %6131 = vmatpush1.bf16.msra.mxu0 0
  %6132 = vmatprep.subr.bf16.mxu0 0
  %6133 = vmatpush1.bf16.msra.mxu0 0
  %6134 = vmatprep.subr.bf16.mxu0 0
  %6135 = vmatpush1.bf16.msra.mxu0 0
  %6136 = vmatprep.subr.bf16.mxu0 0
  %6137 = vmatpush1.bf16.msra.mxu0 0
  %6138 = vmatprep.subr.bf16.mxu0 0
  %6139 = vmatpush1.bf16.msra.mxu0 0
  %6140 = vmatprep.subr.bf16.mxu0 0
  %6141 = vmatpush1.bf16.msra.mxu0 0
  %6142 = vmatprep.subr.bf16.mxu0 0
  %6143 = vmatpush1.bf16.msra.mxu0 0
  %6144 = vmatprep.subr.bf16.mxu0 0
  %6145 = vmatpush1.bf16.msra.mxu0 0
  %6146 = vmatprep.mubr.bf16.mxu0 0
  %6147 = vmatmul.mubr.bf16.gmra.mrb[0].mxu0 %v5791
  %v6148 = vpop.f32.mrb[0].mxu0
  %v6149 = vadd.f32 0.0, %v6148
  %v6150 = vpop.f32.mrb[0].mxu0
  %v6151 = vadd.f32 0.0, %v6150
  %v6152 = vpop.f32.mrb[0].mxu0
  %v6153 = vadd.f32 0.0, %v6152
  %v6154 = vpop.f32.mrb[0].mxu0
  %v6155 = vadd.f32 0.0, %v6154
  %6156 = vmatprep.mubr.bf16.mxu0 0
  %6157 = vmatmul.mubr.bf16.gmra.mrb[0].mxu0 %v5794
  %v6158 = vpop.f32.mrb[0].mxu0
  %v6159 = vadd.f32 0.0, %v6158
  %v6160 = vpop.f32.mrb[0].mxu0
  %v6161 = vadd.f32 0.0, %v6160
  %v6162 = vpop.f32.mrb[0].mxu0
  %v6163 = vadd.f32 0.0, %v6162
  %v6164 = vpop.f32.mrb[0].mxu0
  %v6165 = vadd.f32 0.0, %v6164
  %6166 = vmatprep.mubr.bf16.mxu0 0
  %6167 = vmatmul.mubr.bf16.gmra.mrb[0].mxu0 %v5797
  %v6168 = vpop.f32.mrb[0].mxu0
  %v6169 = vadd.f32 0.0, %v6168
  %v6170 = vpop.f32.mrb[0].mxu0
  %v6171 = vadd.f32 0.0, %v6170
  %v6172 = vpop.f32.mrb[0].mxu0
  %v6173 = vadd.f32 0.0, %v6172
  %v6174 = vpop.f32.mrb[0].mxu0
  %v6175 = vadd.f32 0.0, %v6174
  %6176 = vdwg.mxu0
  %v6177 = vmul.f32 %v2824, %v5834
  %v6178 = vmul.f32 %v2826, %v5836
  %v6179 = vmul.f32 %v2887, %v5897
  %v6180 = vmul.f32 %v2889, %v5899
  %v6181 = vmul.f32 %v2950, %v5960
  %v6182 = vmul.f32 %v2952, %v5962
  %v6183 = vmul.f32 %v3013, %v6023
  %v6184 = vmul.f32 %v3015, %v6025
  %v6185 = vmul.f32 %v3076, %v6086
  %v6186 = vmul.f32 %v3078, %v6088
  %v6187 = vmul.f32 %v3139, %v6149
  %v6188 = vmul.f32 %v3141, %v6151
  %v6189 = vmul.f32 %v2828, %v5838
  %v6190 = vmul.f32 %v2830, %v5840
  %v6191 = vmul.f32 %v2891, %v5901
  %v6192 = vmul.f32 %v2893, %v5903
  %v6193 = vmul.f32 %v2954, %v5964
  %v6194 = vmul.f32 %v2956, %v5966
  %v6195 = vmul.f32 %v3017, %v6027
  %v6196 = vmul.f32 %v3019, %v6029
  %v6197 = vmul.f32 %v3080, %v6090
  %v6198 = vmul.f32 %v3082, %v6092
  %v6199 = vmul.f32 %v3143, %v6153
  %v6200 = vmul.f32 %v3145, %v6155
  %v6201 = vmul.f32 %v2834, %v5844
  %v6202 = vmul.f32 %v2836, %v5846
  %v6203 = vmul.f32 %v2897, %v5907
  %v6204 = vmul.f32 %v2899, %v5909
  %v6205 = vmul.f32 %v2960, %v5970
  %v6206 = vmul.f32 %v2962, %v5972
  %v6207 = vmul.f32 %v3023, %v6033
  %v6208 = vmul.f32 %v3025, %v6035
  %v6209 = vmul.f32 %v3086, %v6096
  %v6210 = vmul.f32 %v3088, %v6098
  %v6211 = vmul.f32 %v3149, %v6159
  %v6212 = vmul.f32 %v3151, %v6161
  %v6213 = vmul.f32 %v2838, %v5848
  %v6214 = vmul.f32 %v2840, %v5850
  %v6215 = vmul.f32 %v2901, %v5911
  %v6216 = vmul.f32 %v2903, %v5913
  %v6217 = vmul.f32 %v2964, %v5974
  %v6218 = vmul.f32 %v2966, %v5976
  %v6219 = vmul.f32 %v3027, %v6037
  %v6220 = vmul.f32 %v3029, %v6039
  %v6221 = vmul.f32 %v3090, %v6100
  %v6222 = vmul.f32 %v3092, %v6102
  %v6223 = vmul.f32 %v3153, %v6163
  %v6224 = vmul.f32 %v3155, %v6165
  %v6225 = vmul.f32 %v2844, %v5854
  %v6226 = vmul.f32 %v2846, %v5856
  %v6227 = vmul.f32 %v2907, %v5917
  %v6228 = vmul.f32 %v2909, %v5919
  %v6229 = vmul.f32 %v2970, %v5980
  %v6230 = vmul.f32 %v2972, %v5982
  %v6231 = vmul.f32 %v3033, %v6043
  %v6232 = vmul.f32 %v3035, %v6045
  %v6233 = vmul.f32 %v3096, %v6106
  %v6234 = vmul.f32 %v3098, %v6108
  %v6235 = vmul.f32 %v3159, %v6169
  %v6236 = vmul.f32 %v3161, %v6171
  %v6237 = vmul.f32 %v2848, %v5858
  %v6238 = vmul.f32 %v2850, %v5860
  %v6239 = vmul.f32 %v2911, %v5921
  %v6240 = vmul.f32 %v2913, %v5923
  %v6241 = vmul.f32 %v2974, %v5984
  %v6242 = vmul.f32 %v2976, %v5986
  %v6243 = vmul.f32 %v3037, %v6047
  %v6244 = vmul.f32 %v3039, %v6049
  %v6245 = vmul.f32 %v3100, %v6110
  %v6246 = vmul.f32 %v3102, %v6112
  %v6247 = vmul.f32 %v3163, %v6173
  %v6248 = vmul.f32 %v3165, %v6175
  %v6249 = vld [vmem:[%s79] sm:$0xf]
  %v6250 = vld [vmem:[%s79 + $0x4] sm:$0xf]
  %v6251 = vld [vmem:[%s79 + $0x8] sm:$0xf]
  %v6252 = vld [vmem:[%s79 + $0xc] sm:$0xf]
  %v6253 = vld [vmem:[%s79 + $0x10] sm:$0xf]
  %v6254 = vld [vmem:[%s79 + $0x14] sm:$0xf]
  %v6255 = vld [vmem:[%s79 + $0x18] sm:$0xf]
  %v6256 = vld [vmem:[%s79 + $0x1c] sm:$0xf]
  %v6257 = vld [vmem:[%s79 + $0x20] sm:$0xf]
  %v6258 = vld [vmem:[%s79 + $0x24] sm:$0xf]
  %v6259 = vld [vmem:[%s79 + $0x28] sm:$0xf]
  %v6260 = vld [vmem:[%s79 + $0x2c] sm:$0xf]
  %v6261 = vld [vmem:[%s79 + $0x30] sm:$0xf]
  %v6262 = vld [vmem:[%s79 + $0x34] sm:$0xf]
  %v6263 = vld [vmem:[%s79 + $0x38] sm:$0xf]
  %v6264 = vld [vmem:[%s79 + $0x3c] sm:$0xf]
  %v6265 = vld [vmem:[%s79 + $0x40] sm:$0xf]
  %v6266 = vld [vmem:[%s79 + $0x44] sm:$0xf]
  %v6267 = vld [vmem:[%s79 + $0x48] sm:$0xf]
  %v6268 = vld [vmem:[%s79 + $0x4c] sm:$0xf]
  %v6269 = vld [vmem:[%s79 + $0x50] sm:$0xf]
  %v6270 = vld [vmem:[%s79 + $0x54] sm:$0xf]
  %v6271 = vld [vmem:[%s79 + $0x58] sm:$0xf]
  %v6272 = vld [vmem:[%s79 + $0x5c] sm:$0xf]
  %v6273 = vld [vmem:[%s79 + $0x60] sm:$0xf]
  %v6274 = vld [vmem:[%s79 + $0x64] sm:$0xf]
  %v6275 = vld [vmem:[%s79 + $0x68] sm:$0xf]
  %v6276 = vld [vmem:[%s79 + $0x6c] sm:$0xf]
  %v6277 = vld [vmem:[%s79 + $0x70] sm:$0xf]
  %v6278 = vld [vmem:[%s79 + $0x74] sm:$0xf]
  %v6279 = vld [vmem:[%s79 + $0x78] sm:$0xf]
  %v6280 = vld [vmem:[%s79 + $0x7c] sm:$0xf]
  %v6281 = vld [vmem:[%s79 + $0x80] sm:$0xf]
  %v6282 = vld [vmem:[%s79 + $0x84] sm:$0xf]
  %v6283 = vld [vmem:[%s79 + $0x88] sm:$0xf]
  %v6284 = vld [vmem:[%s79 + $0x8c] sm:$0xf]
  %v6285 = vld [vmem:[%s79 + $0x90] sm:$0xf]
  %v6286 = vld [vmem:[%s79 + $0x94] sm:$0xf]
  %v6287 = vld [vmem:[%s79 + $0x98] sm:$0xf]
  %v6288 = vld [vmem:[%s79 + $0x9c] sm:$0xf]
  %v6289 = vld [vmem:[%s79 + $0xa0] sm:$0xf]
  %v6290 = vld [vmem:[%s79 + $0xa4] sm:$0xf]
  %v6291 = vld [vmem:[%s79 + $0xa8] sm:$0xf]
  %v6292 = vld [vmem:[%s79 + $0xac] sm:$0xf]
  %v6293 = vld [vmem:[%s79 + $0xb0] sm:$0xf]
  %v6294 = vld [vmem:[%s79 + $0xb4] sm:$0xf]
  %v6295 = vld [vmem:[%s79 + $0xb8] sm:$0xf]
  %v6296 = vld [vmem:[%s79 + $0xbc] sm:$0xf]
  %v6297 = vld [vmem:[%s79 + $0xc0] sm:$0xf]
  %v6298 = vld [vmem:[%s79 + $0xc4] sm:$0xf]
  %v6299 = vld [vmem:[%s79 + $0xc8] sm:$0xf]
  %v6300 = vld [vmem:[%s79 + $0xcc] sm:$0xf]
  %v6301 = vld [vmem:[%s79 + $0xd0] sm:$0xf]
  %v6302 = vld [vmem:[%s79 + $0xd4] sm:$0xf]
  %v6303 = vld [vmem:[%s79 + $0xd8] sm:$0xf]
  %v6304 = vld [vmem:[%s79 + $0xdc] sm:$0xf]
  %v6305 = vld [vmem:[%s79 + $0xe0] sm:$0xf]
  %v6306 = vld [vmem:[%s79 + $0xe4] sm:$0xf]
  %v6307 = vld [vmem:[%s79 + $0xe8] sm:$0xf]
  %v6308 = vld [vmem:[%s79 + $0xec] sm:$0xf]
  %v6309 = vld [vmem:[%s79 + $0xf0] sm:$0xf]
  %v6310 = vld [vmem:[%s79 + $0xf4] sm:$0xf]
  %v6311 = vld [vmem:[%s79 + $0xf8] sm:$0xf]
  %v6312 = vld [vmem:[%s79 + $0xfc] sm:$0xf]
  %v6313 = vld [vmem:[%s79 + $0x100] sm:$0xf]
  %v6314 = vld [vmem:[%s79 + $0x104] sm:$0xf]
  %v6315 = vld [vmem:[%s79 + $0x108] sm:$0xf]
  %v6316 = vld [vmem:[%s79 + $0x10c] sm:$0xf]
  %v6317 = vld [vmem:[%s79 + $0x110] sm:$0xf]
  %v6318 = vld [vmem:[%s79 + $0x114] sm:$0xf]
  %v6319 = vld [vmem:[%s79 + $0x118] sm:$0xf]
  %v6320 = vld [vmem:[%s79 + $0x11c] sm:$0xf]
  %v6321 = vld [vmem:[%s79 + $0x120] sm:$0xf]
  %v6322 = vld [vmem:[%s79 + $0x124] sm:$0xf]
  %v6323 = vld [vmem:[%s79 + $0x128] sm:$0xf]
  %v6324 = vld [vmem:[%s79 + $0x12c] sm:$0xf]
  %v6325 = vld [vmem:[%s79 + $0x130] sm:$0xf]
  %v6326 = vld [vmem:[%s79 + $0x134] sm:$0xf]
  %v6327 = vld [vmem:[%s79 + $0x138] sm:$0xf]
  %v6328 = vld [vmem:[%s79 + $0x13c] sm:$0xf]
  %v6329 = vld [vmem:[%s79 + $0x140] sm:$0xf]
  %v6330 = vld [vmem:[%s79 + $0x144] sm:$0xf]
  %v6331 = vld [vmem:[%s79 + $0x148] sm:$0xf]
  %v6332 = vld [vmem:[%s79 + $0x14c] sm:$0xf]
  %v6333 = vld [vmem:[%s79 + $0x150] sm:$0xf]
  %v6334 = vld [vmem:[%s79 + $0x154] sm:$0xf]
  %v6335 = vld [vmem:[%s79 + $0x158] sm:$0xf]
  %v6336 = vld [vmem:[%s79 + $0x15c] sm:$0xf]
  %v6337 = vld [vmem:[%s79 + $0x160] sm:$0xf]
  %v6338 = vld [vmem:[%s79 + $0x164] sm:$0xf]
  %v6339 = vld [vmem:[%s79 + $0x168] sm:$0xf]
  %v6340 = vld [vmem:[%s79 + $0x16c] sm:$0xf]
  %v6341 = vld [vmem:[%s79 + $0x170] sm:$0xf]
  %v6342 = vld [vmem:[%s79 + $0x174] sm:$0xf]
  %v6343 = vld [vmem:[%s79 + $0x178] sm:$0xf]
  %v6344 = vld [vmem:[%s79 + $0x17c] sm:$0xf]
  %v6345 = vld [vmem:[%s79 + $0x180] sm:$0xf]
  %v6346 = vld [vmem:[%s79 + $0x184] sm:$0xf]
  %v6347 = vld [vmem:[%s79 + $0x188] sm:$0xf]
  %v6348 = vld [vmem:[%s79 + $0x18c] sm:$0xf]
  %v6349 = vld [vmem:[%s79 + $0x190] sm:$0xf]
  %v6350 = vld [vmem:[%s79 + $0x194] sm:$0xf]
  %v6351 = vld [vmem:[%s79 + $0x198] sm:$0xf]
  %v6352 = vld [vmem:[%s79 + $0x19c] sm:$0xf]
  %v6353 = vld [vmem:[%s79 + $0x1a0] sm:$0xf]
  %v6354 = vld [vmem:[%s79 + $0x1a4] sm:$0xf]
  %v6355 = vld [vmem:[%s79 + $0x1a8] sm:$0xf]
  %v6356 = vld [vmem:[%s79 + $0x1ac] sm:$0xf]
  %v6357 = vld [vmem:[%s79 + $0x1b0] sm:$0xf]
  %v6358 = vld [vmem:[%s79 + $0x1b4] sm:$0xf]
  %v6359 = vld [vmem:[%s79 + $0x1b8] sm:$0xf]
  %v6360 = vld [vmem:[%s79 + $0x1bc] sm:$0xf]
  %v6361 = vld [vmem:[%s79 + $0x1c0] sm:$0xf]
  %v6362 = vld [vmem:[%s79 + $0x1c4] sm:$0xf]
  %v6363 = vld [vmem:[%s79 + $0x1c8] sm:$0xf]
  %v6364 = vld [vmem:[%s79 + $0x1cc] sm:$0xf]
  %v6365 = vld [vmem:[%s79 + $0x1d0] sm:$0xf]
  %v6366 = vld [vmem:[%s79 + $0x1d4] sm:$0xf]
  %v6367 = vld [vmem:[%s79 + $0x1d8] sm:$0xf]
  %v6368 = vld [vmem:[%s79 + $0x1dc] sm:$0xf]
  %v6369 = vld [vmem:[%s79 + $0x1e0] sm:$0xf]
  %v6370 = vld [vmem:[%s79 + $0x1e4] sm:$0xf]
  %v6371 = vld [vmem:[%s79 + $0x1e8] sm:$0xf]
  %v6372 = vld [vmem:[%s79 + $0x1ec] sm:$0xf]
  %v6373 = vld [vmem:[%s79 + $0x1f0] sm:$0xf]
  %v6374 = vld [vmem:[%s79 + $0x1f4] sm:$0xf]
  %v6375 = vld [vmem:[%s79 + $0x1f8] sm:$0xf]
  %v6376 = vld [vmem:[%s79 + $0x1fc] sm:$0xf]
  %v6377 = vld [vmem:[%s79 + $0x200] sm:$0xf]
  %v6378 = vld [vmem:[%s79 + $0x204] sm:$0xf]
  %v6379 = vld [vmem:[%s79 + $0x208] sm:$0xf]
  %v6380 = vld [vmem:[%s79 + $0x20c] sm:$0xf]
  %v6381 = vld [vmem:[%s79 + $0x210] sm:$0xf]
  %v6382 = vld [vmem:[%s79 + $0x214] sm:$0xf]
  %v6383 = vld [vmem:[%s79 + $0x218] sm:$0xf]
  %v6384 = vld [vmem:[%s79 + $0x21c] sm:$0xf]
  %v6385 = vld [vmem:[%s79 + $0x220] sm:$0xf]
  %v6386 = vld [vmem:[%s79 + $0x224] sm:$0xf]
  %v6387 = vld [vmem:[%s79 + $0x228] sm:$0xf]
  %v6388 = vld [vmem:[%s79 + $0x22c] sm:$0xf]
  %v6389 = vld [vmem:[%s79 + $0x230] sm:$0xf]
  %v6390 = vld [vmem:[%s79 + $0x234] sm:$0xf]
  %v6391 = vld [vmem:[%s79 + $0x238] sm:$0xf]
  %v6392 = vld [vmem:[%s79 + $0x23c] sm:$0xf]
  %v6393 = vld [vmem:[%s79 + $0x240] sm:$0xf]
  %v6394 = vld [vmem:[%s79 + $0x244] sm:$0xf]
  %v6395 = vld [vmem:[%s79 + $0x248] sm:$0xf]
  %v6396 = vld [vmem:[%s79 + $0x24c] sm:$0xf]
  %v6397 = vld [vmem:[%s79 + $0x250] sm:$0xf]
  %v6398 = vld [vmem:[%s79 + $0x254] sm:$0xf]
  %v6399 = vld [vmem:[%s79 + $0x258] sm:$0xf]
  %v6400 = vld [vmem:[%s79 + $0x25c] sm:$0xf]
  %v6401 = vld [vmem:[%s79 + $0x260] sm:$0xf]
  %v6402 = vld [vmem:[%s79 + $0x264] sm:$0xf]
  %v6403 = vld [vmem:[%s79 + $0x268] sm:$0xf]
  %v6404 = vld [vmem:[%s79 + $0x26c] sm:$0xf]
  %v6405 = vld [vmem:[%s79 + $0x270] sm:$0xf]
  %v6406 = vld [vmem:[%s79 + $0x274] sm:$0xf]
  %v6407 = vld [vmem:[%s79 + $0x278] sm:$0xf]
  %v6408 = vld [vmem:[%s79 + $0x27c] sm:$0xf]
  %v6409 = vld [vmem:[%s79 + $0x280] sm:$0xf]
  %v6410 = vld [vmem:[%s79 + $0x284] sm:$0xf]
  %v6411 = vld [vmem:[%s79 + $0x288] sm:$0xf]
  %v6412 = vld [vmem:[%s79 + $0x28c] sm:$0xf]
  %v6413 = vld [vmem:[%s79 + $0x290] sm:$0xf]
  %v6414 = vld [vmem:[%s79 + $0x294] sm:$0xf]
  %v6415 = vld [vmem:[%s79 + $0x298] sm:$0xf]
  %v6416 = vld [vmem:[%s79 + $0x29c] sm:$0xf]
  %v6417 = vld [vmem:[%s79 + $0x2a0] sm:$0xf]
  %v6418 = vld [vmem:[%s79 + $0x2a4] sm:$0xf]
  %v6419 = vld [vmem:[%s79 + $0x2a8] sm:$0xf]
  %v6420 = vld [vmem:[%s79 + $0x2ac] sm:$0xf]
  %v6421 = vld [vmem:[%s79 + $0x2b0] sm:$0xf]
  %v6422 = vld [vmem:[%s79 + $0x2b4] sm:$0xf]
  %v6423 = vld [vmem:[%s79 + $0x2b8] sm:$0xf]
  %v6424 = vld [vmem:[%s79 + $0x2bc] sm:$0xf]
  %v6425 = vld [vmem:[%s79 + $0x2c0] sm:$0xf]
  %v6426 = vld [vmem:[%s79 + $0x2c4] sm:$0xf]
  %v6427 = vld [vmem:[%s79 + $0x2c8] sm:$0xf]
  %v6428 = vld [vmem:[%s79 + $0x2cc] sm:$0xf]
  %v6429 = vld [vmem:[%s79 + $0x2d0] sm:$0xf]
  %v6430 = vld [vmem:[%s79 + $0x2d4] sm:$0xf]
  %v6431 = vld [vmem:[%s79 + $0x2d8] sm:$0xf]
  %v6432 = vld [vmem:[%s79 + $0x2dc] sm:$0xf]
  %v6433 = vld [vmem:[%s79 + $0x2e0] sm:$0xf]
  %v6434 = vld [vmem:[%s79 + $0x2e4] sm:$0xf]
  %v6435 = vld [vmem:[%s79 + $0x2e8] sm:$0xf]
  %v6436 = vld [vmem:[%s79 + $0x2ec] sm:$0xf]
  %v6437 = vld [vmem:[%s79 + $0x2f0] sm:$0xf]
  %v6438 = vld [vmem:[%s79 + $0x2f4] sm:$0xf]
  %v6439 = vld [vmem:[%s79 + $0x2f8] sm:$0xf]
  %v6440 = vld [vmem:[%s79 + $0x2fc] sm:$0xf]
  %v6441 = vpack.c.bf16 %v6189, %v6177
  %v6442 = vpack.c.bf16 %v6190, %v6178
  %v6443 = vpack.c.bf16 %v6191, %v6179
  %v6444 = vpack.c.bf16 %v6192, %v6180
  %v6445 = vpack.c.bf16 %v6193, %v6181
  %v6446 = vpack.c.bf16 %v6194, %v6182
  %v6447 = vpack.c.bf16 %v6195, %v6183
  %v6448 = vpack.c.bf16 %v6196, %v6184
  %v6449 = vpack.c.bf16 %v6197, %v6185
  %v6450 = vpack.c.bf16 %v6198, %v6186
  %v6451 = vpack.c.bf16 %v6199, %v6187
  %v6452 = vpack.c.bf16 %v6200, %v6188
  %v6453 = vpack.c.bf16 %v6213, %v6201
  %v6454 = vpack.c.bf16 %v6214, %v6202
  %v6455 = vpack.c.bf16 %v6215, %v6203
  %v6456 = vpack.c.bf16 %v6216, %v6204
  %v6457 = vpack.c.bf16 %v6217, %v6205
  %v6458 = vpack.c.bf16 %v6218, %v6206
  %v6459 = vpack.c.bf16 %v6219, %v6207
  %v6460 = vpack.c.bf16 %v6220, %v6208
  %v6461 = vpack.c.bf16 %v6221, %v6209
  %v6462 = vpack.c.bf16 %v6222, %v6210
  %v6463 = vpack.c.bf16 %v6223, %v6211
  %v6464 = vpack.c.bf16 %v6224, %v6212
  %v6465 = vpack.c.bf16 %v6237, %v6225
  %v6466 = vpack.c.bf16 %v6238, %v6226
  %v6467 = vpack.c.bf16 %v6239, %v6227
  %v6468 = vpack.c.bf16 %v6240, %v6228
  %v6469 = vpack.c.bf16 %v6241, %v6229
  %v6470 = vpack.c.bf16 %v6242, %v6230
  %v6471 = vpack.c.bf16 %v6243, %v6231
  %v6472 = vpack.c.bf16 %v6244, %v6232
  %v6473 = vpack.c.bf16 %v6245, %v6233
  %v6474 = vpack.c.bf16 %v6246, %v6234
  %v6475 = vpack.c.bf16 %v6247, %v6235
  %v6476 = vpack.c.bf16 %v6248, %v6236
  %v6669 = vunpack.c.l.b16 %v6249
  %v6670 = vunpack.c.l.b16 %v6250
  %v6671 = vunpack.c.l.b16 %v6251
  %v6672 = vunpack.c.l.b16 %v6252
  %v6673 = vunpack.c.l.b16 %v6253
  %v6674 = vunpack.c.l.b16 %v6254
  %v6675 = vunpack.c.l.b16 %v6255
  %v6676 = vunpack.c.l.b16 %v6256
  %v6677 = vunpack.c.l.b16 %v6257
  %v6678 = vunpack.c.l.b16 %v6258
  %v6679 = vunpack.c.l.b16 %v6259
  %v6680 = vunpack.c.l.b16 %v6260
  %v6681 = vunpack.c.l.b16 %v6261
  %v6682 = vunpack.c.l.b16 %v6262
  %v6683 = vunpack.c.l.b16 %v6263
  %v6684 = vunpack.c.l.b16 %v6264
  %v6685 = vunpack.c.l.b16 %v6265
  %v6686 = vunpack.c.l.b16 %v6266
  %v6687 = vunpack.c.l.b16 %v6267
  %v6688 = vunpack.c.l.b16 %v6268
  %v6689 = vunpack.c.l.b16 %v6269
  %v6690 = vunpack.c.l.b16 %v6270
  %v6691 = vunpack.c.l.b16 %v6271
  %v6692 = vunpack.c.l.b16 %v6272
  %v6693 = vunpack.c.l.b16 %v6273
  %v6694 = vunpack.c.l.b16 %v6274
  %v6695 = vunpack.c.l.b16 %v6275
  %v6696 = vunpack.c.l.b16 %v6276
  %v6697 = vunpack.c.l.b16 %v6277
  %v6698 = vunpack.c.l.b16 %v6278
  %v6699 = vunpack.c.l.b16 %v6279
  %v6700 = vunpack.c.l.b16 %v6280
  %v6701 = vunpack.c.l.b16 %v6281
  %v6702 = vunpack.c.l.b16 %v6282
  %v6703 = vunpack.c.l.b16 %v6283
  %v6704 = vunpack.c.l.b16 %v6284
  %v6705 = vunpack.c.l.b16 %v6285
  %v6706 = vunpack.c.l.b16 %v6286
  %v6707 = vunpack.c.l.b16 %v6287
  %v6708 = vunpack.c.l.b16 %v6288
  %v6709 = vunpack.c.l.b16 %v6289
  %v6710 = vunpack.c.l.b16 %v6290
  %v6711 = vunpack.c.l.b16 %v6291
  %v6712 = vunpack.c.l.b16 %v6292
  %v6713 = vunpack.c.l.b16 %v6293
  %v6714 = vunpack.c.l.b16 %v6294
  %v6715 = vunpack.c.l.b16 %v6295
  %v6716 = vunpack.c.l.b16 %v6296
  %v6717 = vunpack.c.l.b16 %v6297
  %v6718 = vunpack.c.l.b16 %v6298
  %v6719 = vunpack.c.l.b16 %v6299
  %v6720 = vunpack.c.l.b16 %v6300
  %v6721 = vunpack.c.l.b16 %v6301
  %v6722 = vunpack.c.l.b16 %v6302
  %v6723 = vunpack.c.l.b16 %v6303
  %v6724 = vunpack.c.l.b16 %v6304
  %v6725 = vunpack.c.l.b16 %v6305
  %v6726 = vunpack.c.l.b16 %v6306
  %v6727 = vunpack.c.l.b16 %v6307
  %v6728 = vunpack.c.l.b16 %v6308
  %v6729 = vunpack.c.l.b16 %v6309
  %v6730 = vunpack.c.l.b16 %v6310
  %v6731 = vunpack.c.l.b16 %v6311
  %v6732 = vunpack.c.l.b16 %v6312
  %v6733 = vunpack.c.l.b16 %v6313
  %v6734 = vunpack.c.l.b16 %v6314
  %v6735 = vunpack.c.l.b16 %v6315
  %v6736 = vunpack.c.l.b16 %v6316
  %v6737 = vunpack.c.l.b16 %v6317
  %v6738 = vunpack.c.l.b16 %v6318
  %v6739 = vunpack.c.l.b16 %v6319
  %v6740 = vunpack.c.l.b16 %v6320
  %v6741 = vunpack.c.l.b16 %v6321
  %v6742 = vunpack.c.l.b16 %v6322
  %v6743 = vunpack.c.l.b16 %v6323
  %v6744 = vunpack.c.l.b16 %v6324
  %v6745 = vunpack.c.l.b16 %v6325
  %v6746 = vunpack.c.l.b16 %v6326
  %v6747 = vunpack.c.l.b16 %v6327
  %v6748 = vunpack.c.l.b16 %v6328
  %v6749 = vunpack.c.l.b16 %v6329
  %v6750 = vunpack.c.l.b16 %v6330
  %v6751 = vunpack.c.l.b16 %v6331
  %v6752 = vunpack.c.l.b16 %v6332
  %v6753 = vunpack.c.l.b16 %v6333
  %v6754 = vunpack.c.l.b16 %v6334
  %v6755 = vunpack.c.l.b16 %v6335
  %v6756 = vunpack.c.l.b16 %v6336
  %v6757 = vunpack.c.l.b16 %v6337
  %v6758 = vunpack.c.l.b16 %v6338
  %v6759 = vunpack.c.l.b16 %v6339
  %v6760 = vunpack.c.l.b16 %v6340
  %v6761 = vunpack.c.l.b16 %v6341
  %v6762 = vunpack.c.l.b16 %v6342
  %v6763 = vunpack.c.l.b16 %v6343
  %v6764 = vunpack.c.l.b16 %v6344
  %v6765 = vunpack.c.l.b16 %v6345
  %v6766 = vunpack.c.l.b16 %v6346
  %v6767 = vunpack.c.l.b16 %v6347
  %v6768 = vunpack.c.l.b16 %v6348
  %v6769 = vunpack.c.l.b16 %v6349
  %v6770 = vunpack.c.l.b16 %v6350
  %v6771 = vunpack.c.l.b16 %v6351
  %v6772 = vunpack.c.l.b16 %v6352
  %v6773 = vunpack.c.l.b16 %v6353
  %v6774 = vunpack.c.l.b16 %v6354
  %v6775 = vunpack.c.l.b16 %v6355
  %v6776 = vunpack.c.l.b16 %v6356
  %v6777 = vunpack.c.l.b16 %v6357
  %v6778 = vunpack.c.l.b16 %v6358
  %v6779 = vunpack.c.l.b16 %v6359
  %v6780 = vunpack.c.l.b16 %v6360
  %v6781 = vunpack.c.l.b16 %v6361
  %v6782 = vunpack.c.l.b16 %v6362
  %v6783 = vunpack.c.l.b16 %v6363
  %v6784 = vunpack.c.l.b16 %v6364
  %v6785 = vunpack.c.l.b16 %v6365
  %v6786 = vunpack.c.l.b16 %v6366
  %v6787 = vunpack.c.l.b16 %v6367
  %v6788 = vunpack.c.l.b16 %v6368
  %v6789 = vunpack.c.l.b16 %v6369
  %v6790 = vunpack.c.l.b16 %v6370
  %v6791 = vunpack.c.l.b16 %v6371
  %v6792 = vunpack.c.l.b16 %v6372
  %v6793 = vunpack.c.l.b16 %v6373
  %v6794 = vunpack.c.l.b16 %v6374
  %v6795 = vunpack.c.l.b16 %v6375
  %v6796 = vunpack.c.l.b16 %v6376
  %v6797 = vunpack.c.l.b16 %v6377
  %v6798 = vunpack.c.l.b16 %v6378
  %v6799 = vunpack.c.l.b16 %v6379
  %v6800 = vunpack.c.l.b16 %v6380
  %v6801 = vunpack.c.l.b16 %v6381
  %v6802 = vunpack.c.l.b16 %v6382
  %v6803 = vunpack.c.l.b16 %v6383
  %v6804 = vunpack.c.l.b16 %v6384
  %v6805 = vunpack.c.l.b16 %v6385
  %v6806 = vunpack.c.l.b16 %v6386
  %v6807 = vunpack.c.l.b16 %v6387
  %v6808 = vunpack.c.l.b16 %v6388
  %v6809 = vunpack.c.l.b16 %v6389
  %v6810 = vunpack.c.l.b16 %v6390
  %v6811 = vunpack.c.l.b16 %v6391
  %v6812 = vunpack.c.l.b16 %v6392
  %v6813 = vunpack.c.l.b16 %v6393
  %v6814 = vunpack.c.l.b16 %v6394
  %v6815 = vunpack.c.l.b16 %v6395
  %v6816 = vunpack.c.l.b16 %v6396
  %v6817 = vunpack.c.l.b16 %v6397
  %v6818 = vunpack.c.l.b16 %v6398
  %v6819 = vunpack.c.l.b16 %v6399
  %v6820 = vunpack.c.l.b16 %v6400
  %v6821 = vunpack.c.l.b16 %v6401
  %v6822 = vunpack.c.l.b16 %v6402
  %v6823 = vunpack.c.l.b16 %v6403
  %v6824 = vunpack.c.l.b16 %v6404
  %v6825 = vunpack.c.l.b16 %v6405
  %v6826 = vunpack.c.l.b16 %v6406
  %v6827 = vunpack.c.l.b16 %v6407
  %v6828 = vunpack.c.l.b16 %v6408
  %v6829 = vunpack.c.l.b16 %v6409
  %v6830 = vunpack.c.l.b16 %v6410
  %v6831 = vunpack.c.l.b16 %v6411
  %v6832 = vunpack.c.l.b16 %v6412
  %v6833 = vunpack.c.l.b16 %v6413
  %v6834 = vunpack.c.l.b16 %v6414
  %v6835 = vunpack.c.l.b16 %v6415
  %v6836 = vunpack.c.l.b16 %v6416
  %v6837 = vunpack.c.l.b16 %v6417
  %v6838 = vunpack.c.l.b16 %v6418
  %v6839 = vunpack.c.l.b16 %v6419
  %v6840 = vunpack.c.l.b16 %v6420
  %v6841 = vunpack.c.l.b16 %v6421
  %v6842 = vunpack.c.l.b16 %v6422
  %v6843 = vunpack.c.l.b16 %v6423
  %v6844 = vunpack.c.l.b16 %v6424
  %v6845 = vunpack.c.l.b16 %v6425
  %v6846 = vunpack.c.l.b16 %v6426
  %v6847 = vunpack.c.l.b16 %v6427
  %v6848 = vunpack.c.l.b16 %v6428
  %v6849 = vunpack.c.l.b16 %v6429
  %v6850 = vunpack.c.l.b16 %v6430
  %v6851 = vunpack.c.l.b16 %v6431
  %v6852 = vunpack.c.l.b16 %v6432
  %v6853 = vunpack.c.l.b16 %v6433
  %v6854 = vunpack.c.l.b16 %v6434
  %v6855 = vunpack.c.l.b16 %v6435
  %v6856 = vunpack.c.l.b16 %v6436
  %v6857 = vunpack.c.l.b16 %v6437
  %v6858 = vunpack.c.l.b16 %v6438
  %v6859 = vunpack.c.l.b16 %v6439
  %v6860 = vunpack.c.l.b16 %v6440
  %v6861 = vpack.c.b16 %v6670, %v6669
  %v6862 = vpack.c.b16 %v6672, %v6671
  %v6863 = vpack.c.b16 %v6674, %v6673
  %v6864 = vpack.c.b16 %v6676, %v6675
  %v6865 = vpack.c.b16 %v6678, %v6677
  %v6866 = vpack.c.b16 %v6680, %v6679
  %v6867 = vpack.c.b16 %v6682, %v6681
  %v6868 = vpack.c.b16 %v6684, %v6683
  %v6869 = vpack.c.b16 %v6686, %v6685
  %v6870 = vpack.c.b16 %v6688, %v6687
  %v6871 = vpack.c.b16 %v6690, %v6689
  %v6872 = vpack.c.b16 %v6692, %v6691
  %v6873 = vpack.c.b16 %v6694, %v6693
  %v6874 = vpack.c.b16 %v6696, %v6695
  %v6875 = vpack.c.b16 %v6698, %v6697
  %v6876 = vpack.c.b16 %v6700, %v6699
  %v6877 = vpack.c.b16 %v6702, %v6701
  %v6878 = vpack.c.b16 %v6704, %v6703
  %v6879 = vpack.c.b16 %v6706, %v6705
  %v6880 = vpack.c.b16 %v6708, %v6707
  %v6881 = vpack.c.b16 %v6710, %v6709
  %v6882 = vpack.c.b16 %v6712, %v6711
  %v6883 = vpack.c.b16 %v6714, %v6713
  %v6884 = vpack.c.b16 %v6716, %v6715
  %v6885 = vpack.c.b16 %v6718, %v6717
  %v6886 = vpack.c.b16 %v6720, %v6719
  %v6887 = vpack.c.b16 %v6722, %v6721
  %v6888 = vpack.c.b16 %v6724, %v6723
  %v6889 = vpack.c.b16 %v6726, %v6725
  %v6890 = vpack.c.b16 %v6728, %v6727
  %v6891 = vpack.c.b16 %v6730, %v6729
  %v6892 = vpack.c.b16 %v6732, %v6731
  %v6893 = vpack.c.b16 %v6734, %v6733
  %v6894 = vpack.c.b16 %v6736, %v6735
  %v6895 = vpack.c.b16 %v6738, %v6737
  %v6896 = vpack.c.b16 %v6740, %v6739
  %v6897 = vpack.c.b16 %v6742, %v6741
  %v6898 = vpack.c.b16 %v6744, %v6743
  %v6899 = vpack.c.b16 %v6746, %v6745
  %v6900 = vpack.c.b16 %v6748, %v6747
  %v6901 = vpack.c.b16 %v6750, %v6749
  %v6902 = vpack.c.b16 %v6752, %v6751
  %v6903 = vpack.c.b16 %v6754, %v6753
  %v6904 = vpack.c.b16 %v6756, %v6755
  %v6905 = vpack.c.b16 %v6758, %v6757
  %v6906 = vpack.c.b16 %v6760, %v6759
  %v6907 = vpack.c.b16 %v6762, %v6761
  %v6908 = vpack.c.b16 %v6764, %v6763
  %v6909 = vpack.c.b16 %v6766, %v6765
  %v6910 = vpack.c.b16 %v6768, %v6767
  %v6911 = vpack.c.b16 %v6770, %v6769
  %v6912 = vpack.c.b16 %v6772, %v6771
  %v6913 = vpack.c.b16 %v6774, %v6773
  %v6914 = vpack.c.b16 %v6776, %v6775
  %v6915 = vpack.c.b16 %v6778, %v6777
  %v6916 = vpack.c.b16 %v6780, %v6779
  %v6917 = vpack.c.b16 %v6782, %v6781
  %v6918 = vpack.c.b16 %v6784, %v6783
  %v6919 = vpack.c.b16 %v6786, %v6785
  %v6920 = vpack.c.b16 %v6788, %v6787
  %v6921 = vpack.c.b16 %v6790, %v6789
  %v6922 = vpack.c.b16 %v6792, %v6791
  %v6923 = vpack.c.b16 %v6794, %v6793
  %v6924 = vpack.c.b16 %v6796, %v6795
  %v6925 = vpack.c.b16 %v6798, %v6797
  %v6926 = vpack.c.b16 %v6800, %v6799
  %v6927 = vpack.c.b16 %v6802, %v6801
  %v6928 = vpack.c.b16 %v6804, %v6803
  %v6929 = vpack.c.b16 %v6806, %v6805
  %v6930 = vpack.c.b16 %v6808, %v6807
  %v6931 = vpack.c.b16 %v6810, %v6809
  %v6932 = vpack.c.b16 %v6812, %v6811
  %v6933 = vpack.c.b16 %v6814, %v6813
  %v6934 = vpack.c.b16 %v6816, %v6815
  %v6935 = vpack.c.b16 %v6818, %v6817
  %v6936 = vpack.c.b16 %v6820, %v6819
  %v6937 = vpack.c.b16 %v6822, %v6821
  %v6938 = vpack.c.b16 %v6824, %v6823
  %v6939 = vpack.c.b16 %v6826, %v6825
  %v6940 = vpack.c.b16 %v6828, %v6827
  %v6941 = vpack.c.b16 %v6830, %v6829
  %v6942 = vpack.c.b16 %v6832, %v6831
  %v6943 = vpack.c.b16 %v6834, %v6833
  %v6944 = vpack.c.b16 %v6836, %v6835
  %v6945 = vpack.c.b16 %v6838, %v6837
  %v6946 = vpack.c.b16 %v6840, %v6839
  %v6947 = vpack.c.b16 %v6842, %v6841
  %v6948 = vpack.c.b16 %v6844, %v6843
  %v6949 = vpack.c.b16 %v6846, %v6845
  %v6950 = vpack.c.b16 %v6848, %v6847
  %v6951 = vpack.c.b16 %v6850, %v6849
  %v6952 = vpack.c.b16 %v6852, %v6851
  %v6953 = vpack.c.b16 %v6854, %v6853
  %v6954 = vpack.c.b16 %v6856, %v6855
  %v6955 = vpack.c.b16 %v6858, %v6857
  %v6956 = vpack.c.b16 %v6860, %v6859
  %7053 = vmatprep.subr.bf16.mxu0 0
  %7054 = vmatpush1.bf16.msra.mxu0 %v6861
  %7055 = vmatprep.subr.bf16.mxu0 0
  %7056 = vmatpush1.bf16.msra.mxu0 %v6862
  %7057 = vmatprep.subr.bf16.mxu0 0
  %7058 = vmatpush1.bf16.msra.mxu0 %v6863
  %7059 = vmatprep.subr.bf16.mxu0 0
  %7060 = vmatpush1.bf16.msra.mxu0 %v6864
  %7061 = vmatprep.subr.bf16.mxu0 0
  %7062 = vmatpush1.bf16.msra.mxu0 %v6865
  %7063 = vmatprep.subr.bf16.mxu0 0
  %7064 = vmatpush1.bf16.msra.mxu0 %v6866
  %7065 = vmatprep.subr.bf16.mxu0 0
  %7066 = vmatpush1.bf16.msra.mxu0 %v6867
  %7067 = vmatprep.subr.bf16.mxu0 0
  %7068 = vmatpush1.bf16.msra.mxu0 %v6868
  %7069 = vmatprep.subr.bf16.mxu0 0
  %7070 = vmatpush1.bf16.msra.mxu0 %v6869
  %7071 = vmatprep.subr.bf16.mxu0 0
  %7072 = vmatpush1.bf16.msra.mxu0 %v6870
  %7073 = vmatprep.subr.bf16.mxu0 0
  %7074 = vmatpush1.bf16.msra.mxu0 %v6871
  %7075 = vmatprep.subr.bf16.mxu0 0
  %7076 = vmatpush1.bf16.msra.mxu0 %v6872
  %7077 = vmatprep.subr.bf16.mxu0 0
  %7078 = vmatpush1.bf16.msra.mxu0 %v6873
  %7079 = vmatprep.subr.bf16.mxu0 0
  %7080 = vmatpush1.bf16.msra.mxu0 %v6874
  %7081 = vmatprep.subr.bf16.mxu0 0
  %7082 = vmatpush1.bf16.msra.mxu0 %v6875
  %7083 = vmatprep.subr.bf16.mxu0 0
  %7084 = vmatpush1.bf16.msra.mxu0 %v6876
  %7085 = vmatprep.mubr.bf16.mxu0 %v6442
  %7086 = vmatmul.mubr.bf16.gmra.mrb[0].mxu0 %v6441
  %v7087 = vpop.f32.mrb[0].mxu0
  %v7088 = vadd.f32 0.0, %v7087
  %v7089 = vpop.f32.mrb[0].mxu0
  %v7090 = vpop.f32.mrb[0].mxu0
  %v7091 = vadd.f32 0.0, %v7090
  %v7092 = vpop.f32.mrb[0].mxu0
  %7093 = vmatprep.mubr.bf16.mxu0 %v6454
  %7094 = vmatmul.mubr.bf16.gmra.mrb[0].mxu0 %v6453
  %v7095 = vpop.f32.mrb[0].mxu0
  %v7096 = vadd.f32 0.0, %v7095
  %v7097 = vpop.f32.mrb[0].mxu0
  %v7098 = vpop.f32.mrb[0].mxu0
  %v7099 = vadd.f32 0.0, %v7098
  %v7100 = vpop.f32.mrb[0].mxu0
  %7101 = vmatprep.mubr.bf16.mxu0 %v6466
  %7102 = vmatmul.mubr.bf16.gmra.mrb[0].mxu0 %v6465
  %v7103 = vpop.f32.mrb[0].mxu0
  %v7104 = vadd.f32 0.0, %v7103
  %v7105 = vpop.f32.mrb[0].mxu0
  %v7106 = vpop.f32.mrb[0].mxu0
  %v7107 = vadd.f32 0.0, %v7106
  %v7108 = vpop.f32.mrb[0].mxu0
  %7109 = vdwg.mxu0
  %7110 = vmatprep.subr.bf16.mxu0 0
  %7111 = vmatpush1.bf16.msra.mxu0 %v6877
  %7112 = vmatprep.subr.bf16.mxu0 0
  %7113 = vmatpush1.bf16.msra.mxu0 %v6878
  %7114 = vmatprep.subr.bf16.mxu0 0
  %7115 = vmatpush1.bf16.msra.mxu0 %v6879
  %7116 = vmatprep.subr.bf16.mxu0 0
  %7117 = vmatpush1.bf16.msra.mxu0 %v6880
  %7118 = vmatprep.subr.bf16.mxu0 0
  %7119 = vmatpush1.bf16.msra.mxu0 %v6881
  %7120 = vmatprep.subr.bf16.mxu0 0
  %7121 = vmatpush1.bf16.msra.mxu0 %v6882
  %7122 = vmatprep.subr.bf16.mxu0 0
  %7123 = vmatpush1.bf16.msra.mxu0 %v6883
  %7124 = vmatprep.subr.bf16.mxu0 0
  %7125 = vmatpush1.bf16.msra.mxu0 %v6884
  %7126 = vmatprep.subr.bf16.mxu0 0
  %7127 = vmatpush1.bf16.msra.mxu0 %v6885
  %7128 = vmatprep.subr.bf16.mxu0 0
  %7129 = vmatpush1.bf16.msra.mxu0 %v6886
  %7130 = vmatprep.subr.bf16.mxu0 0
  %7131 = vmatpush1.bf16.msra.mxu0 %v6887
  %7132 = vmatprep.subr.bf16.mxu0 0
  %7133 = vmatpush1.bf16.msra.mxu0 %v6888
  %7134 = vmatprep.subr.bf16.mxu0 0
  %7135 = vmatpush1.bf16.msra.mxu0 %v6889
  %7136 = vmatprep.subr.bf16.mxu0 0
  %7137 = vmatpush1.bf16.msra.mxu0 %v6890
  %7138 = vmatprep.subr.bf16.mxu0 0
  %7139 = vmatpush1.bf16.msra.mxu0 %v6891
  %7140 = vmatprep.subr.bf16.mxu0 0
  %7141 = vmatpush1.bf16.msra.mxu0 %v6892
  %7142 = vmatprep.mubr.bf16.mxu0 %v6444
  %7143 = vmatmul.mubr.bf16.gmra.mrb[0].mxu0 %v6443
  %v7144 = vpop.f32.mrb[0].mxu0
  %v7145 = vadd.f32 %v7088, %v7144
  %v7146 = vpop.f32.mrb[0].mxu0
  %v7147 = vpop.f32.mrb[0].mxu0
  %v7148 = vadd.f32 %v7091, %v7147
  %v7149 = vpop.f32.mrb[0].mxu0
  %7150 = vmatprep.mubr.bf16.mxu0 %v6456
  %7151 = vmatmul.mubr.bf16.gmra.mrb[0].mxu0 %v6455
  %v7152 = vpop.f32.mrb[0].mxu0
  %v7153 = vadd.f32 %v7096, %v7152
  %v7154 = vpop.f32.mrb[0].mxu0
  %v7155 = vpop.f32.mrb[0].mxu0
  %v7156 = vadd.f32 %v7099, %v7155
  %v7157 = vpop.f32.mrb[0].mxu0
  %7158 = vmatprep.mubr.bf16.mxu0 %v6468
  %7159 = vmatmul.mubr.bf16.gmra.mrb[0].mxu0 %v6467
  %v7160 = vpop.f32.mrb[0].mxu0
  %v7161 = vadd.f32 %v7104, %v7160
  %v7162 = vpop.f32.mrb[0].mxu0
  %v7163 = vpop.f32.mrb[0].mxu0
  %v7164 = vadd.f32 %v7107, %v7163
  %v7165 = vpop.f32.mrb[0].mxu0
  %7166 = vdwg.mxu0
  %7167 = vmatprep.subr.bf16.mxu0 0
  %7168 = vmatpush1.bf16.msra.mxu0 %v6893
  %7169 = vmatprep.subr.bf16.mxu0 0
  %7170 = vmatpush1.bf16.msra.mxu0 %v6894
  %7171 = vmatprep.subr.bf16.mxu0 0
  %7172 = vmatpush1.bf16.msra.mxu0 %v6895
  %7173 = vmatprep.subr.bf16.mxu0 0
  %7174 = vmatpush1.bf16.msra.mxu0 %v6896
  %7175 = vmatprep.subr.bf16.mxu0 0
  %7176 = vmatpush1.bf16.msra.mxu0 %v6897
  %7177 = vmatprep.subr.bf16.mxu0 0
  %7178 = vmatpush1.bf16.msra.mxu0 %v6898
  %7179 = vmatprep.subr.bf16.mxu0 0
  %7180 = vmatpush1.bf16.msra.mxu0 %v6899
  %7181 = vmatprep.subr.bf16.mxu0 0
  %7182 = vmatpush1.bf16.msra.mxu0 %v6900
  %7183 = vmatprep.subr.bf16.mxu0 0
  %7184 = vmatpush1.bf16.msra.mxu0 %v6901
  %7185 = vmatprep.subr.bf16.mxu0 0
  %7186 = vmatpush1.bf16.msra.mxu0 %v6902
  %7187 = vmatprep.subr.bf16.mxu0 0
  %7188 = vmatpush1.bf16.msra.mxu0 %v6903
  %7189 = vmatprep.subr.bf16.mxu0 0
  %7190 = vmatpush1.bf16.msra.mxu0 %v6904
  %7191 = vmatprep.subr.bf16.mxu0 0
  %7192 = vmatpush1.bf16.msra.mxu0 %v6905
  %7193 = vmatprep.subr.bf16.mxu0 0
  %7194 = vmatpush1.bf16.msra.mxu0 %v6906
  %7195 = vmatprep.subr.bf16.mxu0 0
  %7196 = vmatpush1.bf16.msra.mxu0 %v6907
  %7197 = vmatprep.subr.bf16.mxu0 0
  %7198 = vmatpush1.bf16.msra.mxu0 %v6908
  %7199 = vmatprep.mubr.bf16.mxu0 %v6446
  %7200 = vmatmul.mubr.bf16.gmra.mrb[0].mxu0 %v6445
  %v7201 = vpop.f32.mrb[0].mxu0
  %v7202 = vadd.f32 %v7145, %v7201
  %v7203 = vpop.f32.mrb[0].mxu0
  %v7204 = vpop.f32.mrb[0].mxu0
  %v7205 = vadd.f32 %v7148, %v7204
  %v7206 = vpop.f32.mrb[0].mxu0
  %7207 = vmatprep.mubr.bf16.mxu0 %v6458
  %7208 = vmatmul.mubr.bf16.gmra.mrb[0].mxu0 %v6457
  %v7209 = vpop.f32.mrb[0].mxu0
  %v7210 = vadd.f32 %v7153, %v7209
  %v7211 = vpop.f32.mrb[0].mxu0
  %v7212 = vpop.f32.mrb[0].mxu0
  %v7213 = vadd.f32 %v7156, %v7212
  %v7214 = vpop.f32.mrb[0].mxu0
  %7215 = vmatprep.mubr.bf16.mxu0 %v6470
  %7216 = vmatmul.mubr.bf16.gmra.mrb[0].mxu0 %v6469
  %v7217 = vpop.f32.mrb[0].mxu0
  %v7218 = vadd.f32 %v7161, %v7217
  %v7219 = vpop.f32.mrb[0].mxu0
  %v7220 = vpop.f32.mrb[0].mxu0
  %v7221 = vadd.f32 %v7164, %v7220
  %v7222 = vpop.f32.mrb[0].mxu0
  %7223 = vdwg.mxu0
  %7224 = vmatprep.subr.bf16.mxu0 0
  %7225 = vmatpush1.bf16.msra.mxu0 %v6909
  %7226 = vmatprep.subr.bf16.mxu0 0
  %7227 = vmatpush1.bf16.msra.mxu0 %v6910
  %7228 = vmatprep.subr.bf16.mxu0 0
  %7229 = vmatpush1.bf16.msra.mxu0 %v6911
  %7230 = vmatprep.subr.bf16.mxu0 0
  %7231 = vmatpush1.bf16.msra.mxu0 %v6912
  %7232 = vmatprep.subr.bf16.mxu0 0
  %7233 = vmatpush1.bf16.msra.mxu0 %v6913
  %7234 = vmatprep.subr.bf16.mxu0 0
  %7235 = vmatpush1.bf16.msra.mxu0 %v6914
  %7236 = vmatprep.subr.bf16.mxu0 0
  %7237 = vmatpush1.bf16.msra.mxu0 %v6915
  %7238 = vmatprep.subr.bf16.mxu0 0
  %7239 = vmatpush1.bf16.msra.mxu0 %v6916
  %7240 = vmatprep.subr.bf16.mxu0 0
  %7241 = vmatpush1.bf16.msra.mxu0 %v6917
  %7242 = vmatprep.subr.bf16.mxu0 0
  %7243 = vmatpush1.bf16.msra.mxu0 %v6918
  %7244 = vmatprep.subr.bf16.mxu0 0
  %7245 = vmatpush1.bf16.msra.mxu0 %v6919
  %7246 = vmatprep.subr.bf16.mxu0 0
  %7247 = vmatpush1.bf16.msra.mxu0 %v6920
  %7248 = vmatprep.subr.bf16.mxu0 0
  %7249 = vmatpush1.bf16.msra.mxu0 %v6921
  %7250 = vmatprep.subr.bf16.mxu0 0
  %7251 = vmatpush1.bf16.msra.mxu0 %v6922
  %7252 = vmatprep.subr.bf16.mxu0 0
  %7253 = vmatpush1.bf16.msra.mxu0 %v6923
  %7254 = vmatprep.subr.bf16.mxu0 0
  %7255 = vmatpush1.bf16.msra.mxu0 %v6924
  %7256 = vmatprep.mubr.bf16.mxu0 %v6448
  %7257 = vmatmul.mubr.bf16.gmra.mrb[0].mxu0 %v6447
  %v7258 = vpop.f32.mrb[0].mxu0
  %v7259 = vadd.f32 %v7202, %v7258
  %v7260 = vpop.f32.mrb[0].mxu0
  %v7261 = vpop.f32.mrb[0].mxu0
  %v7262 = vadd.f32 %v7205, %v7261
  %v7263 = vpop.f32.mrb[0].mxu0
  %7264 = vmatprep.mubr.bf16.mxu0 %v6460
  %7265 = vmatmul.mubr.bf16.gmra.mrb[0].mxu0 %v6459
  %v7266 = vpop.f32.mrb[0].mxu0
  %v7267 = vadd.f32 %v7210, %v7266
  %v7268 = vpop.f32.mrb[0].mxu0
  %v7269 = vpop.f32.mrb[0].mxu0
  %v7270 = vadd.f32 %v7213, %v7269
  %v7271 = vpop.f32.mrb[0].mxu0
  %7272 = vmatprep.mubr.bf16.mxu0 %v6472
  %7273 = vmatmul.mubr.bf16.gmra.mrb[0].mxu0 %v6471
  %v7274 = vpop.f32.mrb[0].mxu0
  %v7275 = vadd.f32 %v7218, %v7274
  %v7276 = vpop.f32.mrb[0].mxu0
  %v7277 = vpop.f32.mrb[0].mxu0
  %v7278 = vadd.f32 %v7221, %v7277
  %v7279 = vpop.f32.mrb[0].mxu0
  %7280 = vdwg.mxu0
  %7281 = vmatprep.subr.bf16.mxu0 0
  %7282 = vmatpush1.bf16.msra.mxu0 %v6925
  %7283 = vmatprep.subr.bf16.mxu0 0
  %7284 = vmatpush1.bf16.msra.mxu0 %v6926
  %7285 = vmatprep.subr.bf16.mxu0 0
  %7286 = vmatpush1.bf16.msra.mxu0 %v6927
  %7287 = vmatprep.subr.bf16.mxu0 0
  %7288 = vmatpush1.bf16.msra.mxu0 %v6928
  %7289 = vmatprep.subr.bf16.mxu0 0
  %7290 = vmatpush1.bf16.msra.mxu0 %v6929
  %7291 = vmatprep.subr.bf16.mxu0 0
  %7292 = vmatpush1.bf16.msra.mxu0 %v6930
  %7293 = vmatprep.subr.bf16.mxu0 0
  %7294 = vmatpush1.bf16.msra.mxu0 %v6931
  %7295 = vmatprep.subr.bf16.mxu0 0
  %7296 = vmatpush1.bf16.msra.mxu0 %v6932
  %7297 = vmatprep.subr.bf16.mxu0 0
  %7298 = vmatpush1.bf16.msra.mxu0 %v6933
  %7299 = vmatprep.subr.bf16.mxu0 0
  %7300 = vmatpush1.bf16.msra.mxu0 %v6934
  %7301 = vmatprep.subr.bf16.mxu0 0
  %7302 = vmatpush1.bf16.msra.mxu0 %v6935
  %7303 = vmatprep.subr.bf16.mxu0 0
  %7304 = vmatpush1.bf16.msra.mxu0 %v6936
  %7305 = vmatprep.subr.bf16.mxu0 0
  %7306 = vmatpush1.bf16.msra.mxu0 %v6937
  %7307 = vmatprep.subr.bf16.mxu0 0
  %7308 = vmatpush1.bf16.msra.mxu0 %v6938
  %7309 = vmatprep.subr.bf16.mxu0 0
  %7310 = vmatpush1.bf16.msra.mxu0 %v6939
  %7311 = vmatprep.subr.bf16.mxu0 0
  %7312 = vmatpush1.bf16.msra.mxu0 %v6940
  %7313 = vmatprep.mubr.bf16.mxu0 %v6450
  %7314 = vmatmul.mubr.bf16.gmra.mrb[0].mxu0 %v6449
  %v7315 = vpop.f32.mrb[0].mxu0
  %v7316 = vadd.f32 %v7259, %v7315
  %v7317 = vpop.f32.mrb[0].mxu0
  %v7318 = vpop.f32.mrb[0].mxu0
  %v7319 = vadd.f32 %v7262, %v7318
  %v7320 = vpop.f32.mrb[0].mxu0
  %7321 = vmatprep.mubr.bf16.mxu0 %v6462
  %7322 = vmatmul.mubr.bf16.gmra.mrb[0].mxu0 %v6461
  %v7323 = vpop.f32.mrb[0].mxu0
  %v7324 = vadd.f32 %v7267, %v7323
  %v7325 = vpop.f32.mrb[0].mxu0
  %v7326 = vpop.f32.mrb[0].mxu0
  %v7327 = vadd.f32 %v7270, %v7326
  %v7328 = vpop.f32.mrb[0].mxu0
  %7329 = vmatprep.mubr.bf16.mxu0 %v6474
  %7330 = vmatmul.mubr.bf16.gmra.mrb[0].mxu0 %v6473
  %v7331 = vpop.f32.mrb[0].mxu0
  %v7332 = vadd.f32 %v7275, %v7331
  %v7333 = vpop.f32.mrb[0].mxu0
  %v7334 = vpop.f32.mrb[0].mxu0
  %v7335 = vadd.f32 %v7278, %v7334
  %v7336 = vpop.f32.mrb[0].mxu0
  %7337 = vdwg.mxu0
  %7338 = vmatprep.subr.bf16.mxu0 0
  %7339 = vmatpush1.bf16.msra.mxu0 %v6941
  %7340 = vmatprep.subr.bf16.mxu0 0
  %7341 = vmatpush1.bf16.msra.mxu0 %v6942
  %7342 = vmatprep.subr.bf16.mxu0 0
  %7343 = vmatpush1.bf16.msra.mxu0 %v6943
  %7344 = vmatprep.subr.bf16.mxu0 0
  %7345 = vmatpush1.bf16.msra.mxu0 %v6944
  %7346 = vmatprep.subr.bf16.mxu0 0
  %7347 = vmatpush1.bf16.msra.mxu0 %v6945
  %7348 = vmatprep.subr.bf16.mxu0 0
  %7349 = vmatpush1.bf16.msra.mxu0 %v6946
  %7350 = vmatprep.subr.bf16.mxu0 0
  %7351 = vmatpush1.bf16.msra.mxu0 %v6947
  %7352 = vmatprep.subr.bf16.mxu0 0
  %7353 = vmatpush1.bf16.msra.mxu0 %v6948
  %7354 = vmatprep.subr.bf16.mxu0 0
  %7355 = vmatpush1.bf16.msra.mxu0 %v6949
  %7356 = vmatprep.subr.bf16.mxu0 0
  %7357 = vmatpush1.bf16.msra.mxu0 %v6950
  %7358 = vmatprep.subr.bf16.mxu0 0
  %7359 = vmatpush1.bf16.msra.mxu0 %v6951
  %7360 = vmatprep.subr.bf16.mxu0 0
  %7361 = vmatpush1.bf16.msra.mxu0 %v6952
  %7362 = vmatprep.subr.bf16.mxu0 0
  %7363 = vmatpush1.bf16.msra.mxu0 %v6953
  %7364 = vmatprep.subr.bf16.mxu0 0
  %7365 = vmatpush1.bf16.msra.mxu0 %v6954
  %7366 = vmatprep.subr.bf16.mxu0 0
  %7367 = vmatpush1.bf16.msra.mxu0 %v6955
  %7368 = vmatprep.subr.bf16.mxu0 0
  %7369 = vmatpush1.bf16.msra.mxu0 %v6956
  %7370 = vmatprep.mubr.bf16.mxu0 %v6452
  %7371 = vmatmul.mubr.bf16.gmra.mrb[0].mxu0 %v6451
  %v7372 = vpop.f32.mrb[0].mxu0
  %v7373 = vadd.f32 %v7316, %v7372
  %v7374 = vpop.f32.mrb[0].mxu0
  %v7375 = vpop.f32.mrb[0].mxu0
  %v7376 = vadd.f32 %v7319, %v7375
  %v7377 = vpop.f32.mrb[0].mxu0
  %7378 = vmatprep.mubr.bf16.mxu0 %v6464
  %7379 = vmatmul.mubr.bf16.gmra.mrb[0].mxu0 %v6463
  %v7380 = vpop.f32.mrb[0].mxu0
  %v7381 = vadd.f32 %v7324, %v7380
  %v7382 = vpop.f32.mrb[0].mxu0
  %v7383 = vpop.f32.mrb[0].mxu0
  %v7384 = vadd.f32 %v7327, %v7383
  %v7385 = vpop.f32.mrb[0].mxu0
  %7386 = vmatprep.mubr.bf16.mxu0 %v6476
  %7387 = vmatmul.mubr.bf16.gmra.mrb[0].mxu0 %v6475
  %v7388 = vpop.f32.mrb[0].mxu0
  %v7389 = vadd.f32 %v7332, %v7388
  %v7390 = vpop.f32.mrb[0].mxu0
  %v7391 = vpop.f32.mrb[0].mxu0
  %v7392 = vadd.f32 %v7335, %v7391
  %v7393 = vpop.f32.mrb[0].mxu0
  %7394 = vdwg.mxu0
  %v7395 = vmul.f32 %v7373, 0.17677669
  %v7396 = vmul.f32 %v7376, 0.17677669
  %v7397 = vmul.f32 %v7381, 0.17677669
  %v7398 = vmul.f32 %v7384, 0.17677669
  %v7399 = vmul.f32 %v7389, 0.17677669
  %v7400 = vmul.f32 %v7392, 0.17677669
  %v7401 = vmul.f32 %v7373, 0.35355338
  %v7402 = vmul.f32 %v7376, 0.35355338
  %v7403 = vmul.f32 %v7381, 0.35355338
  %v7404 = vmul.f32 %v7384, 0.35355338
  %v7405 = vmul.f32 %v7389, 0.35355338
  %v7406 = vmul.f32 %v7392, 0.35355338
  %7413 = vrot.lane.b32.xlu0 %v7401, 96
  %v7414 = vpop.permute.xlu0 %7413
  %7415 = vrot.lane.b32.xlu0 %v7402, 96
  %v7416 = vpop.permute.xlu0 %7415
  %7417 = vrot.lane.b32.xlu0 %v7403, 96
  %v7418 = vpop.permute.xlu0 %7417
  %7419 = vrot.lane.b32.xlu0 %v7404, 96
  %v7420 = vpop.permute.xlu0 %7419
  %7421 = vrot.lane.b32.xlu0 %v7405, 96
  %v7422 = vpop.permute.xlu0 %7421
  %7423 = vrot.lane.b32.xlu0 %v7406, 96
  %v7424 = vpop.permute.xlu0 %7423
  %v7431 = vadd.f32 %v7395, %v7414
  %v7432 = vadd.f32 %v7396, %v7416
  %v7433 = vadd.f32 %v7397, %v7418
  %v7434 = vadd.f32 %v7398, %v7420
  %v7435 = vadd.f32 %v7399, %v7422
  %v7436 = vadd.f32 %v7400, %v7424
  %7437 = vrot.lane.b32.xlu0 %v7401, 64
  %v7438 = vpop.permute.xlu0 %7437
  %7439 = vrot.lane.b32.xlu0 %v7402, 64
  %v7440 = vpop.permute.xlu0 %7439
  %7441 = vrot.lane.b32.xlu0 %v7403, 64
  %v7442 = vpop.permute.xlu0 %7441
  %7443 = vrot.lane.b32.xlu0 %v7404, 64
  %v7444 = vpop.permute.xlu0 %7443
  %7445 = vrot.lane.b32.xlu0 %v7405, 64
  %v7446 = vpop.permute.xlu0 %7445
  %7447 = vrot.lane.b32.xlu0 %v7406, 64
  %v7448 = vpop.permute.xlu0 %7447
  %v7455 = vadd.f32 %v7431, %v7438
  %v7456 = vadd.f32 %v7432, %v7440
  %v7457 = vadd.f32 %v7433, %v7442
  %v7458 = vadd.f32 %v7434, %v7444
  %v7459 = vadd.f32 %v7435, %v7446
  %v7460 = vadd.f32 %v7436, %v7448
  %v7461 = vpack.c.bf16 %v7456, %v7455
  %v7462 = vpack.c.bf16 %v7458, %v7457
  %v7463 = vpack.c.bf16 %v7460, %v7459
  %7464 = vmatprep.subr.bf16.mxu0 0
  %7465 = vmatpush1.bf16.msra.mxu0 %v7461
  %7466 = vmatprep.subr.bf16.mxu0 0
  %7467 = vmatpush1.bf16.msra.mxu0 %v7462
  %7468 = vmatprep.subr.bf16.mxu0 0
  %7469 = vmatpush1.bf16.msra.mxu0 %v7463
  %7470 = vmatprep.subr.bf16.mxu0 0
  %7471 = vmatpush1.bf16.msra.mxu0 0
  %7472 = vmatprep.subr.bf16.mxu0 0
  %7473 = vmatpush1.bf16.msra.mxu0 0
  %7474 = vmatprep.subr.bf16.mxu0 0
  %7475 = vmatpush1.bf16.msra.mxu0 0
  %7476 = vmatprep.subr.bf16.mxu0 0
  %7477 = vmatpush1.bf16.msra.mxu0 0
  %7478 = vmatprep.subr.bf16.mxu0 0
  %7479 = vmatpush1.bf16.msra.mxu0 0
  %7480 = vmatprep.subr.bf16.mxu0 0
  %7481 = vmatpush1.bf16.msra.mxu0 0
  %7482 = vmatprep.subr.bf16.mxu0 0
  %7483 = vmatpush1.bf16.msra.mxu0 0
  %7484 = vmatprep.subr.bf16.mxu0 0
  %7485 = vmatpush1.bf16.msra.mxu0 0
  %7486 = vmatprep.subr.bf16.mxu0 0
  %7487 = vmatpush1.bf16.msra.mxu0 0
  %7488 = vmatprep.subr.bf16.mxu0 0
  %7489 = vmatpush1.bf16.msra.mxu0 0
  %7490 = vmatprep.subr.bf16.mxu0 0
  %7491 = vmatpush1.bf16.msra.mxu0 0
  %7492 = vmatprep.subr.bf16.mxu0 0
  %7493 = vmatpush1.bf16.msra.mxu0 0
  %7494 = vmatprep.subr.bf16.mxu0 0
  %7495 = vmatpush1.bf16.msra.mxu0 0
  %7496 = vmatprep.mubr.bf16.mxu0 0
  %7497 = vmatmul.mubr.bf16.gmra.mrb[0].mxu0 %v5193
  %v7498 = vpop.f32.mrb[0].mxu0
  %v7499 = vadd.f32 0.0, %v7498
  %v7500 = vpop.f32.mrb[0].mxu0
  %v7501 = vpop.f32.mrb[0].mxu0
  %v7502 = vadd.f32 0.0, %v7501
  %v7503 = vpop.f32.mrb[0].mxu0
  %7504 = vdwg.mxu0
  %v7505 = vmul.f32 %v7499, %v5239
  %v7506 = vmul.f32 %v7502, %v5244
  %v7507 = vld [vmem:[%s69] sm:$0xff]
  %v7508 = vld [vmem:[%s69 + $0x8] sm:$0xff]
  %v7509 = vld [vmem:[%s69 + $0x10] sm:$0xff]
  %v7510 = vld [vmem:[%s69 + $0x18] sm:$0xff]
  %v7511 = vpack.c.bf16 %v7506, %v7505
  %v7512 = vpack.c.bf16 %v7508, %v7507
  %v7513 = vpack.c.bf16 %v7510, %v7509
  %v7514 = vld [vmem:[%s71] sm:$0x1]
  %v7516 = vlaneseq
  %v7517 = vshrl.u32 %v7516, 7
  %v7518 = vsub.s32 0, %v7517
  %v7519 = vrot.slane %v7514, %v7518
  %v7522 = vsel %vm423, %v7511, 0
  %7524 = vmatprep.subr.bf16.mxu0 0
  %7525 = vmatpush1.bf16.msra.mxu0 %v7512
  %7526 = vmatprep.subr.bf16.mxu0 0
  %7527 = vmatpush1.bf16.msra.mxu0 %v7513
  %7528 = vmatprep.subr.bf16.mxu0 0
  %7529 = vmatpush1.bf16.msra.mxu0 0
  %7530 = vmatprep.subr.bf16.mxu0 0
  %7531 = vmatpush1.bf16.msra.mxu0 0
  %7532 = vmatprep.subr.bf16.mxu0 0
  %7533 = vmatpush1.bf16.msra.mxu0 0
  %7534 = vmatprep.subr.bf16.mxu0 0
  %7535 = vmatpush1.bf16.msra.mxu0 0
  %7536 = vmatprep.subr.bf16.mxu0 0
  %7537 = vmatpush1.bf16.msra.mxu0 0
  %7538 = vmatprep.subr.bf16.mxu0 0
  %7539 = vmatpush1.bf16.msra.mxu0 0
  %7540 = vmatprep.subr.bf16.mxu0 0
  %7541 = vmatpush1.bf16.msra.mxu0 0
  %7542 = vmatprep.subr.bf16.mxu0 0
  %7543 = vmatpush1.bf16.msra.mxu0 0
  %7544 = vmatprep.subr.bf16.mxu0 0
  %7545 = vmatpush1.bf16.msra.mxu0 0
  %7546 = vmatprep.subr.bf16.mxu0 0
  %7547 = vmatpush1.bf16.msra.mxu0 0
  %7548 = vmatprep.subr.bf16.mxu0 0
  %7549 = vmatpush1.bf16.msra.mxu0 0
  %7550 = vmatprep.subr.bf16.mxu0 0
  %7551 = vmatpush1.bf16.msra.mxu0 0
  %7552 = vmatprep.subr.bf16.mxu0 0
  %7553 = vmatpush1.bf16.msra.mxu0 0
  %7554 = vmatprep.subr.bf16.mxu0 0
  %7555 = vmatpush1.bf16.msra.mxu0 0
  %7556 = vmatprep.mubr.bf16.mxu0 0
  %7557 = vmatmul.mubr.bf16.gmra.mrb[0].mxu0 %v7522
  %v7558 = vpop.f32.mrb[0].mxu0
  %v7559 = vadd.f32 %v7519, %v7558
  %v7560 = vpop.f32.mrb[0].mxu0
  %v7561 = vpop.f32.mrb[0].mxu0
  %v7562 = vadd.f32 %v7519, %v7561
  %v7563 = vpop.f32.mrb[0].mxu0
  %7564 = vdwg.mxu0
  %v7565 = vxor.u32 %v7559, 2147483648
  %v7566 = vxor.u32 %v7562, 2147483648
  %v7567 = vmul.f32 %v7565, 1.442695
  %v7568 = vpow.pop %v7567
  %v7569 = vmul.f32 %v7566, 1.442695
  %v7570 = vpow.pop %v7569
  %v7571 = vadd.f32 %v7568, 1.0
  %v7572 = vadd.f32 %v7570, 1.0
  %v7573 = vrcp.pop %v7571
  %v7574 = vmul.f32 1.0, %v7573
  %v7575 = vrcp.pop %v7572
  %v7576 = vmul.f32 1.0, %v7575
  %v7577 = vmul.f32 %v7559, %v7574
  %v7578 = vmul.f32 %v7562, %v7576
  %v7579 = vadd.f32 %v2031, %v7577
  %v7580 = vadd.f32 %v2032, %v7578
  %s7581 = scalar_lea.vmem %s25, 32
  %v7582 = vld [vmem:[%s7581] sm:$0xff]
  %v7583 = vld [vmem:[%s7581 + $0x8] sm:$0xff]
  %v7584 = vld [vmem:[%s7581 + $0x10] sm:$0xff]
  %v7585 = vld [vmem:[%s7581 + $0x18] sm:$0xff]
  %v7586 = vpack.c.bf16 %v7580, %v7579
  %v7587 = vpack.c.bf16 %v7583, %v7582
  %v7588 = vpack.c.bf16 %v7585, %v7584
  %s7589 = scalar_lea.vmem %s27, 1
  %v7590 = vld [vmem:[%s7589] sm:$0x1]
  %v7592 = vlaneseq
  %v7593 = vshrl.u32 %v7592, 7
  %v7594 = vsub.s32 0, %v7593
  %v7595 = vrot.slane %v7590, %v7594
  %v7598 = vsel %vm423, %v7586, 0
  %7600 = vmatprep.subr.bf16.mxu0 0
  %7601 = vmatpush1.bf16.msra.mxu0 %v7587
  %7602 = vmatprep.subr.bf16.mxu0 0
  %7603 = vmatpush1.bf16.msra.mxu0 %v7588
  %7604 = vmatprep.subr.bf16.mxu0 0
  %7605 = vmatpush1.bf16.msra.mxu0 0
  %7606 = vmatprep.subr.bf16.mxu0 0
  %7607 = vmatpush1.bf16.msra.mxu0 0
  %7608 = vmatprep.subr.bf16.mxu0 0
  %7609 = vmatpush1.bf16.msra.mxu0 0
  %7610 = vmatprep.subr.bf16.mxu0 0
  %7611 = vmatpush1.bf16.msra.mxu0 0
  %7612 = vmatprep.subr.bf16.mxu0 0
  %7613 = vmatpush1.bf16.msra.mxu0 0
  %7614 = vmatprep.subr.bf16.mxu0 0
  %7615 = vmatpush1.bf16.msra.mxu0 0
  %7616 = vmatprep.subr.bf16.mxu0 0
  %7617 = vmatpush1.bf16.msra.mxu0 0
  %7618 = vmatprep.subr.bf16.mxu0 0
  %7619 = vmatpush1.bf16.msra.mxu0 0
  %7620 = vmatprep.subr.bf16.mxu0 0
  %7621 = vmatpush1.bf16.msra.mxu0 0
  %7622 = vmatprep.subr.bf16.mxu0 0
  %7623 = vmatpush1.bf16.msra.mxu0 0
  %7624 = vmatprep.subr.bf16.mxu0 0
  %7625 = vmatpush1.bf16.msra.mxu0 0
  %7626 = vmatprep.subr.bf16.mxu0 0
  %7627 = vmatpush1.bf16.msra.mxu0 0
  %7628 = vmatprep.subr.bf16.mxu0 0
  %7629 = vmatpush1.bf16.msra.mxu0 0
  %7630 = vmatprep.subr.bf16.mxu0 0
  %7631 = vmatpush1.bf16.msra.mxu0 0
  %7632 = vmatprep.mubr.bf16.mxu0 0
  %7633 = vmatmul.mubr.bf16.gmra.mrb[0].mxu0 %v7598
  %v7634 = vpop.f32.mrb[0].mxu0
  %v7635 = vadd.f32 %v7595, %v7634
  %v7636 = vpop.f32.mrb[0].mxu0
  %v7637 = vpop.f32.mrb[0].mxu0
  %v7638 = vadd.f32 %v7595, %v7637
  %v7639 = vpop.f32.mrb[0].mxu0
  %7640 = vdwg.mxu0
  %s7641 = scalar_lea.vmem %s29, 32
  %v7642 = vld [vmem:[%s7641] sm:$0xff]
  %v7643 = vld [vmem:[%s7641 + $0x8] sm:$0xff]
  %v7644 = vld [vmem:[%s7641 + $0x10] sm:$0xff]
  %v7645 = vld [vmem:[%s7641 + $0x18] sm:$0xff]
  %v7646 = vpack.c.bf16 %v7643, %v7642
  %v7647 = vpack.c.bf16 %v7645, %v7644
  %s7648 = scalar_lea.vmem %s31, 1
  %v7649 = vld [vmem:[%s7648] sm:$0x1]
  %v7651 = vlaneseq
  %v7652 = vshrl.u32 %v7651, 7
  %v7653 = vsub.s32 0, %v7652
  %v7654 = vrot.slane %v7649, %v7653
  %7656 = vmatprep.subr.bf16.mxu0 0
  %7657 = vmatpush1.bf16.msra.mxu0 %v7646
  %7658 = vmatprep.subr.bf16.mxu0 0
  %7659 = vmatpush1.bf16.msra.mxu0 %v7647
  %7660 = vmatprep.subr.bf16.mxu0 0
  %7661 = vmatpush1.bf16.msra.mxu0 0
  %7662 = vmatprep.subr.bf16.mxu0 0
  %7663 = vmatpush1.bf16.msra.mxu0 0
  %7664 = vmatprep.subr.bf16.mxu0 0
  %7665 = vmatpush1.bf16.msra.mxu0 0
  %7666 = vmatprep.subr.bf16.mxu0 0
  %7667 = vmatpush1.bf16.msra.mxu0 0
  %7668 = vmatprep.subr.bf16.mxu0 0
  %7669 = vmatpush1.bf16.msra.mxu0 0
  %7670 = vmatprep.subr.bf16.mxu0 0
  %7671 = vmatpush1.bf16.msra.mxu0 0
  %7672 = vmatprep.subr.bf16.mxu0 0
  %7673 = vmatpush1.bf16.msra.mxu0 0
  %7674 = vmatprep.subr.bf16.mxu0 0
  %7675 = vmatpush1.bf16.msra.mxu0 0
  %7676 = vmatprep.subr.bf16.mxu0 0
  %7677 = vmatpush1.bf16.msra.mxu0 0
  %7678 = vmatprep.subr.bf16.mxu0 0
  %7679 = vmatpush1.bf16.msra.mxu0 0
  %7680 = vmatprep.subr.bf16.mxu0 0
  %7681 = vmatpush1.bf16.msra.mxu0 0
  %7682 = vmatprep.subr.bf16.mxu0 0
  %7683 = vmatpush1.bf16.msra.mxu0 0
  %7684 = vmatprep.subr.bf16.mxu0 0
  %7685 = vmatpush1.bf16.msra.mxu0 0
  %7686 = vmatprep.subr.bf16.mxu0 0
  %7687 = vmatpush1.bf16.msra.mxu0 0
  %7688 = vmatprep.mubr.bf16.mxu0 0
  %7689 = vmatmul.mubr.bf16.gmra.mrb[0].mxu0 %v1071
  %v7690 = vpop.f32.mrb[0].mxu0
  %v7691 = vadd.f32 %v7654, %v7690
  %v7692 = vpop.f32.mrb[0].mxu0
  %v7693 = vpop.f32.mrb[0].mxu0
  %v7694 = vadd.f32 %v7654, %v7693
  %v7695 = vpop.f32.mrb[0].mxu0
  %7696 = vmatprep.mubr.bf16.mxu0 0
  %7697 = vmatmul.mubr.bf16.gmra.mrb[0].mxu0 %v1074
  %v7698 = vpop.f32.mrb[0].mxu0
  %v7699 = vadd.f32 %v7654, %v7698
  %v7700 = vpop.f32.mrb[0].mxu0
  %v7701 = vpop.f32.mrb[0].mxu0
  %v7702 = vadd.f32 %v7654, %v7701
  %v7703 = vpop.f32.mrb[0].mxu0
  %7704 = vmatprep.mubr.bf16.mxu0 0
  %7705 = vmatmul.mubr.bf16.gmra.mrb[0].mxu0 %v1077
  %v7706 = vpop.f32.mrb[0].mxu0
  %v7707 = vadd.f32 %v7654, %v7706
  %v7708 = vpop.f32.mrb[0].mxu0
  %v7709 = vpop.f32.mrb[0].mxu0
  %v7710 = vadd.f32 %v7654, %v7709
  %v7711 = vpop.f32.mrb[0].mxu0
  %7712 = vdwg.mxu0
  %v7713 = vpack.c.bf16 %v7638, %v7635
  %7714 = vmatprep.subr.bf16.mxu0 0
  %7715 = vmatpush1.bf16.msra.mxu0 %v7713
  %7716 = vmatprep.subr.bf16.mxu0 0
  %7717 = vmatpush1.bf16.msra.mxu0 0
  %7718 = vmatprep.subr.bf16.mxu0 0
  %7719 = vmatpush1.bf16.msra.mxu0 0
  %7720 = vmatprep.subr.bf16.mxu0 0
  %7721 = vmatpush1.bf16.msra.mxu0 0
  %7722 = vmatprep.subr.bf16.mxu0 0
  %7723 = vmatpush1.bf16.msra.mxu0 0
  %7724 = vmatprep.subr.bf16.mxu0 0
  %7725 = vmatpush1.bf16.msra.mxu0 0
  %7726 = vmatprep.subr.bf16.mxu0 0
  %7727 = vmatpush1.bf16.msra.mxu0 0
  %7728 = vmatprep.subr.bf16.mxu0 0
  %7729 = vmatpush1.bf16.msra.mxu0 0
  %7730 = vmatprep.subr.bf16.mxu0 0
  %7731 = vmatpush1.bf16.msra.mxu0 0
  %7732 = vmatprep.subr.bf16.mxu0 0
  %7733 = vmatpush1.bf16.msra.mxu0 0
  %7734 = vmatprep.subr.bf16.mxu0 0
  %7735 = vmatpush1.bf16.msra.mxu0 0
  %7736 = vmatprep.subr.bf16.mxu0 0
  %7737 = vmatpush1.bf16.msra.mxu0 0
  %7738 = vmatprep.subr.bf16.mxu0 0
  %7739 = vmatpush1.bf16.msra.mxu0 0
  %7740 = vmatprep.subr.bf16.mxu0 0
  %7741 = vmatpush1.bf16.msra.mxu0 0
  %7742 = vmatprep.subr.bf16.mxu0 0
  %7743 = vmatpush1.bf16.msra.mxu0 0
  %7744 = vmatprep.subr.bf16.mxu0 0
  %7745 = vmatpush1.bf16.msra.mxu0 0
  %7746 = vmatprep.mubr.bf16.mxu0 0
  %7747 = vmatmul.mubr.bf16.gmra.mrb[0].mxu0 %v1141
  %v7748 = vpop.f32.mrb[0].mxu0
  %v7749 = vadd.f32 0.0, %v7748
  %v7750 = vpop.f32.mrb[0].mxu0
  %v7751 = vpop.f32.mrb[0].mxu0
  %v7752 = vadd.f32 0.0, %v7751
  %v7753 = vpop.f32.mrb[0].mxu0
  %7754 = vmatprep.mubr.bf16.mxu0 0
  %7755 = vmatmul.mubr.bf16.gmra.mrb[0].mxu0 %v1144
  %v7756 = vpop.f32.mrb[0].mxu0
  %v7757 = vadd.f32 0.0, %v7756
  %v7758 = vpop.f32.mrb[0].mxu0
  %v7759 = vpop.f32.mrb[0].mxu0
  %v7760 = vadd.f32 0.0, %v7759
  %v7761 = vpop.f32.mrb[0].mxu0
  %7762 = vmatprep.mubr.bf16.mxu0 0
  %7763 = vmatmul.mubr.bf16.gmra.mrb[0].mxu0 %v1147
  %v7764 = vpop.f32.mrb[0].mxu0
  %v7765 = vadd.f32 0.0, %v7764
  %v7766 = vpop.f32.mrb[0].mxu0
  %v7767 = vpop.f32.mrb[0].mxu0
  %v7768 = vadd.f32 0.0, %v7767
  %v7769 = vpop.f32.mrb[0].mxu0
  %7770 = vdwg.mxu0
  %7771 = vmatprep.subr.bf16.mxu0 0
  %7772 = vmatpush1.bf16.msra.mxu0 %v7713
  %7773 = vmatprep.subr.bf16.mxu0 0
  %7774 = vmatpush1.bf16.msra.mxu0 0
  %7775 = vmatprep.subr.bf16.mxu0 0
  %7776 = vmatpush1.bf16.msra.mxu0 0
  %7777 = vmatprep.subr.bf16.mxu0 0
  %7778 = vmatpush1.bf16.msra.mxu0 0
  %7779 = vmatprep.subr.bf16.mxu0 0
  %7780 = vmatpush1.bf16.msra.mxu0 0
  %7781 = vmatprep.subr.bf16.mxu0 0
  %7782 = vmatpush1.bf16.msra.mxu0 0
  %7783 = vmatprep.subr.bf16.mxu0 0
  %7784 = vmatpush1.bf16.msra.mxu0 0
  %7785 = vmatprep.subr.bf16.mxu0 0
  %7786 = vmatpush1.bf16.msra.mxu0 0
  %7787 = vmatprep.subr.bf16.mxu0 0
  %7788 = vmatpush1.bf16.msra.mxu0 0
  %7789 = vmatprep.subr.bf16.mxu0 0
  %7790 = vmatpush1.bf16.msra.mxu0 0
  %7791 = vmatprep.subr.bf16.mxu0 0
  %7792 = vmatpush1.bf16.msra.mxu0 0
  %7793 = vmatprep.subr.bf16.mxu0 0
  %7794 = vmatpush1.bf16.msra.mxu0 0
  %7795 = vmatprep.subr.bf16.mxu0 0
  %7796 = vmatpush1.bf16.msra.mxu0 0
  %7797 = vmatprep.subr.bf16.mxu0 0
  %7798 = vmatpush1.bf16.msra.mxu0 0
  %7799 = vmatprep.subr.bf16.mxu0 0
  %7800 = vmatpush1.bf16.msra.mxu0 0
  %7801 = vmatprep.subr.bf16.mxu0 0
  %7802 = vmatpush1.bf16.msra.mxu0 0
  %7803 = vmatprep.mubr.bf16.mxu0 0
  %7804 = vmatmul.mubr.bf16.gmra.mrb[0].mxu0 %v1210
  %v7805 = vpop.f32.mrb[0].mxu0
  %v7806 = vadd.f32 0.0, %v7805
  %v7807 = vpop.f32.mrb[0].mxu0
  %v7808 = vpop.f32.mrb[0].mxu0
  %v7809 = vadd.f32 0.0, %v7808
  %v7810 = vpop.f32.mrb[0].mxu0
  %7811 = vmatprep.mubr.bf16.mxu0 0
  %7812 = vmatmul.mubr.bf16.gmra.mrb[0].mxu0 %v1213
  %v7813 = vpop.f32.mrb[0].mxu0
  %v7814 = vadd.f32 0.0, %v7813
  %v7815 = vpop.f32.mrb[0].mxu0
  %v7816 = vpop.f32.mrb[0].mxu0
  %v7817 = vadd.f32 0.0, %v7816
  %v7818 = vpop.f32.mrb[0].mxu0
  %7819 = vmatprep.mubr.bf16.mxu0 0
  %7820 = vmatmul.mubr.bf16.gmra.mrb[0].mxu0 %v1216
  %v7821 = vpop.f32.mrb[0].mxu0
  %v7822 = vadd.f32 0.0, %v7821
  %v7823 = vpop.f32.mrb[0].mxu0
  %v7824 = vpop.f32.mrb[0].mxu0
  %v7825 = vadd.f32 0.0, %v7824
  %v7826 = vpop.f32.mrb[0].mxu0
  %7827 = vdwg.mxu0
  %s7828 = scalar_lea.vmem %s33, 96
  %v7829 = vld [vmem:[%s7828] sm:$0xff]
  %v7830 = vld [vmem:[%s7828 + $0x8] sm:$0xff]
  %v7831 = vld [vmem:[%s7828 + $0x10] sm:$0xff]
  %v7832 = vld [vmem:[%s7828 + $0x18] sm:$0xff]
  %v7833 = vld [vmem:[%s7828 + $0x20] sm:$0xff]
  %v7834 = vld [vmem:[%s7828 + $0x28] sm:$0xff]
  %v7835 = vld [vmem:[%s7828 + $0x30] sm:$0xff]
  %v7836 = vld [vmem:[%s7828 + $0x38] sm:$0xff]
  %v7837 = vld [vmem:[%s7828 + $0x40] sm:$0xff]
  %v7838 = vld [vmem:[%s7828 + $0x48] sm:$0xff]
  %v7839 = vld [vmem:[%s7828 + $0x50] sm:$0xff]
  %v7840 = vld [vmem:[%s7828 + $0x58] sm:$0xff]
  %v7841 = vpack.c.bf16 %v7752, %v7749
  %v7842 = vpack.c.bf16 %v7760, %v7757
  %v7843 = vpack.c.bf16 %v7768, %v7765
  %v7844 = vpack.c.bf16 %v7830, %v7829
  %v7845 = vpack.c.bf16 %v7832, %v7831
  %v7846 = vpack.c.bf16 %v7834, %v7833
  %v7847 = vpack.c.bf16 %v7836, %v7835
  %v7848 = vpack.c.bf16 %v7838, %v7837
  %v7849 = vpack.c.bf16 %v7840, %v7839
  %s7850 = scalar_lea.vmem %s35, 96
  %v7851 = vld [vmem:[%s7850] sm:$0xff]
  %v7852 = vld [vmem:[%s7850 + $0x8] sm:$0xff]
  %v7853 = vld [vmem:[%s7850 + $0x10] sm:$0xff]
  %v7854 = vld [vmem:[%s7850 + $0x18] sm:$0xff]
  %v7855 = vld [vmem:[%s7850 + $0x20] sm:$0xff]
  %v7856 = vld [vmem:[%s7850 + $0x28] sm:$0xff]
  %v7857 = vld [vmem:[%s7850 + $0x30] sm:$0xff]
  %v7858 = vld [vmem:[%s7850 + $0x38] sm:$0xff]
  %v7859 = vld [vmem:[%s7850 + $0x40] sm:$0xff]
  %v7860 = vld [vmem:[%s7850 + $0x48] sm:$0xff]
  %v7861 = vld [vmem:[%s7850 + $0x50] sm:$0xff]
  %v7862 = vld [vmem:[%s7850 + $0x58] sm:$0xff]
  %v7863 = vpack.c.bf16 %v7809, %v7806
  %v7864 = vpack.c.bf16 %v7817, %v7814
  %v7865 = vpack.c.bf16 %v7825, %v7822
  %v7866 = vpack.c.bf16 %v7852, %v7851
  %v7867 = vpack.c.bf16 %v7854, %v7853
  %v7868 = vpack.c.bf16 %v7856, %v7855
  %v7869 = vpack.c.bf16 %v7858, %v7857
  %v7870 = vpack.c.bf16 %v7860, %v7859
  %v7871 = vpack.c.bf16 %v7862, %v7861
  %v7873 = vsel %vm1317, %v7863, 0
  %v7876 = vsel %vm1317, %v7864, 0
  %v7879 = vsel %vm1317, %v7865, 0
  %7881 = vmatprep.subr.bf16.mxu0 0
  %7882 = vmatpush1.bf16.msra.mxu0 %v7866
  %7883 = vmatprep.subr.bf16.mxu0 0
  %7884 = vmatpush1.bf16.msra.mxu0 %v7867
  %7885 = vmatprep.subr.bf16.mxu0 0
  %7886 = vmatpush1.bf16.msra.mxu0 %v7868
  %7887 = vmatprep.subr.bf16.mxu0 0
  %7888 = vmatpush1.bf16.msra.mxu0 %v7869
  %7889 = vmatprep.subr.bf16.mxu0 0
  %7890 = vmatpush1.bf16.msra.mxu0 %v7870
  %7891 = vmatprep.subr.bf16.mxu0 0
  %7892 = vmatpush1.bf16.msra.mxu0 %v7871
  %7893 = vmatprep.subr.bf16.mxu0 0
  %7894 = vmatpush1.bf16.msra.mxu0 0
  %7895 = vmatprep.subr.bf16.mxu0 0
  %7896 = vmatpush1.bf16.msra.mxu0 0
  %7897 = vmatprep.subr.bf16.mxu0 0
  %7898 = vmatpush1.bf16.msra.mxu0 0
  %7899 = vmatprep.subr.bf16.mxu0 0
  %7900 = vmatpush1.bf16.msra.mxu0 0
  %7901 = vmatprep.subr.bf16.mxu0 0
  %7902 = vmatpush1.bf16.msra.mxu0 0
  %7903 = vmatprep.subr.bf16.mxu0 0
  %7904 = vmatpush1.bf16.msra.mxu0 0
  %7905 = vmatprep.subr.bf16.mxu0 0
  %7906 = vmatpush1.bf16.msra.mxu0 0
  %7907 = vmatprep.subr.bf16.mxu0 0
  %7908 = vmatpush1.bf16.msra.mxu0 0
  %7909 = vmatprep.subr.bf16.mxu0 0
  %7910 = vmatpush1.bf16.msra.mxu0 0
  %7911 = vmatprep.subr.bf16.mxu0 0
  %7912 = vmatpush1.bf16.msra.mxu0 0
  %7913 = vmatprep.mubr.bf16.mxu0 0
  %7914 = vmatmul.mubr.bf16.gmra.mrb[0].mxu0 %v7873
  %v7915 = vpop.f32.mrb[0].mxu0
  %v7916 = vadd.f32 0.0, %v7915
  %v7917 = vpop.f32.mrb[0].mxu0
  %v7918 = vpop.f32.mrb[0].mxu0
  %v7919 = vadd.f32 0.0, %v7918
  %v7920 = vpop.f32.mrb[0].mxu0
  %7921 = vmatprep.mubr.bf16.mxu0 0
  %7922 = vmatmul.mubr.bf16.gmra.mrb[0].mxu0 %v7876
  %v7923 = vpop.f32.mrb[0].mxu0
  %v7924 = vadd.f32 0.0, %v7923
  %v7925 = vpop.f32.mrb[0].mxu0
  %v7926 = vpop.f32.mrb[0].mxu0
  %v7927 = vadd.f32 0.0, %v7926
  %v7928 = vpop.f32.mrb[0].mxu0
  %7929 = vmatprep.mubr.bf16.mxu0 0
  %7930 = vmatmul.mubr.bf16.gmra.mrb[0].mxu0 %v7879
  %v7931 = vpop.f32.mrb[0].mxu0
  %v7932 = vadd.f32 0.0, %v7931
  %v7933 = vpop.f32.mrb[0].mxu0
  %v7934 = vpop.f32.mrb[0].mxu0
  %v7935 = vadd.f32 0.0, %v7934
  %v7936 = vpop.f32.mrb[0].mxu0
  %7937 = vdwg.mxu0
  %v7939 = vsel %vm1317, %v7841, 0
  %v7942 = vsel %vm1317, %v7842, 0
  %v7945 = vsel %vm1317, %v7843, 0
  %7947 = vmatprep.subr.bf16.mxu0 0
  %7948 = vmatpush1.bf16.msra.mxu0 %v7844
  %7949 = vmatprep.subr.bf16.mxu0 0
  %7950 = vmatpush1.bf16.msra.mxu0 %v7845
  %7951 = vmatprep.subr.bf16.mxu0 0
  %7952 = vmatpush1.bf16.msra.mxu0 %v7846
  %7953 = vmatprep.subr.bf16.mxu0 0
  %7954 = vmatpush1.bf16.msra.mxu0 %v7847
  %7955 = vmatprep.subr.bf16.mxu0 0
  %7956 = vmatpush1.bf16.msra.mxu0 %v7848
  %7957 = vmatprep.subr.bf16.mxu0 0
  %7958 = vmatpush1.bf16.msra.mxu0 %v7849
  %7959 = vmatprep.subr.bf16.mxu0 0
  %7960 = vmatpush1.bf16.msra.mxu0 0
  %7961 = vmatprep.subr.bf16.mxu0 0
  %7962 = vmatpush1.bf16.msra.mxu0 0
  %7963 = vmatprep.subr.bf16.mxu0 0
  %7964 = vmatpush1.bf16.msra.mxu0 0
  %7965 = vmatprep.subr.bf16.mxu0 0
  %7966 = vmatpush1.bf16.msra.mxu0 0
  %7967 = vmatprep.subr.bf16.mxu0 0
  %7968 = vmatpush1.bf16.msra.mxu0 0
  %7969 = vmatprep.subr.bf16.mxu0 0
  %7970 = vmatpush1.bf16.msra.mxu0 0
  %7971 = vmatprep.subr.bf16.mxu0 0
  %7972 = vmatpush1.bf16.msra.mxu0 0
  %7973 = vmatprep.subr.bf16.mxu0 0
  %7974 = vmatpush1.bf16.msra.mxu0 0
  %7975 = vmatprep.subr.bf16.mxu0 0
  %7976 = vmatpush1.bf16.msra.mxu0 0
  %7977 = vmatprep.subr.bf16.mxu0 0
  %7978 = vmatpush1.bf16.msra.mxu0 0
  %7979 = vmatprep.mubr.bf16.mxu0 0
  %7980 = vmatmul.mubr.bf16.gmra.mrb[0].mxu0 %v7939
  %v7981 = vpop.f32.mrb[0].mxu0
  %v7982 = vadd.f32 %v7916, %v7981
  %v7983 = vpop.f32.mrb[0].mxu0
  %v7984 = vpop.f32.mrb[0].mxu0
  %v7985 = vadd.f32 %v7919, %v7984
  %v7986 = vpop.f32.mrb[0].mxu0
  %7987 = vmatprep.mubr.bf16.mxu0 0
  %7988 = vmatmul.mubr.bf16.gmra.mrb[0].mxu0 %v7942
  %v7989 = vpop.f32.mrb[0].mxu0
  %v7990 = vadd.f32 %v7924, %v7989
  %v7991 = vpop.f32.mrb[0].mxu0
  %v7992 = vpop.f32.mrb[0].mxu0
  %v7993 = vadd.f32 %v7927, %v7992
  %v7994 = vpop.f32.mrb[0].mxu0
  %7995 = vmatprep.mubr.bf16.mxu0 0
  %7996 = vmatmul.mubr.bf16.gmra.mrb[0].mxu0 %v7945
  %v7997 = vpop.f32.mrb[0].mxu0
  %v7998 = vadd.f32 %v7932, %v7997
  %v7999 = vpop.f32.mrb[0].mxu0
  %v8000 = vpop.f32.mrb[0].mxu0
  %v8001 = vadd.f32 %v7935, %v8000
  %v8002 = vpop.f32.mrb[0].mxu0
  %8003 = vdwg.mxu0
  %s8004 = scalar_lea.vmem %s37, 32
  %v8005 = vld [vmem:[%s8004] sm:$0xff]
  %v8006 = vld [vmem:[%s8004 + $0x8] sm:$0xff]
  %v8007 = vld [vmem:[%s8004 + $0x10] sm:$0xff]
  %v8008 = vld [vmem:[%s8004 + $0x18] sm:$0xff]
  %v8009 = vpack.c.bf16 %v7694, %v7691
  %v8010 = vpack.c.bf16 %v7702, %v7699
  %v8011 = vpack.c.bf16 %v7710, %v7707
  %v8012 = vpack.c.bf16 %v8006, %v8005
  %v8013 = vpack.c.bf16 %v8008, %v8007
  %v8015 = vsel %vm423, %v8009, 0
  %v8018 = vsel %vm423, %v8010, 0
  %v8021 = vsel %vm423, %v8011, 0
  %8023 = vmatprep.subr.bf16.mxu0 0
  %8024 = vmatpush1.bf16.msra.mxu0 %v8012
  %8025 = vmatprep.subr.bf16.mxu0 0
  %8026 = vmatpush1.bf16.msra.mxu0 %v8013
  %8027 = vmatprep.subr.bf16.mxu0 0
  %8028 = vmatpush1.bf16.msra.mxu0 0
  %8029 = vmatprep.subr.bf16.mxu0 0
  %8030 = vmatpush1.bf16.msra.mxu0 0
  %8031 = vmatprep.subr.bf16.mxu0 0
  %8032 = vmatpush1.bf16.msra.mxu0 0
  %8033 = vmatprep.subr.bf16.mxu0 0
  %8034 = vmatpush1.bf16.msra.mxu0 0
  %8035 = vmatprep.subr.bf16.mxu0 0
  %8036 = vmatpush1.bf16.msra.mxu0 0
  %8037 = vmatprep.subr.bf16.mxu0 0
  %8038 = vmatpush1.bf16.msra.mxu0 0
  %8039 = vmatprep.subr.bf16.mxu0 0
  %8040 = vmatpush1.bf16.msra.mxu0 0
  %8041 = vmatprep.subr.bf16.mxu0 0
  %8042 = vmatpush1.bf16.msra.mxu0 0
  %8043 = vmatprep.subr.bf16.mxu0 0
  %8044 = vmatpush1.bf16.msra.mxu0 0
  %8045 = vmatprep.subr.bf16.mxu0 0
  %8046 = vmatpush1.bf16.msra.mxu0 0
  %8047 = vmatprep.subr.bf16.mxu0 0
  %8048 = vmatpush1.bf16.msra.mxu0 0
  %8049 = vmatprep.subr.bf16.mxu0 0
  %8050 = vmatpush1.bf16.msra.mxu0 0
  %8051 = vmatprep.subr.bf16.mxu0 0
  %8052 = vmatpush1.bf16.msra.mxu0 0
  %8053 = vmatprep.subr.bf16.mxu0 0
  %8054 = vmatpush1.bf16.msra.mxu0 0
  %8055 = vmatprep.mubr.bf16.mxu0 0
  %8056 = vmatmul.mubr.bf16.gmra.mrb[0].mxu0 %v8015
  %v8057 = vpop.f32.mrb[0].mxu0
  %v8058 = vadd.f32 0.0, %v8057
  %v8059 = vpop.f32.mrb[0].mxu0
  %v8060 = vpop.f32.mrb[0].mxu0
  %v8061 = vadd.f32 0.0, %v8060
  %v8062 = vpop.f32.mrb[0].mxu0
  %8063 = vmatprep.mubr.bf16.mxu0 0
  %8064 = vmatmul.mubr.bf16.gmra.mrb[0].mxu0 %v8018
  %v8065 = vpop.f32.mrb[0].mxu0
  %v8066 = vadd.f32 0.0, %v8065
  %v8067 = vpop.f32.mrb[0].mxu0
  %v8068 = vpop.f32.mrb[0].mxu0
  %v8069 = vadd.f32 0.0, %v8068
  %v8070 = vpop.f32.mrb[0].mxu0
  %8071 = vmatprep.mubr.bf16.mxu0 0
  %8072 = vmatmul.mubr.bf16.gmra.mrb[0].mxu0 %v8021
  %v8073 = vpop.f32.mrb[0].mxu0
  %v8074 = vadd.f32 0.0, %v8073
  %v8075 = vpop.f32.mrb[0].mxu0
  %v8076 = vpop.f32.mrb[0].mxu0
  %v8077 = vadd.f32 0.0, %v8076
  %v8078 = vpop.f32.mrb[0].mxu0
  %8079 = vdwg.mxu0
  %v8080 = vadd.f32 %v7982, %v8058
  %v8081 = vadd.f32 %v7985, %v8061
  %v8082 = vadd.f32 %v7990, %v8066
  %v8083 = vadd.f32 %v7993, %v8069
  %v8084 = vadd.f32 %v7998, %v8074
  %v8085 = vadd.f32 %v8001, %v8077
  %s8086 = scalar_lea.vmem %s39, 1
  %v8087 = vld [vmem:[%s8086] sm:$0x1]
  %v8089 = vlaneseq
  %v8090 = vshrl.u32 %v8089, 7
  %v8091 = vsub.s32 0, %v8090
  %v8092 = vrot.slane %v8087, %v8091
  %v8094 = vadd.f32 %v8080, %v8092
  %v8095 = vadd.f32 %v8081, %v8092
  %v8096 = vadd.f32 %v8082, %v8092
  %v8097 = vadd.f32 %v8083, %v8092
  %v8098 = vadd.f32 %v8084, %v8092
  %v8099 = vadd.f32 %v8085, %v8092
  %v8100 = vxor.u32 %v8094, 2147483648
  %v8101 = vxor.u32 %v8095, 2147483648
  %v8102 = vxor.u32 %v8096, 2147483648
  %v8103 = vxor.u32 %v8097, 2147483648
  %v8104 = vxor.u32 %v8098, 2147483648
  %v8105 = vxor.u32 %v8099, 2147483648
  %v8106 = vmul.f32 %v8100, 1.442695
  %v8107 = vpow.pop %v8106
  %v8108 = vmul.f32 %v8101, 1.442695
  %v8109 = vpow.pop %v8108
  %v8110 = vmul.f32 %v8102, 1.442695
  %v8111 = vpow.pop %v8110
  %v8112 = vmul.f32 %v8103, 1.442695
  %v8113 = vpow.pop %v8112
  %v8114 = vmul.f32 %v8104, 1.442695
  %v8115 = vpow.pop %v8114
  %v8116 = vmul.f32 %v8105, 1.442695
  %v8117 = vpow.pop %v8116
  %v8118 = vadd.f32 %v8107, 1.0
  %v8119 = vadd.f32 %v8109, 1.0
  %v8120 = vadd.f32 %v8111, 1.0
  %v8121 = vadd.f32 %v8113, 1.0
  %v8122 = vadd.f32 %v8115, 1.0
  %v8123 = vadd.f32 %v8117, 1.0
  %v8124 = vrcp.pop %v8118
  %v8125 = vmul.f32 1.0, %v8124
  %v8126 = vrcp.pop %v8119
  %v8127 = vmul.f32 1.0, %v8126
  %v8128 = vrcp.pop %v8120
  %v8129 = vmul.f32 1.0, %v8128
  %v8130 = vrcp.pop %v8121
  %v8131 = vmul.f32 1.0, %v8130
  %v8132 = vrcp.pop %v8122
  %v8133 = vmul.f32 1.0, %v8132
  %v8134 = vrcp.pop %v8123
  %v8135 = vmul.f32 1.0, %v8134
  %v8136 = vmul.f32 %v8094, %v8125
  %v8137 = vmul.f32 %v8095, %v8127
  %v8138 = vmul.f32 %v8096, %v8129
  %v8139 = vmul.f32 %v8097, %v8131
  %v8140 = vmul.f32 %v8098, %v8133
  %v8141 = vmul.f32 %v8099, %v8135
  %s8142 = scalar_lea.vmem %s41, 64
  %v8143 = vld [vmem:[%s8142] sm:$0xff]
  %v8144 = vld [vmem:[%s8142 + $0x8] sm:$0xff]
  %v8145 = vld [vmem:[%s8142 + $0x10] sm:$0xff]
  %v8146 = vld [vmem:[%s8142 + $0x18] sm:$0xff]
  %v8147 = vld [vmem:[%s8142 + $0x20] sm:$0xff]
  %v8148 = vld [vmem:[%s8142 + $0x28] sm:$0xff]
  %v8149 = vld [vmem:[%s8142 + $0x30] sm:$0xff]
  %v8150 = vld [vmem:[%s8142 + $0x38] sm:$0xff]
  %v8151 = vpack.c.bf16 %v8137, %v8136
  %v8152 = vpack.c.bf16 %v8139, %v8138
  %v8153 = vpack.c.bf16 %v8141, %v8140
  %v8154 = vpack.c.bf16 %v8144, %v8143
  %v8155 = vpack.c.bf16 %v8146, %v8145
  %v8156 = vpack.c.bf16 %v8148, %v8147
  %v8157 = vpack.c.bf16 %v8150, %v8149
  %s8158 = scalar_lea.vmem %s43, 1
  %v8159 = vld [vmem:[%s8158] sm:$0x1]
  %v8161 = vlaneseq
  %v8162 = vshrl.u32 %v8161, 7
  %v8163 = vsub.s32 0, %v8162
  %v8164 = vrot.slane %v8159, %v8163
  %v8167 = vsel %vm1608, %v8151, 0
  %v8170 = vsel %vm1608, %v8152, 0
  %v8173 = vsel %vm1608, %v8153, 0
  %8175 = vmatprep.subr.bf16.mxu0 0
  %8176 = vmatpush1.bf16.msra.mxu0 %v8154
  %8177 = vmatprep.subr.bf16.mxu0 0
  %8178 = vmatpush1.bf16.msra.mxu0 %v8155
  %8179 = vmatprep.subr.bf16.mxu0 0
  %8180 = vmatpush1.bf16.msra.mxu0 %v8156
  %8181 = vmatprep.subr.bf16.mxu0 0
  %8182 = vmatpush1.bf16.msra.mxu0 %v8157
  %8183 = vmatprep.subr.bf16.mxu0 0
  %8184 = vmatpush1.bf16.msra.mxu0 0
  %8185 = vmatprep.subr.bf16.mxu0 0
  %8186 = vmatpush1.bf16.msra.mxu0 0
  %8187 = vmatprep.subr.bf16.mxu0 0
  %8188 = vmatpush1.bf16.msra.mxu0 0
  %8189 = vmatprep.subr.bf16.mxu0 0
  %8190 = vmatpush1.bf16.msra.mxu0 0
  %8191 = vmatprep.subr.bf16.mxu0 0
  %8192 = vmatpush1.bf16.msra.mxu0 0
  %8193 = vmatprep.subr.bf16.mxu0 0
  %8194 = vmatpush1.bf16.msra.mxu0 0
  %8195 = vmatprep.subr.bf16.mxu0 0
  %8196 = vmatpush1.bf16.msra.mxu0 0
  %8197 = vmatprep.subr.bf16.mxu0 0
  %8198 = vmatpush1.bf16.msra.mxu0 0
  %8199 = vmatprep.subr.bf16.mxu0 0
  %8200 = vmatpush1.bf16.msra.mxu0 0
  %8201 = vmatprep.subr.bf16.mxu0 0
  %8202 = vmatpush1.bf16.msra.mxu0 0
  %8203 = vmatprep.subr.bf16.mxu0 0
  %8204 = vmatpush1.bf16.msra.mxu0 0
  %8205 = vmatprep.subr.bf16.mxu0 0
  %8206 = vmatpush1.bf16.msra.mxu0 0
  %8207 = vmatprep.mubr.bf16.mxu0 0
  %8208 = vmatmul.mubr.bf16.gmra.mrb[0].mxu0 %v8167
  %v8209 = vpop.f32.mrb[0].mxu0
  %v8210 = vadd.f32 %v8164, %v8209
  %v8211 = vpop.f32.mrb[0].mxu0
  %v8212 = vpop.f32.mrb[0].mxu0
  %v8213 = vadd.f32 %v8164, %v8212
  %v8214 = vpop.f32.mrb[0].mxu0
  %8215 = vmatprep.mubr.bf16.mxu0 0
  %8216 = vmatmul.mubr.bf16.gmra.mrb[0].mxu0 %v8170
  %v8217 = vpop.f32.mrb[0].mxu0
  %v8218 = vadd.f32 %v8164, %v8217
  %v8219 = vpop.f32.mrb[0].mxu0
  %v8220 = vpop.f32.mrb[0].mxu0
  %v8221 = vadd.f32 %v8164, %v8220
  %v8222 = vpop.f32.mrb[0].mxu0
  %8223 = vmatprep.mubr.bf16.mxu0 0
  %8224 = vmatmul.mubr.bf16.gmra.mrb[0].mxu0 %v8173
  %v8225 = vpop.f32.mrb[0].mxu0
  %v8226 = vadd.f32 %v8164, %v8225
  %v8227 = vpop.f32.mrb[0].mxu0
  %v8228 = vpop.f32.mrb[0].mxu0
  %v8229 = vadd.f32 %v8164, %v8228
  %v8230 = vpop.f32.mrb[0].mxu0
  %8231 = vdwg.mxu0
  %v8232 = vmul.f32 %v7749, %v8210
  %v8233 = vmul.f32 %v7752, %v8213
  %v8234 = vmul.f32 %v7757, %v8218
  %v8235 = vmul.f32 %v7760, %v8221
  %v8236 = vmul.f32 %v7765, %v8226
  %v8237 = vmul.f32 %v7768, %v8229
  %v8238 = vmul.f32 %v8232, 0.17677669
  %v8239 = vmul.f32 %v8233, 0.17677669
  %v8240 = vmul.f32 %v8234, 0.17677669
  %v8241 = vmul.f32 %v8235, 0.17677669
  %v8242 = vmul.f32 %v8236, 0.17677669
  %v8243 = vmul.f32 %v8237, 0.17677669
  %v8244 = vsel %vm423, %v8238, 0.0
  %8245 = vadd.xlane.f32.xlu0 %v8244
  %v8246 = vpop.xlane.xlu0 %8245
  %v8247 = vsel %vm423, %v8239, 0.0
  %8248 = vadd.xlane.f32.xlu0 %v8247
  %v8249 = vpop.xlane.xlu0 %8248
  %v8250 = vsel %vm423, %v8240, 0.0
  %8251 = vadd.xlane.f32.xlu0 %v8250
  %v8252 = vpop.xlane.xlu0 %8251
  %v8253 = vsel %vm423, %v8241, 0.0
  %8254 = vadd.xlane.f32.xlu0 %v8253
  %v8255 = vpop.xlane.xlu0 %8254
  %v8256 = vsel %vm423, %v8242, 0.0
  %8257 = vadd.xlane.f32.xlu0 %v8256
  %v8258 = vpop.xlane.xlu0 %8257
  %v8259 = vsel %vm423, %v8243, 0.0
  %8260 = vadd.xlane.f32.xlu0 %v8259
  %v8261 = vpop.xlane.xlu0 %8260
  %v8262 = vmul.f32 %v8246, %v1705
  %v8263 = vmul.f32 %v8249, %v1705
  %v8264 = vmul.f32 %v8252, %v1705
  %v8265 = vmul.f32 %v8255, %v1705
  %v8266 = vmul.f32 %v8258, %v1705
  %v8267 = vmul.f32 %v8261, %v1705
  %v8268 = vsub.f32 %v8238, %v8262
  %v8269 = vsub.f32 %v8239, %v8263
  %v8270 = vsub.f32 %v8240, %v8264
  %v8271 = vsub.f32 %v8241, %v8265
  %v8272 = vsub.f32 %v8242, %v8266
  %v8273 = vsub.f32 %v8243, %v8267
  %v8274 = vmul.f32 %v8268, %v8268
  %v8275 = vmul.f32 %v8269, %v8269
  %v8276 = vmul.f32 %v8270, %v8270
  %v8277 = vmul.f32 %v8271, %v8271
  %v8278 = vmul.f32 %v8272, %v8272
  %v8279 = vmul.f32 %v8273, %v8273
  %v8280 = vsel %vm423, %v8274, 0.0
  %8281 = vadd.xlane.f32.xlu0 %v8280
  %v8282 = vpop.xlane.xlu0 %8281
  %v8283 = vsel %vm423, %v8275, 0.0
  %8284 = vadd.xlane.f32.xlu0 %v8283
  %v8285 = vpop.xlane.xlu0 %8284
  %v8286 = vsel %vm423, %v8276, 0.0
  %8287 = vadd.xlane.f32.xlu0 %v8286
  %v8288 = vpop.xlane.xlu0 %8287
  %v8289 = vsel %vm423, %v8277, 0.0
  %8290 = vadd.xlane.f32.xlu0 %v8289
  %v8291 = vpop.xlane.xlu0 %8290
  %v8292 = vsel %vm423, %v8278, 0.0
  %8293 = vadd.xlane.f32.xlu0 %v8292
  %v8294 = vpop.xlane.xlu0 %8293
  %v8295 = vsel %vm423, %v8279, 0.0
  %8296 = vadd.xlane.f32.xlu0 %v8295
  %v8297 = vpop.xlane.xlu0 %8296
  %v8298 = vmul.f32 %v8282, %v1705
  %v8299 = vmul.f32 %v8285, %v1705
  %v8300 = vmul.f32 %v8288, %v1705
  %v8301 = vmul.f32 %v8291, %v1705
  %v8302 = vmul.f32 %v8294, %v1705
  %v8303 = vmul.f32 %v8297, %v1705
  %v8304 = vadd.f32 %v8298, 1e-05
  %v8305 = vadd.f32 %v8299, 1e-05
  %v8306 = vadd.f32 %v8300, 1e-05
  %v8307 = vadd.f32 %v8301, 1e-05
  %v8308 = vadd.f32 %v8302, 1e-05
  %v8309 = vadd.f32 %v8303, 1e-05
  %v8310 = vrsqrt.pop %v8304
  %v8311 = vrsqrt.pop %v8305
  %v8312 = vrsqrt.pop %v8306
  %v8313 = vrsqrt.pop %v8307
  %v8314 = vrsqrt.pop %v8308
  %v8315 = vrsqrt.pop %v8309
  %v8316 = vmul.f32 %v8268, %v8310
  %v8317 = vmul.f32 %v8269, %v8311
  %v8318 = vmul.f32 %v8270, %v8312
  %v8319 = vmul.f32 %v8271, %v8313
  %v8320 = vmul.f32 %v8272, %v8314
  %v8321 = vmul.f32 %v8273, %v8315
  %s8322 = scalar_lea.vmem %s49, 1
  %v8323 = vld [vmem:[%s8322] sm:$0x1]
  %v8325 = vlaneseq
  %v8326 = vshrl.u32 %v8325, 7
  %v8327 = vsub.s32 0, %v8326
  %v8328 = vrot.slane %v8323, %v8327
  %v8330 = vmul.f32 %v8316, %v8328
  %v8331 = vmul.f32 %v8317, %v8328
  %v8332 = vmul.f32 %v8318, %v8328
  %v8333 = vmul.f32 %v8319, %v8328
  %v8334 = vmul.f32 %v8320, %v8328
  %v8335 = vmul.f32 %v8321, %v8328
  %s8336 = scalar_lea.vmem %s51, 1
  %v8337 = vld [vmem:[%s8336] sm:$0x1]
  %v8339 = vlaneseq
  %v8340 = vshrl.u32 %v8339, 7
  %v8341 = vsub.s32 0, %v8340
  %v8342 = vrot.slane %v8337, %v8341
  %v8344 = vadd.f32 %v8330, %v8342
  %v8345 = vadd.f32 %v8331, %v8342
  %v8346 = vadd.f32 %v8332, %v8342
  %v8347 = vadd.f32 %v8333, %v8342
  %v8348 = vadd.f32 %v8334, %v8342
  %v8349 = vadd.f32 %v8335, %v8342
  %v8350 = vxor.u32 %v8344, 2147483648
  %v8351 = vxor.u32 %v8345, 2147483648
  %v8352 = vxor.u32 %v8346, 2147483648
  %v8353 = vxor.u32 %v8347, 2147483648
  %v8354 = vxor.u32 %v8348, 2147483648
  %v8355 = vxor.u32 %v8349, 2147483648
  %v8356 = vmul.f32 %v8350, 1.442695
  %v8357 = vpow.pop %v8356
  %v8358 = vmul.f32 %v8351, 1.442695
  %v8359 = vpow.pop %v8358
  %v8360 = vmul.f32 %v8352, 1.442695
  %v8361 = vpow.pop %v8360
  %v8362 = vmul.f32 %v8353, 1.442695
  %v8363 = vpow.pop %v8362
  %v8364 = vmul.f32 %v8354, 1.442695
  %v8365 = vpow.pop %v8364
  %v8366 = vmul.f32 %v8355, 1.442695
  %v8367 = vpow.pop %v8366
  %v8368 = vadd.f32 %v8357, 1.0
  %v8369 = vadd.f32 %v8359, 1.0
  %v8370 = vadd.f32 %v8361, 1.0
  %v8371 = vadd.f32 %v8363, 1.0
  %v8372 = vadd.f32 %v8365, 1.0
  %v8373 = vadd.f32 %v8367, 1.0
  %v8374 = vrcp.pop %v8368
  %v8375 = vmul.f32 1.0, %v8374
  %v8376 = vrcp.pop %v8369
  %v8377 = vmul.f32 1.0, %v8376
  %v8378 = vrcp.pop %v8370
  %v8379 = vmul.f32 1.0, %v8378
  %v8380 = vrcp.pop %v8371
  %v8381 = vmul.f32 1.0, %v8380
  %v8382 = vrcp.pop %v8372
  %v8383 = vmul.f32 1.0, %v8382
  %v8384 = vrcp.pop %v8373
  %v8385 = vmul.f32 1.0, %v8384
  %8392 = vrot.lane.b32.xlu0 %v8375, 32
  %v8393 = vpop.permute.xlu0 %8392
  %8394 = vrot.lane.b32.xlu0 %v8377, 32
  %v8395 = vpop.permute.xlu0 %8394
  %8396 = vrot.lane.b32.xlu0 %v8379, 32
  %v8397 = vpop.permute.xlu0 %8396
  %8398 = vrot.lane.b32.xlu0 %v8381, 32
  %v8399 = vpop.permute.xlu0 %8398
  %8400 = vrot.lane.b32.xlu0 %v8383, 32
  %v8401 = vpop.permute.xlu0 %8400
  %8402 = vrot.lane.b32.xlu0 %v8385, 32
  %v8403 = vpop.permute.xlu0 %8402
  %v8410 = vmul.f32 %v8210, %v8393
  %v8411 = vmul.f32 %v8213, %v8395
  %v8412 = vmul.f32 %v8218, %v8397
  %v8413 = vmul.f32 %v8221, %v8399
  %v8414 = vmul.f32 %v8226, %v8401
  %v8415 = vmul.f32 %v8229, %v8403
  %v8416 = vpack.c.bf16 %v8411, %v8410
  %v8417 = vpack.c.bf16 %v8413, %v8412
  %v8418 = vpack.c.bf16 %v8415, %v8414
  %8422 = vrot.lane.b32.xlu0 %v8416, 96
  %v8423 = vpop.permute.xlu0 %8422
  %8424 = vrot.lane.b32.xlu0 %v8417, 96
  %v8425 = vpop.permute.xlu0 %8424
  %8426 = vrot.lane.b32.xlu0 %v8418, 96
  %v8427 = vpop.permute.xlu0 %8426
  %8431 = vmatprep.subr.bf16.mxu0 0
  %8432 = vmatpush1.bf16.msra.mxu0 %v8423
  %8433 = vmatprep.subr.bf16.mxu0 0
  %8434 = vmatpush1.bf16.msra.mxu0 %v8425
  %8435 = vmatprep.subr.bf16.mxu0 0
  %8436 = vmatpush1.bf16.msra.mxu0 %v8427
  %8437 = vmatprep.subr.bf16.mxu0 0
  %8438 = vmatpush1.bf16.msra.mxu0 0
  %8439 = vmatprep.subr.bf16.mxu0 0
  %8440 = vmatpush1.bf16.msra.mxu0 0
  %8441 = vmatprep.subr.bf16.mxu0 0
  %8442 = vmatpush1.bf16.msra.mxu0 0
  %8443 = vmatprep.subr.bf16.mxu0 0
  %8444 = vmatpush1.bf16.msra.mxu0 0
  %8445 = vmatprep.subr.bf16.mxu0 0
  %8446 = vmatpush1.bf16.msra.mxu0 0
  %8447 = vmatprep.subr.bf16.mxu0 0
  %8448 = vmatpush1.bf16.msra.mxu0 0
  %8449 = vmatprep.subr.bf16.mxu0 0
  %8450 = vmatpush1.bf16.msra.mxu0 0
  %8451 = vmatprep.subr.bf16.mxu0 0
  %8452 = vmatpush1.bf16.msra.mxu0 0
  %8453 = vmatprep.subr.bf16.mxu0 0
  %8454 = vmatpush1.bf16.msra.mxu0 0
  %8455 = vmatprep.subr.bf16.mxu0 0
  %8456 = vmatpush1.bf16.msra.mxu0 0
  %8457 = vmatprep.subr.bf16.mxu0 0
  %8458 = vmatpush1.bf16.msra.mxu0 0
  %8459 = vmatprep.subr.bf16.mxu0 0
  %8460 = vmatpush1.bf16.msra.mxu0 0
  %8461 = vmatprep.subr.bf16.mxu0 0
  %8462 = vmatpush1.bf16.msra.mxu0 0
  %8463 = vmatprep.mubr.bf16.mxu0 0
  %8464 = vmatmul.mubr.bf16.gmra.mrb[0].mxu0 %v1876
  %v8465 = vpop.f32.mrb[0].mxu0
  %v8466 = vadd.f32 0.0, %v8465
  %v8467 = vpop.f32.mrb[0].mxu0
  %v8468 = vpop.f32.mrb[0].mxu0
  %v8469 = vadd.f32 0.0, %v8468
  %v8470 = vpop.f32.mrb[0].mxu0
  %8471 = vdwg.mxu0
  %s8472 = scalar_lea.vmem %s45, 32
  %v8473 = vld [vmem:[%s8472] sm:$0xff]
  %v8474 = vld [vmem:[%s8472 + $0x8] sm:$0xff]
  %v8475 = vld [vmem:[%s8472 + $0x10] sm:$0xff]
  %v8476 = vld [vmem:[%s8472 + $0x18] sm:$0xff]
  %v8477 = vpack.c.bf16 %v8469, %v8466
  %v8478 = vpack.c.bf16 %v8474, %v8473
  %v8479 = vpack.c.bf16 %v8476, %v8475
  %s8480 = scalar_lea.vmem %s47, 1
  %v8481 = vld [vmem:[%s8480] sm:$0x1]
  %v8483 = vlaneseq
  %v8484 = vshrl.u32 %v8483, 7
  %v8485 = vsub.s32 0, %v8484
  %v8486 = vrot.slane %v8481, %v8485
  %v8489 = vsel %vm423, %v8477, 0
  %8491 = vmatprep.subr.bf16.mxu0 0
  %8492 = vmatpush1.bf16.msra.mxu0 %v8478
  %8493 = vmatprep.subr.bf16.mxu0 0
  %8494 = vmatpush1.bf16.msra.mxu0 %v8479
  %8495 = vmatprep.subr.bf16.mxu0 0
  %8496 = vmatpush1.bf16.msra.mxu0 0
  %8497 = vmatprep.subr.bf16.mxu0 0
  %8498 = vmatpush1.bf16.msra.mxu0 0
  %8499 = vmatprep.subr.bf16.mxu0 0
  %8500 = vmatpush1.bf16.msra.mxu0 0
  %8501 = vmatprep.subr.bf16.mxu0 0
  %8502 = vmatpush1.bf16.msra.mxu0 0
  %8503 = vmatprep.subr.bf16.mxu0 0
  %8504 = vmatpush1.bf16.msra.mxu0 0
  %8505 = vmatprep.subr.bf16.mxu0 0
  %8506 = vmatpush1.bf16.msra.mxu0 0
  %8507 = vmatprep.subr.bf16.mxu0 0
  %8508 = vmatpush1.bf16.msra.mxu0 0
  %8509 = vmatprep.subr.bf16.mxu0 0
  %8510 = vmatpush1.bf16.msra.mxu0 0
  %8511 = vmatprep.subr.bf16.mxu0 0
  %8512 = vmatpush1.bf16.msra.mxu0 0
  %8513 = vmatprep.subr.bf16.mxu0 0
  %8514 = vmatpush1.bf16.msra.mxu0 0
  %8515 = vmatprep.subr.bf16.mxu0 0
  %8516 = vmatpush1.bf16.msra.mxu0 0
  %8517 = vmatprep.subr.bf16.mxu0 0
  %8518 = vmatpush1.bf16.msra.mxu0 0
  %8519 = vmatprep.subr.bf16.mxu0 0
  %8520 = vmatpush1.bf16.msra.mxu0 0
  %8521 = vmatprep.subr.bf16.mxu0 0
  %8522 = vmatpush1.bf16.msra.mxu0 0
  %8523 = vmatprep.mubr.bf16.mxu0 0
  %8524 = vmatmul.mubr.bf16.gmra.mrb[0].mxu0 %v8489
  %v8525 = vpop.f32.mrb[0].mxu0
  %v8526 = vadd.f32 %v8486, %v8525
  %v8527 = vpop.f32.mrb[0].mxu0
  %v8528 = vpop.f32.mrb[0].mxu0
  %v8529 = vadd.f32 %v8486, %v8528
  %v8530 = vpop.f32.mrb[0].mxu0
  %8531 = vdwg.mxu0
  %s8532 = scalar_lea.vmem %s53, 1
  %v8533 = vld [vmem:[%s8532] sm:$0x1]
  %v8535 = vlaneseq
  %v8536 = vshrl.u32 %v8535, 7
  %v8537 = vsub.s32 0, %v8536
  %v8538 = vrot.slane %v8533, %v8537
  %v8540 = vmul.f32 %v8526, %v8538
  %v8541 = vmul.f32 %v8529, %v8538
  %s8542 = scalar_lea.vmem %s55, 1
  %v8543 = vld [vmem:[%s8542] sm:$0x1]
  %v8545 = vlaneseq
  %v8546 = vshrl.u32 %v8545, 7
  %v8547 = vsub.s32 0, %v8546
  %v8548 = vrot.slane %v8543, %v8547
  %v8550 = vadd.f32 %v8540, %v8548
  %v8551 = vadd.f32 %v8541, %v8548
  %v8552 = vadd.f32 %v7579, %v8550
  %v8553 = vadd.f32 %v7580, %v8551
  %v8554 = vmax.f32 %v8552, 0.0
  %v8555 = vmax.f32 %v8553, 0.0
  %vm8556 = vcmp.ne.f32.partialorder %v8552, %v8552
  %vm8557 = vcmp.ne.f32.partialorder %v8553, %v8553
  %v8558 = vadd.f32 %v8552, 0.0
  %v8559 = vadd.f32 %v8553, 0.0
  %v8560 = vand.u32 2147483647, %v8552
  %v8561 = vand.u32 2147483647, %v8553
  %v8562 = vsub.f32 0.0, %v8560
  %v8563 = vsub.f32 0.0, %v8561
  %v8564 = vmul.f32 %v8562, 1.442695
  %v8565 = vpow.pop %v8564
  %v8566 = vmul.f32 %v8563, 1.442695
  %v8567 = vpow.pop %v8566
  %v8568 = vadd.f32 %v8565, 1.0
  %v8569 = vlog2.pop %v8568
  %v8570 = vmul.f32 %v8569, 0.6931472
  %v8571 = vmul.f32 -0.5, %v8565
  %v8572 = vadd.f32 %v8571, 1.0
  %v8573 = vmul.f32 %v8572, %v8565
  %v8574 = vand.u32 2147483647, %v8565
  %vm8575 = vcmp.lt.f32.partialorder %v8574, 0.0004427343
  %v8576 = vsel %vm8575, %v8573, %v8570
  %v8577 = vadd.f32 %v8567, 1.0
  %v8578 = vlog2.pop %v8577
  %v8579 = vmul.f32 %v8578, 0.6931472
  %v8580 = vmul.f32 -0.5, %v8567
  %v8581 = vadd.f32 %v8580, 1.0
  %v8582 = vmul.f32 %v8581, %v8567
  %v8583 = vand.u32 2147483647, %v8567
  %vm8584 = vcmp.lt.f32.partialorder %v8583, 0.0004427343
  %v8585 = vsel %vm8584, %v8582, %v8579
  %v8586 = vadd.f32 %v8554, %v8576
  %v8587 = vadd.f32 %v8555, %v8585
  %v8588 = vsel %vm8556, %v8558, %v8586
  %v8589 = vsel %vm8557, %v8559, %v8587
  %s8590 = scalar_lea.vmem %s25, 64
  %v8591 = vld [vmem:[%s8590] sm:$0xff]
  %v8592 = vld [vmem:[%s8590 + $0x8] sm:$0xff]
  %v8593 = vld [vmem:[%s8590 + $0x10] sm:$0xff]
  %v8594 = vld [vmem:[%s8590 + $0x18] sm:$0xff]
  %v8595 = vpack.c.bf16 %v8589, %v8588
  %v8596 = vpack.c.bf16 %v8592, %v8591
  %v8597 = vpack.c.bf16 %v8594, %v8593
  %s8598 = scalar_lea.vmem %s27, 2
  %v8599 = vld [vmem:[%s8598] sm:$0x1]
  %v8601 = vlaneseq
  %v8602 = vshrl.u32 %v8601, 7
  %v8603 = vsub.s32 0, %v8602
  %v8604 = vrot.slane %v8599, %v8603
  %v8607 = vsel %vm423, %v8595, 0
  %8609 = vmatprep.subr.bf16.mxu0 0
  %8610 = vmatpush1.bf16.msra.mxu0 %v8596
  %8611 = vmatprep.subr.bf16.mxu0 0
  %8612 = vmatpush1.bf16.msra.mxu0 %v8597
  %8613 = vmatprep.subr.bf16.mxu0 0
  %8614 = vmatpush1.bf16.msra.mxu0 0
  %8615 = vmatprep.subr.bf16.mxu0 0
  %8616 = vmatpush1.bf16.msra.mxu0 0
  %8617 = vmatprep.subr.bf16.mxu0 0
  %8618 = vmatpush1.bf16.msra.mxu0 0
  %8619 = vmatprep.subr.bf16.mxu0 0
  %8620 = vmatpush1.bf16.msra.mxu0 0
  %8621 = vmatprep.subr.bf16.mxu0 0
  %8622 = vmatpush1.bf16.msra.mxu0 0
  %8623 = vmatprep.subr.bf16.mxu0 0
  %8624 = vmatpush1.bf16.msra.mxu0 0
  %8625 = vmatprep.subr.bf16.mxu0 0
  %8626 = vmatpush1.bf16.msra.mxu0 0
  %8627 = vmatprep.subr.bf16.mxu0 0
  %8628 = vmatpush1.bf16.msra.mxu0 0
  %8629 = vmatprep.subr.bf16.mxu0 0
  %8630 = vmatpush1.bf16.msra.mxu0 0
  %8631 = vmatprep.subr.bf16.mxu0 0
  %8632 = vmatpush1.bf16.msra.mxu0 0
  %8633 = vmatprep.subr.bf16.mxu0 0
  %8634 = vmatpush1.bf16.msra.mxu0 0
  %8635 = vmatprep.subr.bf16.mxu0 0
  %8636 = vmatpush1.bf16.msra.mxu0 0
  %8637 = vmatprep.subr.bf16.mxu0 0
  %8638 = vmatpush1.bf16.msra.mxu0 0
  %8639 = vmatprep.subr.bf16.mxu0 0
  %8640 = vmatpush1.bf16.msra.mxu0 0
  %8641 = vmatprep.mubr.bf16.mxu0 0
  %8642 = vmatmul.mubr.bf16.gmra.mrb[0].mxu0 %v8607
  %v8643 = vpop.f32.mrb[0].mxu0
  %v8644 = vadd.f32 %v8604, %v8643
  %v8645 = vpop.f32.mrb[0].mxu0
  %v8646 = vpop.f32.mrb[0].mxu0
  %v8647 = vadd.f32 %v8604, %v8646
  %v8648 = vpop.f32.mrb[0].mxu0
  %8649 = vdwg.mxu0
  %s8650 = scalar_lea.vmem %s29, 64
  %v8651 = vld [vmem:[%s8650] sm:$0xff]
  %v8652 = vld [vmem:[%s8650 + $0x8] sm:$0xff]
  %v8653 = vld [vmem:[%s8650 + $0x10] sm:$0xff]
  %v8654 = vld [vmem:[%s8650 + $0x18] sm:$0xff]
  %v8655 = vpack.c.bf16 %v8652, %v8651
  %v8656 = vpack.c.bf16 %v8654, %v8653
  %s8657 = scalar_lea.vmem %s31, 2
  %v8658 = vld [vmem:[%s8657] sm:$0x1]
  %v8660 = vlaneseq
  %v8661 = vshrl.u32 %v8660, 7
  %v8662 = vsub.s32 0, %v8661
  %v8663 = vrot.slane %v8658, %v8662
  %8665 = vmatprep.subr.bf16.mxu0 0
  %8666 = vmatpush1.bf16.msra.mxu0 %v8655
  %8667 = vmatprep.subr.bf16.mxu0 0
  %8668 = vmatpush1.bf16.msra.mxu0 %v8656
  %8669 = vmatprep.subr.bf16.mxu0 0
  %8670 = vmatpush1.bf16.msra.mxu0 0
  %8671 = vmatprep.subr.bf16.mxu0 0
  %8672 = vmatpush1.bf16.msra.mxu0 0
  %8673 = vmatprep.subr.bf16.mxu0 0
  %8674 = vmatpush1.bf16.msra.mxu0 0
  %8675 = vmatprep.subr.bf16.mxu0 0
  %8676 = vmatpush1.bf16.msra.mxu0 0
  %8677 = vmatprep.subr.bf16.mxu0 0
  %8678 = vmatpush1.bf16.msra.mxu0 0
  %8679 = vmatprep.subr.bf16.mxu0 0
  %8680 = vmatpush1.bf16.msra.mxu0 0
  %8681 = vmatprep.subr.bf16.mxu0 0
  %8682 = vmatpush1.bf16.msra.mxu0 0
  %8683 = vmatprep.subr.bf16.mxu0 0
  %8684 = vmatpush1.bf16.msra.mxu0 0
  %8685 = vmatprep.subr.bf16.mxu0 0
  %8686 = vmatpush1.bf16.msra.mxu0 0
  %8687 = vmatprep.subr.bf16.mxu0 0
  %8688 = vmatpush1.bf16.msra.mxu0 0
  %8689 = vmatprep.subr.bf16.mxu0 0
  %8690 = vmatpush1.bf16.msra.mxu0 0
  %8691 = vmatprep.subr.bf16.mxu0 0
  %8692 = vmatpush1.bf16.msra.mxu0 0
  %8693 = vmatprep.subr.bf16.mxu0 0
  %8694 = vmatpush1.bf16.msra.mxu0 0
  %8695 = vmatprep.subr.bf16.mxu0 0
  %8696 = vmatpush1.bf16.msra.mxu0 0
  %8697 = vmatprep.mubr.bf16.mxu0 0
  %8698 = vmatmul.mubr.bf16.gmra.mrb[0].mxu0 %v1071
  %v8699 = vpop.f32.mrb[0].mxu0
  %v8700 = vadd.f32 %v8663, %v8699
  %v8701 = vpop.f32.mrb[0].mxu0
  %v8702 = vpop.f32.mrb[0].mxu0
  %v8703 = vadd.f32 %v8663, %v8702
  %v8704 = vpop.f32.mrb[0].mxu0
  %8705 = vmatprep.mubr.bf16.mxu0 0
  %8706 = vmatmul.mubr.bf16.gmra.mrb[0].mxu0 %v1074
  %v8707 = vpop.f32.mrb[0].mxu0
  %v8708 = vadd.f32 %v8663, %v8707
  %v8709 = vpop.f32.mrb[0].mxu0
  %v8710 = vpop.f32.mrb[0].mxu0
  %v8711 = vadd.f32 %v8663, %v8710
  %v8712 = vpop.f32.mrb[0].mxu0
  %8713 = vmatprep.mubr.bf16.mxu0 0
  %8714 = vmatmul.mubr.bf16.gmra.mrb[0].mxu0 %v1077
  %v8715 = vpop.f32.mrb[0].mxu0
  %v8716 = vadd.f32 %v8663, %v8715
  %v8717 = vpop.f32.mrb[0].mxu0
  %v8718 = vpop.f32.mrb[0].mxu0
  %v8719 = vadd.f32 %v8663, %v8718
  %v8720 = vpop.f32.mrb[0].mxu0
  %8721 = vdwg.mxu0
  %v8722 = vpack.c.bf16 %v8647, %v8644
  %8723 = vmatprep.subr.bf16.mxu0 0
  %8724 = vmatpush1.bf16.msra.mxu0 %v8722
  %8725 = vmatprep.subr.bf16.mxu0 0
  %8726 = vmatpush1.bf16.msra.mxu0 0
  %8727 = vmatprep.subr.bf16.mxu0 0
  %8728 = vmatpush1.bf16.msra.mxu0 0
  %8729 = vmatprep.subr.bf16.mxu0 0
  %8730 = vmatpush1.bf16.msra.mxu0 0
  %8731 = vmatprep.subr.bf16.mxu0 0
  %8732 = vmatpush1.bf16.msra.mxu0 0
  %8733 = vmatprep.subr.bf16.mxu0 0
  %8734 = vmatpush1.bf16.msra.mxu0 0
  %8735 = vmatprep.subr.bf16.mxu0 0
  %8736 = vmatpush1.bf16.msra.mxu0 0
  %8737 = vmatprep.subr.bf16.mxu0 0
  %8738 = vmatpush1.bf16.msra.mxu0 0
  %8739 = vmatprep.subr.bf16.mxu0 0
  %8740 = vmatpush1.bf16.msra.mxu0 0
  %8741 = vmatprep.subr.bf16.mxu0 0
  %8742 = vmatpush1.bf16.msra.mxu0 0
  %8743 = vmatprep.subr.bf16.mxu0 0
  %8744 = vmatpush1.bf16.msra.mxu0 0
  %8745 = vmatprep.subr.bf16.mxu0 0
  %8746 = vmatpush1.bf16.msra.mxu0 0
  %8747 = vmatprep.subr.bf16.mxu0 0
  %8748 = vmatpush1.bf16.msra.mxu0 0
  %8749 = vmatprep.subr.bf16.mxu0 0
  %8750 = vmatpush1.bf16.msra.mxu0 0
  %8751 = vmatprep.subr.bf16.mxu0 0
  %8752 = vmatpush1.bf16.msra.mxu0 0
  %8753 = vmatprep.subr.bf16.mxu0 0
  %8754 = vmatpush1.bf16.msra.mxu0 0
  %8755 = vmatprep.mubr.bf16.mxu0 0
  %8756 = vmatmul.mubr.bf16.gmra.mrb[0].mxu0 %v1141
  %v8757 = vpop.f32.mrb[0].mxu0
  %v8758 = vadd.f32 0.0, %v8757
  %v8759 = vpop.f32.mrb[0].mxu0
  %v8760 = vpop.f32.mrb[0].mxu0
  %v8761 = vadd.f32 0.0, %v8760
  %v8762 = vpop.f32.mrb[0].mxu0
  %8763 = vmatprep.mubr.bf16.mxu0 0
  %8764 = vmatmul.mubr.bf16.gmra.mrb[0].mxu0 %v1144
  %v8765 = vpop.f32.mrb[0].mxu0
  %v8766 = vadd.f32 0.0, %v8765
  %v8767 = vpop.f32.mrb[0].mxu0
  %v8768 = vpop.f32.mrb[0].mxu0
  %v8769 = vadd.f32 0.0, %v8768
  %v8770 = vpop.f32.mrb[0].mxu0
  %8771 = vmatprep.mubr.bf16.mxu0 0
  %8772 = vmatmul.mubr.bf16.gmra.mrb[0].mxu0 %v1147
  %v8773 = vpop.f32.mrb[0].mxu0
  %v8774 = vadd.f32 0.0, %v8773
  %v8775 = vpop.f32.mrb[0].mxu0
  %v8776 = vpop.f32.mrb[0].mxu0
  %v8777 = vadd.f32 0.0, %v8776
  %v8778 = vpop.f32.mrb[0].mxu0
  %8779 = vdwg.mxu0
  %8780 = vmatprep.subr.bf16.mxu0 0
  %8781 = vmatpush1.bf16.msra.mxu0 %v8722
  %8782 = vmatprep.subr.bf16.mxu0 0
  %8783 = vmatpush1.bf16.msra.mxu0 0
  %8784 = vmatprep.subr.bf16.mxu0 0
  %8785 = vmatpush1.bf16.msra.mxu0 0
  %8786 = vmatprep.subr.bf16.mxu0 0
  %8787 = vmatpush1.bf16.msra.mxu0 0
  %8788 = vmatprep.subr.bf16.mxu0 0
  %8789 = vmatpush1.bf16.msra.mxu0 0
  %8790 = vmatprep.subr.bf16.mxu0 0
  %8791 = vmatpush1.bf16.msra.mxu0 0
  %8792 = vmatprep.subr.bf16.mxu0 0
  %8793 = vmatpush1.bf16.msra.mxu0 0
  %8794 = vmatprep.subr.bf16.mxu0 0
  %8795 = vmatpush1.bf16.msra.mxu0 0
  %8796 = vmatprep.subr.bf16.mxu0 0
  %8797 = vmatpush1.bf16.msra.mxu0 0
  %8798 = vmatprep.subr.bf16.mxu0 0
  %8799 = vmatpush1.bf16.msra.mxu0 0
  %8800 = vmatprep.subr.bf16.mxu0 0
  %8801 = vmatpush1.bf16.msra.mxu0 0
  %8802 = vmatprep.subr.bf16.mxu0 0
  %8803 = vmatpush1.bf16.msra.mxu0 0
  %8804 = vmatprep.subr.bf16.mxu0 0
  %8805 = vmatpush1.bf16.msra.mxu0 0
  %8806 = vmatprep.subr.bf16.mxu0 0
  %8807 = vmatpush1.bf16.msra.mxu0 0
  %8808 = vmatprep.subr.bf16.mxu0 0
  %8809 = vmatpush1.bf16.msra.mxu0 0
  %8810 = vmatprep.subr.bf16.mxu0 0
  %8811 = vmatpush1.bf16.msra.mxu0 0
  %8812 = vmatprep.mubr.bf16.mxu0 0
  %8813 = vmatmul.mubr.bf16.gmra.mrb[0].mxu0 %v1210
  %v8814 = vpop.f32.mrb[0].mxu0
  %v8815 = vadd.f32 0.0, %v8814
  %v8816 = vpop.f32.mrb[0].mxu0
  %v8817 = vpop.f32.mrb[0].mxu0
  %v8818 = vadd.f32 0.0, %v8817
  %v8819 = vpop.f32.mrb[0].mxu0
  %8820 = vmatprep.mubr.bf16.mxu0 0
  %8821 = vmatmul.mubr.bf16.gmra.mrb[0].mxu0 %v1213
  %v8822 = vpop.f32.mrb[0].mxu0
  %v8823 = vadd.f32 0.0, %v8822
  %v8824 = vpop.f32.mrb[0].mxu0
  %v8825 = vpop.f32.mrb[0].mxu0
  %v8826 = vadd.f32 0.0, %v8825
  %v8827 = vpop.f32.mrb[0].mxu0
  %8828 = vmatprep.mubr.bf16.mxu0 0
  %8829 = vmatmul.mubr.bf16.gmra.mrb[0].mxu0 %v1216
  %v8830 = vpop.f32.mrb[0].mxu0
  %v8831 = vadd.f32 0.0, %v8830
  %v8832 = vpop.f32.mrb[0].mxu0
  %v8833 = vpop.f32.mrb[0].mxu0
  %v8834 = vadd.f32 0.0, %v8833
  %v8835 = vpop.f32.mrb[0].mxu0
  %8836 = vdwg.mxu0
  %s8837 = scalar_lea.vmem %s33, 192
  %v8838 = vld [vmem:[%s8837] sm:$0xff]
  %v8839 = vld [vmem:[%s8837 + $0x8] sm:$0xff]
  %v8840 = vld [vmem:[%s8837 + $0x10] sm:$0xff]
  %v8841 = vld [vmem:[%s8837 + $0x18] sm:$0xff]
  %v8842 = vld [vmem:[%s8837 + $0x20] sm:$0xff]
  %v8843 = vld [vmem:[%s8837 + $0x28] sm:$0xff]
  %v8844 = vld [vmem:[%s8837 + $0x30] sm:$0xff]
  %v8845 = vld [vmem:[%s8837 + $0x38] sm:$0xff]
  %v8846 = vld [vmem:[%s8837 + $0x40] sm:$0xff]
  %v8847 = vld [vmem:[%s8837 + $0x48] sm:$0xff]
  %v8848 = vld [vmem:[%s8837 + $0x50] sm:$0xff]
  %v8849 = vld [vmem:[%s8837 + $0x58] sm:$0xff]
  %v8850 = vpack.c.bf16 %v8761, %v8758
  %v8851 = vpack.c.bf16 %v8769, %v8766
  %v8852 = vpack.c.bf16 %v8777, %v8774
  %v8853 = vpack.c.bf16 %v8839, %v8838
  %v8854 = vpack.c.bf16 %v8841, %v8840
  %v8855 = vpack.c.bf16 %v8843, %v8842
  %v8856 = vpack.c.bf16 %v8845, %v8844
  %v8857 = vpack.c.bf16 %v8847, %v8846
  %v8858 = vpack.c.bf16 %v8849, %v8848
  %s8859 = scalar_lea.vmem %s35, 192
  %v8860 = vld [vmem:[%s8859] sm:$0xff]
  %v8861 = vld [vmem:[%s8859 + $0x8] sm:$0xff]
  %v8862 = vld [vmem:[%s8859 + $0x10] sm:$0xff]
  %v8863 = vld [vmem:[%s8859 + $0x18] sm:$0xff]
  %v8864 = vld [vmem:[%s8859 + $0x20] sm:$0xff]
  %v8865 = vld [vmem:[%s8859 + $0x28] sm:$0xff]
  %v8866 = vld [vmem:[%s8859 + $0x30] sm:$0xff]
  %v8867 = vld [vmem:[%s8859 + $0x38] sm:$0xff]
  %v8868 = vld [vmem:[%s8859 + $0x40] sm:$0xff]
  %v8869 = vld [vmem:[%s8859 + $0x48] sm:$0xff]
  %v8870 = vld [vmem:[%s8859 + $0x50] sm:$0xff]
  %v8871 = vld [vmem:[%s8859 + $0x58] sm:$0xff]
  %v8872 = vpack.c.bf16 %v8818, %v8815
  %v8873 = vpack.c.bf16 %v8826, %v8823
  %v8874 = vpack.c.bf16 %v8834, %v8831
  %v8875 = vpack.c.bf16 %v8861, %v8860
  %v8876 = vpack.c.bf16 %v8863, %v8862
  %v8877 = vpack.c.bf16 %v8865, %v8864
  %v8878 = vpack.c.bf16 %v8867, %v8866
  %v8879 = vpack.c.bf16 %v8869, %v8868
  %v8880 = vpack.c.bf16 %v8871, %v8870
  %v8882 = vsel %vm1317, %v8872, 0
  %v8885 = vsel %vm1317, %v8873, 0
  %v8888 = vsel %vm1317, %v8874, 0
  %8890 = vmatprep.subr.bf16.mxu0 0
  %8891 = vmatpush1.bf16.msra.mxu0 %v8875
  %8892 = vmatprep.subr.bf16.mxu0 0
  %8893 = vmatpush1.bf16.msra.mxu0 %v8876
  %8894 = vmatprep.subr.bf16.mxu0 0
  %8895 = vmatpush1.bf16.msra.mxu0 %v8877
  %8896 = vmatprep.subr.bf16.mxu0 0
  %8897 = vmatpush1.bf16.msra.mxu0 %v8878
  %8898 = vmatprep.subr.bf16.mxu0 0
  %8899 = vmatpush1.bf16.msra.mxu0 %v8879
  %8900 = vmatprep.subr.bf16.mxu0 0
  %8901 = vmatpush1.bf16.msra.mxu0 %v8880
  %8902 = vmatprep.subr.bf16.mxu0 0
  %8903 = vmatpush1.bf16.msra.mxu0 0
  %8904 = vmatprep.subr.bf16.mxu0 0
  %8905 = vmatpush1.bf16.msra.mxu0 0
  %8906 = vmatprep.subr.bf16.mxu0 0
  %8907 = vmatpush1.bf16.msra.mxu0 0
  %8908 = vmatprep.subr.bf16.mxu0 0
  %8909 = vmatpush1.bf16.msra.mxu0 0
  %8910 = vmatprep.subr.bf16.mxu0 0
  %8911 = vmatpush1.bf16.msra.mxu0 0
  %8912 = vmatprep.subr.bf16.mxu0 0
  %8913 = vmatpush1.bf16.msra.mxu0 0
  %8914 = vmatprep.subr.bf16.mxu0 0
  %8915 = vmatpush1.bf16.msra.mxu0 0
  %8916 = vmatprep.subr.bf16.mxu0 0
  %8917 = vmatpush1.bf16.msra.mxu0 0
  %8918 = vmatprep.subr.bf16.mxu0 0
  %8919 = vmatpush1.bf16.msra.mxu0 0
  %8920 = vmatprep.subr.bf16.mxu0 0
  %8921 = vmatpush1.bf16.msra.mxu0 0
  %8922 = vmatprep.mubr.bf16.mxu0 0
  %8923 = vmatmul.mubr.bf16.gmra.mrb[0].mxu0 %v8882
  %v8924 = vpop.f32.mrb[0].mxu0
  %v8925 = vadd.f32 0.0, %v8924
  %v8926 = vpop.f32.mrb[0].mxu0
  %v8927 = vpop.f32.mrb[0].mxu0
  %v8928 = vadd.f32 0.0, %v8927
  %v8929 = vpop.f32.mrb[0].mxu0
  %8930 = vmatprep.mubr.bf16.mxu0 0
  %8931 = vmatmul.mubr.bf16.gmra.mrb[0].mxu0 %v8885
  %v8932 = vpop.f32.mrb[0].mxu0
  %v8933 = vadd.f32 0.0, %v8932
  %v8934 = vpop.f32.mrb[0].mxu0
  %v8935 = vpop.f32.mrb[0].mxu0
  %v8936 = vadd.f32 0.0, %v8935
  %v8937 = vpop.f32.mrb[0].mxu0
  %8938 = vmatprep.mubr.bf16.mxu0 0
  %8939 = vmatmul.mubr.bf16.gmra.mrb[0].mxu0 %v8888
  %v8940 = vpop.f32.mrb[0].mxu0
  %v8941 = vadd.f32 0.0, %v8940
  %v8942 = vpop.f32.mrb[0].mxu0
  %v8943 = vpop.f32.mrb[0].mxu0
  %v8944 = vadd.f32 0.0, %v8943
  %v8945 = vpop.f32.mrb[0].mxu0
  %8946 = vdwg.mxu0
  %v8948 = vsel %vm1317, %v8850, 0
  %v8951 = vsel %vm1317, %v8851, 0
  %v8954 = vsel %vm1317, %v8852, 0
  %8956 = vmatprep.subr.bf16.mxu0 0
  %8957 = vmatpush1.bf16.msra.mxu0 %v8853
  %8958 = vmatprep.subr.bf16.mxu0 0
  %8959 = vmatpush1.bf16.msra.mxu0 %v8854
  %8960 = vmatprep.subr.bf16.mxu0 0
  %8961 = vmatpush1.bf16.msra.mxu0 %v8855
  %8962 = vmatprep.subr.bf16.mxu0 0
  %8963 = vmatpush1.bf16.msra.mxu0 %v8856
  %8964 = vmatprep.subr.bf16.mxu0 0
  %8965 = vmatpush1.bf16.msra.mxu0 %v8857
  %8966 = vmatprep.subr.bf16.mxu0 0
  %8967 = vmatpush1.bf16.msra.mxu0 %v8858
  %8968 = vmatprep.subr.bf16.mxu0 0
  %8969 = vmatpush1.bf16.msra.mxu0 0
  %8970 = vmatprep.subr.bf16.mxu0 0
  %8971 = vmatpush1.bf16.msra.mxu0 0
  %8972 = vmatprep.subr.bf16.mxu0 0
  %8973 = vmatpush1.bf16.msra.mxu0 0
  %8974 = vmatprep.subr.bf16.mxu0 0
  %8975 = vmatpush1.bf16.msra.mxu0 0
  %8976 = vmatprep.subr.bf16.mxu0 0
  %8977 = vmatpush1.bf16.msra.mxu0 0
  %8978 = vmatprep.subr.bf16.mxu0 0
  %8979 = vmatpush1.bf16.msra.mxu0 0
  %8980 = vmatprep.subr.bf16.mxu0 0
  %8981 = vmatpush1.bf16.msra.mxu0 0
  %8982 = vmatprep.subr.bf16.mxu0 0
  %8983 = vmatpush1.bf16.msra.mxu0 0
  %8984 = vmatprep.subr.bf16.mxu0 0
  %8985 = vmatpush1.bf16.msra.mxu0 0
  %8986 = vmatprep.subr.bf16.mxu0 0
  %8987 = vmatpush1.bf16.msra.mxu0 0
  %8988 = vmatprep.mubr.bf16.mxu0 0
  %8989 = vmatmul.mubr.bf16.gmra.mrb[0].mxu0 %v8948
  %v8990 = vpop.f32.mrb[0].mxu0
  %v8991 = vadd.f32 %v8925, %v8990
  %v8992 = vpop.f32.mrb[0].mxu0
  %v8993 = vpop.f32.mrb[0].mxu0
  %v8994 = vadd.f32 %v8928, %v8993
  %v8995 = vpop.f32.mrb[0].mxu0
  %8996 = vmatprep.mubr.bf16.mxu0 0
  %8997 = vmatmul.mubr.bf16.gmra.mrb[0].mxu0 %v8951
  %v8998 = vpop.f32.mrb[0].mxu0
  %v8999 = vadd.f32 %v8933, %v8998
  %v9000 = vpop.f32.mrb[0].mxu0
  %v9001 = vpop.f32.mrb[0].mxu0
  %v9002 = vadd.f32 %v8936, %v9001
  %v9003 = vpop.f32.mrb[0].mxu0
  %9004 = vmatprep.mubr.bf16.mxu0 0
  %9005 = vmatmul.mubr.bf16.gmra.mrb[0].mxu0 %v8954
  %v9006 = vpop.f32.mrb[0].mxu0
  %v9007 = vadd.f32 %v8941, %v9006
  %v9008 = vpop.f32.mrb[0].mxu0
  %v9009 = vpop.f32.mrb[0].mxu0
  %v9010 = vadd.f32 %v8944, %v9009
  %v9011 = vpop.f32.mrb[0].mxu0
  %9012 = vdwg.mxu0
  %s9013 = scalar_lea.vmem %s37, 64
  %v9014 = vld [vmem:[%s9013] sm:$0xff]
  %v9015 = vld [vmem:[%s9013 + $0x8] sm:$0xff]
  %v9016 = vld [vmem:[%s9013 + $0x10] sm:$0xff]
  %v9017 = vld [vmem:[%s9013 + $0x18] sm:$0xff]
  %v9018 = vpack.c.bf16 %v8703, %v8700
  %v9019 = vpack.c.bf16 %v8711, %v8708
  %v9020 = vpack.c.bf16 %v8719, %v8716
  %v9021 = vpack.c.bf16 %v9015, %v9014
  %v9022 = vpack.c.bf16 %v9017, %v9016
  %v9024 = vsel %vm423, %v9018, 0
  %v9027 = vsel %vm423, %v9019, 0
  %v9030 = vsel %vm423, %v9020, 0
  %9032 = vmatprep.subr.bf16.mxu0 0
  %9033 = vmatpush1.bf16.msra.mxu0 %v9021
  %9034 = vmatprep.subr.bf16.mxu0 0
  %9035 = vmatpush1.bf16.msra.mxu0 %v9022
  %9036 = vmatprep.subr.bf16.mxu0 0
  %9037 = vmatpush1.bf16.msra.mxu0 0
  %9038 = vmatprep.subr.bf16.mxu0 0
  %9039 = vmatpush1.bf16.msra.mxu0 0
  %9040 = vmatprep.subr.bf16.mxu0 0
  %9041 = vmatpush1.bf16.msra.mxu0 0
  %9042 = vmatprep.subr.bf16.mxu0 0
  %9043 = vmatpush1.bf16.msra.mxu0 0
  %9044 = vmatprep.subr.bf16.mxu0 0
  %9045 = vmatpush1.bf16.msra.mxu0 0
  %9046 = vmatprep.subr.bf16.mxu0 0
  %9047 = vmatpush1.bf16.msra.mxu0 0
  %9048 = vmatprep.subr.bf16.mxu0 0
  %9049 = vmatpush1.bf16.msra.mxu0 0
  %9050 = vmatprep.subr.bf16.mxu0 0
  %9051 = vmatpush1.bf16.msra.mxu0 0
  %9052 = vmatprep.subr.bf16.mxu0 0
  %9053 = vmatpush1.bf16.msra.mxu0 0
  %9054 = vmatprep.subr.bf16.mxu0 0
  %9055 = vmatpush1.bf16.msra.mxu0 0
  %9056 = vmatprep.subr.bf16.mxu0 0
  %9057 = vmatpush1.bf16.msra.mxu0 0
  %9058 = vmatprep.subr.bf16.mxu0 0
  %9059 = vmatpush1.bf16.msra.mxu0 0
  %9060 = vmatprep.subr.bf16.mxu0 0
  %9061 = vmatpush1.bf16.msra.mxu0 0
  %9062 = vmatprep.subr.bf16.mxu0 0
  %9063 = vmatpush1.bf16.msra.mxu0 0
  %9064 = vmatprep.mubr.bf16.mxu0 0
  %9065 = vmatmul.mubr.bf16.gmra.mrb[0].mxu0 %v9024
  %v9066 = vpop.f32.mrb[0].mxu0
  %v9067 = vadd.f32 0.0, %v9066
  %v9068 = vpop.f32.mrb[0].mxu0
  %v9069 = vpop.f32.mrb[0].mxu0
  %v9070 = vadd.f32 0.0, %v9069
  %v9071 = vpop.f32.mrb[0].mxu0
  %9072 = vmatprep.mubr.bf16.mxu0 0
  %9073 = vmatmul.mubr.bf16.gmra.mrb[0].mxu0 %v9027
  %v9074 = vpop.f32.mrb[0].mxu0
  %v9075 = vadd.f32 0.0, %v9074
  %v9076 = vpop.f32.mrb[0].mxu0
  %v9077 = vpop.f32.mrb[0].mxu0
  %v9078 = vadd.f32 0.0, %v9077
  %v9079 = vpop.f32.mrb[0].mxu0
  %9080 = vmatprep.mubr.bf16.mxu0 0
  %9081 = vmatmul.mubr.bf16.gmra.mrb[0].mxu0 %v9030
  %v9082 = vpop.f32.mrb[0].mxu0
  %v9083 = vadd.f32 0.0, %v9082
  %v9084 = vpop.f32.mrb[0].mxu0
  %v9085 = vpop.f32.mrb[0].mxu0
  %v9086 = vadd.f32 0.0, %v9085
  %v9087 = vpop.f32.mrb[0].mxu0
  %9088 = vdwg.mxu0
  %v9089 = vadd.f32 %v8991, %v9067
  %v9090 = vadd.f32 %v8994, %v9070
  %v9091 = vadd.f32 %v8999, %v9075
  %v9092 = vadd.f32 %v9002, %v9078
  %v9093 = vadd.f32 %v9007, %v9083
  %v9094 = vadd.f32 %v9010, %v9086
  %s9095 = scalar_lea.vmem %s39, 2
  %v9096 = vld [vmem:[%s9095] sm:$0x1]
  %v9098 = vlaneseq
  %v9099 = vshrl.u32 %v9098, 7
  %v9100 = vsub.s32 0, %v9099
  %v9101 = vrot.slane %v9096, %v9100
  %v9103 = vadd.f32 %v9089, %v9101
  %v9104 = vadd.f32 %v9090, %v9101
  %v9105 = vadd.f32 %v9091, %v9101
  %v9106 = vadd.f32 %v9092, %v9101
  %v9107 = vadd.f32 %v9093, %v9101
  %v9108 = vadd.f32 %v9094, %v9101
  %v9109 = vxor.u32 %v9103, 2147483648
  %v9110 = vxor.u32 %v9104, 2147483648
  %v9111 = vxor.u32 %v9105, 2147483648
  %v9112 = vxor.u32 %v9106, 2147483648
  %v9113 = vxor.u32 %v9107, 2147483648
  %v9114 = vxor.u32 %v9108, 2147483648
  %v9115 = vmul.f32 %v9109, 1.442695
  %v9116 = vpow.pop %v9115
  %v9117 = vmul.f32 %v9110, 1.442695
  %v9118 = vpow.pop %v9117
  %v9119 = vmul.f32 %v9111, 1.442695
  %v9120 = vpow.pop %v9119
  %v9121 = vmul.f32 %v9112, 1.442695
  %v9122 = vpow.pop %v9121
  %v9123 = vmul.f32 %v9113, 1.442695
  %v9124 = vpow.pop %v9123
  %v9125 = vmul.f32 %v9114, 1.442695
  %v9126 = vpow.pop %v9125
  %v9127 = vadd.f32 %v9116, 1.0
  %v9128 = vadd.f32 %v9118, 1.0
  %v9129 = vadd.f32 %v9120, 1.0
  %v9130 = vadd.f32 %v9122, 1.0
  %v9131 = vadd.f32 %v9124, 1.0
  %v9132 = vadd.f32 %v9126, 1.0
  %v9133 = vrcp.pop %v9127
  %v9134 = vmul.f32 1.0, %v9133
  %v9135 = vrcp.pop %v9128
  %v9136 = vmul.f32 1.0, %v9135
  %v9137 = vrcp.pop %v9129
  %v9138 = vmul.f32 1.0, %v9137
  %v9139 = vrcp.pop %v9130
  %v9140 = vmul.f32 1.0, %v9139
  %v9141 = vrcp.pop %v9131
  %v9142 = vmul.f32 1.0, %v9141
  %v9143 = vrcp.pop %v9132
  %v9144 = vmul.f32 1.0, %v9143
  %v9145 = vmul.f32 %v9103, %v9134
  %v9146 = vmul.f32 %v9104, %v9136
  %v9147 = vmul.f32 %v9105, %v9138
  %v9148 = vmul.f32 %v9106, %v9140
  %v9149 = vmul.f32 %v9107, %v9142
  %v9150 = vmul.f32 %v9108, %v9144
  %s9151 = scalar_lea.vmem %s41, 128
  %v9152 = vld [vmem:[%s9151] sm:$0xff]
  %v9153 = vld [vmem:[%s9151 + $0x8] sm:$0xff]
  %v9154 = vld [vmem:[%s9151 + $0x10] sm:$0xff]
  %v9155 = vld [vmem:[%s9151 + $0x18] sm:$0xff]
  %v9156 = vld [vmem:[%s9151 + $0x20] sm:$0xff]
  %v9157 = vld [vmem:[%s9151 + $0x28] sm:$0xff]
  %v9158 = vld [vmem:[%s9151 + $0x30] sm:$0xff]
  %v9159 = vld [vmem:[%s9151 + $0x38] sm:$0xff]
  %v9160 = vpack.c.bf16 %v9146, %v9145
  %v9161 = vpack.c.bf16 %v9148, %v9147
  %v9162 = vpack.c.bf16 %v9150, %v9149
  %v9163 = vpack.c.bf16 %v9153, %v9152
  %v9164 = vpack.c.bf16 %v9155, %v9154
  %v9165 = vpack.c.bf16 %v9157, %v9156
  %v9166 = vpack.c.bf16 %v9159, %v9158
  %s9167 = scalar_lea.vmem %s43, 2
  %v9168 = vld [vmem:[%s9167] sm:$0x1]
  %v9170 = vlaneseq
  %v9171 = vshrl.u32 %v9170, 7
  %v9172 = vsub.s32 0, %v9171
  %v9173 = vrot.slane %v9168, %v9172
  %v9176 = vsel %vm1608, %v9160, 0
  %v9179 = vsel %vm1608, %v9161, 0
  %v9182 = vsel %vm1608, %v9162, 0
  %9184 = vmatprep.subr.bf16.mxu0 0
  %9185 = vmatpush1.bf16.msra.mxu0 %v9163
  %9186 = vmatprep.subr.bf16.mxu0 0
  %9187 = vmatpush1.bf16.msra.mxu0 %v9164
  %9188 = vmatprep.subr.bf16.mxu0 0
  %9189 = vmatpush1.bf16.msra.mxu0 %v9165
  %9190 = vmatprep.subr.bf16.mxu0 0
  %9191 = vmatpush1.bf16.msra.mxu0 %v9166
  %9192 = vmatprep.subr.bf16.mxu0 0
  %9193 = vmatpush1.bf16.msra.mxu0 0
  %9194 = vmatprep.subr.bf16.mxu0 0
  %9195 = vmatpush1.bf16.msra.mxu0 0
  %9196 = vmatprep.subr.bf16.mxu0 0
  %9197 = vmatpush1.bf16.msra.mxu0 0
  %9198 = vmatprep.subr.bf16.mxu0 0
  %9199 = vmatpush1.bf16.msra.mxu0 0
  %9200 = vmatprep.subr.bf16.mxu0 0
  %9201 = vmatpush1.bf16.msra.mxu0 0
  %9202 = vmatprep.subr.bf16.mxu0 0
  %9203 = vmatpush1.bf16.msra.mxu0 0
  %9204 = vmatprep.subr.bf16.mxu0 0
  %9205 = vmatpush1.bf16.msra.mxu0 0
  %9206 = vmatprep.subr.bf16.mxu0 0
  %9207 = vmatpush1.bf16.msra.mxu0 0
  %9208 = vmatprep.subr.bf16.mxu0 0
  %9209 = vmatpush1.bf16.msra.mxu0 0
  %9210 = vmatprep.subr.bf16.mxu0 0
  %9211 = vmatpush1.bf16.msra.mxu0 0
  %9212 = vmatprep.subr.bf16.mxu0 0
  %9213 = vmatpush1.bf16.msra.mxu0 0
  %9214 = vmatprep.subr.bf16.mxu0 0
  %9215 = vmatpush1.bf16.msra.mxu0 0
  %9216 = vmatprep.mubr.bf16.mxu0 0
  %9217 = vmatmul.mubr.bf16.gmra.mrb[0].mxu0 %v9176
  %v9218 = vpop.f32.mrb[0].mxu0
  %v9219 = vadd.f32 %v9173, %v9218
  %v9220 = vpop.f32.mrb[0].mxu0
  %v9221 = vpop.f32.mrb[0].mxu0
  %v9222 = vadd.f32 %v9173, %v9221
  %v9223 = vpop.f32.mrb[0].mxu0
  %9224 = vmatprep.mubr.bf16.mxu0 0
  %9225 = vmatmul.mubr.bf16.gmra.mrb[0].mxu0 %v9179
  %v9226 = vpop.f32.mrb[0].mxu0
  %v9227 = vadd.f32 %v9173, %v9226
  %v9228 = vpop.f32.mrb[0].mxu0
  %v9229 = vpop.f32.mrb[0].mxu0
  %v9230 = vadd.f32 %v9173, %v9229
  %v9231 = vpop.f32.mrb[0].mxu0
  %9232 = vmatprep.mubr.bf16.mxu0 0
  %9233 = vmatmul.mubr.bf16.gmra.mrb[0].mxu0 %v9182
  %v9234 = vpop.f32.mrb[0].mxu0
  %v9235 = vadd.f32 %v9173, %v9234
  %v9236 = vpop.f32.mrb[0].mxu0
  %v9237 = vpop.f32.mrb[0].mxu0
  %v9238 = vadd.f32 %v9173, %v9237
  %v9239 = vpop.f32.mrb[0].mxu0
  %9240 = vdwg.mxu0
  %v9241 = vmul.f32 %v8758, %v9219
  %v9242 = vmul.f32 %v8761, %v9222
  %v9243 = vmul.f32 %v8766, %v9227
  %v9244 = vmul.f32 %v8769, %v9230
  %v9245 = vmul.f32 %v8774, %v9235
  %v9246 = vmul.f32 %v8777, %v9238
  %v9247 = vmul.f32 %v9241, 0.17677669
  %v9248 = vmul.f32 %v9242, 0.17677669
  %v9249 = vmul.f32 %v9243, 0.17677669
  %v9250 = vmul.f32 %v9244, 0.17677669
  %v9251 = vmul.f32 %v9245, 0.17677669
  %v9252 = vmul.f32 %v9246, 0.17677669
  %v9253 = vsel %vm423, %v9247, 0.0
  %9254 = vadd.xlane.f32.xlu0 %v9253
  %v9255 = vpop.xlane.xlu0 %9254
  %v9256 = vsel %vm423, %v9248, 0.0
  %9257 = vadd.xlane.f32.xlu0 %v9256
  %v9258 = vpop.xlane.xlu0 %9257
  %v9259 = vsel %vm423, %v9249, 0.0
  %9260 = vadd.xlane.f32.xlu0 %v9259
  %v9261 = vpop.xlane.xlu0 %9260
  %v9262 = vsel %vm423, %v9250, 0.0
  %9263 = vadd.xlane.f32.xlu0 %v9262
  %v9264 = vpop.xlane.xlu0 %9263
  %v9265 = vsel %vm423, %v9251, 0.0
  %9266 = vadd.xlane.f32.xlu0 %v9265
  %v9267 = vpop.xlane.xlu0 %9266
  %v9268 = vsel %vm423, %v9252, 0.0
  %9269 = vadd.xlane.f32.xlu0 %v9268
  %v9270 = vpop.xlane.xlu0 %9269
  %v9271 = vmul.f32 %v9255, %v1705
  %v9272 = vmul.f32 %v9258, %v1705
  %v9273 = vmul.f32 %v9261, %v1705
  %v9274 = vmul.f32 %v9264, %v1705
  %v9275 = vmul.f32 %v9267, %v1705
  %v9276 = vmul.f32 %v9270, %v1705
  %v9277 = vsub.f32 %v9247, %v9271
  %v9278 = vsub.f32 %v9248, %v9272
  %v9279 = vsub.f32 %v9249, %v9273
  %v9280 = vsub.f32 %v9250, %v9274
  %v9281 = vsub.f32 %v9251, %v9275
  %v9282 = vsub.f32 %v9252, %v9276
  %v9283 = vmul.f32 %v9277, %v9277
  %v9284 = vmul.f32 %v9278, %v9278
  %v9285 = vmul.f32 %v9279, %v9279
  %v9286 = vmul.f32 %v9280, %v9280
  %v9287 = vmul.f32 %v9281, %v9281
  %v9288 = vmul.f32 %v9282, %v9282
  %v9289 = vsel %vm423, %v9283, 0.0
  %9290 = vadd.xlane.f32.xlu0 %v9289
  %v9291 = vpop.xlane.xlu0 %9290
  %v9292 = vsel %vm423, %v9284, 0.0
  %9293 = vadd.xlane.f32.xlu0 %v9292
  %v9294 = vpop.xlane.xlu0 %9293
  %v9295 = vsel %vm423, %v9285, 0.0
  %9296 = vadd.xlane.f32.xlu0 %v9295
  %v9297 = vpop.xlane.xlu0 %9296
  %v9298 = vsel %vm423, %v9286, 0.0
  %9299 = vadd.xlane.f32.xlu0 %v9298
  %v9300 = vpop.xlane.xlu0 %9299
  %v9301 = vsel %vm423, %v9287, 0.0
  %9302 = vadd.xlane.f32.xlu0 %v9301
  %v9303 = vpop.xlane.xlu0 %9302
  %v9304 = vsel %vm423, %v9288, 0.0
  %9305 = vadd.xlane.f32.xlu0 %v9304
  %v9306 = vpop.xlane.xlu0 %9305
  %v9307 = vmul.f32 %v9291, %v1705
  %v9308 = vmul.f32 %v9294, %v1705
  %v9309 = vmul.f32 %v9297, %v1705
  %v9310 = vmul.f32 %v9300, %v1705
  %v9311 = vmul.f32 %v9303, %v1705
  %v9312 = vmul.f32 %v9306, %v1705
  %v9313 = vadd.f32 %v9307, 1e-05
  %v9314 = vadd.f32 %v9308, 1e-05
  %v9315 = vadd.f32 %v9309, 1e-05
  %v9316 = vadd.f32 %v9310, 1e-05
  %v9317 = vadd.f32 %v9311, 1e-05
  %v9318 = vadd.f32 %v9312, 1e-05
  %v9319 = vrsqrt.pop %v9313
  %v9320 = vrsqrt.pop %v9314
  %v9321 = vrsqrt.pop %v9315
  %v9322 = vrsqrt.pop %v9316
  %v9323 = vrsqrt.pop %v9317
  %v9324 = vrsqrt.pop %v9318
  %v9325 = vmul.f32 %v9277, %v9319
  %v9326 = vmul.f32 %v9278, %v9320
  %v9327 = vmul.f32 %v9279, %v9321
  %v9328 = vmul.f32 %v9280, %v9322
  %v9329 = vmul.f32 %v9281, %v9323
  %v9330 = vmul.f32 %v9282, %v9324
  %s9331 = scalar_lea.vmem %s49, 2
  %v9332 = vld [vmem:[%s9331] sm:$0x1]
  %v9334 = vlaneseq
  %v9335 = vshrl.u32 %v9334, 7
  %v9336 = vsub.s32 0, %v9335
  %v9337 = vrot.slane %v9332, %v9336
  %v9339 = vmul.f32 %v9325, %v9337
  %v9340 = vmul.f32 %v9326, %v9337
  %v9341 = vmul.f32 %v9327, %v9337
  %v9342 = vmul.f32 %v9328, %v9337
  %v9343 = vmul.f32 %v9329, %v9337
  %v9344 = vmul.f32 %v9330, %v9337
  %s9345 = scalar_lea.vmem %s51, 2
  %v9346 = vld [vmem:[%s9345] sm:$0x1]
  %v9348 = vlaneseq
  %v9349 = vshrl.u32 %v9348, 7
  %v9350 = vsub.s32 0, %v9349
  %v9351 = vrot.slane %v9346, %v9350
  %v9353 = vadd.f32 %v9339, %v9351
  %v9354 = vadd.f32 %v9340, %v9351
  %v9355 = vadd.f32 %v9341, %v9351
  %v9356 = vadd.f32 %v9342, %v9351
  %v9357 = vadd.f32 %v9343, %v9351
  %v9358 = vadd.f32 %v9344, %v9351
  %v9359 = vxor.u32 %v9353, 2147483648
  %v9360 = vxor.u32 %v9354, 2147483648
  %v9361 = vxor.u32 %v9355, 2147483648
  %v9362 = vxor.u32 %v9356, 2147483648
  %v9363 = vxor.u32 %v9357, 2147483648
  %v9364 = vxor.u32 %v9358, 2147483648
  %v9365 = vmul.f32 %v9359, 1.442695
  %v9366 = vpow.pop %v9365
  %v9367 = vmul.f32 %v9360, 1.442695
  %v9368 = vpow.pop %v9367
  %v9369 = vmul.f32 %v9361, 1.442695
  %v9370 = vpow.pop %v9369
  %v9371 = vmul.f32 %v9362, 1.442695
  %v9372 = vpow.pop %v9371
  %v9373 = vmul.f32 %v9363, 1.442695
  %v9374 = vpow.pop %v9373
  %v9375 = vmul.f32 %v9364, 1.442695
  %v9376 = vpow.pop %v9375
  %v9377 = vadd.f32 %v9366, 1.0
  %v9378 = vadd.f32 %v9368, 1.0
  %v9379 = vadd.f32 %v9370, 1.0
  %v9380 = vadd.f32 %v9372, 1.0
  %v9381 = vadd.f32 %v9374, 1.0
  %v9382 = vadd.f32 %v9376, 1.0
  %v9383 = vrcp.pop %v9377
  %v9384 = vmul.f32 1.0, %v9383
  %v9385 = vrcp.pop %v9378
  %v9386 = vmul.f32 1.0, %v9385
  %v9387 = vrcp.pop %v9379
  %v9388 = vmul.f32 1.0, %v9387
  %v9389 = vrcp.pop %v9380
  %v9390 = vmul.f32 1.0, %v9389
  %v9391 = vrcp.pop %v9381
  %v9392 = vmul.f32 1.0, %v9391
  %v9393 = vrcp.pop %v9382
  %v9394 = vmul.f32 1.0, %v9393
  %9401 = vrot.lane.b32.xlu0 %v9384, 32
  %v9402 = vpop.permute.xlu0 %9401
  %9403 = vrot.lane.b32.xlu0 %v9386, 32
  %v9404 = vpop.permute.xlu0 %9403
  %9405 = vrot.lane.b32.xlu0 %v9388, 32
  %v9406 = vpop.permute.xlu0 %9405
  %9407 = vrot.lane.b32.xlu0 %v9390, 32
  %v9408 = vpop.permute.xlu0 %9407
  %9409 = vrot.lane.b32.xlu0 %v9392, 32
  %v9410 = vpop.permute.xlu0 %9409
  %9411 = vrot.lane.b32.xlu0 %v9394, 32
  %v9412 = vpop.permute.xlu0 %9411
  %v9419 = vmul.f32 %v9219, %v9402
  %v9420 = vmul.f32 %v9222, %v9404
  %v9421 = vmul.f32 %v9227, %v9406
  %v9422 = vmul.f32 %v9230, %v9408
  %v9423 = vmul.f32 %v9235, %v9410
  %v9424 = vmul.f32 %v9238, %v9412
  %v9425 = vpack.c.bf16 %v9420, %v9419
  %v9426 = vpack.c.bf16 %v9422, %v9421
  %v9427 = vpack.c.bf16 %v9424, %v9423
  %9431 = vrot.lane.b32.xlu0 %v9425, 96
  %v9432 = vpop.permute.xlu0 %9431
  %9433 = vrot.lane.b32.xlu0 %v9426, 96
  %v9434 = vpop.permute.xlu0 %9433
  %9435 = vrot.lane.b32.xlu0 %v9427, 96
  %v9436 = vpop.permute.xlu0 %9435
  %9440 = vmatprep.subr.bf16.mxu0 0
  %9441 = vmatpush1.bf16.msra.mxu0 %v9432
  %9442 = vmatprep.subr.bf16.mxu0 0
  %9443 = vmatpush1.bf16.msra.mxu0 %v9434
  %9444 = vmatprep.subr.bf16.mxu0 0
  %9445 = vmatpush1.bf16.msra.mxu0 %v9436
  %9446 = vmatprep.subr.bf16.mxu0 0
  %9447 = vmatpush1.bf16.msra.mxu0 0
  %9448 = vmatprep.subr.bf16.mxu0 0
  %9449 = vmatpush1.bf16.msra.mxu0 0
  %9450 = vmatprep.subr.bf16.mxu0 0
  %9451 = vmatpush1.bf16.msra.mxu0 0
  %9452 = vmatprep.subr.bf16.mxu0 0
  %9453 = vmatpush1.bf16.msra.mxu0 0
  %9454 = vmatprep.subr.bf16.mxu0 0
  %9455 = vmatpush1.bf16.msra.mxu0 0
  %9456 = vmatprep.subr.bf16.mxu0 0
  %9457 = vmatpush1.bf16.msra.mxu0 0
  %9458 = vmatprep.subr.bf16.mxu0 0
  %9459 = vmatpush1.bf16.msra.mxu0 0
  %9460 = vmatprep.subr.bf16.mxu0 0
  %9461 = vmatpush1.bf16.msra.mxu0 0
  %9462 = vmatprep.subr.bf16.mxu0 0
  %9463 = vmatpush1.bf16.msra.mxu0 0
  %9464 = vmatprep.subr.bf16.mxu0 0
  %9465 = vmatpush1.bf16.msra.mxu0 0
  %9466 = vmatprep.subr.bf16.mxu0 0
  %9467 = vmatpush1.bf16.msra.mxu0 0
  %9468 = vmatprep.subr.bf16.mxu0 0
  %9469 = vmatpush1.bf16.msra.mxu0 0
  %9470 = vmatprep.subr.bf16.mxu0 0
  %9471 = vmatpush1.bf16.msra.mxu0 0
  %9472 = vmatprep.mubr.bf16.mxu0 0
  %9473 = vmatmul.mubr.bf16.gmra.mrb[0].mxu0 %v1876
  %v9474 = vpop.f32.mrb[0].mxu0
  %v9475 = vadd.f32 0.0, %v9474
  %v9476 = vpop.f32.mrb[0].mxu0
  %v9477 = vpop.f32.mrb[0].mxu0
  %v9478 = vadd.f32 0.0, %v9477
  %v9479 = vpop.f32.mrb[0].mxu0
  %9480 = vdwg.mxu0
  %s9481 = scalar_lea.vmem %s45, 64
  %v9482 = vld [vmem:[%s9481] sm:$0xff]
  %v9483 = vld [vmem:[%s9481 + $0x8] sm:$0xff]
  %v9484 = vld [vmem:[%s9481 + $0x10] sm:$0xff]
  %v9485 = vld [vmem:[%s9481 + $0x18] sm:$0xff]
  %v9486 = vpack.c.bf16 %v9478, %v9475
  %v9487 = vpack.c.bf16 %v9483, %v9482
  %v9488 = vpack.c.bf16 %v9485, %v9484
  %s9489 = scalar_lea.vmem %s47, 2
  %v9490 = vld [vmem:[%s9489] sm:$0x1]
  %v9492 = vlaneseq
  %v9493 = vshrl.u32 %v9492, 7
  %v9494 = vsub.s32 0, %v9493
  %v9495 = vrot.slane %v9490, %v9494
  %v9498 = vsel %vm423, %v9486, 0
  %9500 = vmatprep.subr.bf16.mxu0 0
  %9501 = vmatpush1.bf16.msra.mxu0 %v9487
  %9502 = vmatprep.subr.bf16.mxu0 0
  %9503 = vmatpush1.bf16.msra.mxu0 %v9488
  %9504 = vmatprep.subr.bf16.mxu0 0
  %9505 = vmatpush1.bf16.msra.mxu0 0
  %9506 = vmatprep.subr.bf16.mxu0 0
  %9507 = vmatpush1.bf16.msra.mxu0 0
  %9508 = vmatprep.subr.bf16.mxu0 0
  %9509 = vmatpush1.bf16.msra.mxu0 0
  %9510 = vmatprep.subr.bf16.mxu0 0
  %9511 = vmatpush1.bf16.msra.mxu0 0
  %9512 = vmatprep.subr.bf16.mxu0 0
  %9513 = vmatpush1.bf16.msra.mxu0 0
  %9514 = vmatprep.subr.bf16.mxu0 0
  %9515 = vmatpush1.bf16.msra.mxu0 0
  %9516 = vmatprep.subr.bf16.mxu0 0
  %9517 = vmatpush1.bf16.msra.mxu0 0
  %9518 = vmatprep.subr.bf16.mxu0 0
  %9519 = vmatpush1.bf16.msra.mxu0 0
  %9520 = vmatprep.subr.bf16.mxu0 0
  %9521 = vmatpush1.bf16.msra.mxu0 0
  %9522 = vmatprep.subr.bf16.mxu0 0
  %9523 = vmatpush1.bf16.msra.mxu0 0
  %9524 = vmatprep.subr.bf16.mxu0 0
  %9525 = vmatpush1.bf16.msra.mxu0 0
  %9526 = vmatprep.subr.bf16.mxu0 0
  %9527 = vmatpush1.bf16.msra.mxu0 0
  %9528 = vmatprep.subr.bf16.mxu0 0
  %9529 = vmatpush1.bf16.msra.mxu0 0
  %9530 = vmatprep.subr.bf16.mxu0 0
  %9531 = vmatpush1.bf16.msra.mxu0 0
  %9532 = vmatprep.mubr.bf16.mxu0 0
  %9533 = vmatmul.mubr.bf16.gmra.mrb[0].mxu0 %v9498
  %v9534 = vpop.f32.mrb[0].mxu0
  %v9535 = vadd.f32 %v9495, %v9534
  %v9536 = vpop.f32.mrb[0].mxu0
  %v9537 = vpop.f32.mrb[0].mxu0
  %v9538 = vadd.f32 %v9495, %v9537
  %v9539 = vpop.f32.mrb[0].mxu0
  %9540 = vdwg.mxu0
  %s9541 = scalar_lea.vmem %s53, 2
  %v9542 = vld [vmem:[%s9541] sm:$0x1]
  %v9544 = vlaneseq
  %v9545 = vshrl.u32 %v9544, 7
  %v9546 = vsub.s32 0, %v9545
  %v9547 = vrot.slane %v9542, %v9546
  %v9549 = vmul.f32 %v9535, %v9547
  %v9550 = vmul.f32 %v9538, %v9547
  %s9551 = scalar_lea.vmem %s55, 2
  %v9552 = vld [vmem:[%s9551] sm:$0x1]
  %v9554 = vlaneseq
  %v9555 = vshrl.u32 %v9554, 7
  %v9556 = vsub.s32 0, %v9555
  %v9557 = vrot.slane %v9552, %v9556
  %v9559 = vadd.f32 %v9549, %v9557
  %v9560 = vadd.f32 %v9550, %v9557
  %v9561 = vadd.f32 %v8588, %v9559
  %v9562 = vadd.f32 %v8589, %v9560
  %v9563 = vmax.f32 %v9561, 0.0
  %v9564 = vmax.f32 %v9562, 0.0
  %vm9565 = vcmp.ne.f32.partialorder %v9561, %v9561
  %vm9566 = vcmp.ne.f32.partialorder %v9562, %v9562
  %v9567 = vadd.f32 %v9561, 0.0
  %v9568 = vadd.f32 %v9562, 0.0
  %v9569 = vand.u32 2147483647, %v9561
  %v9570 = vand.u32 2147483647, %v9562
  %v9571 = vsub.f32 0.0, %v9569
  %v9572 = vsub.f32 0.0, %v9570
  %v9573 = vmul.f32 %v9571, 1.442695
  %v9574 = vpow.pop %v9573
  %v9575 = vmul.f32 %v9572, 1.442695
  %v9576 = vpow.pop %v9575
  %v9577 = vadd.f32 %v9574, 1.0
  %v9578 = vlog2.pop %v9577
  %v9579 = vmul.f32 %v9578, 0.6931472
  %v9580 = vmul.f32 -0.5, %v9574
  %v9581 = vadd.f32 %v9580, 1.0
  %v9582 = vmul.f32 %v9581, %v9574
  %v9583 = vand.u32 2147483647, %v9574
  %vm9584 = vcmp.lt.f32.partialorder %v9583, 0.0004427343
  %v9585 = vsel %vm9584, %v9582, %v9579
  %v9586 = vadd.f32 %v9576, 1.0
  %v9587 = vlog2.pop %v9586
  %v9588 = vmul.f32 %v9587, 0.6931472
  %v9589 = vmul.f32 -0.5, %v9576
  %v9590 = vadd.f32 %v9589, 1.0
  %v9591 = vmul.f32 %v9590, %v9576
  %v9592 = vand.u32 2147483647, %v9576
  %vm9593 = vcmp.lt.f32.partialorder %v9592, 0.0004427343
  %v9594 = vsel %vm9593, %v9591, %v9588
  %v9595 = vadd.f32 %v9563, %v9585
  %v9596 = vadd.f32 %v9564, %v9594
  %v9597 = vsel %vm9565, %v9567, %v9595
  %v9598 = vsel %vm9566, %v9568, %v9596
  %v9599 = vld [vmem:[%s9] sm:$0xff]
  %v9600 = vld [vmem:[%s9 + $0x8] sm:$0xff]
  %9601 = vxpose.xlu0.b32.start [1/16] %v9599, 128
  %9602 = vxpose.xlu0.b32.cont [2/16] %v9600, 128
  %9603 = vxpose.xlu0.b32.cont [3/16] 0.0, 128
  %9604 = vxpose.xlu0.b32.cont [4/16] 0.0, 128
  %9605 = vxpose.xlu0.b32.cont [5/16] 0.0, 128
  %9606 = vxpose.xlu0.b32.cont [6/16] 0.0, 128
  %9607 = vxpose.xlu0.b32.cont [7/16] 0.0, 128
  %9608 = vxpose.xlu0.b32.cont [8/16] 0.0, 128
  %9609 = vxpose.xlu0.b32.cont [9/16] 0.0, 128
  %9610 = vxpose.xlu0.b32.cont [10/16] 0.0, 128
  %9611 = vxpose.xlu0.b32.cont [11/16] 0.0, 128
  %9612 = vxpose.xlu0.b32.cont [12/16] 0.0, 128
  %9613 = vxpose.xlu0.b32.cont [13/16] 0.0, 128
  %9614 = vxpose.xlu0.b32.cont [14/16] 0.0, 128
  %9615 = vxpose.xlu0.b32.cont [15/16] 0.0, 128
  %9616 = vxpose.xlu0.b32.end [16/16] 0.0, 128
  %v9617 = vpop.trf.xlu0
  %v9618 = vpop.trf.xlu0
  %v9619 = vpop.trf.xlu0
  %v9620 = vpop.trf.xlu0
  %v9621 = vpop.trf.xlu0
  %v9622 = vpop.trf.xlu0
  %v9623 = vpop.trf.xlu0
  %v9624 = vpop.trf.xlu0
  %v9625 = vpop.trf.xlu0
  %v9626 = vpop.trf.xlu0
  %v9627 = vpop.trf.xlu0
  %v9628 = vpop.trf.xlu0
  %v9629 = vpop.trf.xlu0
  %v9630 = vpop.trf.xlu0
  %v9631 = vpop.trf.xlu0
  %v9632 = vpop.trf.xlu0
  %v9633 = vpack.c.bf16 %v9617, %v9617
  %v9634 = vpack.c.bf16 %v9598, %v9597
  %v9636 = vsel %vm276, %v9633, 0
  %9638 = vmatprep.subr.bf16.mxu0 0
  %9639 = vmatpush1.bf16.msra.mxu0 %v9634
  %9640 = vmatprep.subr.bf16.mxu0 0
  %9641 = vmatpush1.bf16.msra.mxu0 0
  %9642 = vmatprep.subr.bf16.mxu0 0
  %9643 = vmatpush1.bf16.msra.mxu0 0
  %9644 = vmatprep.subr.bf16.mxu0 0
  %9645 = vmatpush1.bf16.msra.mxu0 0
  %9646 = vmatprep.subr.bf16.mxu0 0
  %9647 = vmatpush1.bf16.msra.mxu0 0
  %9648 = vmatprep.subr.bf16.mxu0 0
  %9649 = vmatpush1.bf16.msra.mxu0 0
  %9650 = vmatprep.subr.bf16.mxu0 0
  %9651 = vmatpush1.bf16.msra.mxu0 0
  %9652 = vmatprep.subr.bf16.mxu0 0
  %9653 = vmatpush1.bf16.msra.mxu0 0
  %9654 = vmatprep.subr.bf16.mxu0 0
  %9655 = vmatpush1.bf16.msra.mxu0 0
  %9656 = vmatprep.subr.bf16.mxu0 0
  %9657 = vmatpush1.bf16.msra.mxu0 0
  %9658 = vmatprep.subr.bf16.mxu0 0
  %9659 = vmatpush1.bf16.msra.mxu0 0
  %9660 = vmatprep.subr.bf16.mxu0 0
  %9661 = vmatpush1.bf16.msra.mxu0 0
  %9662 = vmatprep.subr.bf16.mxu0 0
  %9663 = vmatpush1.bf16.msra.mxu0 0
  %9664 = vmatprep.subr.bf16.mxu0 0
  %9665 = vmatpush1.bf16.msra.mxu0 0
  %9666 = vmatprep.subr.bf16.mxu0 0
  %9667 = vmatpush1.bf16.msra.mxu0 0
  %9668 = vmatprep.subr.bf16.mxu0 0
  %9669 = vmatpush1.bf16.msra.mxu0 0
  %9670 = vmatprep.mubr.bf16.mxu0 0
  %9671 = vmatmul.mubr.bf16.gmra.mrb[0].mxu0 %v9636
  %v9672 = vpop.f32.mrb[0].mxu0
  %v9673 = vadd.f32 0.0, %v9672
  %v9674 = vpop.f32.mrb[0].mxu0
  %v9675 = vpop.f32.mrb[0].mxu0
  %v9676 = vpop.f32.mrb[0].mxu0
  %9677 = vdwg.mxu0
  %v9678 = vld [vmem:[%s13] sm:$0x3]
  %9680 = vset.pattern.permute.xlu0 0
  %9681 = vperm.xlu0 %9680, %v9678
  %v9682 = vpop.permute.xlu0 %9681
  %v9684 = vmul.f32 %v9673, %v9682
  %v9685 = vld [vmem:[%s81] sm:$0xff]
  %v9686 = vld [vmem:[%s81 + $0x8] sm:$0xff]
  %v9687 = vld [vmem:[%s81 + $0x10] sm:$0xff]
  %v9688 = vld [vmem:[%s81 + $0x18] sm:$0xff]
  %v9689 = vpack.c.bf16 %v9684, %v9684
  %v9690 = vpack.c.bf16 %v9686, %v9685
  %v9691 = vpack.c.bf16 %v9688, %v9687
  %v9692 = vld [vmem:[%s83] sm:$0x1]
  %v9694 = vlaneseq
  %v9695 = vshrl.u32 %v9694, 7
  %v9696 = vsub.s32 0, %v9695
  %v9697 = vrot.slane %v9692, %v9696
  %v9700 = vsel %vm423, %v9689, 0
  %9702 = vmatprep.subr.bf16.mxu0 0
  %9703 = vmatpush1.bf16.msra.mxu0 %v9690
  %9704 = vmatprep.subr.bf16.mxu0 0
  %9705 = vmatpush1.bf16.msra.mxu0 %v9691
  %9706 = vmatprep.subr.bf16.mxu0 0
  %9707 = vmatpush1.bf16.msra.mxu0 0
  %9708 = vmatprep.subr.bf16.mxu0 0
  %9709 = vmatpush1.bf16.msra.mxu0 0
  %9710 = vmatprep.subr.bf16.mxu0 0
  %9711 = vmatpush1.bf16.msra.mxu0 0
  %9712 = vmatprep.subr.bf16.mxu0 0
  %9713 = vmatpush1.bf16.msra.mxu0 0
  %9714 = vmatprep.subr.bf16.mxu0 0
  %9715 = vmatpush1.bf16.msra.mxu0 0
  %9716 = vmatprep.subr.bf16.mxu0 0
  %9717 = vmatpush1.bf16.msra.mxu0 0
  %9718 = vmatprep.subr.bf16.mxu0 0
  %9719 = vmatpush1.bf16.msra.mxu0 0
  %9720 = vmatprep.subr.bf16.mxu0 0
  %9721 = vmatpush1.bf16.msra.mxu0 0
  %9722 = vmatprep.subr.bf16.mxu0 0
  %9723 = vmatpush1.bf16.msra.mxu0 0
  %9724 = vmatprep.subr.bf16.mxu0 0
  %9725 = vmatpush1.bf16.msra.mxu0 0
  %9726 = vmatprep.subr.bf16.mxu0 0
  %9727 = vmatpush1.bf16.msra.mxu0 0
  %9728 = vmatprep.subr.bf16.mxu0 0
  %9729 = vmatpush1.bf16.msra.mxu0 0
  %9730 = vmatprep.subr.bf16.mxu0 0
  %9731 = vmatpush1.bf16.msra.mxu0 0
  %9732 = vmatprep.subr.bf16.mxu0 0
  %9733 = vmatpush1.bf16.msra.mxu0 0
  %9734 = vmatprep.mubr.bf16.mxu0 0
  %9735 = vmatmul.mubr.bf16.gmra.mrb[0].mxu0 %v9700
  %v9736 = vpop.f32.mrb[0].mxu0
  %v9737 = vadd.f32 %v9697, %v9736
  %v9738 = vpop.f32.mrb[0].mxu0
  %v9739 = vpop.f32.mrb[0].mxu0
  %v9740 = vpop.f32.mrb[0].mxu0
  %9741 = vdwg.mxu0
  %v9742 = vxor.u32 %v9737, 2147483648
  %v9743 = vmul.f32 %v9742, 1.442695
  %v9744 = vpow.pop %v9743
  %v9745 = vadd.f32 %v9744, 1.0
  %v9746 = vrcp.pop %v9745
  %v9747 = vmul.f32 1.0, %v9746
  %v9748 = vmul.f32 %v9737, %v9747
  %v9749 = vld [vmem:[%s85] sm:$0xff]
  %v9750 = vld [vmem:[%s85 + $0x8] sm:$0xff]
  %v9751 = vld [vmem:[%s85 + $0x10] sm:$0xff]
  %v9752 = vld [vmem:[%s85 + $0x18] sm:$0xff]
  %v9753 = vld [vmem:[#allocation2] sm:$0x1]
  %v9755 = vlaneseq
  %v9756 = vshrl.u32 %v9755, 7
  %v9757 = vsub.s32 0, %v9756
  %v9758 = vrot.slane %v9753, %v9757
  %v9761 = vsel %vm423, %v9748, 0
  %9763 = vmatprep.subr.mxu0 0.0
  %9764 = vmatpush1.msra.mxu0 %v9749
  %9765 = vmatprep.subr.mxu0 0.0
  %9766 = vmatpush1.msra.mxu0 %v9750
  %9767 = vmatprep.subr.mxu0 0.0
  %9768 = vmatpush1.msra.mxu0 %v9751
  %9769 = vmatprep.subr.mxu0 0.0
  %9770 = vmatpush1.msra.mxu0 %v9752
  %9771 = vmatprep.subr.mxu0 0.0
  %9772 = vmatpush1.msra.mxu0 0.0
  %9773 = vmatprep.subr.mxu0 0.0
  %9774 = vmatpush1.msra.mxu0 0.0
  %9775 = vmatprep.subr.mxu0 0.0
  %9776 = vmatpush1.msra.mxu0 0.0
  %9777 = vmatprep.subr.mxu0 0.0
  %9778 = vmatpush1.msra.mxu0 0.0
  %9779 = vmatprep.subr.mxu0 0.0
  %9780 = vmatpush1.msra.mxu0 0.0
  %9781 = vmatprep.subr.mxu0 0.0
  %9782 = vmatpush1.msra.mxu0 0.0
  %9783 = vmatprep.subr.mxu0 0.0
  %9784 = vmatpush1.msra.mxu0 0.0
  %9785 = vmatprep.subr.mxu0 0.0
  %9786 = vmatpush1.msra.mxu0 0.0
  %9787 = vmatprep.subr.mxu0 0.0
  %9788 = vmatpush1.msra.mxu0 0.0
  %9789 = vmatprep.subr.mxu0 0.0
  %9790 = vmatpush1.msra.mxu0 0.0
  %9791 = vmatprep.subr.mxu0 0.0
  %9792 = vmatpush1.msra.mxu0 0.0
  %9793 = vmatprep.subr.mxu0 0.0
  %9794 = vmatpush1.msra.mxu0 0.0
  %9795 = vmatprep.subr.mxu0 0.0
  %9796 = vmatpush1.msra.mxu0 0.0
  %9797 = vmatprep.subr.mxu0 0.0
  %9798 = vmatpush1.msra.mxu0 0.0
  %9799 = vmatprep.subr.mxu0 0.0
  %9800 = vmatpush1.msra.mxu0 0.0
  %9801 = vmatprep.subr.mxu0 0.0
  %9802 = vmatpush1.msra.mxu0 0.0
  %9803 = vmatprep.subr.mxu0 0.0
  %9804 = vmatpush1.msra.mxu0 0.0
  %9805 = vmatprep.subr.mxu0 0.0
  %9806 = vmatpush1.msra.mxu0 0.0
  %9807 = vmatprep.subr.mxu0 0.0
  %9808 = vmatpush1.msra.mxu0 0.0
  %9809 = vmatprep.subr.mxu0 0.0
  %9810 = vmatpush1.msra.mxu0 0.0
  %9811 = vmatprep.subr.mxu0 0.0
  %9812 = vmatpush1.msra.mxu0 0.0
  %9813 = vmatprep.subr.mxu0 0.0
  %9814 = vmatpush1.msra.mxu0 0.0
  %9815 = vmatprep.subr.mxu0 0.0
  %9816 = vmatpush1.msra.mxu0 0.0
  %9817 = vmatprep.subr.mxu0 0.0
  %9818 = vmatpush1.msra.mxu0 0.0
  %9819 = vmatprep.subr.mxu0 0.0
  %9820 = vmatpush1.msra.mxu0 0.0
  %9821 = vmatprep.subr.mxu0 0.0
  %9822 = vmatpush1.msra.mxu0 0.0
  %9823 = vmatprep.subr.mxu0 0.0
  %9824 = vmatpush1.msra.mxu0 0.0
  %9825 = vmatprep.subr.mxu0 0.0
  %9826 = vmatpush1.msra.mxu0 0.0
  %9827 = vmatprep.mubr.f32.mxu0 0.0
  %9828 = vmatmul.mubr.f32.gmra.mrb[0].mxu0 %v9761
  %v9829 = vpop.f32.mrb[0].mxu0
  %v9830 = vadd.f32 %v9758, %v9829
  %v9831 = vpop.f32.mrb[0].mxu0
  %9832 = vdwg.mxu0
  %vm9833 = vcmask 1024
  %9834 = vst.msk [vmem:[%s89] sm:$0x3] %vm9833, %v9830
  // Predicated region
  $region178: #{ecomformer_forward.1} parent=0 // pred_check
    _
  $region179: #{ecomformer_forward.1} parent=0 // pred_check_branch
    %9836 = sbr.rel (0) target = $region181
  $region180: #{ecomformer_forward.1} parent=0 // pred_region
    _
  $region181: #{ecomformer_forward.1} parent=0 // pred_fallthru
    _
  // Predicated region
  $region182: #{ecomformer_forward.1} parent=0 // pred_check
    _
  $region183: #{ecomformer_forward.1} parent=0 // pred_check_branch
    %9838 = sbr.rel (0) target = $region185
  $region184: #{ecomformer_forward.1} parent=0 // pred_region
    _
  $region185: #{ecomformer_forward.1} parent=0 // pred_fallthru
    _

</llo_original>
